<compile_context>
chip_gen: v7x
topology: tpu7x:2x2x1
jax: 0.10.0
libtpu: 0.0.40
codegen_flags: <defaults>
</compile_context>

<pallas_src>
import jax
import jax.numpy as jnp
import numpy as np
from jax.experimental import pallas as pl
from jax.experimental.pallas import tpu as pltpu


def _make_kernel(H, W, Ch, Cin):
    """ConvGRU kernel for fixed spatial / channel sizes."""
    HW = H * W

    def kernel(hxp_ref, h_ref, wzrq_ref, wqh_ref, bzrq_ref, out_ref, rhp_ref):
        # hxp_ref : (H+2, W+2, Cin)  bf16  zero-padded concat [h, x]
        # h_ref   : (H,   W,   Ch)   f32   unpadded hidden state
        # wzrq_ref: (9, Cin, 3*Ch)   bf16  [Wz | Wr | Wq_x(h-rows zeroed)]
        # wqh_ref : (9, Ch,  Ch)     bf16  h-input half of Wq
        # bzrq_ref: (1, 3*Ch)        f32   [bz | br | bq]
        # out_ref : (H, W, Ch)       f32
        # rhp_ref : (H+2, W+2, Ch)   bf16  scratch, padded r*h

        # ---- pass 1: z / r gates + x-contribution of q, fused per tap ----
        acc = jnp.broadcast_to(bzrq_ref[...], (HW, 3 * Ch)).astype(jnp.float32)
        for dy in range(3):
            for dx in range(3):
                t = dy * 3 + dx
                win = hxp_ref[dy:dy + H, dx:dx + W, :].reshape(HW, Cin)
                acc += jnp.dot(win, wzrq_ref[t],
                               preferred_element_type=jnp.float32)

        z = jax.nn.sigmoid(acc[:, :Ch])            # (HW, Ch) f32
        r = jax.nn.sigmoid(acc[:, Ch:2 * Ch])      # (HW, Ch) f32
        qx = acc[:, 2 * Ch:]                       # conv_q(x) + bq, f32

        h_in = h_ref[...].reshape(HW, Ch)          # f32

        # ---- write r*h into padded scratch (re-zero only the thin border) ----
        zero_row = jnp.zeros((1, W + 2, Ch), jnp.bfloat16)
        zero_col = jnp.zeros((H + 2, 1, Ch), jnp.bfloat16)
        rhp_ref[0:1, :, :] = zero_row
        rhp_ref[H + 1:H + 2, :, :] = zero_row
        rhp_ref[:, 0:1, :] = zero_col
        rhp_ref[:, W + 1:W + 2, :] = zero_col
        rhp_ref[1:H + 1, 1:W + 1, :] = (
            (r * h_in).astype(jnp.bfloat16).reshape(H, W, Ch))

        # ---- pass 2: h-contribution of q (conv over r*h) ----
        acc_q = qx
        for dy in range(3):
            for dx in range(3):
                t = dy * 3 + dx
                win = rhp_ref[dy:dy + H, dx:dx + W, :].reshape(HW, Ch)
                acc_q += jnp.dot(win, wqh_ref[t],
                                 preferred_element_type=jnp.float32)
        q = jnp.tanh(acc_q)

        # ---- GRU state update ----
        h_new = (1.0 - z) * h_in + z * q
        out_ref[...] = h_new.reshape(H, W, Ch)

    return kernel


@jax.jit
def conv_gru_pallas(h, x, wz, bz, wr, br, wq, bq):
    """h: (N, Ch, H, W), x: (N, Cx, H, W) NCHW (PyTorch convention).

    Conv weights PyTorch-shaped (Ch, Ch+Cx, 3, 3); biases (Ch,).
    Returns the new hidden state (N, Ch, H, W) in f32.
    """
    N, Ch, H, W = h.shape
    Cx = x.shape[1]
    Cin = Ch + Cx
    f32 = jnp.float32

    h_f = h.astype(f32)
    x_f = x.astype(f32)

    # glue: channel concat, NCHW -> NHWC, zero spatial pad, bf16 matmul operand
    hx_nhwc = jnp.transpose(jnp.concatenate([h_f, x_f], axis=1), (0, 2, 3, 1))
    hxp = jnp.pad(hx_nhwc, ((0, 0), (1, 1), (1, 1), (0, 0))).astype(jnp.bfloat16)
    h_nhwc = jnp.transpose(h_f, (0, 2, 3, 1))      # f32, for the GRU update

    # glue: OIHW -> (kh, kw, Cin, Cout), then kernel-ready layouts
    to_hwio = lambda w: jnp.transpose(w, (2, 3, 1, 0)).astype(f32)
    wz_h, wr_h, wq_h = to_hwio(wz), to_hwio(wr), to_hwio(wq)
    # x-input half of Wq with its h-input rows zeroed -> hx-window @ it == x-part
    wq_x_only = jnp.concatenate(
        [jnp.zeros((3, 3, Ch, Ch), f32), wq_h[:, :, Ch:, :]], axis=2)
    wzrq = jnp.concatenate([wz_h, wr_h, wq_x_only], axis=-1)       # (3,3,Cin,3Ch)
    wzrq = wzrq.reshape(9, Cin, 3 * Ch).astype(jnp.bfloat16)
    wqh = wq_h[:, :, :Ch, :].reshape(9, Ch, Ch).astype(jnp.bfloat16)
    bzrq = jnp.concatenate([bz, br, bq]).reshape(1, 3 * Ch).astype(f32)

    kernel = _make_kernel(H, W, Ch, Cin)

    out = pl.pallas_call(
        kernel,
        out_shape=jax.ShapeDtypeStruct((N, H, W, Ch), f32),
        grid=(N,),
        in_specs=[
            pl.BlockSpec((None, H + 2, W + 2, Cin), lambda n: (n, 0, 0, 0)),
            pl.BlockSpec((None, H, W, Ch), lambda n: (n, 0, 0, 0)),
            pl.BlockSpec((9, Cin, 3 * Ch), lambda n: (0, 0, 0)),
            pl.BlockSpec((9, Ch, Ch), lambda n: (0, 0, 0)),
            pl.BlockSpec((1, 3 * Ch), lambda n: (0, 0)),
        ],
        out_specs=pl.BlockSpec((None, H, W, Ch), lambda n: (n, 0, 0, 0)),
        scratch_shapes=[pltpu.VMEM((H + 2, W + 2, Ch), jnp.bfloat16)],
        compiler_params=pltpu.CompilerParams(
            dimension_semantics=("parallel",),
            vmem_limit_bytes=48 * 1024 * 1024),
    )(hxp, h_nhwc, wzrq, wqh, bzrq)

    # glue: NHWC -> NCHW
    return jnp.transpose(out, (0, 3, 1, 2))


def conv_gru_ref(h, x, wz, bz, wr, br, wq, bq):
    """Pure-JAX f32 reference matching the PyTorch forward exactly."""
    def conv(inp, w, b):
        out = jax.lax.conv_general_dilated(
            inp, w, window_strides=(1, 1), padding=((1, 1), (1, 1)),
            dimension_numbers=("NCHW", "OIHW", "NCHW"))
        return out + b[None, :, None, None]

    hx = jnp.concatenate([h, x], axis=1)
    z = jax.nn.sigmoid(conv(hx, wz, bz))
    r = jax.nn.sigmoid(conv(hx, wr, br))
    q = jnp.tanh(conv(jnp.concatenate([r * h, x], axis=1), wq, bq))
    return (1.0 - z) * h + z * q


if __name__ == "__main__":
    # Small shapes consistent with the module's forward
    # (module default: hidden_dim=128, input_dim=c=64; scaled down here).
    N, Ch, Cx, H, W = 2, 32, 8, 16, 16
    Cin = Ch + Cx

    key = jax.random.PRNGKey(0)
    k = jax.random.split(key, 8)

    h = jax.random.normal(k[0], (N, Ch, H, W), jnp.float32)
    x = jax.random.normal(k[1], (N, Cx, H, W), jnp.float32)

    w_scale = 1.0 / np.sqrt(Cin * 9)
    wz = jax.random.normal(k[2], (Ch, Cin, 3, 3), jnp.float32) * w_scale
    wr = jax.random.normal(k[3], (Ch, Cin, 3, 3), jnp.float32) * w_scale
    wq = jax.random.normal(k[4], (Ch, Cin, 3, 3), jnp.float32) * w_scale
    bz = jax.random.normal(k[5], (Ch,), jnp.float32) * w_scale
    br = jax.random.normal(k[6], (Ch,), jnp.float32) * w_scale
    bq = jax.random.normal(k[7], (Ch,), jnp.float32) * w_scale

    out = conv_gru_pallas(h, x, wz, bz, wr, br, wq, bq)
    out = jax.block_until_ready(out)

    ref = conv_gru_ref(h, x, wz, bz, wr, br, wq, bq)
    # bf16 matmul operands (f32 accumulation) -> slightly looser tolerance
    np.testing.assert_allclose(np.asarray(out), np.asarray(ref),
                               atol=2e-2, rtol=2e-2)

    print("KERNEL_OK")
</pallas_src>

<mosaic_0001>
module attributes {stable_mosaic.version = 11 : i64} {
  func.func @kernel(%arg0: i32, %arg1: memref<1x18x18x40xbf16, #tpu.memory_space<vmem>>, %arg2: memref<1x16x16x32xf32, #tpu.memory_space<vmem>>, %arg3: memref<9x40x96xbf16, #tpu.memory_space<vmem>>, %arg4: memref<9x32x32xbf16, #tpu.memory_space<vmem>>, %arg5: memref<1x96xf32, #tpu.memory_space<vmem>>, %arg6: memref<1x16x16x32xf32, #tpu.memory_space<vmem>>, %arg7: memref<18x18x32xbf16, #tpu.memory_space<vmem>>) attributes {dimension_semantics = [#tpu.dimension_semantics<parallel>], iteration_bounds = array<i64: 2>, scalar_prefetch = 0 : i64, scratch_operands = 1 : i64, tpu.core_type = #tpu.core_type<tc>, window_params = [{transform_indices = @transform_0, window_bounds = array<i64: 1, 18, 18, 40>}, {transform_indices = @transform_1, window_bounds = array<i64: 1, 16, 16, 32>}, {pipeline_mode = #tpu.pipeline_mode<synchronous>, transform_indices = @transform_2, window_bounds = array<i64: 9, 40, 96>}, {pipeline_mode = #tpu.pipeline_mode<synchronous>, transform_indices = @transform_3, window_bounds = array<i64: 9, 32, 32>}, {pipeline_mode = #tpu.pipeline_mode<synchronous>, transform_indices = @transform_4, window_bounds = array<i64: 1, 96>}, {transform_indices = @transform_5, window_bounds = array<i64: 1, 16, 16, 32>}]} {
    %c0 = arith.constant 0 : index
    %c0_0 = arith.constant 0 : index
    %0 = vector.load %arg5[%c0, %c0_0] : memref<1x96xf32, #tpu.memory_space<vmem>>, vector<1x96xf32>
    %1 = vector.shape_cast %0 : vector<1x96xf32> to vector<1x96xf32>
    %2 = vector.broadcast %1 : vector<1x96xf32> to vector<256x96xf32>
    %c0_1 = arith.constant 0 : index
    %c0_2 = arith.constant 0 : index
    %c0_3 = arith.constant 0 : index
    %c0_4 = arith.constant 0 : index
    %3 = vector.load %arg1[%c0_1, %c0_2, %c0_3, %c0_4] : memref<1x18x18x40xbf16, #tpu.memory_space<vmem>>, vector<1x16x16x40xbf16>
    %4 = vector.shape_cast %3 : vector<1x16x16x40xbf16> to vector<16x16x40xbf16>
    %5 = vector.shape_cast %4 : vector<16x16x40xbf16> to vector<256x40xbf16>
    %c0_5 = arith.constant 0 : index
    %c0_6 = arith.constant 0 : index
    %c0_7 = arith.constant 0 : index
    %6 = vector.load %arg3[%c0_5, %c0_6, %c0_7] : memref<9x40x96xbf16, #tpu.memory_space<vmem>>, vector<1x40x96xbf16>
    %7 = vector.shape_cast %6 : vector<1x40x96xbf16> to vector<40x96xbf16>
    %cst = arith.constant dense<0.000000e+00> : vector<256x96xf32>
    %8 = tpu.matmul %5, %7, %cst {dimension_numbers = #tpu.dot_dimension_numbers<[1], [0], [0], [1], [0, 0, 1, 1], [], []>} : vector<256x40xbf16>, vector<40x96xbf16>, vector<256x96xf32> -> vector<256x96xf32>
    %9 = arith.addf %2, %8 : vector<256x96xf32>
    %c0_8 = arith.constant 0 : index
    %c0_9 = arith.constant 0 : index
    %c1 = arith.constant 1 : index
    %c0_10 = arith.constant 0 : index
    %10 = vector.load %arg1[%c0_8, %c0_9, %c1, %c0_10] : memref<1x18x18x40xbf16, #tpu.memory_space<vmem>>, vector<1x16x16x40xbf16>
    %11 = vector.shape_cast %10 : vector<1x16x16x40xbf16> to vector<16x16x40xbf16>
    %12 = vector.shape_cast %11 : vector<16x16x40xbf16> to vector<256x40xbf16>
    %c1_11 = arith.constant 1 : index
    %c0_12 = arith.constant 0 : index
    %c0_13 = arith.constant 0 : index
    %13 = vector.load %arg3[%c1_11, %c0_12, %c0_13] : memref<9x40x96xbf16, #tpu.memory_space<vmem>>, vector<1x40x96xbf16>
    %14 = vector.shape_cast %13 : vector<1x40x96xbf16> to vector<40x96xbf16>
    %cst_14 = arith.constant dense<0.000000e+00> : vector<256x96xf32>
    %15 = tpu.matmul %12, %14, %cst_14 {dimension_numbers = #tpu.dot_dimension_numbers<[1], [0], [0], [1], [0, 0, 1, 1], [], []>} : vector<256x40xbf16>, vector<40x96xbf16>, vector<256x96xf32> -> vector<256x96xf32>
    %16 = arith.addf %9, %15 : vector<256x96xf32>
    %c0_15 = arith.constant 0 : index
    %c0_16 = arith.constant 0 : index
    %c2 = arith.constant 2 : index
    %c0_17 = arith.constant 0 : index
    %17 = vector.load %arg1[%c0_15, %c0_16, %c2, %c0_17] : memref<1x18x18x40xbf16, #tpu.memory_space<vmem>>, vector<1x16x16x40xbf16>
    %18 = vector.shape_cast %17 : vector<1x16x16x40xbf16> to vector<16x16x40xbf16>
    %19 = vector.shape_cast %18 : vector<16x16x40xbf16> to vector<256x40xbf16>
    %c2_18 = arith.constant 2 : index
    %c0_19 = arith.constant 0 : index
    %c0_20 = arith.constant 0 : index
    %20 = vector.load %arg3[%c2_18, %c0_19, %c0_20] : memref<9x40x96xbf16, #tpu.memory_space<vmem>>, vector<1x40x96xbf16>
    %21 = vector.shape_cast %20 : vector<1x40x96xbf16> to vector<40x96xbf16>
    %cst_21 = arith.constant dense<0.000000e+00> : vector<256x96xf32>
    %22 = tpu.matmul %19, %21, %cst_21 {dimension_numbers = #tpu.dot_dimension_numbers<[1], [0], [0], [1], [0, 0, 1, 1], [], []>} : vector<256x40xbf16>, vector<40x96xbf16>, vector<256x96xf32> -> vector<256x96xf32>
    %23 = arith.addf %16, %22 : vector<256x96xf32>
    %c0_22 = arith.constant 0 : index
    %c1_23 = arith.constant 1 : index
    %c0_24 = arith.constant 0 : index
    %c0_25 = arith.constant 0 : index
    %24 = vector.load %arg1[%c0_22, %c1_23, %c0_24, %c0_25] : memref<1x18x18x40xbf16, #tpu.memory_space<vmem>>, vector<1x16x16x40xbf16>
    %25 = vector.shape_cast %24 : vector<1x16x16x40xbf16> to vector<16x16x40xbf16>
    %26 = vector.shape_cast %25 : vector<16x16x40xbf16> to vector<256x40xbf16>
    %c3 = arith.constant 3 : index
    %c0_26 = arith.constant 0 : index
    %c0_27 = arith.constant 0 : index
    %27 = vector.load %arg3[%c3, %c0_26, %c0_27] : memref<9x40x96xbf16, #tpu.memory_space<vmem>>, vector<1x40x96xbf16>
    %28 = vector.shape_cast %27 : vector<1x40x96xbf16> to vector<40x96xbf16>
    %cst_28 = arith.constant dense<0.000000e+00> : vector<256x96xf32>
    %29 = tpu.matmul %26, %28, %cst_28 {dimension_numbers = #tpu.dot_dimension_numbers<[1], [0], [0], [1], [0, 0, 1, 1], [], []>} : vector<256x40xbf16>, vector<40x96xbf16>, vector<256x96xf32> -> vector<256x96xf32>
    %30 = arith.addf %23, %29 : vector<256x96xf32>
    %c0_29 = arith.constant 0 : index
    %c1_30 = arith.constant 1 : index
    %c1_31 = arith.constant 1 : index
    %c0_32 = arith.constant 0 : index
    %31 = vector.load %arg1[%c0_29, %c1_30, %c1_31, %c0_32] : memref<1x18x18x40xbf16, #tpu.memory_space<vmem>>, vector<1x16x16x40xbf16>
    %32 = vector.shape_cast %31 : vector<1x16x16x40xbf16> to vector<16x16x40xbf16>
    %33 = vector.shape_cast %32 : vector<16x16x40xbf16> to vector<256x40xbf16>
    %c4 = arith.constant 4 : index
    %c0_33 = arith.constant 0 : index
    %c0_34 = arith.constant 0 : index
    %34 = vector.load %arg3[%c4, %c0_33, %c0_34] : memref<9x40x96xbf16, #tpu.memory_space<vmem>>, vector<1x40x96xbf16>
    %35 = vector.shape_cast %34 : vector<1x40x96xbf16> to vector<40x96xbf16>
    %cst_35 = arith.constant dense<0.000000e+00> : vector<256x96xf32>
    %36 = tpu.matmul %33, %35, %cst_35 {dimension_numbers = #tpu.dot_dimension_numbers<[1], [0], [0], [1], [0, 0, 1, 1], [], []>} : vector<256x40xbf16>, vector<40x96xbf16>, vector<256x96xf32> -> vector<256x96xf32>
    %37 = arith.addf %30, %36 : vector<256x96xf32>
    %c0_36 = arith.constant 0 : index
    %c1_37 = arith.constant 1 : index
    %c2_38 = arith.constant 2 : index
    %c0_39 = arith.constant 0 : index
    %38 = vector.load %arg1[%c0_36, %c1_37, %c2_38, %c0_39] : memref<1x18x18x40xbf16, #tpu.memory_space<vmem>>, vector<1x16x16x40xbf16>
    %39 = vector.shape_cast %38 : vector<1x16x16x40xbf16> to vector<16x16x40xbf16>
    %40 = vector.shape_cast %39 : vector<16x16x40xbf16> to vector<256x40xbf16>
    %c5 = arith.constant 5 : index
    %c0_40 = arith.constant 0 : index
    %c0_41 = arith.constant 0 : index
    %41 = vector.load %arg3[%c5, %c0_40, %c0_41] : memref<9x40x96xbf16, #tpu.memory_space<vmem>>, vector<1x40x96xbf16>
    %42 = vector.shape_cast %41 : vector<1x40x96xbf16> to vector<40x96xbf16>
    %cst_42 = arith.constant dense<0.000000e+00> : vector<256x96xf32>
    %43 = tpu.matmul %40, %42, %cst_42 {dimension_numbers = #tpu.dot_dimension_numbers<[1], [0], [0], [1], [0, 0, 1, 1], [], []>} : vector<256x40xbf16>, vector<40x96xbf16>, vector<256x96xf32> -> vector<256x96xf32>
    %44 = arith.addf %37, %43 : vector<256x96xf32>
    %c0_43 = arith.constant 0 : index
    %c2_44 = arith.constant 2 : index
    %c0_45 = arith.constant 0 : index
    %c0_46 = arith.constant 0 : index
    %45 = vector.load %arg1[%c0_43, %c2_44, %c0_45, %c0_46] : memref<1x18x18x40xbf16, #tpu.memory_space<vmem>>, vector<1x16x16x40xbf16>
    %46 = vector.shape_cast %45 : vector<1x16x16x40xbf16> to vector<16x16x40xbf16>
    %47 = vector.shape_cast %46 : vector<16x16x40xbf16> to vector<256x40xbf16>
    %c6 = arith.constant 6 : index
    %c0_47 = arith.constant 0 : index
    %c0_48 = arith.constant 0 : index
    %48 = vector.load %arg3[%c6, %c0_47, %c0_48] : memref<9x40x96xbf16, #tpu.memory_space<vmem>>, vector<1x40x96xbf16>
    %49 = vector.shape_cast %48 : vector<1x40x96xbf16> to vector<40x96xbf16>
    %cst_49 = arith.constant dense<0.000000e+00> : vector<256x96xf32>
    %50 = tpu.matmul %47, %49, %cst_49 {dimension_numbers = #tpu.dot_dimension_numbers<[1], [0], [0], [1], [0, 0, 1, 1], [], []>} : vector<256x40xbf16>, vector<40x96xbf16>, vector<256x96xf32> -> vector<256x96xf32>
    %51 = arith.addf %44, %50 : vector<256x96xf32>
    %c0_50 = arith.constant 0 : index
    %c2_51 = arith.constant 2 : index
    %c1_52 = arith.constant 1 : index
    %c0_53 = arith.constant 0 : index
    %52 = vector.load %arg1[%c0_50, %c2_51, %c1_52, %c0_53] : memref<1x18x18x40xbf16, #tpu.memory_space<vmem>>, vector<1x16x16x40xbf16>
    %53 = vector.shape_cast %52 : vector<1x16x16x40xbf16> to vector<16x16x40xbf16>
    %54 = vector.shape_cast %53 : vector<16x16x40xbf16> to vector<256x40xbf16>
    %c7 = arith.constant 7 : index
    %c0_54 = arith.constant 0 : index
    %c0_55 = arith.constant 0 : index
    %55 = vector.load %arg3[%c7, %c0_54, %c0_55] : memref<9x40x96xbf16, #tpu.memory_space<vmem>>, vector<1x40x96xbf16>
    %56 = vector.shape_cast %55 : vector<1x40x96xbf16> to vector<40x96xbf16>
    %cst_56 = arith.constant dense<0.000000e+00> : vector<256x96xf32>
    %57 = tpu.matmul %54, %56, %cst_56 {dimension_numbers = #tpu.dot_dimension_numbers<[1], [0], [0], [1], [0, 0, 1, 1], [], []>} : vector<256x40xbf16>, vector<40x96xbf16>, vector<256x96xf32> -> vector<256x96xf32>
    %58 = arith.addf %51, %57 : vector<256x96xf32>
    %c0_57 = arith.constant 0 : index
    %c2_58 = arith.constant 2 : index
    %c2_59 = arith.constant 2 : index
    %c0_60 = arith.constant 0 : index
    %59 = vector.load %arg1[%c0_57, %c2_58, %c2_59, %c0_60] : memref<1x18x18x40xbf16, #tpu.memory_space<vmem>>, vector<1x16x16x40xbf16>
    %60 = vector.shape_cast %59 : vector<1x16x16x40xbf16> to vector<16x16x40xbf16>
    %61 = vector.shape_cast %60 : vector<16x16x40xbf16> to vector<256x40xbf16>
    %c8 = arith.constant 8 : index
    %c0_61 = arith.constant 0 : index
    %c0_62 = arith.constant 0 : index
    %62 = vector.load %arg3[%c8, %c0_61, %c0_62] : memref<9x40x96xbf16, #tpu.memory_space<vmem>>, vector<1x40x96xbf16>
    %63 = vector.shape_cast %62 : vector<1x40x96xbf16> to vector<40x96xbf16>
    %cst_63 = arith.constant dense<0.000000e+00> : vector<256x96xf32>
    %64 = tpu.matmul %61, %63, %cst_63 {dimension_numbers = #tpu.dot_dimension_numbers<[1], [0], [0], [1], [0, 0, 1, 1], [], []>} : vector<256x40xbf16>, vector<40x96xbf16>, vector<256x96xf32> -> vector<256x96xf32>
    %65 = arith.addf %58, %64 : vector<256x96xf32>
    %66 = vector.extract_strided_slice %65 {offsets = [0, 0], sizes = [256, 32], strides = [1, 1]} : vector<256x96xf32> to vector<256x32xf32>
    %67 = arith.negf %66 : vector<256x32xf32>
    %68 = math.exp %67 : vector<256x32xf32>
    %cst_64 = arith.constant 1.000000e+00 : f32
    %69 = vector.broadcast %cst_64 : f32 to vector<256x32xf32>
    %70 = arith.addf %69, %68 : vector<256x32xf32>
    %71 = arith.divf %69, %70 : vector<256x32xf32>
    %72 = vector.extract_strided_slice %65 {offsets = [0, 32], sizes = [256, 32], strides = [1, 1]} : vector<256x96xf32> to vector<256x32xf32>
    %73 = arith.negf %72 : vector<256x32xf32>
    %74 = math.exp %73 : vector<256x32xf32>
    %cst_65 = arith.constant 1.000000e+00 : f32
    %75 = vector.broadcast %cst_65 : f32 to vector<256x32xf32>
    %76 = arith.addf %75, %74 : vector<256x32xf32>
    %77 = arith.divf %75, %76 : vector<256x32xf32>
    %78 = vector.extract_strided_slice %65 {offsets = [0, 64], sizes = [256, 32], strides = [1, 1]} : vector<256x96xf32> to vector<256x32xf32>
    %c0_66 = arith.constant 0 : index
    %c0_67 = arith.constant 0 : index
    %c0_68 = arith.constant 0 : index
    %c0_69 = arith.constant 0 : index
    %79 = vector.load %arg2[%c0_66, %c0_67, %c0_68, %c0_69] : memref<1x16x16x32xf32, #tpu.memory_space<vmem>>, vector<1x16x16x32xf32>
    %80 = vector.shape_cast %79 : vector<1x16x16x32xf32> to vector<16x16x32xf32>
    %81 = vector.shape_cast %80 : vector<16x16x32xf32> to vector<256x32xf32>
    %cst_70 = arith.constant 0.000000e+00 : bf16
    %82 = vector.broadcast %cst_70 : bf16 to vector<1x18x32xbf16>
    %cst_71 = arith.constant 0.000000e+00 : bf16
    %83 = vector.broadcast %cst_71 : bf16 to vector<18x1x32xbf16>
    %c0_72 = arith.constant 0 : index
    %c0_73 = arith.constant 0 : index
    %c0_74 = arith.constant 0 : index
    %84 = vector.load %arg7[%c0_72, %c0_73, %c0_74] : memref<18x18x32xbf16, #tpu.memory_space<vmem>>, vector<1x18x32xbf16>
    tpu.vector_store %arg7[%c0_72, %c0_73, %c0_74], %82 {strides = array<i32>} : memref<18x18x32xbf16, #tpu.memory_space<vmem>>, vector<1x18x32xbf16>,
    %c17 = arith.constant 17 : index
    %c0_75 = arith.constant 0 : index
    %c0_76 = arith.constant 0 : index
    %85 = vector.load %arg7[%c17, %c0_75, %c0_76] : memref<18x18x32xbf16, #tpu.memory_space<vmem>>, vector<1x18x32xbf16>
    tpu.vector_store %arg7[%c17, %c0_75, %c0_76], %82 {strides = array<i32>} : memref<18x18x32xbf16, #tpu.memory_space<vmem>>, vector<1x18x32xbf16>,
    %c0_77 = arith.constant 0 : index
    %c0_78 = arith.constant 0 : index
    %c0_79 = arith.constant 0 : index
    %86 = vector.load %arg7[%c0_77, %c0_78, %c0_79] : memref<18x18x32xbf16, #tpu.memory_space<vmem>>, vector<18x1x32xbf16>
    tpu.vector_store %arg7[%c0_77, %c0_78, %c0_79], %83 {strides = array<i32>} : memref<18x18x32xbf16, #tpu.memory_space<vmem>>, vector<18x1x32xbf16>,
    %c0_80 = arith.constant 0 : index
    %c17_81 = arith.constant 17 : index
    %c0_82 = arith.constant 0 : index
    %87 = vector.load %arg7[%c0_80, %c17_81, %c0_82] : memref<18x18x32xbf16, #tpu.memory_space<vmem>>, vector<18x1x32xbf16>
    tpu.vector_store %arg7[%c0_80, %c17_81, %c0_82], %83 {strides = array<i32>} : memref<18x18x32xbf16, #tpu.memory_space<vmem>>, vector<18x1x32xbf16>,
    %88 = arith.mulf %77, %81 : vector<256x32xf32>
    %89 = arith.truncf %88 : vector<256x32xf32> to vector<256x32xbf16>
    %90 = vector.shape_cast %89 : vector<256x32xbf16> to vector<16x16x32xbf16>
    %c1_83 = arith.constant 1 : index
    %c1_84 = arith.constant 1 : index
    %c0_85 = arith.constant 0 : index
    %91 = vector.load %arg7[%c1_83, %c1_84, %c0_85] : memref<18x18x32xbf16, #tpu.memory_space<vmem>>, vector<16x16x32xbf16>
    tpu.vector_store %arg7[%c1_83, %c1_84, %c0_85], %90 {strides = array<i32>} : memref<18x18x32xbf16, #tpu.memory_space<vmem>>, vector<16x16x32xbf16>,
    %c0_86 = arith.constant 0 : index
    %c0_87 = arith.constant 0 : index
    %c0_88 = arith.constant 0 : index
    %92 = vector.load %arg7[%c0_86, %c0_87, %c0_88] : memref<18x18x32xbf16, #tpu.memory_space<vmem>>, vector<16x16x32xbf16>
    %93 = vector.shape_cast %92 : vector<16x16x32xbf16> to vector<256x32xbf16>
    %c0_89 = arith.constant 0 : index
    %c0_90 = arith.constant 0 : index
    %c0_91 = arith.constant 0 : index
    %94 = vector.load %arg4[%c0_89, %c0_90, %c0_91] : memref<9x32x32xbf16, #tpu.memory_space<vmem>>, vector<1x32x32xbf16>
    %95 = vector.shape_cast %94 : vector<1x32x32xbf16> to vector<32x32xbf16>
    %cst_92 = arith.constant dense<0.000000e+00> : vector<256x32xf32>
    %96 = tpu.matmul %93, %95, %cst_92 {dimension_numbers = #tpu.dot_dimension_numbers<[1], [0], [0], [1], [0, 0, 1, 1], [], []>} : vector<256x32xbf16>, vector<32x32xbf16>, vector<256x32xf32> -> vector<256x32xf32>
    %97 = arith.addf %78, %96 : vector<256x32xf32>
    %c0_93 = arith.constant 0 : index
    %c1_94 = arith.constant 1 : index
    %c0_95 = arith.constant 0 : index
    %98 = vector.load %arg7[%c0_93, %c1_94, %c0_95] : memref<18x18x32xbf16, #tpu.memory_space<vmem>>, vector<16x16x32xbf16>
    %99 = vector.shape_cast %98 : vector<16x16x32xbf16> to vector<256x32xbf16>
    %c1_96 = arith.constant 1 : index
    %c0_97 = arith.constant 0 : index
    %c0_98 = arith.constant 0 : index
    %100 = vector.load %arg4[%c1_96, %c0_97, %c0_98] : memref<9x32x32xbf16, #tpu.memory_space<vmem>>, vector<1x32x32xbf16>
    %101 = vector.shape_cast %100 : vector<1x32x32xbf16> to vector<32x32xbf16>
    %cst_99 = arith.constant dense<0.000000e+00> : vector<256x32xf32>
    %102 = tpu.matmul %99, %101, %cst_99 {dimension_numbers = #tpu.dot_dimension_numbers<[1], [0], [0], [1], [0, 0, 1, 1], [], []>} : vector<256x32xbf16>, vector<32x32xbf16>, vector<256x32xf32> -> vector<256x32xf32>
    %103 = arith.addf %97, %102 : vector<256x32xf32>
    %c0_100 = arith.constant 0 : index
    %c2_101 = arith.constant 2 : index
    %c0_102 = arith.constant 0 : index
    %104 = vector.load %arg7[%c0_100, %c2_101, %c0_102] : memref<18x18x32xbf16, #tpu.memory_space<vmem>>, vector<16x16x32xbf16>
    %105 = vector.shape_cast %104 : vector<16x16x32xbf16> to vector<256x32xbf16>
    %c2_103 = arith.constant 2 : index
    %c0_104 = arith.constant 0 : index
    %c0_105 = arith.constant 0 : index
    %106 = vector.load %arg4[%c2_103, %c0_104, %c0_105] : memref<9x32x32xbf16, #tpu.memory_space<vmem>>, vector<1x32x32xbf16>
    %107 = vector.shape_cast %106 : vector<1x32x32xbf16> to vector<32x32xbf16>
    %cst_106 = arith.constant dense<0.000000e+00> : vector<256x32xf32>
    %108 = tpu.matmul %105, %107, %cst_106 {dimension_numbers = #tpu.dot_dimension_numbers<[1], [0], [0], [1], [0, 0, 1, 1], [], []>} : vector<256x32xbf16>, vector<32x32xbf16>, vector<256x32xf32> -> vector<256x32xf32>
    %109 = arith.addf %103, %108 : vector<256x32xf32>
    %c1_107 = arith.constant 1 : index
    %c0_108 = arith.constant 0 : index
    %c0_109 = arith.constant 0 : index
    %110 = vector.load %arg7[%c1_107, %c0_108, %c0_109] : memref<18x18x32xbf16, #tpu.memory_space<vmem>>, vector<16x16x32xbf16>
    %111 = vector.shape_cast %110 : vector<16x16x32xbf16> to vector<256x32xbf16>
    %c3_110 = arith.constant 3 : index
    %c0_111 = arith.constant 0 : index
    %c0_112 = arith.constant 0 : index
    %112 = vector.load %arg4[%c3_110, %c0_111, %c0_112] : memref<9x32x32xbf16, #tpu.memory_space<vmem>>, vector<1x32x32xbf16>
    %113 = vector.shape_cast %112 : vector<1x32x32xbf16> to vector<32x32xbf16>
    %cst_113 = arith.constant dense<0.000000e+00> : vector<256x32xf32>
    %114 = tpu.matmul %111, %113, %cst_113 {dimension_numbers = #tpu.dot_dimension_numbers<[1], [0], [0], [1], [0, 0, 1, 1], [], []>} : vector<256x32xbf16>, vector<32x32xbf16>, vector<256x32xf32> -> vector<256x32xf32>
    %115 = arith.addf %109, %114 : vector<256x32xf32>
    %c1_114 = arith.constant 1 : index
    %c1_115 = arith.constant 1 : index
    %c0_116 = arith.constant 0 : index
    %116 = vector.load %arg7[%c1_114, %c1_115, %c0_116] : memref<18x18x32xbf16, #tpu.memory_space<vmem>>, vector<16x16x32xbf16>
    %117 = vector.shape_cast %116 : vector<16x16x32xbf16> to vector<256x32xbf16>
    %c4_117 = arith.constant 4 : index
    %c0_118 = arith.constant 0 : index
    %c0_119 = arith.constant 0 : index
    %118 = vector.load %arg4[%c4_117, %c0_118, %c0_119] : memref<9x32x32xbf16, #tpu.memory_space<vmem>>, vector<1x32x32xbf16>
    %119 = vector.shape_cast %118 : vector<1x32x32xbf16> to vector<32x32xbf16>
    %cst_120 = arith.constant dense<0.000000e+00> : vector<256x32xf32>
    %120 = tpu.matmul %117, %119, %cst_120 {dimension_numbers = #tpu.dot_dimension_numbers<[1], [0], [0], [1], [0, 0, 1, 1], [], []>} : vector<256x32xbf16>, vector<32x32xbf16>, vector<256x32xf32> -> vector<256x32xf32>
    %121 = arith.addf %115, %120 : vector<256x32xf32>
    %c1_121 = arith.constant 1 : index
    %c2_122 = arith.constant 2 : index
    %c0_123 = arith.constant 0 : index
    %122 = vector.load %arg7[%c1_121, %c2_122, %c0_123] : memref<18x18x32xbf16, #tpu.memory_space<vmem>>, vector<16x16x32xbf16>
    %123 = vector.shape_cast %122 : vector<16x16x32xbf16> to vector<256x32xbf16>
    %c5_124 = arith.constant 5 : index
    %c0_125 = arith.constant 0 : index
    %c0_126 = arith.constant 0 : index
    %124 = vector.load %arg4[%c5_124, %c0_125, %c0_126] : memref<9x32x32xbf16, #tpu.memory_space<vmem>>, vector<1x32x32xbf16>
    %125 = vector.shape_cast %124 : vector<1x32x32xbf16> to vector<32x32xbf16>
    %cst_127 = arith.constant dense<0.000000e+00> : vector<256x32xf32>
    %126 = tpu.matmul %123, %125, %cst_127 {dimension_numbers = #tpu.dot_dimension_numbers<[1], [0], [0], [1], [0, 0, 1, 1], [], []>} : vector<256x32xbf16>, vector<32x32xbf16>, vector<256x32xf32> -> vector<256x32xf32>
    %127 = arith.addf %121, %126 : vector<256x32xf32>
    %c2_128 = arith.constant 2 : index
    %c0_129 = arith.constant 0 : index
    %c0_130 = arith.constant 0 : index
    %128 = vector.load %arg7[%c2_128, %c0_129, %c0_130] : memref<18x18x32xbf16, #tpu.memory_space<vmem>>, vector<16x16x32xbf16>
    %129 = vector.shape_cast %128 : vector<16x16x32xbf16> to vector<256x32xbf16>
    %c6_131 = arith.constant 6 : index
    %c0_132 = arith.constant 0 : index
    %c0_133 = arith.constant 0 : index
    %130 = vector.load %arg4[%c6_131, %c0_132, %c0_133] : memref<9x32x32xbf16, #tpu.memory_space<vmem>>, vector<1x32x32xbf16>
    %131 = vector.shape_cast %130 : vector<1x32x32xbf16> to vector<32x32xbf16>
    %cst_134 = arith.constant dense<0.000000e+00> : vector<256x32xf32>
    %132 = tpu.matmul %129, %131, %cst_134 {dimension_numbers = #tpu.dot_dimension_numbers<[1], [0], [0], [1], [0, 0, 1, 1], [], []>} : vector<256x32xbf16>, vector<32x32xbf16>, vector<256x32xf32> -> vector<256x32xf32>
    %133 = arith.addf %127, %132 : vector<256x32xf32>
    %c2_135 = arith.constant 2 : index
    %c1_136 = arith.constant 1 : index
    %c0_137 = arith.constant 0 : index
    %134 = vector.load %arg7[%c2_135, %c1_136, %c0_137] : memref<18x18x32xbf16, #tpu.memory_space<vmem>>, vector<16x16x32xbf16>
    %135 = vector.shape_cast %134 : vector<16x16x32xbf16> to vector<256x32xbf16>
    %c7_138 = arith.constant 7 : index
    %c0_139 = arith.constant 0 : index
    %c0_140 = arith.constant 0 : index
    %136 = vector.load %arg4[%c7_138, %c0_139, %c0_140] : memref<9x32x32xbf16, #tpu.memory_space<vmem>>, vector<1x32x32xbf16>
    %137 = vector.shape_cast %136 : vector<1x32x32xbf16> to vector<32x32xbf16>
    %cst_141 = arith.constant dense<0.000000e+00> : vector<256x32xf32>
    %138 = tpu.matmul %135, %137, %cst_141 {dimension_numbers = #tpu.dot_dimension_numbers<[1], [0], [0], [1], [0, 0, 1, 1], [], []>} : vector<256x32xbf16>, vector<32x32xbf16>, vector<256x32xf32> -> vector<256x32xf32>
    %139 = arith.addf %133, %138 : vector<256x32xf32>
    %c2_142 = arith.constant 2 : index
    %c2_143 = arith.constant 2 : index
    %c0_144 = arith.constant 0 : index
    %140 = vector.load %arg7[%c2_142, %c2_143, %c0_144] : memref<18x18x32xbf16, #tpu.memory_space<vmem>>, vector<16x16x32xbf16>
    %141 = vector.shape_cast %140 : vector<16x16x32xbf16> to vector<256x32xbf16>
    %c8_145 = arith.constant 8 : index
    %c0_146 = arith.constant 0 : index
    %c0_147 = arith.constant 0 : index
    %142 = vector.load %arg4[%c8_145, %c0_146, %c0_147] : memref<9x32x32xbf16, #tpu.memory_space<vmem>>, vector<1x32x32xbf16>
    %143 = vector.shape_cast %142 : vector<1x32x32xbf16> to vector<32x32xbf16>
    %cst_148 = arith.constant dense<0.000000e+00> : vector<256x32xf32>
    %144 = tpu.matmul %141, %143, %cst_148 {dimension_numbers = #tpu.dot_dimension_numbers<[1], [0], [0], [1], [0, 0, 1, 1], [], []>} : vector<256x32xbf16>, vector<32x32xbf16>, vector<256x32xf32> -> vector<256x32xf32>
    %145 = arith.addf %139, %144 : vector<256x32xf32>
    %146 = math.tanh %145 : vector<256x32xf32>
    %cst_149 = arith.constant 1.000000e+00 : f32
    %147 = vector.broadcast %cst_149 : f32 to vector<256x32xf32>
    %148 = arith.subf %147, %71 : vector<256x32xf32>
    %149 = arith.mulf %148, %81 : vector<256x32xf32>
    %150 = arith.mulf %71, %146 : vector<256x32xf32>
    %151 = arith.addf %149, %150 : vector<256x32xf32>
    %152 = vector.shape_cast %151 : vector<256x32xf32> to vector<16x16x32xf32>
    %c0_150 = arith.constant 0 : index
    %c0_151 = arith.constant 0 : index
    %c0_152 = arith.constant 0 : index
    %c0_153 = arith.constant 0 : index
    %153 = vector.load %arg6[%c0_150, %c0_151, %c0_152, %c0_153] : memref<1x16x16x32xf32, #tpu.memory_space<vmem>>, vector<1x16x16x32xf32>
    %154 = vector.shape_cast %153 : vector<1x16x16x32xf32> to vector<16x16x32xf32>
    %155 = vector.shape_cast %152 : vector<16x16x32xf32> to vector<1x16x16x32xf32>
    tpu.vector_store %arg6[%c0_150, %c0_151, %c0_152, %c0_153], %155 {strides = array<i32>} : memref<1x16x16x32xf32, #tpu.memory_space<vmem>>, vector<1x16x16x32xf32>,
    return
  }
  func.func @transform_0(%arg0: i32) -> (i32, i32, i32, i32) {
    %c0_i32 = arith.constant 0 : i32
    %c0_i32_0 = arith.constant 0 : i32
    %c0_i32_1 = arith.constant 0 : i32
    %c0_i32_2 = arith.constant 0 : i32
    return %arg0, %c0_i32, %c0_i32_0, %c0_i32_1 : i32, i32, i32, i32
  }
  func.func @transform_1(%arg0: i32) -> (i32, i32, i32, i32) {
    %c0_i32 = arith.constant 0 : i32
    %c0_i32_0 = arith.constant 0 : i32
    %c0_i32_1 = arith.constant 0 : i32
    %c0_i32_2 = arith.constant 0 : i32
    return %arg0, %c0_i32, %c0_i32_0, %c0_i32_1 : i32, i32, i32, i32
  }
  func.func @transform_2(%arg0: i32) -> (i32, i32, i32) {
    %c0_i32 = arith.constant 0 : i32
    %c0_i32_0 = arith.constant 0 : i32
    %c0_i32_1 = arith.constant 0 : i32
    %c0_i32_2 = arith.constant 0 : i32
    return %c0_i32, %c0_i32_0, %c0_i32_1 : i32, i32, i32
  }
  func.func @transform_3(%arg0: i32) -> (i32, i32, i32) {
    %c0_i32 = arith.constant 0 : i32
    %c0_i32_0 = arith.constant 0 : i32
    %c0_i32_1 = arith.constant 0 : i32
    %c0_i32_2 = arith.constant 0 : i32
    return %c0_i32, %c0_i32_0, %c0_i32_1 : i32, i32, i32
  }
  func.func @transform_4(%arg0: i32) -> (i32, i32) {
    %c0_i32 = arith.constant 0 : i32
    %c0_i32_0 = arith.constant 0 : i32
    %c0_i32_1 = arith.constant 0 : i32
    return %c0_i32, %c0_i32_0 : i32, i32
  }
  func.func @transform_5(%arg0: i32) -> (i32, i32, i32, i32) {
    %c0_i32 = arith.constant 0 : i32
    %c0_i32_0 = arith.constant 0 : i32
    %c0_i32_1 = arith.constant 0 : i32
    %c0_i32_2 = arith.constant 0 : i32
    return %arg0, %c0_i32, %c0_i32_0, %c0_i32_1 : i32, i32, i32, i32
  }
}

</mosaic_0001>

<llo_original>
// kernel: conv_gru_pallas.1
$region0: #{conv_gru_pallas.1}
  #allocation0 [shape = 'u32[]', space=smem, size = 0x4, offset = 0x4, fixed_abs, tag = 'smem constant byte address 0x4 - core index']
  #allocation1 [shape = 'u32[144,128]{1,0:T(1,128)}', space=vmem, size = 0x12000, scoped, tag = 'internal scratch']
  #allocation2 [shape = 'bf16[18,18,32]{2,1,0:T(8,128)(2,1)}', space=vmem, size = 0x1b000, scoped, tag = 'scratch operand']
  %s0 = inlined_call_operand.vmem [shape: bf16[2,18,18,40], index: 0, kind: input, shape index: {}]
  %s1 = inlined_call_operand.vmem [shape: f32[2,16,16,32], index: 1, kind: input, shape index: {}]
  %s2 = inlined_call_operand.vmem [shape: bf16[9,40,96], index: 2, kind: input, shape index: {}]
  %s3 = inlined_call_operand.vmem [shape: bf16[9,32,32], index: 3, kind: input, shape index: {}]
  %s4 = inlined_call_operand.vmem [shape: f32[1,96], index: 4, kind: input, shape index: {}]
  %s5 = inlined_call_operand.hbm [shape: f32[2,16,16,32], index: 5, kind: output, shape index: {}]
  %s6 = sld [smem:[#allocation0]]
  $region53: #{conv_gru_pallas.1} parent=0
    _
  %s8 = ssub.s32 1, %s6
  %s9 = scalar_select 0, %s8, %s6
  $region1: #{conv_gru_pallas.1} parent=0
    #allocation3 [shape = 'u8[262144]{0}', space=vmem, size = 0x40000, scoped, tag = 'output window, operand 0']
    #allocation4 [shape = 's32[2]{0}', space=sflag, size = 0x8, scoped, tag = 'scoped memory for conv_gru_pallas.1']
    %10 = vsyncpa [#allocation4], 0
    %s11 = scalar_lea.sflag [#allocation4], 1
    %12 = vsyncpa %s11, 0
    loop: start=0, step=1, limit=4
    $region2: #{conv_gru_pallas.1} parent=1 // loop_pre_header
      _
    $region3: #{conv_gru_pallas.1} parent=1 // loop_header
      %s14 = sphi 0, %s18
      %p15 = scmp.ge.s32.totalorder %s14, 4
      %s24 = sphi 0, %s26
      %s27 = sphi 0, %s24
      %s28 = sphi 0, %s27
      %s44 = sphi 0, %s28
      %s50 = sphi 0, %s52
      %s53 = sphi 0, %s50
      %s54 = sphi 0, %s53
      %s70 = sphi 0, %s54
      %s74 = sphi 0, %s74
      %s76 = sphi 0, %s74
      %s77 = sphi 0, %s76
      %s91 = sphi 0, %s77
      %s95 = sphi 0, %s95
      %s97 = sphi 0, %s95
      %s98 = sphi 0, %s97
      %s112 = sphi 0, %s98
      %s116 = sphi 0, %s116
      %s118 = sphi 0, %s116
      %s119 = sphi 0, %s118
      %s133 = sphi 0, %s119
      %s139 = sphi 0, %s141
      %s142 = sphi 0, %s139
      %s143 = sphi 0, %s142
      %s159 = sphi 0, %s143
    $region4: #{conv_gru_pallas.1} parent=1 // loop_header_branch
      %17 = sbr.rel (%p15) target = $region8
    $region5: #{conv_gru_pallas.1} parent=1 // loop_body
      %s19 = ssub.s32 %s14, 1
      %s20 = ssub.s32 %s14, 2
      %s21 = sadd.s32 %s14, 1
      %s22 = ssub.s32 %s14, %s21
      %p23 = scmp.eq.s32.totalorder %s22, 0
      %s25 = sadd.s32 %s24, 1
      %s26 = scalar_select %p23, %s24, %s25
      %p29 = pneg %p23
      %p30 = scmp.eq.s32.totalorder %s14, 1
      %p31 = por %p29, %p30
      %p32 = scmp.ne.s32.totalorder %s24, %s27
      %p33 = scmp.eq.s32.totalorder %s14, 0
      %p34 = por %p32, %p33
      %p35 = scmp.ne.s32.totalorder %s24, %s27
      %p36 = scmp.eq.s32.totalorder %s19, 1
      %p37 = por %p35, %p36
      %p38 = scmp.ne.s32.totalorder %s27, %s28
      %p39 = scmp.eq.s32.totalorder %s19, 0
      %p40 = por %p38, %p39
      %p41 = scmp.ne.s32.totalorder %s27, %s28
      %p42 = scmp.eq.s32.totalorder %s20, 1
      %p43 = por %p41, %p42
      %p45 = scmp.ne.s32.totalorder %s28, %s44
      %p46 = scmp.eq.s32.totalorder %s20, 0
      %p47 = por %p45, %p46
      %s48 = ssub.s32 %s14, %s21
      %p49 = scmp.eq.s32.totalorder %s48, 0
      %s51 = sadd.s32 %s50, 1
      %s52 = scalar_select %p49, %s50, %s51
      %p55 = pneg %p49
      %p56 = scmp.eq.s32.totalorder %s14, 1
      %p57 = por %p55, %p56
      %p58 = scmp.ne.s32.totalorder %s50, %s53
      %p59 = scmp.eq.s32.totalorder %s14, 0
      %p60 = por %p58, %p59
      %p61 = scmp.ne.s32.totalorder %s50, %s53
      %p62 = scmp.eq.s32.totalorder %s19, 1
      %p63 = por %p61, %p62
      %p64 = scmp.ne.s32.totalorder %s53, %s54
      %p65 = scmp.eq.s32.totalorder %s19, 0
      %p66 = por %p64, %p65
      %p67 = scmp.ne.s32.totalorder %s53, %s54
      %p68 = scmp.eq.s32.totalorder %s20, 1
      %p69 = por %p67, %p68
      %p71 = scmp.ne.s32.totalorder %s54, %s70
      %p72 = scmp.eq.s32.totalorder %s20, 0
      %p73 = por %p71, %p72
      %s75 = sadd.s32 %s74, 1
      %p78 = scmp.eq.s32.totalorder %s14, 1
      %p79 = scmp.ne.s32.totalorder %s74, %s76
      %p80 = scmp.eq.s32.totalorder %s14, 0
      %p81 = por %p79, %p80
      %p82 = scmp.ne.s32.totalorder %s74, %s76
      %p83 = scmp.eq.s32.totalorder %s19, 1
      %p84 = por %p82, %p83
      %p85 = scmp.ne.s32.totalorder %s76, %s77
      %p86 = scmp.eq.s32.totalorder %s19, 0
      %p87 = por %p85, %p86
      %p88 = scmp.ne.s32.totalorder %s76, %s77
      %p89 = scmp.eq.s32.totalorder %s20, 1
      %p90 = por %p88, %p89
      %p92 = scmp.ne.s32.totalorder %s77, %s91
      %p93 = scmp.eq.s32.totalorder %s20, 0
      %p94 = por %p92, %p93
      %s96 = sadd.s32 %s95, 1
      %p99 = scmp.eq.s32.totalorder %s14, 1
      %p100 = scmp.ne.s32.totalorder %s95, %s97
      %p101 = scmp.eq.s32.totalorder %s14, 0
      %p102 = por %p100, %p101
      %p103 = scmp.ne.s32.totalorder %s95, %s97
      %p104 = scmp.eq.s32.totalorder %s19, 1
      %p105 = por %p103, %p104
      %p106 = scmp.ne.s32.totalorder %s97, %s98
      %p107 = scmp.eq.s32.totalorder %s19, 0
      %p108 = por %p106, %p107
      %p109 = scmp.ne.s32.totalorder %s97, %s98
      %p110 = scmp.eq.s32.totalorder %s20, 1
      %p111 = por %p109, %p110
      %p113 = scmp.ne.s32.totalorder %s98, %s112
      %p114 = scmp.eq.s32.totalorder %s20, 0
      %p115 = por %p113, %p114
      %s117 = sadd.s32 %s116, 1
      %p120 = scmp.eq.s32.totalorder %s14, 1
      %p121 = scmp.ne.s32.totalorder %s116, %s118
      %p122 = scmp.eq.s32.totalorder %s14, 0
      %p123 = por %p121, %p122
      %p124 = scmp.ne.s32.totalorder %s116, %s118
      %p125 = scmp.eq.s32.totalorder %s19, 1
      %p126 = por %p124, %p125
      %p127 = scmp.ne.s32.totalorder %s118, %s119
      %p128 = scmp.eq.s32.totalorder %s19, 0
      %p129 = por %p127, %p128
      %p130 = scmp.ne.s32.totalorder %s118, %s119
      %p131 = scmp.eq.s32.totalorder %s20, 1
      %p132 = por %p130, %p131
      %p134 = scmp.ne.s32.totalorder %s119, %s133
      %p135 = scmp.eq.s32.totalorder %s20, 0
      %p136 = por %p134, %p135
      %s137 = ssub.s32 %s14, %s21
      %p138 = scmp.eq.s32.totalorder %s137, 0
      %s140 = sadd.s32 %s139, 1
      %s141 = scalar_select %p138, %s139, %s140
      %p144 = pneg %p138
      %p145 = scmp.eq.s32.totalorder %s14, 1
      %p146 = por %p144, %p145
      %p147 = scmp.ne.s32.totalorder %s139, %s142
      %p148 = scmp.eq.s32.totalorder %s14, 0
      %p149 = por %p147, %p148
      %p150 = scmp.ne.s32.totalorder %s139, %s142
      %p151 = scmp.eq.s32.totalorder %s19, 1
      %p152 = por %p150, %p151
      %p153 = scmp.ne.s32.totalorder %s142, %s143
      %p154 = scmp.eq.s32.totalorder %s19, 0
      %p155 = por %p153, %p154
      %p156 = scmp.ne.s32.totalorder %s142, %s143
      %p157 = scmp.eq.s32.totalorder %s20, 1
      %p158 = por %p156, %p157
      %p160 = scmp.ne.s32.totalorder %s143, %s159
      %p161 = scmp.eq.s32.totalorder %s20, 0
      %p162 = por %p160, %p161
      %p163 = scmp.le.s32.totalorder 1, %s14
      %p164 = scmp.lt.s32.totalorder %s14, 3
      %p165 = pnand %p163, %p164
      %p166 = pneg %p165
      // Predicated region
      $region9: #{conv_gru_pallas.1} parent=5 // pred_check
        _
      $region10: #{conv_gru_pallas.1} parent=5 // pred_check_branch
        %168 = sbr.rel (%p165) target = $region12
      $region11: #{conv_gru_pallas.1} parent=5 // pred_region
        %s169 = ssub.s32 %s14, 1
        // Predicated region
        $region13: #{conv_gru_pallas.1} parent=11 // pred_check
          %p170 = pneg %p87
        $region14: #{conv_gru_pallas.1} parent=11 // pred_check_branch
          %172 = sbr.rel (%p170) target = $region16
        $region15: #{conv_gru_pallas.1} parent=11 // pred_region
          _
        $region16: #{conv_gru_pallas.1} parent=11 // pred_fallthru
          _
        // Predicated region
        $region17: #{conv_gru_pallas.1} parent=11 // pred_check
          %p173 = pneg %p108
        $region18: #{conv_gru_pallas.1} parent=11 // pred_check_branch
          %175 = sbr.rel (%p173) target = $region20
        $region19: #{conv_gru_pallas.1} parent=11 // pred_region
          _
        $region20: #{conv_gru_pallas.1} parent=11 // pred_fallthru
          _
        // Predicated region
        $region21: #{conv_gru_pallas.1} parent=11 // pred_check
          %p176 = pneg %p129
        $region22: #{conv_gru_pallas.1} parent=11 // pred_check_branch
          %178 = sbr.rel (%p176) target = $region24
        $region23: #{conv_gru_pallas.1} parent=11 // pred_region
          _
        $region24: #{conv_gru_pallas.1} parent=11 // pred_fallthru
          _
      $region12: #{conv_gru_pallas.1} parent=5 // pred_fallthru
        _
      %p179 = scmp.lt.s32.totalorder %s14, 2
      // Predicated region
      $region25: #{conv_gru_pallas.1} parent=5 // pred_check
        %p180 = pneg %p179
      $region26: #{conv_gru_pallas.1} parent=5 // pred_check_branch
        %182 = sbr.rel (%p180) target = $region28
      $region27: #{conv_gru_pallas.1} parent=5 // pred_region
        // Predicated region
        $region29: #{conv_gru_pallas.1} parent=27 // pred_check
          %p183 = pneg %p34
        $region30: #{conv_gru_pallas.1} parent=27 // pred_check_branch
          %185 = sbr.rel (%p183) target = $region32
        $region31: #{conv_gru_pallas.1} parent=27 // pred_region
          %p186 = scmp.lt.s32.totalorder %s14, 1
          %s187 = scalar_select %p186, %s14, 1
          %s188 = smul.addr %s187, 54
          %s189 = smul.addr %s188, 4
          %s190 = scalar_lea.vmem %s0, %s189
        $region32: #{conv_gru_pallas.1} parent=27 // pred_fallthru
          _
        // Predicated region
        $region33: #{conv_gru_pallas.1} parent=27 // pred_check
          %p191 = pneg %p60
        $region34: #{conv_gru_pallas.1} parent=27 // pred_check_branch
          %193 = sbr.rel (%p191) target = $region36
        $region35: #{conv_gru_pallas.1} parent=27 // pred_region
          %p194 = scmp.lt.s32.totalorder %s14, 1
          %s195 = scalar_select %p194, %s14, 1
          %s196 = smul.addr %s195, 32
          %s197 = smul.addr %s196, 8
          %s198 = scalar_lea.vmem %s1, %s197
        $region36: #{conv_gru_pallas.1} parent=27 // pred_fallthru
          _
      $region28: #{conv_gru_pallas.1} parent=5 // pred_fallthru
        _
      %p199 = scmp.le.s32.totalorder 1, %s14
      %p200 = scmp.lt.s32.totalorder %s14, 3
      %p201 = pnand %p199, %p200
      %p202 = pneg %p201
      // Predicated region
      $region37: #{conv_gru_pallas.1} parent=5 // pred_check
        _
      $region38: #{conv_gru_pallas.1} parent=5 // pred_check_branch
        %204 = sbr.rel (%p201) target = $region40
      $region39: #{conv_gru_pallas.1} parent=5 // pred_region
        %s205 = ssub.s32 %s14, 1
        %p206 = scmp.lt.s32.totalorder %s19, 1
        %s207 = scalar_select %p206, %s19, 1
        %s208 = smul.addr %s207, 54
        %s209 = smul.addr %s208, 4
        %s210 = scalar_lea.vmem %s0, %s209
        %p211 = pneg %p40
        %p212 = pneg %p37
        %p213 = scmp.lt.s32.totalorder %s19, 1
        %s214 = scalar_select %p213, %s19, 1
        %s215 = smul.addr %s214, 32
        %s216 = smul.addr %s215, 8
        %s217 = scalar_lea.vmem %s1, %s216
        %p218 = pneg %p66
        %p219 = pneg %p63
        %p220 = pneg %p87
        %p221 = pneg %p84
        %p222 = pneg %p108
        %p223 = pneg %p105
        %p224 = pneg %p129
        %p225 = pneg %p126
        %p226 = pneg %p155
        %p227 = pneg %p152
        %s228 = sand.u32 %s142, 1
        %s229 = scalar_lea.sflag [#allocation4], %s228
        %s230 = sand.u32 %s142, 1
        %s231 = smul.addr %s230, 256
        %s232 = scalar_lea.vmem [#allocation3], %s231
        %p233 = scmp.lt.s32.totalorder %s19, 1
        %s234 = scalar_select %p233, %s19, 1
        %s235 = smul.addr %s234, 54
        %s236 = smul.addr %s235, 4
        %s237 = scalar_lea.vmem %s0, %s236
        %p238 = scmp.lt.s32.totalorder %s19, 1
        %s239 = scalar_select %p238, %s19, 1
        %s240 = smul.addr %s239, 32
        %s241 = smul.addr %s240, 8
        %s242 = scalar_lea.vmem %s1, %s241
        %v244 = vld [vmem:[%s4] sm:$0x1]
        %v246 = vlaneseq
        %v247 = vshrl.u32 %v246, 7
        %v248 = vsub.s32 0, %v247
        %v249 = vrot.slane %v244, %v248
        %v251 = vld [vmem:[%s237] sm:$0xf]
        %v252 = vld [vmem:[%s237 + $0x4] sm:$0xf]
        %v253 = vld [vmem:[%s237 + $0xc] sm:$0xf]
        %v254 = vld [vmem:[%s237 + $0x10] sm:$0xf]
        %v255 = vld [vmem:[%s237 + $0x18] sm:$0xf]
        %v256 = vld [vmem:[%s237 + $0x1c] sm:$0xf]
        %v257 = vld [vmem:[%s237 + $0x24] sm:$0xf]
        %v258 = vld [vmem:[%s237 + $0x28] sm:$0xf]
        %v259 = vld [vmem:[%s237 + $0x30] sm:$0xf]
        %v260 = vld [vmem:[%s237 + $0x34] sm:$0xf]
        %v261 = vld [vmem:[%s237 + $0x3c] sm:$0xf]
        %v262 = vld [vmem:[%s237 + $0x40] sm:$0xf]
        %v263 = vld [vmem:[%s237 + $0x48] sm:$0xf]
        %v264 = vld [vmem:[%s237 + $0x4c] sm:$0xf]
        %v265 = vld [vmem:[%s237 + $0x54] sm:$0xf]
        %v266 = vld [vmem:[%s237 + $0x58] sm:$0xf]
        %v267 = vld [vmem:[%s237 + $0x60] sm:$0xf]
        %v268 = vld [vmem:[%s237 + $0x64] sm:$0xf]
        %v269 = vld [vmem:[%s237 + $0x6c] sm:$0xf]
        %v270 = vld [vmem:[%s237 + $0x70] sm:$0xf]
        %v271 = vld [vmem:[%s237 + $0x78] sm:$0xf]
        %v272 = vld [vmem:[%s237 + $0x7c] sm:$0xf]
        %v273 = vld [vmem:[%s237 + $0x84] sm:$0xf]
        %v274 = vld [vmem:[%s237 + $0x88] sm:$0xf]
        %v275 = vld [vmem:[%s237 + $0x90] sm:$0xf]
        %v276 = vld [vmem:[%s237 + $0x94] sm:$0xf]
        %v277 = vld [vmem:[%s237 + $0x9c] sm:$0xf]
        %v278 = vld [vmem:[%s237 + $0xa0] sm:$0xf]
        %v279 = vld [vmem:[%s237 + $0xa8] sm:$0xf]
        %v280 = vld [vmem:[%s237 + $0xac] sm:$0xf]
        %v281 = vld [vmem:[%s237 + $0xb4] sm:$0xf]
        %v282 = vld [vmem:[%s237 + $0xb8] sm:$0xf]
        %v283 = vld [vmem:[%s2] sm:$0xf]
        %v284 = vld [vmem:[%s2 + $0x4] sm:$0xf]
        %v285 = vld [vmem:[%s2 + $0x8] sm:$0xf]
        %v286 = vld [vmem:[%s2 + $0xc] sm:$0xf]
        %v287 = vld [vmem:[%s2 + $0x10] sm:$0xf]
        %v320 = vunpack.c.l.b16 %v251
        %v321 = vunpack.c.l.b16 %v252
        %v322 = vunpack.c.l.b16 %v253
        %v323 = vunpack.c.l.b16 %v254
        %v324 = vunpack.c.l.b16 %v255
        %v325 = vunpack.c.l.b16 %v256
        %v326 = vunpack.c.l.b16 %v257
        %v327 = vunpack.c.l.b16 %v258
        %v328 = vunpack.c.l.b16 %v259
        %v329 = vunpack.c.l.b16 %v260
        %v330 = vunpack.c.l.b16 %v261
        %v331 = vunpack.c.l.b16 %v262
        %v332 = vunpack.c.l.b16 %v263
        %v333 = vunpack.c.l.b16 %v264
        %v334 = vunpack.c.l.b16 %v265
        %v335 = vunpack.c.l.b16 %v266
        %v336 = vunpack.c.l.b16 %v267
        %v337 = vunpack.c.l.b16 %v268
        %v338 = vunpack.c.l.b16 %v269
        %v339 = vunpack.c.l.b16 %v270
        %v340 = vunpack.c.l.b16 %v271
        %v341 = vunpack.c.l.b16 %v272
        %v342 = vunpack.c.l.b16 %v273
        %v343 = vunpack.c.l.b16 %v274
        %v344 = vunpack.c.l.b16 %v275
        %v345 = vunpack.c.l.b16 %v276
        %v346 = vunpack.c.l.b16 %v277
        %v347 = vunpack.c.l.b16 %v278
        %v348 = vunpack.c.l.b16 %v279
        %v349 = vunpack.c.l.b16 %v280
        %v350 = vunpack.c.l.b16 %v281
        %v351 = vunpack.c.l.b16 %v282
        %v352 = vpack.c.b16 %v321, %v320
        %v353 = vpack.c.b16 %v323, %v322
        %v354 = vpack.c.b16 %v325, %v324
        %v355 = vpack.c.b16 %v327, %v326
        %v356 = vpack.c.b16 %v329, %v328
        %v357 = vpack.c.b16 %v331, %v330
        %v358 = vpack.c.b16 %v333, %v332
        %v359 = vpack.c.b16 %v335, %v334
        %v360 = vpack.c.b16 %v337, %v336
        %v361 = vpack.c.b16 %v339, %v338
        %v362 = vpack.c.b16 %v341, %v340
        %v363 = vpack.c.b16 %v343, %v342
        %v364 = vpack.c.b16 %v345, %v344
        %v365 = vpack.c.b16 %v347, %v346
        %v366 = vpack.c.b16 %v349, %v348
        %v367 = vpack.c.b16 %v351, %v350
        %v373 = vunpack.c.l.b16 %v283
        %v374 = vunpack.c.l.b16 %v284
        %v375 = vunpack.c.l.b16 %v285
        %v376 = vunpack.c.l.b16 %v286
        %v377 = vunpack.c.l.b16 %v287
        %v378 = vpack.c.b16 %v374, %v373
        %v379 = vpack.c.b16 %v376, %v375
        %v380 = vpack.c.b16 %v377, %v377
        %vm383 = vcmask 326656
        %v385 = vsel %vm383, %v352, 0
        %v388 = vsel %vm383, %v353, 0
        %v391 = vsel %vm383, %v354, 0
        %v394 = vsel %vm383, %v355, 0
        %v397 = vsel %vm383, %v356, 0
        %v400 = vsel %vm383, %v357, 0
        %v403 = vsel %vm383, %v358, 0
        %v406 = vsel %vm383, %v359, 0
        %v409 = vsel %vm383, %v360, 0
        %v412 = vsel %vm383, %v361, 0
        %v415 = vsel %vm383, %v362, 0
        %v418 = vsel %vm383, %v363, 0
        %v421 = vsel %vm383, %v364, 0
        %v424 = vsel %vm383, %v365, 0
        %v427 = vsel %vm383, %v366, 0
        %v430 = vsel %vm383, %v367, 0
        %vm432 = vcmask 1043456
        %v434 = vsel %vm432, %v380, 0
        %436 = vmatprep.subr.bf16.mxu0 0
        %437 = vmatpush1.bf16.msra.mxu0 %v378
        %438 = vmatprep.subr.bf16.mxu0 0
        %439 = vmatpush1.bf16.msra.mxu0 %v379
        %440 = vmatprep.subr.bf16.mxu0 0
        %441 = vmatpush1.bf16.msra.mxu0 %v434
        %442 = vmatprep.subr.bf16.mxu0 0
        %443 = vmatpush1.bf16.msra.mxu0 0
        %444 = vmatprep.subr.bf16.mxu0 0
        %445 = vmatpush1.bf16.msra.mxu0 0
        %446 = vmatprep.subr.bf16.mxu0 0
        %447 = vmatpush1.bf16.msra.mxu0 0
        %448 = vmatprep.subr.bf16.mxu0 0
        %449 = vmatpush1.bf16.msra.mxu0 0
        %450 = vmatprep.subr.bf16.mxu0 0
        %451 = vmatpush1.bf16.msra.mxu0 0
        %452 = vmatprep.subr.bf16.mxu0 0
        %453 = vmatpush1.bf16.msra.mxu0 0
        %454 = vmatprep.subr.bf16.mxu0 0
        %455 = vmatpush1.bf16.msra.mxu0 0
        %456 = vmatprep.subr.bf16.mxu0 0
        %457 = vmatpush1.bf16.msra.mxu0 0
        %458 = vmatprep.subr.bf16.mxu0 0
        %459 = vmatpush1.bf16.msra.mxu0 0
        %460 = vmatprep.subr.bf16.mxu0 0
        %461 = vmatpush1.bf16.msra.mxu0 0
        %462 = vmatprep.subr.bf16.mxu0 0
        %463 = vmatpush1.bf16.msra.mxu0 0
        %464 = vmatprep.subr.bf16.mxu0 0
        %465 = vmatpush1.bf16.msra.mxu0 0
        %466 = vmatprep.subr.bf16.mxu0 0
        %467 = vmatpush1.bf16.msra.mxu0 0
        %468 = vmatprep.mubr.bf16.mxu0 0
        %469 = vmatmul.mubr.bf16.gmra.mrb[0].mxu0 %v385
        %v470 = vpop.f32.mrb[0].mxu0
        %v471 = vadd.f32 0.0, %v470
        %v472 = vpop.f32.mrb[0].mxu0
        %v473 = vpop.f32.mrb[0].mxu0
        %v474 = vadd.f32 0.0, %v473
        %v475 = vpop.f32.mrb[0].mxu0
        %476 = vmatprep.mubr.bf16.mxu0 0
        %477 = vmatmul.mubr.bf16.gmra.mrb[0].mxu0 %v388
        %v478 = vpop.f32.mrb[0].mxu0
        %v479 = vadd.f32 0.0, %v478
        %v480 = vpop.f32.mrb[0].mxu0
        %v481 = vpop.f32.mrb[0].mxu0
        %v482 = vadd.f32 0.0, %v481
        %v483 = vpop.f32.mrb[0].mxu0
        %484 = vmatprep.mubr.bf16.mxu0 0
        %485 = vmatmul.mubr.bf16.gmra.mrb[0].mxu0 %v391
        %v486 = vpop.f32.mrb[0].mxu0
        %v487 = vadd.f32 0.0, %v486
        %v488 = vpop.f32.mrb[0].mxu0
        %v489 = vpop.f32.mrb[0].mxu0
        %v490 = vadd.f32 0.0, %v489
        %v491 = vpop.f32.mrb[0].mxu0
        %492 = vmatprep.mubr.bf16.mxu0 0
        %493 = vmatmul.mubr.bf16.gmra.mrb[0].mxu0 %v394
        %v494 = vpop.f32.mrb[0].mxu0
        %v495 = vadd.f32 0.0, %v494
        %v496 = vpop.f32.mrb[0].mxu0
        %v497 = vpop.f32.mrb[0].mxu0
        %v498 = vadd.f32 0.0, %v497
        %v499 = vpop.f32.mrb[0].mxu0
        %500 = vmatprep.mubr.bf16.mxu0 0
        %501 = vmatmul.mubr.bf16.gmra.mrb[0].mxu0 %v397
        %v502 = vpop.f32.mrb[0].mxu0
        %v503 = vadd.f32 0.0, %v502
        %v504 = vpop.f32.mrb[0].mxu0
        %v505 = vpop.f32.mrb[0].mxu0
        %v506 = vadd.f32 0.0, %v505
        %v507 = vpop.f32.mrb[0].mxu0
        %508 = vmatprep.mubr.bf16.mxu0 0
        %509 = vmatmul.mubr.bf16.gmra.mrb[0].mxu0 %v400
        %v510 = vpop.f32.mrb[0].mxu0
        %v511 = vadd.f32 0.0, %v510
        %v512 = vpop.f32.mrb[0].mxu0
        %v513 = vpop.f32.mrb[0].mxu0
        %v514 = vadd.f32 0.0, %v513
        %v515 = vpop.f32.mrb[0].mxu0
        %516 = vmatprep.mubr.bf16.mxu0 0
        %517 = vmatmul.mubr.bf16.gmra.mrb[0].mxu0 %v403
        %v518 = vpop.f32.mrb[0].mxu0
        %v519 = vadd.f32 0.0, %v518
        %v520 = vpop.f32.mrb[0].mxu0
        %v521 = vpop.f32.mrb[0].mxu0
        %v522 = vadd.f32 0.0, %v521
        %v523 = vpop.f32.mrb[0].mxu0
        %524 = vmatprep.mubr.bf16.mxu0 0
        %525 = vmatmul.mubr.bf16.gmra.mrb[0].mxu0 %v406
        %v526 = vpop.f32.mrb[0].mxu0
        %v527 = vadd.f32 0.0, %v526
        %v528 = vpop.f32.mrb[0].mxu0
        %v529 = vpop.f32.mrb[0].mxu0
        %v530 = vadd.f32 0.0, %v529
        %v531 = vpop.f32.mrb[0].mxu0
        %532 = vmatprep.mubr.bf16.mxu0 0
        %533 = vmatmul.mubr.bf16.gmra.mrb[0].mxu0 %v409
        %v534 = vpop.f32.mrb[0].mxu0
        %v535 = vadd.f32 0.0, %v534
        %v536 = vpop.f32.mrb[0].mxu0
        %v537 = vpop.f32.mrb[0].mxu0
        %v538 = vadd.f32 0.0, %v537
        %v539 = vpop.f32.mrb[0].mxu0
        %540 = vmatprep.mubr.bf16.mxu0 0
        %541 = vmatmul.mubr.bf16.gmra.mrb[0].mxu0 %v412
        %v542 = vpop.f32.mrb[0].mxu0
        %v543 = vadd.f32 0.0, %v542
        %v544 = vpop.f32.mrb[0].mxu0
        %v545 = vpop.f32.mrb[0].mxu0
        %v546 = vadd.f32 0.0, %v545
        %v547 = vpop.f32.mrb[0].mxu0
        %548 = vmatprep.mubr.bf16.mxu0 0
        %549 = vmatmul.mubr.bf16.gmra.mrb[0].mxu0 %v415
        %v550 = vpop.f32.mrb[0].mxu0
        %v551 = vadd.f32 0.0, %v550
        %v552 = vpop.f32.mrb[0].mxu0
        %v553 = vpop.f32.mrb[0].mxu0
        %v554 = vadd.f32 0.0, %v553
        %v555 = vpop.f32.mrb[0].mxu0
        %556 = vmatprep.mubr.bf16.mxu0 0
        %557 = vmatmul.mubr.bf16.gmra.mrb[0].mxu0 %v418
        %v558 = vpop.f32.mrb[0].mxu0
        %v559 = vadd.f32 0.0, %v558
        %v560 = vpop.f32.mrb[0].mxu0
        %v561 = vpop.f32.mrb[0].mxu0
        %v562 = vadd.f32 0.0, %v561
        %v563 = vpop.f32.mrb[0].mxu0
        %564 = vmatprep.mubr.bf16.mxu0 0
        %565 = vmatmul.mubr.bf16.gmra.mrb[0].mxu0 %v421
        %v566 = vpop.f32.mrb[0].mxu0
        %v567 = vadd.f32 0.0, %v566
        %v568 = vpop.f32.mrb[0].mxu0
        %v569 = vpop.f32.mrb[0].mxu0
        %v570 = vadd.f32 0.0, %v569
        %v571 = vpop.f32.mrb[0].mxu0
        %572 = vmatprep.mubr.bf16.mxu0 0
        %573 = vmatmul.mubr.bf16.gmra.mrb[0].mxu0 %v424
        %v574 = vpop.f32.mrb[0].mxu0
        %v575 = vadd.f32 0.0, %v574
        %v576 = vpop.f32.mrb[0].mxu0
        %v577 = vpop.f32.mrb[0].mxu0
        %v578 = vadd.f32 0.0, %v577
        %v579 = vpop.f32.mrb[0].mxu0
        %580 = vmatprep.mubr.bf16.mxu0 0
        %581 = vmatmul.mubr.bf16.gmra.mrb[0].mxu0 %v427
        %v582 = vpop.f32.mrb[0].mxu0
        %v583 = vadd.f32 0.0, %v582
        %v584 = vpop.f32.mrb[0].mxu0
        %v585 = vpop.f32.mrb[0].mxu0
        %v586 = vadd.f32 0.0, %v585
        %v587 = vpop.f32.mrb[0].mxu0
        %588 = vmatprep.mubr.bf16.mxu0 0
        %589 = vmatmul.mubr.bf16.gmra.mrb[0].mxu0 %v430
        %v590 = vpop.f32.mrb[0].mxu0
        %v591 = vadd.f32 0.0, %v590
        %v592 = vpop.f32.mrb[0].mxu0
        %v593 = vpop.f32.mrb[0].mxu0
        %v594 = vadd.f32 0.0, %v593
        %v595 = vpop.f32.mrb[0].mxu0
        %596 = vdwg.mxu0
        %v597 = vadd.f32 %v249, %v471
        %v598 = vadd.f32 %v249, %v474
        %v599 = vadd.f32 %v249, %v479
        %v600 = vadd.f32 %v249, %v482
        %v601 = vadd.f32 %v249, %v487
        %v602 = vadd.f32 %v249, %v490
        %v603 = vadd.f32 %v249, %v495
        %v604 = vadd.f32 %v249, %v498
        %v605 = vadd.f32 %v249, %v503
        %v606 = vadd.f32 %v249, %v506
        %v607 = vadd.f32 %v249, %v511
        %v608 = vadd.f32 %v249, %v514
        %v609 = vadd.f32 %v249, %v519
        %v610 = vadd.f32 %v249, %v522
        %v611 = vadd.f32 %v249, %v527
        %v612 = vadd.f32 %v249, %v530
        %v613 = vadd.f32 %v249, %v535
        %v614 = vadd.f32 %v249, %v538
        %v615 = vadd.f32 %v249, %v543
        %v616 = vadd.f32 %v249, %v546
        %v617 = vadd.f32 %v249, %v551
        %v618 = vadd.f32 %v249, %v554
        %v619 = vadd.f32 %v249, %v559
        %v620 = vadd.f32 %v249, %v562
        %v621 = vadd.f32 %v249, %v567
        %v622 = vadd.f32 %v249, %v570
        %v623 = vadd.f32 %v249, %v575
        %v624 = vadd.f32 %v249, %v578
        %v625 = vadd.f32 %v249, %v583
        %v626 = vadd.f32 %v249, %v586
        %v627 = vadd.f32 %v249, %v591
        %v628 = vadd.f32 %v249, %v594
        %v629 = vld [vmem:[%s237] sm:$0xf]
        %v630 = vld [vmem:[%s237 + $0x4] sm:$0xf]
        %v631 = vld [vmem:[%s237 + $0x8] sm:$0x1]
        %v632 = vld [vmem:[%s237 + $0xc] sm:$0xf]
        %v633 = vld [vmem:[%s237 + $0x10] sm:$0xf]
        %v634 = vld [vmem:[%s237 + $0x14] sm:$0x1]
        %v635 = vld [vmem:[%s237 + $0x18] sm:$0xf]
        %v636 = vld [vmem:[%s237 + $0x1c] sm:$0xf]
        %v637 = vld [vmem:[%s237 + $0x20] sm:$0x1]
        %v638 = vld [vmem:[%s237 + $0x24] sm:$0xf]
        %v639 = vld [vmem:[%s237 + $0x28] sm:$0xf]
        %v640 = vld [vmem:[%s237 + $0x2c] sm:$0x1]
        %v641 = vld [vmem:[%s237 + $0x30] sm:$0xf]
        %v642 = vld [vmem:[%s237 + $0x34] sm:$0xf]
        %v643 = vld [vmem:[%s237 + $0x38] sm:$0x1]
        %v644 = vld [vmem:[%s237 + $0x3c] sm:$0xf]
        %v645 = vld [vmem:[%s237 + $0x40] sm:$0xf]
        %v646 = vld [vmem:[%s237 + $0x44] sm:$0x1]
        %v647 = vld [vmem:[%s237 + $0x48] sm:$0xf]
        %v648 = vld [vmem:[%s237 + $0x4c] sm:$0xf]
        %v649 = vld [vmem:[%s237 + $0x50] sm:$0x1]
        %v650 = vld [vmem:[%s237 + $0x54] sm:$0xf]
        %v651 = vld [vmem:[%s237 + $0x58] sm:$0xf]
        %v652 = vld [vmem:[%s237 + $0x5c] sm:$0x1]
        %v653 = vld [vmem:[%s237 + $0x60] sm:$0xf]
        %v654 = vld [vmem:[%s237 + $0x64] sm:$0xf]
        %v655 = vld [vmem:[%s237 + $0x68] sm:$0x1]
        %v656 = vld [vmem:[%s237 + $0x6c] sm:$0xf]
        %v657 = vld [vmem:[%s237 + $0x70] sm:$0xf]
        %v658 = vld [vmem:[%s237 + $0x74] sm:$0x1]
        %v659 = vld [vmem:[%s237 + $0x78] sm:$0xf]
        %v660 = vld [vmem:[%s237 + $0x7c] sm:$0xf]
        %v661 = vld [vmem:[%s237 + $0x80] sm:$0x1]
        %v662 = vld [vmem:[%s237 + $0x84] sm:$0xf]
        %v663 = vld [vmem:[%s237 + $0x88] sm:$0xf]
        %v664 = vld [vmem:[%s237 + $0x8c] sm:$0x1]
        %v665 = vld [vmem:[%s237 + $0x90] sm:$0xf]
        %v666 = vld [vmem:[%s237 + $0x94] sm:$0xf]
        %v667 = vld [vmem:[%s237 + $0x98] sm:$0x1]
        %v668 = vld [vmem:[%s237 + $0x9c] sm:$0xf]
        %v669 = vld [vmem:[%s237 + $0xa0] sm:$0xf]
        %v670 = vld [vmem:[%s237 + $0xa4] sm:$0x1]
        %v671 = vld [vmem:[%s237 + $0xa8] sm:$0xf]
        %v672 = vld [vmem:[%s237 + $0xac] sm:$0xf]
        %v673 = vld [vmem:[%s237 + $0xb0] sm:$0x1]
        %v674 = vld [vmem:[%s237 + $0xb4] sm:$0xf]
        %v675 = vld [vmem:[%s237 + $0xb8] sm:$0xf]
        %v676 = vld [vmem:[%s237 + $0xbc] sm:$0x1]
        %vm677 = vsmask.f32 3328
        %vm678 = vsmask.f32 7440
        %vm679 = vmor %vm677, %vm678
        %v681 = vshrl.u32 %v629, 16
        %v683 = vrot.slane %v681, 4
        %v684 = vshll.u32 %v629, 16
        %v686 = vrot.slane %v684, 5
        %v687 = vor.u32 %v683, %v686
        %v688 = vrot.slane %v687, 4
        %v690 = vshll.u32 %v630, 16
        %v692 = vrot.slane %v690, 5
        %v693 = vsel %vm679, %v688, %v692
        %v694 = vshrl.u32 %v630, 16
        %v696 = vrot.slane %v694, 4
        %v697 = vor.u32 %v696, %v692
        %v698 = vrot.slane %v697, 4
        %v700 = vshll.u32 %v631, 16
        %v702 = vrot.slane %v700, 5
        %v703 = vsel %vm679, %v698, %v702
        %v705 = vshrl.u32 %v632, 16
        %v707 = vrot.slane %v705, 4
        %v708 = vshll.u32 %v632, 16
        %v710 = vrot.slane %v708, 5
        %v711 = vor.u32 %v707, %v710
        %v712 = vrot.slane %v711, 4
        %v714 = vshll.u32 %v633, 16
        %v716 = vrot.slane %v714, 5
        %v717 = vsel %vm679, %v712, %v716
        %v718 = vshrl.u32 %v633, 16
        %v720 = vrot.slane %v718, 4
        %v721 = vor.u32 %v720, %v716
        %v722 = vrot.slane %v721, 4
        %v724 = vshll.u32 %v634, 16
        %v726 = vrot.slane %v724, 5
        %v727 = vsel %vm679, %v722, %v726
        %v729 = vshrl.u32 %v635, 16
        %v731 = vrot.slane %v729, 4
        %v732 = vshll.u32 %v635, 16
        %v734 = vrot.slane %v732, 5
        %v735 = vor.u32 %v731, %v734
        %v736 = vrot.slane %v735, 4
        %v738 = vshll.u32 %v636, 16
        %v740 = vrot.slane %v738, 5
        %v741 = vsel %vm679, %v736, %v740
        %v742 = vshrl.u32 %v636, 16
        %v744 = vrot.slane %v742, 4
        %v745 = vor.u32 %v744, %v740
        %v746 = vrot.slane %v745, 4
        %v748 = vshll.u32 %v637, 16
        %v750 = vrot.slane %v748, 5
        %v751 = vsel %vm679, %v746, %v750
        %v753 = vshrl.u32 %v638, 16
        %v755 = vrot.slane %v753, 4
        %v756 = vshll.u32 %v638, 16
        %v758 = vrot.slane %v756, 5
        %v759 = vor.u32 %v755, %v758
        %v760 = vrot.slane %v759, 4
        %v762 = vshll.u32 %v639, 16
        %v764 = vrot.slane %v762, 5
        %v765 = vsel %vm679, %v760, %v764
        %v766 = vshrl.u32 %v639, 16
        %v768 = vrot.slane %v766, 4
        %v769 = vor.u32 %v768, %v764
        %v770 = vrot.slane %v769, 4
        %v772 = vshll.u32 %v640, 16
        %v774 = vrot.slane %v772, 5
        %v775 = vsel %vm679, %v770, %v774
        %v777 = vshrl.u32 %v641, 16
        %v779 = vrot.slane %v777, 4
        %v780 = vshll.u32 %v641, 16
        %v782 = vrot.slane %v780, 5
        %v783 = vor.u32 %v779, %v782
        %v784 = vrot.slane %v783, 4
        %v786 = vshll.u32 %v642, 16
        %v788 = vrot.slane %v786, 5
        %v789 = vsel %vm679, %v784, %v788
        %v790 = vshrl.u32 %v642, 16
        %v792 = vrot.slane %v790, 4
        %v793 = vor.u32 %v792, %v788
        %v794 = vrot.slane %v793, 4
        %v796 = vshll.u32 %v643, 16
        %v798 = vrot.slane %v796, 5
        %v799 = vsel %vm679, %v794, %v798
        %v801 = vshrl.u32 %v644, 16
        %v803 = vrot.slane %v801, 4
        %v804 = vshll.u32 %v644, 16
        %v806 = vrot.slane %v804, 5
        %v807 = vor.u32 %v803, %v806
        %v808 = vrot.slane %v807, 4
        %v810 = vshll.u32 %v645, 16
        %v812 = vrot.slane %v810, 5
        %v813 = vsel %vm679, %v808, %v812
        %v814 = vshrl.u32 %v645, 16
        %v816 = vrot.slane %v814, 4
        %v817 = vor.u32 %v816, %v812
        %v818 = vrot.slane %v817, 4
        %v820 = vshll.u32 %v646, 16
        %v822 = vrot.slane %v820, 5
        %v823 = vsel %vm679, %v818, %v822
        %v825 = vshrl.u32 %v647, 16
        %v827 = vrot.slane %v825, 4
        %v828 = vshll.u32 %v647, 16
        %v830 = vrot.slane %v828, 5
        %v831 = vor.u32 %v827, %v830
        %v832 = vrot.slane %v831, 4
        %v834 = vshll.u32 %v648, 16
        %v836 = vrot.slane %v834, 5
        %v837 = vsel %vm679, %v832, %v836
        %v838 = vshrl.u32 %v648, 16
        %v840 = vrot.slane %v838, 4
        %v841 = vor.u32 %v840, %v836
        %v842 = vrot.slane %v841, 4
        %v844 = vshll.u32 %v649, 16
        %v846 = vrot.slane %v844, 5
        %v847 = vsel %vm679, %v842, %v846
        %v849 = vshrl.u32 %v650, 16
        %v851 = vrot.slane %v849, 4
        %v852 = vshll.u32 %v650, 16
        %v854 = vrot.slane %v852, 5
        %v855 = vor.u32 %v851, %v854
        %v856 = vrot.slane %v855, 4
        %v858 = vshll.u32 %v651, 16
        %v860 = vrot.slane %v858, 5
        %v861 = vsel %vm679, %v856, %v860
        %v862 = vshrl.u32 %v651, 16
        %v864 = vrot.slane %v862, 4
        %v865 = vor.u32 %v864, %v860
        %v866 = vrot.slane %v865, 4
        %v868 = vshll.u32 %v652, 16
        %v870 = vrot.slane %v868, 5
        %v871 = vsel %vm679, %v866, %v870
        %v873 = vshrl.u32 %v653, 16
        %v875 = vrot.slane %v873, 4
        %v876 = vshll.u32 %v653, 16
        %v878 = vrot.slane %v876, 5
        %v879 = vor.u32 %v875, %v878
        %v880 = vrot.slane %v879, 4
        %v882 = vshll.u32 %v654, 16
        %v884 = vrot.slane %v882, 5
        %v885 = vsel %vm679, %v880, %v884
        %v886 = vshrl.u32 %v654, 16
        %v888 = vrot.slane %v886, 4
        %v889 = vor.u32 %v888, %v884
        %v890 = vrot.slane %v889, 4
        %v892 = vshll.u32 %v655, 16
        %v894 = vrot.slane %v892, 5
        %v895 = vsel %vm679, %v890, %v894
        %v897 = vshrl.u32 %v656, 16
        %v899 = vrot.slane %v897, 4
        %v900 = vshll.u32 %v656, 16
        %v902 = vrot.slane %v900, 5
        %v903 = vor.u32 %v899, %v902
        %v904 = vrot.slane %v903, 4
        %v906 = vshll.u32 %v657, 16
        %v908 = vrot.slane %v906, 5
        %v909 = vsel %vm679, %v904, %v908
        %v910 = vshrl.u32 %v657, 16
        %v912 = vrot.slane %v910, 4
        %v913 = vor.u32 %v912, %v908
        %v914 = vrot.slane %v913, 4
        %v916 = vshll.u32 %v658, 16
        %v918 = vrot.slane %v916, 5
        %v919 = vsel %vm679, %v914, %v918
        %v921 = vshrl.u32 %v659, 16
        %v923 = vrot.slane %v921, 4
        %v924 = vshll.u32 %v659, 16
        %v926 = vrot.slane %v924, 5
        %v927 = vor.u32 %v923, %v926
        %v928 = vrot.slane %v927, 4
        %v930 = vshll.u32 %v660, 16
        %v932 = vrot.slane %v930, 5
        %v933 = vsel %vm679, %v928, %v932
        %v934 = vshrl.u32 %v660, 16
        %v936 = vrot.slane %v934, 4
        %v937 = vor.u32 %v936, %v932
        %v938 = vrot.slane %v937, 4
        %v940 = vshll.u32 %v661, 16
        %v942 = vrot.slane %v940, 5
        %v943 = vsel %vm679, %v938, %v942
        %v945 = vshrl.u32 %v662, 16
        %v947 = vrot.slane %v945, 4
        %v948 = vshll.u32 %v662, 16
        %v950 = vrot.slane %v948, 5
        %v951 = vor.u32 %v947, %v950
        %v952 = vrot.slane %v951, 4
        %v954 = vshll.u32 %v663, 16
        %v956 = vrot.slane %v954, 5
        %v957 = vsel %vm679, %v952, %v956
        %v958 = vshrl.u32 %v663, 16
        %v960 = vrot.slane %v958, 4
        %v961 = vor.u32 %v960, %v956
        %v962 = vrot.slane %v961, 4
        %v964 = vshll.u32 %v664, 16
        %v966 = vrot.slane %v964, 5
        %v967 = vsel %vm679, %v962, %v966
        %v969 = vshrl.u32 %v665, 16
        %v971 = vrot.slane %v969, 4
        %v972 = vshll.u32 %v665, 16
        %v974 = vrot.slane %v972, 5
        %v975 = vor.u32 %v971, %v974
        %v976 = vrot.slane %v975, 4
        %v978 = vshll.u32 %v666, 16
        %v980 = vrot.slane %v978, 5
        %v981 = vsel %vm679, %v976, %v980
        %v982 = vshrl.u32 %v666, 16
        %v984 = vrot.slane %v982, 4
        %v985 = vor.u32 %v984, %v980
        %v986 = vrot.slane %v985, 4
        %v988 = vshll.u32 %v667, 16
        %v990 = vrot.slane %v988, 5
        %v991 = vsel %vm679, %v986, %v990
        %v993 = vshrl.u32 %v668, 16
        %v995 = vrot.slane %v993, 4
        %v996 = vshll.u32 %v668, 16
        %v998 = vrot.slane %v996, 5
        %v999 = vor.u32 %v995, %v998
        %v1000 = vrot.slane %v999, 4
        %v1002 = vshll.u32 %v669, 16
        %v1004 = vrot.slane %v1002, 5
        %v1005 = vsel %vm679, %v1000, %v1004
        %v1006 = vshrl.u32 %v669, 16
        %v1008 = vrot.slane %v1006, 4
        %v1009 = vor.u32 %v1008, %v1004
        %v1010 = vrot.slane %v1009, 4
        %v1012 = vshll.u32 %v670, 16
        %v1014 = vrot.slane %v1012, 5
        %v1015 = vsel %vm679, %v1010, %v1014
        %v1017 = vshrl.u32 %v671, 16
        %v1019 = vrot.slane %v1017, 4
        %v1020 = vshll.u32 %v671, 16
        %v1022 = vrot.slane %v1020, 5
        %v1023 = vor.u32 %v1019, %v1022
        %v1024 = vrot.slane %v1023, 4
        %v1026 = vshll.u32 %v672, 16
        %v1028 = vrot.slane %v1026, 5
        %v1029 = vsel %vm679, %v1024, %v1028
        %v1030 = vshrl.u32 %v672, 16
        %v1032 = vrot.slane %v1030, 4
        %v1033 = vor.u32 %v1032, %v1028
        %v1034 = vrot.slane %v1033, 4
        %v1036 = vshll.u32 %v673, 16
        %v1038 = vrot.slane %v1036, 5
        %v1039 = vsel %vm679, %v1034, %v1038
        %v1041 = vshrl.u32 %v674, 16
        %v1043 = vrot.slane %v1041, 4
        %v1044 = vshll.u32 %v674, 16
        %v1046 = vrot.slane %v1044, 5
        %v1047 = vor.u32 %v1043, %v1046
        %v1048 = vrot.slane %v1047, 4
        %v1050 = vshll.u32 %v675, 16
        %v1052 = vrot.slane %v1050, 5
        %v1053 = vsel %vm679, %v1048, %v1052
        %v1054 = vshrl.u32 %v675, 16
        %v1056 = vrot.slane %v1054, 4
        %v1057 = vor.u32 %v1056, %v1052
        %v1058 = vrot.slane %v1057, 4
        %v1060 = vshll.u32 %v676, 16
        %v1062 = vrot.slane %v1060, 5
        %v1063 = vsel %vm679, %v1058, %v1062
        %s1064 = scalar_lea.vmem %s2, 20
        %v1065 = vld [vmem:[%s1064] sm:$0xf]
        %v1066 = vld [vmem:[%s1064 + $0x4] sm:$0xf]
        %v1067 = vld [vmem:[%s1064 + $0x8] sm:$0xf]
        %v1068 = vld [vmem:[%s1064 + $0xc] sm:$0xf]
        %v1069 = vld [vmem:[%s1064 + $0x10] sm:$0xf]
        %v1070 = vunpack.c.l.b16 %v693
        %v1071 = vunpack.c.l.b16 %v703
        %v1072 = vunpack.c.l.b16 %v717
        %v1073 = vunpack.c.l.b16 %v727
        %v1074 = vunpack.c.l.b16 %v741
        %v1075 = vunpack.c.l.b16 %v751
        %v1076 = vunpack.c.l.b16 %v765
        %v1077 = vunpack.c.l.b16 %v775
        %v1078 = vunpack.c.l.b16 %v789
        %v1079 = vunpack.c.l.b16 %v799
        %v1080 = vunpack.c.l.b16 %v813
        %v1081 = vunpack.c.l.b16 %v823
        %v1082 = vunpack.c.l.b16 %v837
        %v1083 = vunpack.c.l.b16 %v847
        %v1084 = vunpack.c.l.b16 %v861
        %v1085 = vunpack.c.l.b16 %v871
        %v1086 = vunpack.c.l.b16 %v885
        %v1087 = vunpack.c.l.b16 %v895
        %v1088 = vunpack.c.l.b16 %v909
        %v1089 = vunpack.c.l.b16 %v919
        %v1090 = vunpack.c.l.b16 %v933
        %v1091 = vunpack.c.l.b16 %v943
        %v1092 = vunpack.c.l.b16 %v957
        %v1093 = vunpack.c.l.b16 %v967
        %v1094 = vunpack.c.l.b16 %v981
        %v1095 = vunpack.c.l.b16 %v991
        %v1096 = vunpack.c.l.b16 %v1005
        %v1097 = vunpack.c.l.b16 %v1015
        %v1098 = vunpack.c.l.b16 %v1029
        %v1099 = vunpack.c.l.b16 %v1039
        %v1100 = vunpack.c.l.b16 %v1053
        %v1101 = vunpack.c.l.b16 %v1063
        %v1102 = vpack.c.b16 %v1071, %v1070
        %v1103 = vpack.c.b16 %v1073, %v1072
        %v1104 = vpack.c.b16 %v1075, %v1074
        %v1105 = vpack.c.b16 %v1077, %v1076
        %v1106 = vpack.c.b16 %v1079, %v1078
        %v1107 = vpack.c.b16 %v1081, %v1080
        %v1108 = vpack.c.b16 %v1083, %v1082
        %v1109 = vpack.c.b16 %v1085, %v1084
        %v1110 = vpack.c.b16 %v1087, %v1086
        %v1111 = vpack.c.b16 %v1089, %v1088
        %v1112 = vpack.c.b16 %v1091, %v1090
        %v1113 = vpack.c.b16 %v1093, %v1092
        %v1114 = vpack.c.b16 %v1095, %v1094
        %v1115 = vpack.c.b16 %v1097, %v1096
        %v1116 = vpack.c.b16 %v1099, %v1098
        %v1117 = vpack.c.b16 %v1101, %v1100
        %v1123 = vunpack.c.l.b16 %v1065
        %v1124 = vunpack.c.l.b16 %v1066
        %v1125 = vunpack.c.l.b16 %v1067
        %v1126 = vunpack.c.l.b16 %v1068
        %v1127 = vunpack.c.l.b16 %v1069
        %v1128 = vpack.c.b16 %v1124, %v1123
        %v1129 = vpack.c.b16 %v1126, %v1125
        %v1130 = vpack.c.b16 %v1127, %v1127
        %v1134 = vsel %vm383, %v1102, 0
        %v1137 = vsel %vm383, %v1103, 0
        %v1140 = vsel %vm383, %v1104, 0
        %v1143 = vsel %vm383, %v1105, 0
        %v1146 = vsel %vm383, %v1106, 0
        %v1149 = vsel %vm383, %v1107, 0
        %v1152 = vsel %vm383, %v1108, 0
        %v1155 = vsel %vm383, %v1109, 0
        %v1158 = vsel %vm383, %v1110, 0
        %v1161 = vsel %vm383, %v1111, 0
        %v1164 = vsel %vm383, %v1112, 0
        %v1167 = vsel %vm383, %v1113, 0
        %v1170 = vsel %vm383, %v1114, 0
        %v1173 = vsel %vm383, %v1115, 0
        %v1176 = vsel %vm383, %v1116, 0
        %v1179 = vsel %vm383, %v1117, 0
        %v1182 = vsel %vm432, %v1130, 0
        %1184 = vmatprep.subr.bf16.mxu0 0
        %1185 = vmatpush1.bf16.msra.mxu0 %v1128
        %1186 = vmatprep.subr.bf16.mxu0 0
        %1187 = vmatpush1.bf16.msra.mxu0 %v1129
        %1188 = vmatprep.subr.bf16.mxu0 0
        %1189 = vmatpush1.bf16.msra.mxu0 %v1182
        %1190 = vmatprep.subr.bf16.mxu0 0
        %1191 = vmatpush1.bf16.msra.mxu0 0
        %1192 = vmatprep.subr.bf16.mxu0 0
        %1193 = vmatpush1.bf16.msra.mxu0 0
        %1194 = vmatprep.subr.bf16.mxu0 0
        %1195 = vmatpush1.bf16.msra.mxu0 0
        %1196 = vmatprep.subr.bf16.mxu0 0
        %1197 = vmatpush1.bf16.msra.mxu0 0
        %1198 = vmatprep.subr.bf16.mxu0 0
        %1199 = vmatpush1.bf16.msra.mxu0 0
        %1200 = vmatprep.subr.bf16.mxu0 0
        %1201 = vmatpush1.bf16.msra.mxu0 0
        %1202 = vmatprep.subr.bf16.mxu0 0
        %1203 = vmatpush1.bf16.msra.mxu0 0
        %1204 = vmatprep.subr.bf16.mxu0 0
        %1205 = vmatpush1.bf16.msra.mxu0 0
        %1206 = vmatprep.subr.bf16.mxu0 0
        %1207 = vmatpush1.bf16.msra.mxu0 0
        %1208 = vmatprep.subr.bf16.mxu0 0
        %1209 = vmatpush1.bf16.msra.mxu0 0
        %1210 = vmatprep.subr.bf16.mxu0 0
        %1211 = vmatpush1.bf16.msra.mxu0 0
        %1212 = vmatprep.subr.bf16.mxu0 0
        %1213 = vmatpush1.bf16.msra.mxu0 0
        %1214 = vmatprep.subr.bf16.mxu0 0
        %1215 = vmatpush1.bf16.msra.mxu0 0
        %1216 = vmatprep.mubr.bf16.mxu0 0
        %1217 = vmatmul.mubr.bf16.gmra.mrb[0].mxu0 %v1134
        %v1218 = vpop.f32.mrb[0].mxu0
        %v1219 = vadd.f32 0.0, %v1218
        %v1220 = vpop.f32.mrb[0].mxu0
        %v1221 = vpop.f32.mrb[0].mxu0
        %v1222 = vadd.f32 0.0, %v1221
        %v1223 = vpop.f32.mrb[0].mxu0
        %1224 = vmatprep.mubr.bf16.mxu0 0
        %1225 = vmatmul.mubr.bf16.gmra.mrb[0].mxu0 %v1137
        %v1226 = vpop.f32.mrb[0].mxu0
        %v1227 = vadd.f32 0.0, %v1226
        %v1228 = vpop.f32.mrb[0].mxu0
        %v1229 = vpop.f32.mrb[0].mxu0
        %v1230 = vadd.f32 0.0, %v1229
        %v1231 = vpop.f32.mrb[0].mxu0
        %1232 = vmatprep.mubr.bf16.mxu0 0
        %1233 = vmatmul.mubr.bf16.gmra.mrb[0].mxu0 %v1140
        %v1234 = vpop.f32.mrb[0].mxu0
        %v1235 = vadd.f32 0.0, %v1234
        %v1236 = vpop.f32.mrb[0].mxu0
        %v1237 = vpop.f32.mrb[0].mxu0
        %v1238 = vadd.f32 0.0, %v1237
        %v1239 = vpop.f32.mrb[0].mxu0
        %1240 = vmatprep.mubr.bf16.mxu0 0
        %1241 = vmatmul.mubr.bf16.gmra.mrb[0].mxu0 %v1143
        %v1242 = vpop.f32.mrb[0].mxu0
        %v1243 = vadd.f32 0.0, %v1242
        %v1244 = vpop.f32.mrb[0].mxu0
        %v1245 = vpop.f32.mrb[0].mxu0
        %v1246 = vadd.f32 0.0, %v1245
        %v1247 = vpop.f32.mrb[0].mxu0
        %1248 = vmatprep.mubr.bf16.mxu0 0
        %1249 = vmatmul.mubr.bf16.gmra.mrb[0].mxu0 %v1146
        %v1250 = vpop.f32.mrb[0].mxu0
        %v1251 = vadd.f32 0.0, %v1250
        %v1252 = vpop.f32.mrb[0].mxu0
        %v1253 = vpop.f32.mrb[0].mxu0
        %v1254 = vadd.f32 0.0, %v1253
        %v1255 = vpop.f32.mrb[0].mxu0
        %1256 = vmatprep.mubr.bf16.mxu0 0
        %1257 = vmatmul.mubr.bf16.gmra.mrb[0].mxu0 %v1149
        %v1258 = vpop.f32.mrb[0].mxu0
        %v1259 = vadd.f32 0.0, %v1258
        %v1260 = vpop.f32.mrb[0].mxu0
        %v1261 = vpop.f32.mrb[0].mxu0
        %v1262 = vadd.f32 0.0, %v1261
        %v1263 = vpop.f32.mrb[0].mxu0
        %1264 = vmatprep.mubr.bf16.mxu0 0
        %1265 = vmatmul.mubr.bf16.gmra.mrb[0].mxu0 %v1152
        %v1266 = vpop.f32.mrb[0].mxu0
        %v1267 = vadd.f32 0.0, %v1266
        %v1268 = vpop.f32.mrb[0].mxu0
        %v1269 = vpop.f32.mrb[0].mxu0
        %v1270 = vadd.f32 0.0, %v1269
        %v1271 = vpop.f32.mrb[0].mxu0
        %1272 = vmatprep.mubr.bf16.mxu0 0
        %1273 = vmatmul.mubr.bf16.gmra.mrb[0].mxu0 %v1155
        %v1274 = vpop.f32.mrb[0].mxu0
        %v1275 = vadd.f32 0.0, %v1274
        %v1276 = vpop.f32.mrb[0].mxu0
        %v1277 = vpop.f32.mrb[0].mxu0
        %v1278 = vadd.f32 0.0, %v1277
        %v1279 = vpop.f32.mrb[0].mxu0
        %1280 = vmatprep.mubr.bf16.mxu0 0
        %1281 = vmatmul.mubr.bf16.gmra.mrb[0].mxu0 %v1158
        %v1282 = vpop.f32.mrb[0].mxu0
        %v1283 = vadd.f32 0.0, %v1282
        %v1284 = vpop.f32.mrb[0].mxu0
        %v1285 = vpop.f32.mrb[0].mxu0
        %v1286 = vadd.f32 0.0, %v1285
        %v1287 = vpop.f32.mrb[0].mxu0
        %1288 = vmatprep.mubr.bf16.mxu0 0
        %1289 = vmatmul.mubr.bf16.gmra.mrb[0].mxu0 %v1161
        %v1290 = vpop.f32.mrb[0].mxu0
        %v1291 = vadd.f32 0.0, %v1290
        %v1292 = vpop.f32.mrb[0].mxu0
        %v1293 = vpop.f32.mrb[0].mxu0
        %v1294 = vadd.f32 0.0, %v1293
        %v1295 = vpop.f32.mrb[0].mxu0
        %1296 = vmatprep.mubr.bf16.mxu0 0
        %1297 = vmatmul.mubr.bf16.gmra.mrb[0].mxu0 %v1164
        %v1298 = vpop.f32.mrb[0].mxu0
        %v1299 = vadd.f32 0.0, %v1298
        %v1300 = vpop.f32.mrb[0].mxu0
        %v1301 = vpop.f32.mrb[0].mxu0
        %v1302 = vadd.f32 0.0, %v1301
        %v1303 = vpop.f32.mrb[0].mxu0
        %1304 = vmatprep.mubr.bf16.mxu0 0
        %1305 = vmatmul.mubr.bf16.gmra.mrb[0].mxu0 %v1167
        %v1306 = vpop.f32.mrb[0].mxu0
        %v1307 = vadd.f32 0.0, %v1306
        %v1308 = vpop.f32.mrb[0].mxu0
        %v1309 = vpop.f32.mrb[0].mxu0
        %v1310 = vadd.f32 0.0, %v1309
        %v1311 = vpop.f32.mrb[0].mxu0
        %1312 = vmatprep.mubr.bf16.mxu0 0
        %1313 = vmatmul.mubr.bf16.gmra.mrb[0].mxu0 %v1170
        %v1314 = vpop.f32.mrb[0].mxu0
        %v1315 = vadd.f32 0.0, %v1314
        %v1316 = vpop.f32.mrb[0].mxu0
        %v1317 = vpop.f32.mrb[0].mxu0
        %v1318 = vadd.f32 0.0, %v1317
        %v1319 = vpop.f32.mrb[0].mxu0
        %1320 = vmatprep.mubr.bf16.mxu0 0
        %1321 = vmatmul.mubr.bf16.gmra.mrb[0].mxu0 %v1173
        %v1322 = vpop.f32.mrb[0].mxu0
        %v1323 = vadd.f32 0.0, %v1322
        %v1324 = vpop.f32.mrb[0].mxu0
        %v1325 = vpop.f32.mrb[0].mxu0
        %v1326 = vadd.f32 0.0, %v1325
        %v1327 = vpop.f32.mrb[0].mxu0
        %1328 = vmatprep.mubr.bf16.mxu0 0
        %1329 = vmatmul.mubr.bf16.gmra.mrb[0].mxu0 %v1176
        %v1330 = vpop.f32.mrb[0].mxu0
        %v1331 = vadd.f32 0.0, %v1330
        %v1332 = vpop.f32.mrb[0].mxu0
        %v1333 = vpop.f32.mrb[0].mxu0
        %v1334 = vadd.f32 0.0, %v1333
        %v1335 = vpop.f32.mrb[0].mxu0
        %1336 = vmatprep.mubr.bf16.mxu0 0
        %1337 = vmatmul.mubr.bf16.gmra.mrb[0].mxu0 %v1179
        %v1338 = vpop.f32.mrb[0].mxu0
        %v1339 = vadd.f32 0.0, %v1338
        %v1340 = vpop.f32.mrb[0].mxu0
        %v1341 = vpop.f32.mrb[0].mxu0
        %v1342 = vadd.f32 0.0, %v1341
        %v1343 = vpop.f32.mrb[0].mxu0
        %1344 = vdwg.mxu0
        %v1345 = vadd.f32 %v597, %v1219
        %v1346 = vadd.f32 %v598, %v1222
        %v1347 = vadd.f32 %v599, %v1227
        %v1348 = vadd.f32 %v600, %v1230
        %v1349 = vadd.f32 %v601, %v1235
        %v1350 = vadd.f32 %v602, %v1238
        %v1351 = vadd.f32 %v603, %v1243
        %v1352 = vadd.f32 %v604, %v1246
        %v1353 = vadd.f32 %v605, %v1251
        %v1354 = vadd.f32 %v606, %v1254
        %v1355 = vadd.f32 %v607, %v1259
        %v1356 = vadd.f32 %v608, %v1262
        %v1357 = vadd.f32 %v609, %v1267
        %v1358 = vadd.f32 %v610, %v1270
        %v1359 = vadd.f32 %v611, %v1275
        %v1360 = vadd.f32 %v612, %v1278
        %v1361 = vadd.f32 %v613, %v1283
        %v1362 = vadd.f32 %v614, %v1286
        %v1363 = vadd.f32 %v615, %v1291
        %v1364 = vadd.f32 %v616, %v1294
        %v1365 = vadd.f32 %v617, %v1299
        %v1366 = vadd.f32 %v618, %v1302
        %v1367 = vadd.f32 %v619, %v1307
        %v1368 = vadd.f32 %v620, %v1310
        %v1369 = vadd.f32 %v621, %v1315
        %v1370 = vadd.f32 %v622, %v1318
        %v1371 = vadd.f32 %v623, %v1323
        %v1372 = vadd.f32 %v624, %v1326
        %v1373 = vadd.f32 %v625, %v1331
        %v1374 = vadd.f32 %v626, %v1334
        %v1375 = vadd.f32 %v627, %v1339
        %v1376 = vadd.f32 %v628, %v1342
        %v1377 = vld [vmem:[%s237] sm:$0xe]
        %v1378 = vld [vmem:[%s237 + $0xc] sm:$0xe]
        %v1379 = vld [vmem:[%s237 + $0x18] sm:$0xe]
        %v1380 = vld [vmem:[%s237 + $0x24] sm:$0xe]
        %v1381 = vld [vmem:[%s237 + $0x30] sm:$0xe]
        %v1382 = vld [vmem:[%s237 + $0x3c] sm:$0xe]
        %v1383 = vld [vmem:[%s237 + $0x48] sm:$0xe]
        %v1384 = vld [vmem:[%s237 + $0x54] sm:$0xe]
        %v1385 = vld [vmem:[%s237 + $0x60] sm:$0xe]
        %v1386 = vld [vmem:[%s237 + $0x6c] sm:$0xe]
        %v1387 = vld [vmem:[%s237 + $0x78] sm:$0xe]
        %v1388 = vld [vmem:[%s237 + $0x84] sm:$0xe]
        %v1389 = vld [vmem:[%s237 + $0x90] sm:$0xe]
        %v1390 = vld [vmem:[%s237 + $0x9c] sm:$0xe]
        %v1391 = vld [vmem:[%s237 + $0xa8] sm:$0xe]
        %v1392 = vld [vmem:[%s237 + $0xb4] sm:$0xe]
        %vm1441 = vcmask 1042432
        %vm1442 = vcmask 1046532
        %vm1443 = vmor %vm1441, %vm1442
        %v1444 = vrot.slane %v1377, 5
        %v1445 = vrot.slane %v1444, 4
        %v1446 = vrot.slane %v630, 5
        %v1447 = vsel %vm1443, %v1445, %v1446
        %v1448 = vrot.slane %v1446, 4
        %v1449 = vrot.slane %v631, 5
        %v1450 = vsel %vm1443, %v1448, %v1449
        %v1451 = vrot.slane %v1378, 5
        %v1452 = vrot.slane %v1451, 4
        %v1453 = vrot.slane %v633, 5
        %v1454 = vsel %vm1443, %v1452, %v1453
        %v1455 = vrot.slane %v1453, 4
        %v1456 = vrot.slane %v634, 5
        %v1457 = vsel %vm1443, %v1455, %v1456
        %v1458 = vrot.slane %v1379, 5
        %v1459 = vrot.slane %v1458, 4
        %v1460 = vrot.slane %v636, 5
        %v1461 = vsel %vm1443, %v1459, %v1460
        %v1462 = vrot.slane %v1460, 4
        %v1463 = vrot.slane %v637, 5
        %v1464 = vsel %vm1443, %v1462, %v1463
        %v1465 = vrot.slane %v1380, 5
        %v1466 = vrot.slane %v1465, 4
        %v1467 = vrot.slane %v639, 5
        %v1468 = vsel %vm1443, %v1466, %v1467
        %v1469 = vrot.slane %v1467, 4
        %v1470 = vrot.slane %v640, 5
        %v1471 = vsel %vm1443, %v1469, %v1470
        %v1472 = vrot.slane %v1381, 5
        %v1473 = vrot.slane %v1472, 4
        %v1474 = vrot.slane %v642, 5
        %v1475 = vsel %vm1443, %v1473, %v1474
        %v1476 = vrot.slane %v1474, 4
        %v1477 = vrot.slane %v643, 5
        %v1478 = vsel %vm1443, %v1476, %v1477
        %v1479 = vrot.slane %v1382, 5
        %v1480 = vrot.slane %v1479, 4
        %v1481 = vrot.slane %v645, 5
        %v1482 = vsel %vm1443, %v1480, %v1481
        %v1483 = vrot.slane %v1481, 4
        %v1484 = vrot.slane %v646, 5
        %v1485 = vsel %vm1443, %v1483, %v1484
        %v1486 = vrot.slane %v1383, 5
        %v1487 = vrot.slane %v1486, 4
        %v1488 = vrot.slane %v648, 5
        %v1489 = vsel %vm1443, %v1487, %v1488
        %v1490 = vrot.slane %v1488, 4
        %v1491 = vrot.slane %v649, 5
        %v1492 = vsel %vm1443, %v1490, %v1491
        %v1493 = vrot.slane %v1384, 5
        %v1494 = vrot.slane %v1493, 4
        %v1495 = vrot.slane %v651, 5
        %v1496 = vsel %vm1443, %v1494, %v1495
        %v1497 = vrot.slane %v1495, 4
        %v1498 = vrot.slane %v652, 5
        %v1499 = vsel %vm1443, %v1497, %v1498
        %v1500 = vrot.slane %v1385, 5
        %v1501 = vrot.slane %v1500, 4
        %v1502 = vrot.slane %v654, 5
        %v1503 = vsel %vm1443, %v1501, %v1502
        %v1504 = vrot.slane %v1502, 4
        %v1505 = vrot.slane %v655, 5
        %v1506 = vsel %vm1443, %v1504, %v1505
        %v1507 = vrot.slane %v1386, 5
        %v1508 = vrot.slane %v1507, 4
        %v1509 = vrot.slane %v657, 5
        %v1510 = vsel %vm1443, %v1508, %v1509
        %v1511 = vrot.slane %v1509, 4
        %v1512 = vrot.slane %v658, 5
        %v1513 = vsel %vm1443, %v1511, %v1512
        %v1514 = vrot.slane %v1387, 5
        %v1515 = vrot.slane %v1514, 4
        %v1516 = vrot.slane %v660, 5
        %v1517 = vsel %vm1443, %v1515, %v1516
        %v1518 = vrot.slane %v1516, 4
        %v1519 = vrot.slane %v661, 5
        %v1520 = vsel %vm1443, %v1518, %v1519
        %v1521 = vrot.slane %v1388, 5
        %v1522 = vrot.slane %v1521, 4
        %v1523 = vrot.slane %v663, 5
        %v1524 = vsel %vm1443, %v1522, %v1523
        %v1525 = vrot.slane %v1523, 4
        %v1526 = vrot.slane %v664, 5
        %v1527 = vsel %vm1443, %v1525, %v1526
        %v1528 = vrot.slane %v1389, 5
        %v1529 = vrot.slane %v1528, 4
        %v1530 = vrot.slane %v666, 5
        %v1531 = vsel %vm1443, %v1529, %v1530
        %v1532 = vrot.slane %v1530, 4
        %v1533 = vrot.slane %v667, 5
        %v1534 = vsel %vm1443, %v1532, %v1533
        %v1535 = vrot.slane %v1390, 5
        %v1536 = vrot.slane %v1535, 4
        %v1537 = vrot.slane %v669, 5
        %v1538 = vsel %vm1443, %v1536, %v1537
        %v1539 = vrot.slane %v1537, 4
        %v1540 = vrot.slane %v670, 5
        %v1541 = vsel %vm1443, %v1539, %v1540
        %v1542 = vrot.slane %v1391, 5
        %v1543 = vrot.slane %v1542, 4
        %v1544 = vrot.slane %v672, 5
        %v1545 = vsel %vm1443, %v1543, %v1544
        %v1546 = vrot.slane %v1544, 4
        %v1547 = vrot.slane %v673, 5
        %v1548 = vsel %vm1443, %v1546, %v1547
        %v1549 = vrot.slane %v1392, 5
        %v1550 = vrot.slane %v1549, 4
        %v1551 = vrot.slane %v675, 5
        %v1552 = vsel %vm1443, %v1550, %v1551
        %v1553 = vrot.slane %v1551, 4
        %v1554 = vrot.slane %v676, 5
        %v1555 = vsel %vm1443, %v1553, %v1554
        %s1556 = scalar_lea.vmem %s2, 40
        %v1557 = vld [vmem:[%s1556] sm:$0xf]
        %v1558 = vld [vmem:[%s1556 + $0x4] sm:$0xf]
        %v1559 = vld [vmem:[%s1556 + $0x8] sm:$0xf]
        %v1560 = vld [vmem:[%s1556 + $0xc] sm:$0xf]
        %v1561 = vld [vmem:[%s1556 + $0x10] sm:$0xf]
        %v1562 = vunpack.c.l.b16 %v1447
        %v1563 = vunpack.c.l.b16 %v1450
        %v1564 = vunpack.c.l.b16 %v1454
        %v1565 = vunpack.c.l.b16 %v1457
        %v1566 = vunpack.c.l.b16 %v1461
        %v1567 = vunpack.c.l.b16 %v1464
        %v1568 = vunpack.c.l.b16 %v1468
        %v1569 = vunpack.c.l.b16 %v1471
        %v1570 = vunpack.c.l.b16 %v1475
        %v1571 = vunpack.c.l.b16 %v1478
        %v1572 = vunpack.c.l.b16 %v1482
        %v1573 = vunpack.c.l.b16 %v1485
        %v1574 = vunpack.c.l.b16 %v1489
        %v1575 = vunpack.c.l.b16 %v1492
        %v1576 = vunpack.c.l.b16 %v1496
        %v1577 = vunpack.c.l.b16 %v1499
        %v1578 = vunpack.c.l.b16 %v1503
        %v1579 = vunpack.c.l.b16 %v1506
        %v1580 = vunpack.c.l.b16 %v1510
        %v1581 = vunpack.c.l.b16 %v1513
        %v1582 = vunpack.c.l.b16 %v1517
        %v1583 = vunpack.c.l.b16 %v1520
        %v1584 = vunpack.c.l.b16 %v1524
        %v1585 = vunpack.c.l.b16 %v1527
        %v1586 = vunpack.c.l.b16 %v1531
        %v1587 = vunpack.c.l.b16 %v1534
        %v1588 = vunpack.c.l.b16 %v1538
        %v1589 = vunpack.c.l.b16 %v1541
        %v1590 = vunpack.c.l.b16 %v1545
        %v1591 = vunpack.c.l.b16 %v1548
        %v1592 = vunpack.c.l.b16 %v1552
        %v1593 = vunpack.c.l.b16 %v1555
        %v1594 = vpack.c.b16 %v1563, %v1562
        %v1595 = vpack.c.b16 %v1565, %v1564
        %v1596 = vpack.c.b16 %v1567, %v1566
        %v1597 = vpack.c.b16 %v1569, %v1568
        %v1598 = vpack.c.b16 %v1571, %v1570
        %v1599 = vpack.c.b16 %v1573, %v1572
        %v1600 = vpack.c.b16 %v1575, %v1574
        %v1601 = vpack.c.b16 %v1577, %v1576
        %v1602 = vpack.c.b16 %v1579, %v1578
        %v1603 = vpack.c.b16 %v1581, %v1580
        %v1604 = vpack.c.b16 %v1583, %v1582
        %v1605 = vpack.c.b16 %v1585, %v1584
        %v1606 = vpack.c.b16 %v1587, %v1586
        %v1607 = vpack.c.b16 %v1589, %v1588
        %v1608 = vpack.c.b16 %v1591, %v1590
        %v1609 = vpack.c.b16 %v1593, %v1592
        %v1615 = vunpack.c.l.b16 %v1557
        %v1616 = vunpack.c.l.b16 %v1558
        %v1617 = vunpack.c.l.b16 %v1559
        %v1618 = vunpack.c.l.b16 %v1560
        %v1619 = vunpack.c.l.b16 %v1561
        %v1620 = vpack.c.b16 %v1616, %v1615
        %v1621 = vpack.c.b16 %v1618, %v1617
        %v1622 = vpack.c.b16 %v1619, %v1619
        %v1626 = vsel %vm383, %v1594, 0
        %v1629 = vsel %vm383, %v1595, 0
        %v1632 = vsel %vm383, %v1596, 0
        %v1635 = vsel %vm383, %v1597, 0
        %v1638 = vsel %vm383, %v1598, 0
        %v1641 = vsel %vm383, %v1599, 0
        %v1644 = vsel %vm383, %v1600, 0
        %v1647 = vsel %vm383, %v1601, 0
        %v1650 = vsel %vm383, %v1602, 0
        %v1653 = vsel %vm383, %v1603, 0
        %v1656 = vsel %vm383, %v1604, 0
        %v1659 = vsel %vm383, %v1605, 0
        %v1662 = vsel %vm383, %v1606, 0
        %v1665 = vsel %vm383, %v1607, 0
        %v1668 = vsel %vm383, %v1608, 0
        %v1671 = vsel %vm383, %v1609, 0
        %v1674 = vsel %vm432, %v1622, 0
        %1676 = vmatprep.subr.bf16.mxu0 0
        %1677 = vmatpush1.bf16.msra.mxu0 %v1620
        %1678 = vmatprep.subr.bf16.mxu0 0
        %1679 = vmatpush1.bf16.msra.mxu0 %v1621
        %1680 = vmatprep.subr.bf16.mxu0 0
        %1681 = vmatpush1.bf16.msra.mxu0 %v1674
        %1682 = vmatprep.subr.bf16.mxu0 0
        %1683 = vmatpush1.bf16.msra.mxu0 0
        %1684 = vmatprep.subr.bf16.mxu0 0
        %1685 = vmatpush1.bf16.msra.mxu0 0
        %1686 = vmatprep.subr.bf16.mxu0 0
        %1687 = vmatpush1.bf16.msra.mxu0 0
        %1688 = vmatprep.subr.bf16.mxu0 0
        %1689 = vmatpush1.bf16.msra.mxu0 0
        %1690 = vmatprep.subr.bf16.mxu0 0
        %1691 = vmatpush1.bf16.msra.mxu0 0
        %1692 = vmatprep.subr.bf16.mxu0 0
        %1693 = vmatpush1.bf16.msra.mxu0 0
        %1694 = vmatprep.subr.bf16.mxu0 0
        %1695 = vmatpush1.bf16.msra.mxu0 0
        %1696 = vmatprep.subr.bf16.mxu0 0
        %1697 = vmatpush1.bf16.msra.mxu0 0
        %1698 = vmatprep.subr.bf16.mxu0 0
        %1699 = vmatpush1.bf16.msra.mxu0 0
        %1700 = vmatprep.subr.bf16.mxu0 0
        %1701 = vmatpush1.bf16.msra.mxu0 0
        %1702 = vmatprep.subr.bf16.mxu0 0
        %1703 = vmatpush1.bf16.msra.mxu0 0
        %1704 = vmatprep.subr.bf16.mxu0 0
        %1705 = vmatpush1.bf16.msra.mxu0 0
        %1706 = vmatprep.subr.bf16.mxu0 0
        %1707 = vmatpush1.bf16.msra.mxu0 0
        %1708 = vmatprep.mubr.bf16.mxu0 0
        %1709 = vmatmul.mubr.bf16.gmra.mrb[0].mxu0 %v1626
        %v1710 = vpop.f32.mrb[0].mxu0
        %v1711 = vadd.f32 0.0, %v1710
        %v1712 = vpop.f32.mrb[0].mxu0
        %v1713 = vpop.f32.mrb[0].mxu0
        %v1714 = vadd.f32 0.0, %v1713
        %v1715 = vpop.f32.mrb[0].mxu0
        %1716 = vmatprep.mubr.bf16.mxu0 0
        %1717 = vmatmul.mubr.bf16.gmra.mrb[0].mxu0 %v1629
        %v1718 = vpop.f32.mrb[0].mxu0
        %v1719 = vadd.f32 0.0, %v1718
        %v1720 = vpop.f32.mrb[0].mxu0
        %v1721 = vpop.f32.mrb[0].mxu0
        %v1722 = vadd.f32 0.0, %v1721
        %v1723 = vpop.f32.mrb[0].mxu0
        %1724 = vmatprep.mubr.bf16.mxu0 0
        %1725 = vmatmul.mubr.bf16.gmra.mrb[0].mxu0 %v1632
        %v1726 = vpop.f32.mrb[0].mxu0
        %v1727 = vadd.f32 0.0, %v1726
        %v1728 = vpop.f32.mrb[0].mxu0
        %v1729 = vpop.f32.mrb[0].mxu0
        %v1730 = vadd.f32 0.0, %v1729
        %v1731 = vpop.f32.mrb[0].mxu0
        %1732 = vmatprep.mubr.bf16.mxu0 0
        %1733 = vmatmul.mubr.bf16.gmra.mrb[0].mxu0 %v1635
        %v1734 = vpop.f32.mrb[0].mxu0
        %v1735 = vadd.f32 0.0, %v1734
        %v1736 = vpop.f32.mrb[0].mxu0
        %v1737 = vpop.f32.mrb[0].mxu0
        %v1738 = vadd.f32 0.0, %v1737
        %v1739 = vpop.f32.mrb[0].mxu0
        %1740 = vmatprep.mubr.bf16.mxu0 0
        %1741 = vmatmul.mubr.bf16.gmra.mrb[0].mxu0 %v1638
        %v1742 = vpop.f32.mrb[0].mxu0
        %v1743 = vadd.f32 0.0, %v1742
        %v1744 = vpop.f32.mrb[0].mxu0
        %v1745 = vpop.f32.mrb[0].mxu0
        %v1746 = vadd.f32 0.0, %v1745
        %v1747 = vpop.f32.mrb[0].mxu0
        %1748 = vmatprep.mubr.bf16.mxu0 0
        %1749 = vmatmul.mubr.bf16.gmra.mrb[0].mxu0 %v1641
        %v1750 = vpop.f32.mrb[0].mxu0
        %v1751 = vadd.f32 0.0, %v1750
        %v1752 = vpop.f32.mrb[0].mxu0
        %v1753 = vpop.f32.mrb[0].mxu0
        %v1754 = vadd.f32 0.0, %v1753
        %v1755 = vpop.f32.mrb[0].mxu0
        %1756 = vmatprep.mubr.bf16.mxu0 0
        %1757 = vmatmul.mubr.bf16.gmra.mrb[0].mxu0 %v1644
        %v1758 = vpop.f32.mrb[0].mxu0
        %v1759 = vadd.f32 0.0, %v1758
        %v1760 = vpop.f32.mrb[0].mxu0
        %v1761 = vpop.f32.mrb[0].mxu0
        %v1762 = vadd.f32 0.0, %v1761
        %v1763 = vpop.f32.mrb[0].mxu0
        %1764 = vmatprep.mubr.bf16.mxu0 0
        %1765 = vmatmul.mubr.bf16.gmra.mrb[0].mxu0 %v1647
        %v1766 = vpop.f32.mrb[0].mxu0
        %v1767 = vadd.f32 0.0, %v1766
        %v1768 = vpop.f32.mrb[0].mxu0
        %v1769 = vpop.f32.mrb[0].mxu0
        %v1770 = vadd.f32 0.0, %v1769
        %v1771 = vpop.f32.mrb[0].mxu0
        %1772 = vmatprep.mubr.bf16.mxu0 0
        %1773 = vmatmul.mubr.bf16.gmra.mrb[0].mxu0 %v1650
        %v1774 = vpop.f32.mrb[0].mxu0
        %v1775 = vadd.f32 0.0, %v1774
        %v1776 = vpop.f32.mrb[0].mxu0
        %v1777 = vpop.f32.mrb[0].mxu0
        %v1778 = vadd.f32 0.0, %v1777
        %v1779 = vpop.f32.mrb[0].mxu0
        %1780 = vmatprep.mubr.bf16.mxu0 0
        %1781 = vmatmul.mubr.bf16.gmra.mrb[0].mxu0 %v1653
        %v1782 = vpop.f32.mrb[0].mxu0
        %v1783 = vadd.f32 0.0, %v1782
        %v1784 = vpop.f32.mrb[0].mxu0
        %v1785 = vpop.f32.mrb[0].mxu0
        %v1786 = vadd.f32 0.0, %v1785
        %v1787 = vpop.f32.mrb[0].mxu0
        %1788 = vmatprep.mubr.bf16.mxu0 0
        %1789 = vmatmul.mubr.bf16.gmra.mrb[0].mxu0 %v1656
        %v1790 = vpop.f32.mrb[0].mxu0
        %v1791 = vadd.f32 0.0, %v1790
        %v1792 = vpop.f32.mrb[0].mxu0
        %v1793 = vpop.f32.mrb[0].mxu0
        %v1794 = vadd.f32 0.0, %v1793
        %v1795 = vpop.f32.mrb[0].mxu0
        %1796 = vmatprep.mubr.bf16.mxu0 0
        %1797 = vmatmul.mubr.bf16.gmra.mrb[0].mxu0 %v1659
        %v1798 = vpop.f32.mrb[0].mxu0
        %v1799 = vadd.f32 0.0, %v1798
        %v1800 = vpop.f32.mrb[0].mxu0
        %v1801 = vpop.f32.mrb[0].mxu0
        %v1802 = vadd.f32 0.0, %v1801
        %v1803 = vpop.f32.mrb[0].mxu0
        %1804 = vmatprep.mubr.bf16.mxu0 0
        %1805 = vmatmul.mubr.bf16.gmra.mrb[0].mxu0 %v1662
        %v1806 = vpop.f32.mrb[0].mxu0
        %v1807 = vadd.f32 0.0, %v1806
        %v1808 = vpop.f32.mrb[0].mxu0
        %v1809 = vpop.f32.mrb[0].mxu0
        %v1810 = vadd.f32 0.0, %v1809
        %v1811 = vpop.f32.mrb[0].mxu0
        %1812 = vmatprep.mubr.bf16.mxu0 0
        %1813 = vmatmul.mubr.bf16.gmra.mrb[0].mxu0 %v1665
        %v1814 = vpop.f32.mrb[0].mxu0
        %v1815 = vadd.f32 0.0, %v1814
        %v1816 = vpop.f32.mrb[0].mxu0
        %v1817 = vpop.f32.mrb[0].mxu0
        %v1818 = vadd.f32 0.0, %v1817
        %v1819 = vpop.f32.mrb[0].mxu0
        %1820 = vmatprep.mubr.bf16.mxu0 0
        %1821 = vmatmul.mubr.bf16.gmra.mrb[0].mxu0 %v1668
        %v1822 = vpop.f32.mrb[0].mxu0
        %v1823 = vadd.f32 0.0, %v1822
        %v1824 = vpop.f32.mrb[0].mxu0
        %v1825 = vpop.f32.mrb[0].mxu0
        %v1826 = vadd.f32 0.0, %v1825
        %v1827 = vpop.f32.mrb[0].mxu0
        %1828 = vmatprep.mubr.bf16.mxu0 0
        %1829 = vmatmul.mubr.bf16.gmra.mrb[0].mxu0 %v1671
        %v1830 = vpop.f32.mrb[0].mxu0
        %v1831 = vadd.f32 0.0, %v1830
        %v1832 = vpop.f32.mrb[0].mxu0
        %v1833 = vpop.f32.mrb[0].mxu0
        %v1834 = vadd.f32 0.0, %v1833
        %v1835 = vpop.f32.mrb[0].mxu0
        %1836 = vdwg.mxu0
        %v1837 = vadd.f32 %v1345, %v1711
        %v1838 = vadd.f32 %v1346, %v1714
        %v1839 = vadd.f32 %v1347, %v1719
        %v1840 = vadd.f32 %v1348, %v1722
        %v1841 = vadd.f32 %v1349, %v1727
        %v1842 = vadd.f32 %v1350, %v1730
        %v1843 = vadd.f32 %v1351, %v1735
        %v1844 = vadd.f32 %v1352, %v1738
        %v1845 = vadd.f32 %v1353, %v1743
        %v1846 = vadd.f32 %v1354, %v1746
        %v1847 = vadd.f32 %v1355, %v1751
        %v1848 = vadd.f32 %v1356, %v1754
        %v1849 = vadd.f32 %v1357, %v1759
        %v1850 = vadd.f32 %v1358, %v1762
        %v1851 = vadd.f32 %v1359, %v1767
        %v1852 = vadd.f32 %v1360, %v1770
        %v1853 = vadd.f32 %v1361, %v1775
        %v1854 = vadd.f32 %v1362, %v1778
        %v1855 = vadd.f32 %v1363, %v1783
        %v1856 = vadd.f32 %v1364, %v1786
        %v1857 = vadd.f32 %v1365, %v1791
        %v1858 = vadd.f32 %v1366, %v1794
        %v1859 = vadd.f32 %v1367, %v1799
        %v1860 = vadd.f32 %v1368, %v1802
        %v1861 = vadd.f32 %v1369, %v1807
        %v1862 = vadd.f32 %v1370, %v1810
        %v1863 = vadd.f32 %v1371, %v1815
        %v1864 = vadd.f32 %v1372, %v1818
        %v1865 = vadd.f32 %v1373, %v1823
        %v1866 = vadd.f32 %v1374, %v1826
        %v1867 = vadd.f32 %v1375, %v1831
        %v1868 = vadd.f32 %v1376, %v1834
        %s1869 = scalar_lea.vmem %s237, 12
        %v1870 = vld [vmem:[%s1869] sm:$0xf]
        %v1871 = vld [vmem:[%s1869 + $0x4] sm:$0xf]
        %v1872 = vld [vmem:[%s1869 + $0xc] sm:$0xf]
        %v1873 = vld [vmem:[%s1869 + $0x10] sm:$0xf]
        %v1874 = vld [vmem:[%s1869 + $0x18] sm:$0xf]
        %v1875 = vld [vmem:[%s1869 + $0x1c] sm:$0xf]
        %v1876 = vld [vmem:[%s1869 + $0x24] sm:$0xf]
        %v1877 = vld [vmem:[%s1869 + $0x28] sm:$0xf]
        %v1878 = vld [vmem:[%s1869 + $0x30] sm:$0xf]
        %v1879 = vld [vmem:[%s1869 + $0x34] sm:$0xf]
        %v1880 = vld [vmem:[%s1869 + $0x3c] sm:$0xf]
        %v1881 = vld [vmem:[%s1869 + $0x40] sm:$0xf]
        %v1882 = vld [vmem:[%s1869 + $0x48] sm:$0xf]
        %v1883 = vld [vmem:[%s1869 + $0x4c] sm:$0xf]
        %v1884 = vld [vmem:[%s1869 + $0x54] sm:$0xf]
        %v1885 = vld [vmem:[%s1869 + $0x58] sm:$0xf]
        %v1886 = vld [vmem:[%s1869 + $0x60] sm:$0xf]
        %v1887 = vld [vmem:[%s1869 + $0x64] sm:$0xf]
        %v1888 = vld [vmem:[%s1869 + $0x6c] sm:$0xf]
        %v1889 = vld [vmem:[%s1869 + $0x70] sm:$0xf]
        %v1890 = vld [vmem:[%s1869 + $0x78] sm:$0xf]
        %v1891 = vld [vmem:[%s1869 + $0x7c] sm:$0xf]
        %v1892 = vld [vmem:[%s1869 + $0x84] sm:$0xf]
        %v1893 = vld [vmem:[%s1869 + $0x88] sm:$0xf]
        %v1894 = vld [vmem:[%s1869 + $0x90] sm:$0xf]
        %v1895 = vld [vmem:[%s1869 + $0x94] sm:$0xf]
        %v1896 = vld [vmem:[%s1869 + $0x9c] sm:$0xf]
        %v1897 = vld [vmem:[%s1869 + $0xa0] sm:$0xf]
        %v1898 = vld [vmem:[%s1869 + $0xa8] sm:$0xf]
        %v1899 = vld [vmem:[%s1869 + $0xac] sm:$0xf]
        %v1900 = vld [vmem:[%s1869 + $0xb4] sm:$0xf]
        %v1901 = vld [vmem:[%s1869 + $0xb8] sm:$0xf]
        %s1902 = scalar_lea.vmem %s2, 60
        %v1903 = vld [vmem:[%s1902] sm:$0xf]
        %v1904 = vld [vmem:[%s1902 + $0x4] sm:$0xf]
        %v1905 = vld [vmem:[%s1902 + $0x8] sm:$0xf]
        %v1906 = vld [vmem:[%s1902 + $0xc] sm:$0xf]
        %v1907 = vld [vmem:[%s1902 + $0x10] sm:$0xf]
        %v1940 = vunpack.c.l.b16 %v1870
        %v1941 = vunpack.c.l.b16 %v1871
        %v1942 = vunpack.c.l.b16 %v1872
        %v1943 = vunpack.c.l.b16 %v1873
        %v1944 = vunpack.c.l.b16 %v1874
        %v1945 = vunpack.c.l.b16 %v1875
        %v1946 = vunpack.c.l.b16 %v1876
        %v1947 = vunpack.c.l.b16 %v1877
        %v1948 = vunpack.c.l.b16 %v1878
        %v1949 = vunpack.c.l.b16 %v1879
        %v1950 = vunpack.c.l.b16 %v1880
        %v1951 = vunpack.c.l.b16 %v1881
        %v1952 = vunpack.c.l.b16 %v1882
        %v1953 = vunpack.c.l.b16 %v1883
        %v1954 = vunpack.c.l.b16 %v1884
        %v1955 = vunpack.c.l.b16 %v1885
        %v1956 = vunpack.c.l.b16 %v1886
        %v1957 = vunpack.c.l.b16 %v1887
        %v1958 = vunpack.c.l.b16 %v1888
        %v1959 = vunpack.c.l.b16 %v1889
        %v1960 = vunpack.c.l.b16 %v1890
        %v1961 = vunpack.c.l.b16 %v1891
        %v1962 = vunpack.c.l.b16 %v1892
        %v1963 = vunpack.c.l.b16 %v1893
        %v1964 = vunpack.c.l.b16 %v1894
        %v1965 = vunpack.c.l.b16 %v1895
        %v1966 = vunpack.c.l.b16 %v1896
        %v1967 = vunpack.c.l.b16 %v1897
        %v1968 = vunpack.c.l.b16 %v1898
        %v1969 = vunpack.c.l.b16 %v1899
        %v1970 = vunpack.c.l.b16 %v1900
        %v1971 = vunpack.c.l.b16 %v1901
        %v1972 = vpack.c.b16 %v1941, %v1940
        %v1973 = vpack.c.b16 %v1943, %v1942
        %v1974 = vpack.c.b16 %v1945, %v1944
        %v1975 = vpack.c.b16 %v1947, %v1946
        %v1976 = vpack.c.b16 %v1949, %v1948
        %v1977 = vpack.c.b16 %v1951, %v1950
        %v1978 = vpack.c.b16 %v1953, %v1952
        %v1979 = vpack.c.b16 %v1955, %v1954
        %v1980 = vpack.c.b16 %v1957, %v1956
        %v1981 = vpack.c.b16 %v1959, %v1958
        %v1982 = vpack.c.b16 %v1961, %v1960
        %v1983 = vpack.c.b16 %v1963, %v1962
        %v1984 = vpack.c.b16 %v1965, %v1964
        %v1985 = vpack.c.b16 %v1967, %v1966
        %v1986 = vpack.c.b16 %v1969, %v1968
        %v1987 = vpack.c.b16 %v1971, %v1970
        %v1993 = vunpack.c.l.b16 %v1903
        %v1994 = vunpack.c.l.b16 %v1904
        %v1995 = vunpack.c.l.b16 %v1905
        %v1996 = vunpack.c.l.b16 %v1906
        %v1997 = vunpack.c.l.b16 %v1907
        %v1998 = vpack.c.b16 %v1994, %v1993
        %v1999 = vpack.c.b16 %v1996, %v1995
        %v2000 = vpack.c.b16 %v1997, %v1997
        %v2004 = vsel %vm383, %v1972, 0
        %v2007 = vsel %vm383, %v1973, 0
        %v2010 = vsel %vm383, %v1974, 0
        %v2013 = vsel %vm383, %v1975, 0
        %v2016 = vsel %vm383, %v1976, 0
        %v2019 = vsel %vm383, %v1977, 0
        %v2022 = vsel %vm383, %v1978, 0
        %v2025 = vsel %vm383, %v1979, 0
        %v2028 = vsel %vm383, %v1980, 0
        %v2031 = vsel %vm383, %v1981, 0
        %v2034 = vsel %vm383, %v1982, 0
        %v2037 = vsel %vm383, %v1983, 0
        %v2040 = vsel %vm383, %v1984, 0
        %v2043 = vsel %vm383, %v1985, 0
        %v2046 = vsel %vm383, %v1986, 0
        %v2049 = vsel %vm383, %v1987, 0
        %v2052 = vsel %vm432, %v2000, 0
        %2054 = vmatprep.subr.bf16.mxu0 0
        %2055 = vmatpush1.bf16.msra.mxu0 %v1998
        %2056 = vmatprep.subr.bf16.mxu0 0
        %2057 = vmatpush1.bf16.msra.mxu0 %v1999
        %2058 = vmatprep.subr.bf16.mxu0 0
        %2059 = vmatpush1.bf16.msra.mxu0 %v2052
        %2060 = vmatprep.subr.bf16.mxu0 0
        %2061 = vmatpush1.bf16.msra.mxu0 0
        %2062 = vmatprep.subr.bf16.mxu0 0
        %2063 = vmatpush1.bf16.msra.mxu0 0
        %2064 = vmatprep.subr.bf16.mxu0 0
        %2065 = vmatpush1.bf16.msra.mxu0 0
        %2066 = vmatprep.subr.bf16.mxu0 0
        %2067 = vmatpush1.bf16.msra.mxu0 0
        %2068 = vmatprep.subr.bf16.mxu0 0
        %2069 = vmatpush1.bf16.msra.mxu0 0
        %2070 = vmatprep.subr.bf16.mxu0 0
        %2071 = vmatpush1.bf16.msra.mxu0 0
        %2072 = vmatprep.subr.bf16.mxu0 0
        %2073 = vmatpush1.bf16.msra.mxu0 0
        %2074 = vmatprep.subr.bf16.mxu0 0
        %2075 = vmatpush1.bf16.msra.mxu0 0
        %2076 = vmatprep.subr.bf16.mxu0 0
        %2077 = vmatpush1.bf16.msra.mxu0 0
        %2078 = vmatprep.subr.bf16.mxu0 0
        %2079 = vmatpush1.bf16.msra.mxu0 0
        %2080 = vmatprep.subr.bf16.mxu0 0
        %2081 = vmatpush1.bf16.msra.mxu0 0
        %2082 = vmatprep.subr.bf16.mxu0 0
        %2083 = vmatpush1.bf16.msra.mxu0 0
        %2084 = vmatprep.subr.bf16.mxu0 0
        %2085 = vmatpush1.bf16.msra.mxu0 0
        %2086 = vmatprep.mubr.bf16.mxu0 0
        %2087 = vmatmul.mubr.bf16.gmra.mrb[0].mxu0 %v2004
        %v2088 = vpop.f32.mrb[0].mxu0
        %v2089 = vadd.f32 0.0, %v2088
        %v2090 = vpop.f32.mrb[0].mxu0
        %v2091 = vpop.f32.mrb[0].mxu0
        %v2092 = vadd.f32 0.0, %v2091
        %v2093 = vpop.f32.mrb[0].mxu0
        %2094 = vmatprep.mubr.bf16.mxu0 0
        %2095 = vmatmul.mubr.bf16.gmra.mrb[0].mxu0 %v2007
        %v2096 = vpop.f32.mrb[0].mxu0
        %v2097 = vadd.f32 0.0, %v2096
        %v2098 = vpop.f32.mrb[0].mxu0
        %v2099 = vpop.f32.mrb[0].mxu0
        %v2100 = vadd.f32 0.0, %v2099
        %v2101 = vpop.f32.mrb[0].mxu0
        %2102 = vmatprep.mubr.bf16.mxu0 0
        %2103 = vmatmul.mubr.bf16.gmra.mrb[0].mxu0 %v2010
        %v2104 = vpop.f32.mrb[0].mxu0
        %v2105 = vadd.f32 0.0, %v2104
        %v2106 = vpop.f32.mrb[0].mxu0
        %v2107 = vpop.f32.mrb[0].mxu0
        %v2108 = vadd.f32 0.0, %v2107
        %v2109 = vpop.f32.mrb[0].mxu0
        %2110 = vmatprep.mubr.bf16.mxu0 0
        %2111 = vmatmul.mubr.bf16.gmra.mrb[0].mxu0 %v2013
        %v2112 = vpop.f32.mrb[0].mxu0
        %v2113 = vadd.f32 0.0, %v2112
        %v2114 = vpop.f32.mrb[0].mxu0
        %v2115 = vpop.f32.mrb[0].mxu0
        %v2116 = vadd.f32 0.0, %v2115
        %v2117 = vpop.f32.mrb[0].mxu0
        %2118 = vmatprep.mubr.bf16.mxu0 0
        %2119 = vmatmul.mubr.bf16.gmra.mrb[0].mxu0 %v2016
        %v2120 = vpop.f32.mrb[0].mxu0
        %v2121 = vadd.f32 0.0, %v2120
        %v2122 = vpop.f32.mrb[0].mxu0
        %v2123 = vpop.f32.mrb[0].mxu0
        %v2124 = vadd.f32 0.0, %v2123
        %v2125 = vpop.f32.mrb[0].mxu0
        %2126 = vmatprep.mubr.bf16.mxu0 0
        %2127 = vmatmul.mubr.bf16.gmra.mrb[0].mxu0 %v2019
        %v2128 = vpop.f32.mrb[0].mxu0
        %v2129 = vadd.f32 0.0, %v2128
        %v2130 = vpop.f32.mrb[0].mxu0
        %v2131 = vpop.f32.mrb[0].mxu0
        %v2132 = vadd.f32 0.0, %v2131
        %v2133 = vpop.f32.mrb[0].mxu0
        %2134 = vmatprep.mubr.bf16.mxu0 0
        %2135 = vmatmul.mubr.bf16.gmra.mrb[0].mxu0 %v2022
        %v2136 = vpop.f32.mrb[0].mxu0
        %v2137 = vadd.f32 0.0, %v2136
        %v2138 = vpop.f32.mrb[0].mxu0
        %v2139 = vpop.f32.mrb[0].mxu0
        %v2140 = vadd.f32 0.0, %v2139
        %v2141 = vpop.f32.mrb[0].mxu0
        %2142 = vmatprep.mubr.bf16.mxu0 0
        %2143 = vmatmul.mubr.bf16.gmra.mrb[0].mxu0 %v2025
        %v2144 = vpop.f32.mrb[0].mxu0
        %v2145 = vadd.f32 0.0, %v2144
        %v2146 = vpop.f32.mrb[0].mxu0
        %v2147 = vpop.f32.mrb[0].mxu0
        %v2148 = vadd.f32 0.0, %v2147
        %v2149 = vpop.f32.mrb[0].mxu0
        %2150 = vmatprep.mubr.bf16.mxu0 0
        %2151 = vmatmul.mubr.bf16.gmra.mrb[0].mxu0 %v2028
        %v2152 = vpop.f32.mrb[0].mxu0
        %v2153 = vadd.f32 0.0, %v2152
        %v2154 = vpop.f32.mrb[0].mxu0
        %v2155 = vpop.f32.mrb[0].mxu0
        %v2156 = vadd.f32 0.0, %v2155
        %v2157 = vpop.f32.mrb[0].mxu0
        %2158 = vmatprep.mubr.bf16.mxu0 0
        %2159 = vmatmul.mubr.bf16.gmra.mrb[0].mxu0 %v2031
        %v2160 = vpop.f32.mrb[0].mxu0
        %v2161 = vadd.f32 0.0, %v2160
        %v2162 = vpop.f32.mrb[0].mxu0
        %v2163 = vpop.f32.mrb[0].mxu0
        %v2164 = vadd.f32 0.0, %v2163
        %v2165 = vpop.f32.mrb[0].mxu0
        %2166 = vmatprep.mubr.bf16.mxu0 0
        %2167 = vmatmul.mubr.bf16.gmra.mrb[0].mxu0 %v2034
        %v2168 = vpop.f32.mrb[0].mxu0
        %v2169 = vadd.f32 0.0, %v2168
        %v2170 = vpop.f32.mrb[0].mxu0
        %v2171 = vpop.f32.mrb[0].mxu0
        %v2172 = vadd.f32 0.0, %v2171
        %v2173 = vpop.f32.mrb[0].mxu0
        %2174 = vmatprep.mubr.bf16.mxu0 0
        %2175 = vmatmul.mubr.bf16.gmra.mrb[0].mxu0 %v2037
        %v2176 = vpop.f32.mrb[0].mxu0
        %v2177 = vadd.f32 0.0, %v2176
        %v2178 = vpop.f32.mrb[0].mxu0
        %v2179 = vpop.f32.mrb[0].mxu0
        %v2180 = vadd.f32 0.0, %v2179
        %v2181 = vpop.f32.mrb[0].mxu0
        %2182 = vmatprep.mubr.bf16.mxu0 0
        %2183 = vmatmul.mubr.bf16.gmra.mrb[0].mxu0 %v2040
        %v2184 = vpop.f32.mrb[0].mxu0
        %v2185 = vadd.f32 0.0, %v2184
        %v2186 = vpop.f32.mrb[0].mxu0
        %v2187 = vpop.f32.mrb[0].mxu0
        %v2188 = vadd.f32 0.0, %v2187
        %v2189 = vpop.f32.mrb[0].mxu0
        %2190 = vmatprep.mubr.bf16.mxu0 0
        %2191 = vmatmul.mubr.bf16.gmra.mrb[0].mxu0 %v2043
        %v2192 = vpop.f32.mrb[0].mxu0
        %v2193 = vadd.f32 0.0, %v2192
        %v2194 = vpop.f32.mrb[0].mxu0
        %v2195 = vpop.f32.mrb[0].mxu0
        %v2196 = vadd.f32 0.0, %v2195
        %v2197 = vpop.f32.mrb[0].mxu0
        %2198 = vmatprep.mubr.bf16.mxu0 0
        %2199 = vmatmul.mubr.bf16.gmra.mrb[0].mxu0 %v2046
        %v2200 = vpop.f32.mrb[0].mxu0
        %v2201 = vadd.f32 0.0, %v2200
        %v2202 = vpop.f32.mrb[0].mxu0
        %v2203 = vpop.f32.mrb[0].mxu0
        %v2204 = vadd.f32 0.0, %v2203
        %v2205 = vpop.f32.mrb[0].mxu0
        %2206 = vmatprep.mubr.bf16.mxu0 0
        %2207 = vmatmul.mubr.bf16.gmra.mrb[0].mxu0 %v2049
        %v2208 = vpop.f32.mrb[0].mxu0
        %v2209 = vadd.f32 0.0, %v2208
        %v2210 = vpop.f32.mrb[0].mxu0
        %v2211 = vpop.f32.mrb[0].mxu0
        %v2212 = vadd.f32 0.0, %v2211
        %v2213 = vpop.f32.mrb[0].mxu0
        %2214 = vdwg.mxu0
        %v2215 = vadd.f32 %v1837, %v2089
        %v2216 = vadd.f32 %v1838, %v2092
        %v2217 = vadd.f32 %v1839, %v2097
        %v2218 = vadd.f32 %v1840, %v2100
        %v2219 = vadd.f32 %v1841, %v2105
        %v2220 = vadd.f32 %v1842, %v2108
        %v2221 = vadd.f32 %v1843, %v2113
        %v2222 = vadd.f32 %v1844, %v2116
        %v2223 = vadd.f32 %v1845, %v2121
        %v2224 = vadd.f32 %v1846, %v2124
        %v2225 = vadd.f32 %v1847, %v2129
        %v2226 = vadd.f32 %v1848, %v2132
        %v2227 = vadd.f32 %v1849, %v2137
        %v2228 = vadd.f32 %v1850, %v2140
        %v2229 = vadd.f32 %v1851, %v2145
        %v2230 = vadd.f32 %v1852, %v2148
        %v2231 = vadd.f32 %v1853, %v2153
        %v2232 = vadd.f32 %v1854, %v2156
        %v2233 = vadd.f32 %v1855, %v2161
        %v2234 = vadd.f32 %v1856, %v2164
        %v2235 = vadd.f32 %v1857, %v2169
        %v2236 = vadd.f32 %v1858, %v2172
        %v2237 = vadd.f32 %v1859, %v2177
        %v2238 = vadd.f32 %v1860, %v2180
        %v2239 = vadd.f32 %v1861, %v2185
        %v2240 = vadd.f32 %v1862, %v2188
        %v2241 = vadd.f32 %v1863, %v2193
        %v2242 = vadd.f32 %v1864, %v2196
        %v2243 = vadd.f32 %v1865, %v2201
        %v2244 = vadd.f32 %v1866, %v2204
        %v2245 = vadd.f32 %v1867, %v2209
        %v2246 = vadd.f32 %v1868, %v2212
        %v2247 = vld [vmem:[%s1869] sm:$0xf]
        %v2248 = vld [vmem:[%s1869 + $0x4] sm:$0xf]
        %v2249 = vld [vmem:[%s1869 + $0x8] sm:$0x1]
        %v2250 = vld [vmem:[%s1869 + $0xc] sm:$0xf]
        %v2251 = vld [vmem:[%s1869 + $0x10] sm:$0xf]
        %v2252 = vld [vmem:[%s1869 + $0x14] sm:$0x1]
        %v2253 = vld [vmem:[%s1869 + $0x18] sm:$0xf]
        %v2254 = vld [vmem:[%s1869 + $0x1c] sm:$0xf]
        %v2255 = vld [vmem:[%s1869 + $0x20] sm:$0x1]
        %v2256 = vld [vmem:[%s1869 + $0x24] sm:$0xf]
        %v2257 = vld [vmem:[%s1869 + $0x28] sm:$0xf]
        %v2258 = vld [vmem:[%s1869 + $0x2c] sm:$0x1]
        %v2259 = vld [vmem:[%s1869 + $0x30] sm:$0xf]
        %v2260 = vld [vmem:[%s1869 + $0x34] sm:$0xf]
        %v2261 = vld [vmem:[%s1869 + $0x38] sm:$0x1]
        %v2262 = vld [vmem:[%s1869 + $0x3c] sm:$0xf]
        %v2263 = vld [vmem:[%s1869 + $0x40] sm:$0xf]
        %v2264 = vld [vmem:[%s1869 + $0x44] sm:$0x1]
        %v2265 = vld [vmem:[%s1869 + $0x48] sm:$0xf]
        %v2266 = vld [vmem:[%s1869 + $0x4c] sm:$0xf]
        %v2267 = vld [vmem:[%s1869 + $0x50] sm:$0x1]
        %v2268 = vld [vmem:[%s1869 + $0x54] sm:$0xf]
        %v2269 = vld [vmem:[%s1869 + $0x58] sm:$0xf]
        %v2270 = vld [vmem:[%s1869 + $0x5c] sm:$0x1]
        %v2271 = vld [vmem:[%s1869 + $0x60] sm:$0xf]
        %v2272 = vld [vmem:[%s1869 + $0x64] sm:$0xf]
        %v2273 = vld [vmem:[%s1869 + $0x68] sm:$0x1]
        %v2274 = vld [vmem:[%s1869 + $0x6c] sm:$0xf]
        %v2275 = vld [vmem:[%s1869 + $0x70] sm:$0xf]
        %v2276 = vld [vmem:[%s1869 + $0x74] sm:$0x1]
        %v2277 = vld [vmem:[%s1869 + $0x78] sm:$0xf]
        %v2278 = vld [vmem:[%s1869 + $0x7c] sm:$0xf]
        %v2279 = vld [vmem:[%s1869 + $0x80] sm:$0x1]
        %v2280 = vld [vmem:[%s1869 + $0x84] sm:$0xf]
        %v2281 = vld [vmem:[%s1869 + $0x88] sm:$0xf]
        %v2282 = vld [vmem:[%s1869 + $0x8c] sm:$0x1]
        %v2283 = vld [vmem:[%s1869 + $0x90] sm:$0xf]
        %v2284 = vld [vmem:[%s1869 + $0x94] sm:$0xf]
        %v2285 = vld [vmem:[%s1869 + $0x98] sm:$0x1]
        %v2286 = vld [vmem:[%s1869 + $0x9c] sm:$0xf]
        %v2287 = vld [vmem:[%s1869 + $0xa0] sm:$0xf]
        %v2288 = vld [vmem:[%s1869 + $0xa4] sm:$0x1]
        %v2289 = vld [vmem:[%s1869 + $0xa8] sm:$0xf]
        %v2290 = vld [vmem:[%s1869 + $0xac] sm:$0xf]
        %v2291 = vld [vmem:[%s1869 + $0xb0] sm:$0x1]
        %v2292 = vld [vmem:[%s1869 + $0xb4] sm:$0xf]
        %v2293 = vld [vmem:[%s1869 + $0xb8] sm:$0xf]
        %v2294 = vld [vmem:[%s1869 + $0xbc] sm:$0x1]
        %v2296 = vshrl.u32 %v2247, 16
        %v2298 = vrot.slane %v2296, 4
        %v2299 = vshll.u32 %v2247, 16
        %v2301 = vrot.slane %v2299, 5
        %v2302 = vor.u32 %v2298, %v2301
        %v2303 = vrot.slane %v2302, 4
        %v2305 = vshll.u32 %v2248, 16
        %v2307 = vrot.slane %v2305, 5
        %v2308 = vsel %vm679, %v2303, %v2307
        %v2309 = vshrl.u32 %v2248, 16
        %v2311 = vrot.slane %v2309, 4
        %v2312 = vor.u32 %v2311, %v2307
        %v2313 = vrot.slane %v2312, 4
        %v2315 = vshll.u32 %v2249, 16
        %v2317 = vrot.slane %v2315, 5
        %v2318 = vsel %vm679, %v2313, %v2317
        %v2320 = vshrl.u32 %v2250, 16
        %v2322 = vrot.slane %v2320, 4
        %v2323 = vshll.u32 %v2250, 16
        %v2325 = vrot.slane %v2323, 5
        %v2326 = vor.u32 %v2322, %v2325
        %v2327 = vrot.slane %v2326, 4
        %v2329 = vshll.u32 %v2251, 16
        %v2331 = vrot.slane %v2329, 5
        %v2332 = vsel %vm679, %v2327, %v2331
        %v2333 = vshrl.u32 %v2251, 16
        %v2335 = vrot.slane %v2333, 4
        %v2336 = vor.u32 %v2335, %v2331
        %v2337 = vrot.slane %v2336, 4
        %v2339 = vshll.u32 %v2252, 16
        %v2341 = vrot.slane %v2339, 5
        %v2342 = vsel %vm679, %v2337, %v2341
        %v2344 = vshrl.u32 %v2253, 16
        %v2346 = vrot.slane %v2344, 4
        %v2347 = vshll.u32 %v2253, 16
        %v2349 = vrot.slane %v2347, 5
        %v2350 = vor.u32 %v2346, %v2349
        %v2351 = vrot.slane %v2350, 4
        %v2353 = vshll.u32 %v2254, 16
        %v2355 = vrot.slane %v2353, 5
        %v2356 = vsel %vm679, %v2351, %v2355
        %v2357 = vshrl.u32 %v2254, 16
        %v2359 = vrot.slane %v2357, 4
        %v2360 = vor.u32 %v2359, %v2355
        %v2361 = vrot.slane %v2360, 4
        %v2363 = vshll.u32 %v2255, 16
        %v2365 = vrot.slane %v2363, 5
        %v2366 = vsel %vm679, %v2361, %v2365
        %v2368 = vshrl.u32 %v2256, 16
        %v2370 = vrot.slane %v2368, 4
        %v2371 = vshll.u32 %v2256, 16
        %v2373 = vrot.slane %v2371, 5
        %v2374 = vor.u32 %v2370, %v2373
        %v2375 = vrot.slane %v2374, 4
        %v2377 = vshll.u32 %v2257, 16
        %v2379 = vrot.slane %v2377, 5
        %v2380 = vsel %vm679, %v2375, %v2379
        %v2381 = vshrl.u32 %v2257, 16
        %v2383 = vrot.slane %v2381, 4
        %v2384 = vor.u32 %v2383, %v2379
        %v2385 = vrot.slane %v2384, 4
        %v2387 = vshll.u32 %v2258, 16
        %v2389 = vrot.slane %v2387, 5
        %v2390 = vsel %vm679, %v2385, %v2389
        %v2392 = vshrl.u32 %v2259, 16
        %v2394 = vrot.slane %v2392, 4
        %v2395 = vshll.u32 %v2259, 16
        %v2397 = vrot.slane %v2395, 5
        %v2398 = vor.u32 %v2394, %v2397
        %v2399 = vrot.slane %v2398, 4
        %v2401 = vshll.u32 %v2260, 16
        %v2403 = vrot.slane %v2401, 5
        %v2404 = vsel %vm679, %v2399, %v2403
        %v2405 = vshrl.u32 %v2260, 16
        %v2407 = vrot.slane %v2405, 4
        %v2408 = vor.u32 %v2407, %v2403
        %v2409 = vrot.slane %v2408, 4
        %v2411 = vshll.u32 %v2261, 16
        %v2413 = vrot.slane %v2411, 5
        %v2414 = vsel %vm679, %v2409, %v2413
        %v2416 = vshrl.u32 %v2262, 16
        %v2418 = vrot.slane %v2416, 4
        %v2419 = vshll.u32 %v2262, 16
        %v2421 = vrot.slane %v2419, 5
        %v2422 = vor.u32 %v2418, %v2421
        %v2423 = vrot.slane %v2422, 4
        %v2425 = vshll.u32 %v2263, 16
        %v2427 = vrot.slane %v2425, 5
        %v2428 = vsel %vm679, %v2423, %v2427
        %v2429 = vshrl.u32 %v2263, 16
        %v2431 = vrot.slane %v2429, 4
        %v2432 = vor.u32 %v2431, %v2427
        %v2433 = vrot.slane %v2432, 4
        %v2435 = vshll.u32 %v2264, 16
        %v2437 = vrot.slane %v2435, 5
        %v2438 = vsel %vm679, %v2433, %v2437
        %v2440 = vshrl.u32 %v2265, 16
        %v2442 = vrot.slane %v2440, 4
        %v2443 = vshll.u32 %v2265, 16
        %v2445 = vrot.slane %v2443, 5
        %v2446 = vor.u32 %v2442, %v2445
        %v2447 = vrot.slane %v2446, 4
        %v2449 = vshll.u32 %v2266, 16
        %v2451 = vrot.slane %v2449, 5
        %v2452 = vsel %vm679, %v2447, %v2451
        %v2453 = vshrl.u32 %v2266, 16
        %v2455 = vrot.slane %v2453, 4
        %v2456 = vor.u32 %v2455, %v2451
        %v2457 = vrot.slane %v2456, 4
        %v2459 = vshll.u32 %v2267, 16
        %v2461 = vrot.slane %v2459, 5
        %v2462 = vsel %vm679, %v2457, %v2461
        %v2464 = vshrl.u32 %v2268, 16
        %v2466 = vrot.slane %v2464, 4
        %v2467 = vshll.u32 %v2268, 16
        %v2469 = vrot.slane %v2467, 5
        %v2470 = vor.u32 %v2466, %v2469
        %v2471 = vrot.slane %v2470, 4
        %v2473 = vshll.u32 %v2269, 16
        %v2475 = vrot.slane %v2473, 5
        %v2476 = vsel %vm679, %v2471, %v2475
        %v2477 = vshrl.u32 %v2269, 16
        %v2479 = vrot.slane %v2477, 4
        %v2480 = vor.u32 %v2479, %v2475
        %v2481 = vrot.slane %v2480, 4
        %v2483 = vshll.u32 %v2270, 16
        %v2485 = vrot.slane %v2483, 5
        %v2486 = vsel %vm679, %v2481, %v2485
        %v2488 = vshrl.u32 %v2271, 16
        %v2490 = vrot.slane %v2488, 4
        %v2491 = vshll.u32 %v2271, 16
        %v2493 = vrot.slane %v2491, 5
        %v2494 = vor.u32 %v2490, %v2493
        %v2495 = vrot.slane %v2494, 4
        %v2497 = vshll.u32 %v2272, 16
        %v2499 = vrot.slane %v2497, 5
        %v2500 = vsel %vm679, %v2495, %v2499
        %v2501 = vshrl.u32 %v2272, 16
        %v2503 = vrot.slane %v2501, 4
        %v2504 = vor.u32 %v2503, %v2499
        %v2505 = vrot.slane %v2504, 4
        %v2507 = vshll.u32 %v2273, 16
        %v2509 = vrot.slane %v2507, 5
        %v2510 = vsel %vm679, %v2505, %v2509
        %v2512 = vshrl.u32 %v2274, 16
        %v2514 = vrot.slane %v2512, 4
        %v2515 = vshll.u32 %v2274, 16
        %v2517 = vrot.slane %v2515, 5
        %v2518 = vor.u32 %v2514, %v2517
        %v2519 = vrot.slane %v2518, 4
        %v2521 = vshll.u32 %v2275, 16
        %v2523 = vrot.slane %v2521, 5
        %v2524 = vsel %vm679, %v2519, %v2523
        %v2525 = vshrl.u32 %v2275, 16
        %v2527 = vrot.slane %v2525, 4
        %v2528 = vor.u32 %v2527, %v2523
        %v2529 = vrot.slane %v2528, 4
        %v2531 = vshll.u32 %v2276, 16
        %v2533 = vrot.slane %v2531, 5
        %v2534 = vsel %vm679, %v2529, %v2533
        %v2536 = vshrl.u32 %v2277, 16
        %v2538 = vrot.slane %v2536, 4
        %v2539 = vshll.u32 %v2277, 16
        %v2541 = vrot.slane %v2539, 5
        %v2542 = vor.u32 %v2538, %v2541
        %v2543 = vrot.slane %v2542, 4
        %v2545 = vshll.u32 %v2278, 16
        %v2547 = vrot.slane %v2545, 5
        %v2548 = vsel %vm679, %v2543, %v2547
        %v2549 = vshrl.u32 %v2278, 16
        %v2551 = vrot.slane %v2549, 4
        %v2552 = vor.u32 %v2551, %v2547
        %v2553 = vrot.slane %v2552, 4
        %v2555 = vshll.u32 %v2279, 16
        %v2557 = vrot.slane %v2555, 5
        %v2558 = vsel %vm679, %v2553, %v2557
        %v2560 = vshrl.u32 %v2280, 16
        %v2562 = vrot.slane %v2560, 4
        %v2563 = vshll.u32 %v2280, 16
        %v2565 = vrot.slane %v2563, 5
        %v2566 = vor.u32 %v2562, %v2565
        %v2567 = vrot.slane %v2566, 4
        %v2569 = vshll.u32 %v2281, 16
        %v2571 = vrot.slane %v2569, 5
        %v2572 = vsel %vm679, %v2567, %v2571
        %v2573 = vshrl.u32 %v2281, 16
        %v2575 = vrot.slane %v2573, 4
        %v2576 = vor.u32 %v2575, %v2571
        %v2577 = vrot.slane %v2576, 4
        %v2579 = vshll.u32 %v2282, 16
        %v2581 = vrot.slane %v2579, 5
        %v2582 = vsel %vm679, %v2577, %v2581
        %v2584 = vshrl.u32 %v2283, 16
        %v2586 = vrot.slane %v2584, 4
        %v2587 = vshll.u32 %v2283, 16
        %v2589 = vrot.slane %v2587, 5
        %v2590 = vor.u32 %v2586, %v2589
        %v2591 = vrot.slane %v2590, 4
        %v2593 = vshll.u32 %v2284, 16
        %v2595 = vrot.slane %v2593, 5
        %v2596 = vsel %vm679, %v2591, %v2595
        %v2597 = vshrl.u32 %v2284, 16
        %v2599 = vrot.slane %v2597, 4
        %v2600 = vor.u32 %v2599, %v2595
        %v2601 = vrot.slane %v2600, 4
        %v2603 = vshll.u32 %v2285, 16
        %v2605 = vrot.slane %v2603, 5
        %v2606 = vsel %vm679, %v2601, %v2605
        %v2608 = vshrl.u32 %v2286, 16
        %v2610 = vrot.slane %v2608, 4
        %v2611 = vshll.u32 %v2286, 16
        %v2613 = vrot.slane %v2611, 5
        %v2614 = vor.u32 %v2610, %v2613
        %v2615 = vrot.slane %v2614, 4
        %v2617 = vshll.u32 %v2287, 16
        %v2619 = vrot.slane %v2617, 5
        %v2620 = vsel %vm679, %v2615, %v2619
        %v2621 = vshrl.u32 %v2287, 16
        %v2623 = vrot.slane %v2621, 4
        %v2624 = vor.u32 %v2623, %v2619
        %v2625 = vrot.slane %v2624, 4
        %v2627 = vshll.u32 %v2288, 16
        %v2629 = vrot.slane %v2627, 5
        %v2630 = vsel %vm679, %v2625, %v2629
        %v2632 = vshrl.u32 %v2289, 16
        %v2634 = vrot.slane %v2632, 4
        %v2635 = vshll.u32 %v2289, 16
        %v2637 = vrot.slane %v2635, 5
        %v2638 = vor.u32 %v2634, %v2637
        %v2639 = vrot.slane %v2638, 4
        %v2641 = vshll.u32 %v2290, 16
        %v2643 = vrot.slane %v2641, 5
        %v2644 = vsel %vm679, %v2639, %v2643
        %v2645 = vshrl.u32 %v2290, 16
        %v2647 = vrot.slane %v2645, 4
        %v2648 = vor.u32 %v2647, %v2643
        %v2649 = vrot.slane %v2648, 4
        %v2651 = vshll.u32 %v2291, 16
        %v2653 = vrot.slane %v2651, 5
        %v2654 = vsel %vm679, %v2649, %v2653
        %v2656 = vshrl.u32 %v2292, 16
        %v2658 = vrot.slane %v2656, 4
        %v2659 = vshll.u32 %v2292, 16
        %v2661 = vrot.slane %v2659, 5
        %v2662 = vor.u32 %v2658, %v2661
        %v2663 = vrot.slane %v2662, 4
        %v2665 = vshll.u32 %v2293, 16
        %v2667 = vrot.slane %v2665, 5
        %v2668 = vsel %vm679, %v2663, %v2667
        %v2669 = vshrl.u32 %v2293, 16
        %v2671 = vrot.slane %v2669, 4
        %v2672 = vor.u32 %v2671, %v2667
        %v2673 = vrot.slane %v2672, 4
        %v2675 = vshll.u32 %v2294, 16
        %v2677 = vrot.slane %v2675, 5
        %v2678 = vsel %vm679, %v2673, %v2677
        %s2679 = scalar_lea.vmem %s2, 80
        %v2680 = vld [vmem:[%s2679] sm:$0xf]
        %v2681 = vld [vmem:[%s2679 + $0x4] sm:$0xf]
        %v2682 = vld [vmem:[%s2679 + $0x8] sm:$0xf]
        %v2683 = vld [vmem:[%s2679 + $0xc] sm:$0xf]
        %v2684 = vld [vmem:[%s2679 + $0x10] sm:$0xf]
        %v2685 = vunpack.c.l.b16 %v2308
        %v2686 = vunpack.c.l.b16 %v2318
        %v2687 = vunpack.c.l.b16 %v2332
        %v2688 = vunpack.c.l.b16 %v2342
        %v2689 = vunpack.c.l.b16 %v2356
        %v2690 = vunpack.c.l.b16 %v2366
        %v2691 = vunpack.c.l.b16 %v2380
        %v2692 = vunpack.c.l.b16 %v2390
        %v2693 = vunpack.c.l.b16 %v2404
        %v2694 = vunpack.c.l.b16 %v2414
        %v2695 = vunpack.c.l.b16 %v2428
        %v2696 = vunpack.c.l.b16 %v2438
        %v2697 = vunpack.c.l.b16 %v2452
        %v2698 = vunpack.c.l.b16 %v2462
        %v2699 = vunpack.c.l.b16 %v2476
        %v2700 = vunpack.c.l.b16 %v2486
        %v2701 = vunpack.c.l.b16 %v2500
        %v2702 = vunpack.c.l.b16 %v2510
        %v2703 = vunpack.c.l.b16 %v2524
        %v2704 = vunpack.c.l.b16 %v2534
        %v2705 = vunpack.c.l.b16 %v2548
        %v2706 = vunpack.c.l.b16 %v2558
        %v2707 = vunpack.c.l.b16 %v2572
        %v2708 = vunpack.c.l.b16 %v2582
        %v2709 = vunpack.c.l.b16 %v2596
        %v2710 = vunpack.c.l.b16 %v2606
        %v2711 = vunpack.c.l.b16 %v2620
        %v2712 = vunpack.c.l.b16 %v2630
        %v2713 = vunpack.c.l.b16 %v2644
        %v2714 = vunpack.c.l.b16 %v2654
        %v2715 = vunpack.c.l.b16 %v2668
        %v2716 = vunpack.c.l.b16 %v2678
        %v2717 = vpack.c.b16 %v2686, %v2685
        %v2718 = vpack.c.b16 %v2688, %v2687
        %v2719 = vpack.c.b16 %v2690, %v2689
        %v2720 = vpack.c.b16 %v2692, %v2691
        %v2721 = vpack.c.b16 %v2694, %v2693
        %v2722 = vpack.c.b16 %v2696, %v2695
        %v2723 = vpack.c.b16 %v2698, %v2697
        %v2724 = vpack.c.b16 %v2700, %v2699
        %v2725 = vpack.c.b16 %v2702, %v2701
        %v2726 = vpack.c.b16 %v2704, %v2703
        %v2727 = vpack.c.b16 %v2706, %v2705
        %v2728 = vpack.c.b16 %v2708, %v2707
        %v2729 = vpack.c.b16 %v2710, %v2709
        %v2730 = vpack.c.b16 %v2712, %v2711
        %v2731 = vpack.c.b16 %v2714, %v2713
        %v2732 = vpack.c.b16 %v2716, %v2715
        %v2738 = vunpack.c.l.b16 %v2680
        %v2739 = vunpack.c.l.b16 %v2681
        %v2740 = vunpack.c.l.b16 %v2682
        %v2741 = vunpack.c.l.b16 %v2683
        %v2742 = vunpack.c.l.b16 %v2684
        %v2743 = vpack.c.b16 %v2739, %v2738
        %v2744 = vpack.c.b16 %v2741, %v2740
        %v2745 = vpack.c.b16 %v2742, %v2742
        %v2749 = vsel %vm383, %v2717, 0
        %v2752 = vsel %vm383, %v2718, 0
        %v2755 = vsel %vm383, %v2719, 0
        %v2758 = vsel %vm383, %v2720, 0
        %v2761 = vsel %vm383, %v2721, 0
        %v2764 = vsel %vm383, %v2722, 0
        %v2767 = vsel %vm383, %v2723, 0
        %v2770 = vsel %vm383, %v2724, 0
        %v2773 = vsel %vm383, %v2725, 0
        %v2776 = vsel %vm383, %v2726, 0
        %v2779 = vsel %vm383, %v2727, 0
        %v2782 = vsel %vm383, %v2728, 0
        %v2785 = vsel %vm383, %v2729, 0
        %v2788 = vsel %vm383, %v2730, 0
        %v2791 = vsel %vm383, %v2731, 0
        %v2794 = vsel %vm383, %v2732, 0
        %v2797 = vsel %vm432, %v2745, 0
        %2799 = vmatprep.subr.bf16.mxu0 0
        %2800 = vmatpush1.bf16.msra.mxu0 %v2743
        %2801 = vmatprep.subr.bf16.mxu0 0
        %2802 = vmatpush1.bf16.msra.mxu0 %v2744
        %2803 = vmatprep.subr.bf16.mxu0 0
        %2804 = vmatpush1.bf16.msra.mxu0 %v2797
        %2805 = vmatprep.subr.bf16.mxu0 0
        %2806 = vmatpush1.bf16.msra.mxu0 0
        %2807 = vmatprep.subr.bf16.mxu0 0
        %2808 = vmatpush1.bf16.msra.mxu0 0
        %2809 = vmatprep.subr.bf16.mxu0 0
        %2810 = vmatpush1.bf16.msra.mxu0 0
        %2811 = vmatprep.subr.bf16.mxu0 0
        %2812 = vmatpush1.bf16.msra.mxu0 0
        %2813 = vmatprep.subr.bf16.mxu0 0
        %2814 = vmatpush1.bf16.msra.mxu0 0
        %2815 = vmatprep.subr.bf16.mxu0 0
        %2816 = vmatpush1.bf16.msra.mxu0 0
        %2817 = vmatprep.subr.bf16.mxu0 0
        %2818 = vmatpush1.bf16.msra.mxu0 0
        %2819 = vmatprep.subr.bf16.mxu0 0
        %2820 = vmatpush1.bf16.msra.mxu0 0
        %2821 = vmatprep.subr.bf16.mxu0 0
        %2822 = vmatpush1.bf16.msra.mxu0 0
        %2823 = vmatprep.subr.bf16.mxu0 0
        %2824 = vmatpush1.bf16.msra.mxu0 0
        %2825 = vmatprep.subr.bf16.mxu0 0
        %2826 = vmatpush1.bf16.msra.mxu0 0
        %2827 = vmatprep.subr.bf16.mxu0 0
        %2828 = vmatpush1.bf16.msra.mxu0 0
        %2829 = vmatprep.subr.bf16.mxu0 0
        %2830 = vmatpush1.bf16.msra.mxu0 0
        %2831 = vmatprep.mubr.bf16.mxu0 0
        %2832 = vmatmul.mubr.bf16.gmra.mrb[0].mxu0 %v2749
        %v2833 = vpop.f32.mrb[0].mxu0
        %v2834 = vadd.f32 0.0, %v2833
        %v2835 = vpop.f32.mrb[0].mxu0
        %v2836 = vpop.f32.mrb[0].mxu0
        %v2837 = vadd.f32 0.0, %v2836
        %v2838 = vpop.f32.mrb[0].mxu0
        %2839 = vmatprep.mubr.bf16.mxu0 0
        %2840 = vmatmul.mubr.bf16.gmra.mrb[0].mxu0 %v2752
        %v2841 = vpop.f32.mrb[0].mxu0
        %v2842 = vadd.f32 0.0, %v2841
        %v2843 = vpop.f32.mrb[0].mxu0
        %v2844 = vpop.f32.mrb[0].mxu0
        %v2845 = vadd.f32 0.0, %v2844
        %v2846 = vpop.f32.mrb[0].mxu0
        %2847 = vmatprep.mubr.bf16.mxu0 0
        %2848 = vmatmul.mubr.bf16.gmra.mrb[0].mxu0 %v2755
        %v2849 = vpop.f32.mrb[0].mxu0
        %v2850 = vadd.f32 0.0, %v2849
        %v2851 = vpop.f32.mrb[0].mxu0
        %v2852 = vpop.f32.mrb[0].mxu0
        %v2853 = vadd.f32 0.0, %v2852
        %v2854 = vpop.f32.mrb[0].mxu0
        %2855 = vmatprep.mubr.bf16.mxu0 0
        %2856 = vmatmul.mubr.bf16.gmra.mrb[0].mxu0 %v2758
        %v2857 = vpop.f32.mrb[0].mxu0
        %v2858 = vadd.f32 0.0, %v2857
        %v2859 = vpop.f32.mrb[0].mxu0
        %v2860 = vpop.f32.mrb[0].mxu0
        %v2861 = vadd.f32 0.0, %v2860
        %v2862 = vpop.f32.mrb[0].mxu0
        %2863 = vmatprep.mubr.bf16.mxu0 0
        %2864 = vmatmul.mubr.bf16.gmra.mrb[0].mxu0 %v2761
        %v2865 = vpop.f32.mrb[0].mxu0
        %v2866 = vadd.f32 0.0, %v2865
        %v2867 = vpop.f32.mrb[0].mxu0
        %v2868 = vpop.f32.mrb[0].mxu0
        %v2869 = vadd.f32 0.0, %v2868
        %v2870 = vpop.f32.mrb[0].mxu0
        %2871 = vmatprep.mubr.bf16.mxu0 0
        %2872 = vmatmul.mubr.bf16.gmra.mrb[0].mxu0 %v2764
        %v2873 = vpop.f32.mrb[0].mxu0
        %v2874 = vadd.f32 0.0, %v2873
        %v2875 = vpop.f32.mrb[0].mxu0
        %v2876 = vpop.f32.mrb[0].mxu0
        %v2877 = vadd.f32 0.0, %v2876
        %v2878 = vpop.f32.mrb[0].mxu0
        %2879 = vmatprep.mubr.bf16.mxu0 0
        %2880 = vmatmul.mubr.bf16.gmra.mrb[0].mxu0 %v2767
        %v2881 = vpop.f32.mrb[0].mxu0
        %v2882 = vadd.f32 0.0, %v2881
        %v2883 = vpop.f32.mrb[0].mxu0
        %v2884 = vpop.f32.mrb[0].mxu0
        %v2885 = vadd.f32 0.0, %v2884
        %v2886 = vpop.f32.mrb[0].mxu0
        %2887 = vmatprep.mubr.bf16.mxu0 0
        %2888 = vmatmul.mubr.bf16.gmra.mrb[0].mxu0 %v2770
        %v2889 = vpop.f32.mrb[0].mxu0
        %v2890 = vadd.f32 0.0, %v2889
        %v2891 = vpop.f32.mrb[0].mxu0
        %v2892 = vpop.f32.mrb[0].mxu0
        %v2893 = vadd.f32 0.0, %v2892
        %v2894 = vpop.f32.mrb[0].mxu0
        %2895 = vmatprep.mubr.bf16.mxu0 0
        %2896 = vmatmul.mubr.bf16.gmra.mrb[0].mxu0 %v2773
        %v2897 = vpop.f32.mrb[0].mxu0
        %v2898 = vadd.f32 0.0, %v2897
        %v2899 = vpop.f32.mrb[0].mxu0
        %v2900 = vpop.f32.mrb[0].mxu0
        %v2901 = vadd.f32 0.0, %v2900
        %v2902 = vpop.f32.mrb[0].mxu0
        %2903 = vmatprep.mubr.bf16.mxu0 0
        %2904 = vmatmul.mubr.bf16.gmra.mrb[0].mxu0 %v2776
        %v2905 = vpop.f32.mrb[0].mxu0
        %v2906 = vadd.f32 0.0, %v2905
        %v2907 = vpop.f32.mrb[0].mxu0
        %v2908 = vpop.f32.mrb[0].mxu0
        %v2909 = vadd.f32 0.0, %v2908
        %v2910 = vpop.f32.mrb[0].mxu0
        %2911 = vmatprep.mubr.bf16.mxu0 0
        %2912 = vmatmul.mubr.bf16.gmra.mrb[0].mxu0 %v2779
        %v2913 = vpop.f32.mrb[0].mxu0
        %v2914 = vadd.f32 0.0, %v2913
        %v2915 = vpop.f32.mrb[0].mxu0
        %v2916 = vpop.f32.mrb[0].mxu0
        %v2917 = vadd.f32 0.0, %v2916
        %v2918 = vpop.f32.mrb[0].mxu0
        %2919 = vmatprep.mubr.bf16.mxu0 0
        %2920 = vmatmul.mubr.bf16.gmra.mrb[0].mxu0 %v2782
        %v2921 = vpop.f32.mrb[0].mxu0
        %v2922 = vadd.f32 0.0, %v2921
        %v2923 = vpop.f32.mrb[0].mxu0
        %v2924 = vpop.f32.mrb[0].mxu0
        %v2925 = vadd.f32 0.0, %v2924
        %v2926 = vpop.f32.mrb[0].mxu0
        %2927 = vmatprep.mubr.bf16.mxu0 0
        %2928 = vmatmul.mubr.bf16.gmra.mrb[0].mxu0 %v2785
        %v2929 = vpop.f32.mrb[0].mxu0
        %v2930 = vadd.f32 0.0, %v2929
        %v2931 = vpop.f32.mrb[0].mxu0
        %v2932 = vpop.f32.mrb[0].mxu0
        %v2933 = vadd.f32 0.0, %v2932
        %v2934 = vpop.f32.mrb[0].mxu0
        %2935 = vmatprep.mubr.bf16.mxu0 0
        %2936 = vmatmul.mubr.bf16.gmra.mrb[0].mxu0 %v2788
        %v2937 = vpop.f32.mrb[0].mxu0
        %v2938 = vadd.f32 0.0, %v2937
        %v2939 = vpop.f32.mrb[0].mxu0
        %v2940 = vpop.f32.mrb[0].mxu0
        %v2941 = vadd.f32 0.0, %v2940
        %v2942 = vpop.f32.mrb[0].mxu0
        %2943 = vmatprep.mubr.bf16.mxu0 0
        %2944 = vmatmul.mubr.bf16.gmra.mrb[0].mxu0 %v2791
        %v2945 = vpop.f32.mrb[0].mxu0
        %v2946 = vadd.f32 0.0, %v2945
        %v2947 = vpop.f32.mrb[0].mxu0
        %v2948 = vpop.f32.mrb[0].mxu0
        %v2949 = vadd.f32 0.0, %v2948
        %v2950 = vpop.f32.mrb[0].mxu0
        %2951 = vmatprep.mubr.bf16.mxu0 0
        %2952 = vmatmul.mubr.bf16.gmra.mrb[0].mxu0 %v2794
        %v2953 = vpop.f32.mrb[0].mxu0
        %v2954 = vadd.f32 0.0, %v2953
        %v2955 = vpop.f32.mrb[0].mxu0
        %v2956 = vpop.f32.mrb[0].mxu0
        %v2957 = vadd.f32 0.0, %v2956
        %v2958 = vpop.f32.mrb[0].mxu0
        %2959 = vdwg.mxu0
        %v2960 = vadd.f32 %v2215, %v2834
        %v2961 = vadd.f32 %v2216, %v2837
        %v2962 = vadd.f32 %v2217, %v2842
        %v2963 = vadd.f32 %v2218, %v2845
        %v2964 = vadd.f32 %v2219, %v2850
        %v2965 = vadd.f32 %v2220, %v2853
        %v2966 = vadd.f32 %v2221, %v2858
        %v2967 = vadd.f32 %v2222, %v2861
        %v2968 = vadd.f32 %v2223, %v2866
        %v2969 = vadd.f32 %v2224, %v2869
        %v2970 = vadd.f32 %v2225, %v2874
        %v2971 = vadd.f32 %v2226, %v2877
        %v2972 = vadd.f32 %v2227, %v2882
        %v2973 = vadd.f32 %v2228, %v2885
        %v2974 = vadd.f32 %v2229, %v2890
        %v2975 = vadd.f32 %v2230, %v2893
        %v2976 = vadd.f32 %v2231, %v2898
        %v2977 = vadd.f32 %v2232, %v2901
        %v2978 = vadd.f32 %v2233, %v2906
        %v2979 = vadd.f32 %v2234, %v2909
        %v2980 = vadd.f32 %v2235, %v2914
        %v2981 = vadd.f32 %v2236, %v2917
        %v2982 = vadd.f32 %v2237, %v2922
        %v2983 = vadd.f32 %v2238, %v2925
        %v2984 = vadd.f32 %v2239, %v2930
        %v2985 = vadd.f32 %v2240, %v2933
        %v2986 = vadd.f32 %v2241, %v2938
        %v2987 = vadd.f32 %v2242, %v2941
        %v2988 = vadd.f32 %v2243, %v2946
        %v2989 = vadd.f32 %v2244, %v2949
        %v2990 = vadd.f32 %v2245, %v2954
        %v2991 = vadd.f32 %v2246, %v2957
        %v2992 = vld [vmem:[%s1869] sm:$0xe]
        %v2993 = vld [vmem:[%s1869 + $0xc] sm:$0xe]
        %v2994 = vld [vmem:[%s1869 + $0x18] sm:$0xe]
        %v2995 = vld [vmem:[%s1869 + $0x24] sm:$0xe]
        %v2996 = vld [vmem:[%s1869 + $0x30] sm:$0xe]
        %v2997 = vld [vmem:[%s1869 + $0x3c] sm:$0xe]
        %v2998 = vld [vmem:[%s1869 + $0x48] sm:$0xe]
        %v2999 = vld [vmem:[%s1869 + $0x54] sm:$0xe]
        %v3000 = vld [vmem:[%s1869 + $0x60] sm:$0xe]
        %v3001 = vld [vmem:[%s1869 + $0x6c] sm:$0xe]
        %v3002 = vld [vmem:[%s1869 + $0x78] sm:$0xe]
        %v3003 = vld [vmem:[%s1869 + $0x84] sm:$0xe]
        %v3004 = vld [vmem:[%s1869 + $0x90] sm:$0xe]
        %v3005 = vld [vmem:[%s1869 + $0x9c] sm:$0xe]
        %v3006 = vld [vmem:[%s1869 + $0xa8] sm:$0xe]
        %v3007 = vld [vmem:[%s1869 + $0xb4] sm:$0xe]
        %v3056 = vrot.slane %v2992, 5
        %v3057 = vrot.slane %v3056, 4
        %v3058 = vrot.slane %v2248, 5
        %v3059 = vsel %vm1443, %v3057, %v3058
        %v3060 = vrot.slane %v3058, 4
        %v3061 = vrot.slane %v2249, 5
        %v3062 = vsel %vm1443, %v3060, %v3061
        %v3063 = vrot.slane %v2993, 5
        %v3064 = vrot.slane %v3063, 4
        %v3065 = vrot.slane %v2251, 5
        %v3066 = vsel %vm1443, %v3064, %v3065
        %v3067 = vrot.slane %v3065, 4
        %v3068 = vrot.slane %v2252, 5
        %v3069 = vsel %vm1443, %v3067, %v3068
        %v3070 = vrot.slane %v2994, 5
        %v3071 = vrot.slane %v3070, 4
        %v3072 = vrot.slane %v2254, 5
        %v3073 = vsel %vm1443, %v3071, %v3072
        %v3074 = vrot.slane %v3072, 4
        %v3075 = vrot.slane %v2255, 5
        %v3076 = vsel %vm1443, %v3074, %v3075
        %v3077 = vrot.slane %v2995, 5
        %v3078 = vrot.slane %v3077, 4
        %v3079 = vrot.slane %v2257, 5
        %v3080 = vsel %vm1443, %v3078, %v3079
        %v3081 = vrot.slane %v3079, 4
        %v3082 = vrot.slane %v2258, 5
        %v3083 = vsel %vm1443, %v3081, %v3082
        %v3084 = vrot.slane %v2996, 5
        %v3085 = vrot.slane %v3084, 4
        %v3086 = vrot.slane %v2260, 5
        %v3087 = vsel %vm1443, %v3085, %v3086
        %v3088 = vrot.slane %v3086, 4
        %v3089 = vrot.slane %v2261, 5
        %v3090 = vsel %vm1443, %v3088, %v3089
        %v3091 = vrot.slane %v2997, 5
        %v3092 = vrot.slane %v3091, 4
        %v3093 = vrot.slane %v2263, 5
        %v3094 = vsel %vm1443, %v3092, %v3093
        %v3095 = vrot.slane %v3093, 4
        %v3096 = vrot.slane %v2264, 5
        %v3097 = vsel %vm1443, %v3095, %v3096
        %v3098 = vrot.slane %v2998, 5
        %v3099 = vrot.slane %v3098, 4
        %v3100 = vrot.slane %v2266, 5
        %v3101 = vsel %vm1443, %v3099, %v3100
        %v3102 = vrot.slane %v3100, 4
        %v3103 = vrot.slane %v2267, 5
        %v3104 = vsel %vm1443, %v3102, %v3103
        %v3105 = vrot.slane %v2999, 5
        %v3106 = vrot.slane %v3105, 4
        %v3107 = vrot.slane %v2269, 5
        %v3108 = vsel %vm1443, %v3106, %v3107
        %v3109 = vrot.slane %v3107, 4
        %v3110 = vrot.slane %v2270, 5
        %v3111 = vsel %vm1443, %v3109, %v3110
        %v3112 = vrot.slane %v3000, 5
        %v3113 = vrot.slane %v3112, 4
        %v3114 = vrot.slane %v2272, 5
        %v3115 = vsel %vm1443, %v3113, %v3114
        %v3116 = vrot.slane %v3114, 4
        %v3117 = vrot.slane %v2273, 5
        %v3118 = vsel %vm1443, %v3116, %v3117
        %v3119 = vrot.slane %v3001, 5
        %v3120 = vrot.slane %v3119, 4
        %v3121 = vrot.slane %v2275, 5
        %v3122 = vsel %vm1443, %v3120, %v3121
        %v3123 = vrot.slane %v3121, 4
        %v3124 = vrot.slane %v2276, 5
        %v3125 = vsel %vm1443, %v3123, %v3124
        %v3126 = vrot.slane %v3002, 5
        %v3127 = vrot.slane %v3126, 4
        %v3128 = vrot.slane %v2278, 5
        %v3129 = vsel %vm1443, %v3127, %v3128
        %v3130 = vrot.slane %v3128, 4
        %v3131 = vrot.slane %v2279, 5
        %v3132 = vsel %vm1443, %v3130, %v3131
        %v3133 = vrot.slane %v3003, 5
        %v3134 = vrot.slane %v3133, 4
        %v3135 = vrot.slane %v2281, 5
        %v3136 = vsel %vm1443, %v3134, %v3135
        %v3137 = vrot.slane %v3135, 4
        %v3138 = vrot.slane %v2282, 5
        %v3139 = vsel %vm1443, %v3137, %v3138
        %v3140 = vrot.slane %v3004, 5
        %v3141 = vrot.slane %v3140, 4
        %v3142 = vrot.slane %v2284, 5
        %v3143 = vsel %vm1443, %v3141, %v3142
        %v3144 = vrot.slane %v3142, 4
        %v3145 = vrot.slane %v2285, 5
        %v3146 = vsel %vm1443, %v3144, %v3145
        %v3147 = vrot.slane %v3005, 5
        %v3148 = vrot.slane %v3147, 4
        %v3149 = vrot.slane %v2287, 5
        %v3150 = vsel %vm1443, %v3148, %v3149
        %v3151 = vrot.slane %v3149, 4
        %v3152 = vrot.slane %v2288, 5
        %v3153 = vsel %vm1443, %v3151, %v3152
        %v3154 = vrot.slane %v3006, 5
        %v3155 = vrot.slane %v3154, 4
        %v3156 = vrot.slane %v2290, 5
        %v3157 = vsel %vm1443, %v3155, %v3156
        %v3158 = vrot.slane %v3156, 4
        %v3159 = vrot.slane %v2291, 5
        %v3160 = vsel %vm1443, %v3158, %v3159
        %v3161 = vrot.slane %v3007, 5
        %v3162 = vrot.slane %v3161, 4
        %v3163 = vrot.slane %v2293, 5
        %v3164 = vsel %vm1443, %v3162, %v3163
        %v3165 = vrot.slane %v3163, 4
        %v3166 = vrot.slane %v2294, 5
        %v3167 = vsel %vm1443, %v3165, %v3166
        %s3168 = scalar_lea.vmem %s2, 100
        %v3169 = vld [vmem:[%s3168] sm:$0xf]
        %v3170 = vld [vmem:[%s3168 + $0x4] sm:$0xf]
        %v3171 = vld [vmem:[%s3168 + $0x8] sm:$0xf]
        %v3172 = vld [vmem:[%s3168 + $0xc] sm:$0xf]
        %v3173 = vld [vmem:[%s3168 + $0x10] sm:$0xf]
        %v3174 = vunpack.c.l.b16 %v3059
        %v3175 = vunpack.c.l.b16 %v3062
        %v3176 = vunpack.c.l.b16 %v3066
        %v3177 = vunpack.c.l.b16 %v3069
        %v3178 = vunpack.c.l.b16 %v3073
        %v3179 = vunpack.c.l.b16 %v3076
        %v3180 = vunpack.c.l.b16 %v3080
        %v3181 = vunpack.c.l.b16 %v3083
        %v3182 = vunpack.c.l.b16 %v3087
        %v3183 = vunpack.c.l.b16 %v3090
        %v3184 = vunpack.c.l.b16 %v3094
        %v3185 = vunpack.c.l.b16 %v3097
        %v3186 = vunpack.c.l.b16 %v3101
        %v3187 = vunpack.c.l.b16 %v3104
        %v3188 = vunpack.c.l.b16 %v3108
        %v3189 = vunpack.c.l.b16 %v3111
        %v3190 = vunpack.c.l.b16 %v3115
        %v3191 = vunpack.c.l.b16 %v3118
        %v3192 = vunpack.c.l.b16 %v3122
        %v3193 = vunpack.c.l.b16 %v3125
        %v3194 = vunpack.c.l.b16 %v3129
        %v3195 = vunpack.c.l.b16 %v3132
        %v3196 = vunpack.c.l.b16 %v3136
        %v3197 = vunpack.c.l.b16 %v3139
        %v3198 = vunpack.c.l.b16 %v3143
        %v3199 = vunpack.c.l.b16 %v3146
        %v3200 = vunpack.c.l.b16 %v3150
        %v3201 = vunpack.c.l.b16 %v3153
        %v3202 = vunpack.c.l.b16 %v3157
        %v3203 = vunpack.c.l.b16 %v3160
        %v3204 = vunpack.c.l.b16 %v3164
        %v3205 = vunpack.c.l.b16 %v3167
        %v3206 = vpack.c.b16 %v3175, %v3174
        %v3207 = vpack.c.b16 %v3177, %v3176
        %v3208 = vpack.c.b16 %v3179, %v3178
        %v3209 = vpack.c.b16 %v3181, %v3180
        %v3210 = vpack.c.b16 %v3183, %v3182
        %v3211 = vpack.c.b16 %v3185, %v3184
        %v3212 = vpack.c.b16 %v3187, %v3186
        %v3213 = vpack.c.b16 %v3189, %v3188
        %v3214 = vpack.c.b16 %v3191, %v3190
        %v3215 = vpack.c.b16 %v3193, %v3192
        %v3216 = vpack.c.b16 %v3195, %v3194
        %v3217 = vpack.c.b16 %v3197, %v3196
        %v3218 = vpack.c.b16 %v3199, %v3198
        %v3219 = vpack.c.b16 %v3201, %v3200
        %v3220 = vpack.c.b16 %v3203, %v3202
        %v3221 = vpack.c.b16 %v3205, %v3204
        %v3227 = vunpack.c.l.b16 %v3169
        %v3228 = vunpack.c.l.b16 %v3170
        %v3229 = vunpack.c.l.b16 %v3171
        %v3230 = vunpack.c.l.b16 %v3172
        %v3231 = vunpack.c.l.b16 %v3173
        %v3232 = vpack.c.b16 %v3228, %v3227
        %v3233 = vpack.c.b16 %v3230, %v3229
        %v3234 = vpack.c.b16 %v3231, %v3231
        %v3238 = vsel %vm383, %v3206, 0
        %v3241 = vsel %vm383, %v3207, 0
        %v3244 = vsel %vm383, %v3208, 0
        %v3247 = vsel %vm383, %v3209, 0
        %v3250 = vsel %vm383, %v3210, 0
        %v3253 = vsel %vm383, %v3211, 0
        %v3256 = vsel %vm383, %v3212, 0
        %v3259 = vsel %vm383, %v3213, 0
        %v3262 = vsel %vm383, %v3214, 0
        %v3265 = vsel %vm383, %v3215, 0
        %v3268 = vsel %vm383, %v3216, 0
        %v3271 = vsel %vm383, %v3217, 0
        %v3274 = vsel %vm383, %v3218, 0
        %v3277 = vsel %vm383, %v3219, 0
        %v3280 = vsel %vm383, %v3220, 0
        %v3283 = vsel %vm383, %v3221, 0
        %v3286 = vsel %vm432, %v3234, 0
        %3288 = vmatprep.subr.bf16.mxu0 0
        %3289 = vmatpush1.bf16.msra.mxu0 %v3232
        %3290 = vmatprep.subr.bf16.mxu0 0
        %3291 = vmatpush1.bf16.msra.mxu0 %v3233
        %3292 = vmatprep.subr.bf16.mxu0 0
        %3293 = vmatpush1.bf16.msra.mxu0 %v3286
        %3294 = vmatprep.subr.bf16.mxu0 0
        %3295 = vmatpush1.bf16.msra.mxu0 0
        %3296 = vmatprep.subr.bf16.mxu0 0
        %3297 = vmatpush1.bf16.msra.mxu0 0
        %3298 = vmatprep.subr.bf16.mxu0 0
        %3299 = vmatpush1.bf16.msra.mxu0 0
        %3300 = vmatprep.subr.bf16.mxu0 0
        %3301 = vmatpush1.bf16.msra.mxu0 0
        %3302 = vmatprep.subr.bf16.mxu0 0
        %3303 = vmatpush1.bf16.msra.mxu0 0
        %3304 = vmatprep.subr.bf16.mxu0 0
        %3305 = vmatpush1.bf16.msra.mxu0 0
        %3306 = vmatprep.subr.bf16.mxu0 0
        %3307 = vmatpush1.bf16.msra.mxu0 0
        %3308 = vmatprep.subr.bf16.mxu0 0
        %3309 = vmatpush1.bf16.msra.mxu0 0
        %3310 = vmatprep.subr.bf16.mxu0 0
        %3311 = vmatpush1.bf16.msra.mxu0 0
        %3312 = vmatprep.subr.bf16.mxu0 0
        %3313 = vmatpush1.bf16.msra.mxu0 0
        %3314 = vmatprep.subr.bf16.mxu0 0
        %3315 = vmatpush1.bf16.msra.mxu0 0
        %3316 = vmatprep.subr.bf16.mxu0 0
        %3317 = vmatpush1.bf16.msra.mxu0 0
        %3318 = vmatprep.subr.bf16.mxu0 0
        %3319 = vmatpush1.bf16.msra.mxu0 0
        %3320 = vmatprep.mubr.bf16.mxu0 0
        %3321 = vmatmul.mubr.bf16.gmra.mrb[0].mxu0 %v3238
        %v3322 = vpop.f32.mrb[0].mxu0
        %v3323 = vadd.f32 0.0, %v3322
        %v3324 = vpop.f32.mrb[0].mxu0
        %v3325 = vpop.f32.mrb[0].mxu0
        %v3326 = vadd.f32 0.0, %v3325
        %v3327 = vpop.f32.mrb[0].mxu0
        %3328 = vmatprep.mubr.bf16.mxu0 0
        %3329 = vmatmul.mubr.bf16.gmra.mrb[0].mxu0 %v3241
        %v3330 = vpop.f32.mrb[0].mxu0
        %v3331 = vadd.f32 0.0, %v3330
        %v3332 = vpop.f32.mrb[0].mxu0
        %v3333 = vpop.f32.mrb[0].mxu0
        %v3334 = vadd.f32 0.0, %v3333
        %v3335 = vpop.f32.mrb[0].mxu0
        %3336 = vmatprep.mubr.bf16.mxu0 0
        %3337 = vmatmul.mubr.bf16.gmra.mrb[0].mxu0 %v3244
        %v3338 = vpop.f32.mrb[0].mxu0
        %v3339 = vadd.f32 0.0, %v3338
        %v3340 = vpop.f32.mrb[0].mxu0
        %v3341 = vpop.f32.mrb[0].mxu0
        %v3342 = vadd.f32 0.0, %v3341
        %v3343 = vpop.f32.mrb[0].mxu0
        %3344 = vmatprep.mubr.bf16.mxu0 0
        %3345 = vmatmul.mubr.bf16.gmra.mrb[0].mxu0 %v3247
        %v3346 = vpop.f32.mrb[0].mxu0
        %v3347 = vadd.f32 0.0, %v3346
        %v3348 = vpop.f32.mrb[0].mxu0
        %v3349 = vpop.f32.mrb[0].mxu0
        %v3350 = vadd.f32 0.0, %v3349
        %v3351 = vpop.f32.mrb[0].mxu0
        %3352 = vmatprep.mubr.bf16.mxu0 0
        %3353 = vmatmul.mubr.bf16.gmra.mrb[0].mxu0 %v3250
        %v3354 = vpop.f32.mrb[0].mxu0
        %v3355 = vadd.f32 0.0, %v3354
        %v3356 = vpop.f32.mrb[0].mxu0
        %v3357 = vpop.f32.mrb[0].mxu0
        %v3358 = vadd.f32 0.0, %v3357
        %v3359 = vpop.f32.mrb[0].mxu0
        %3360 = vmatprep.mubr.bf16.mxu0 0
        %3361 = vmatmul.mubr.bf16.gmra.mrb[0].mxu0 %v3253
        %v3362 = vpop.f32.mrb[0].mxu0
        %v3363 = vadd.f32 0.0, %v3362
        %v3364 = vpop.f32.mrb[0].mxu0
        %v3365 = vpop.f32.mrb[0].mxu0
        %v3366 = vadd.f32 0.0, %v3365
        %v3367 = vpop.f32.mrb[0].mxu0
        %3368 = vmatprep.mubr.bf16.mxu0 0
        %3369 = vmatmul.mubr.bf16.gmra.mrb[0].mxu0 %v3256
        %v3370 = vpop.f32.mrb[0].mxu0
        %v3371 = vadd.f32 0.0, %v3370
        %v3372 = vpop.f32.mrb[0].mxu0
        %v3373 = vpop.f32.mrb[0].mxu0
        %v3374 = vadd.f32 0.0, %v3373
        %v3375 = vpop.f32.mrb[0].mxu0
        %3376 = vmatprep.mubr.bf16.mxu0 0
        %3377 = vmatmul.mubr.bf16.gmra.mrb[0].mxu0 %v3259
        %v3378 = vpop.f32.mrb[0].mxu0
        %v3379 = vadd.f32 0.0, %v3378
        %v3380 = vpop.f32.mrb[0].mxu0
        %v3381 = vpop.f32.mrb[0].mxu0
        %v3382 = vadd.f32 0.0, %v3381
        %v3383 = vpop.f32.mrb[0].mxu0
        %3384 = vmatprep.mubr.bf16.mxu0 0
        %3385 = vmatmul.mubr.bf16.gmra.mrb[0].mxu0 %v3262
        %v3386 = vpop.f32.mrb[0].mxu0
        %v3387 = vadd.f32 0.0, %v3386
        %v3388 = vpop.f32.mrb[0].mxu0
        %v3389 = vpop.f32.mrb[0].mxu0
        %v3390 = vadd.f32 0.0, %v3389
        %v3391 = vpop.f32.mrb[0].mxu0
        %3392 = vmatprep.mubr.bf16.mxu0 0
        %3393 = vmatmul.mubr.bf16.gmra.mrb[0].mxu0 %v3265
        %v3394 = vpop.f32.mrb[0].mxu0
        %v3395 = vadd.f32 0.0, %v3394
        %v3396 = vpop.f32.mrb[0].mxu0
        %v3397 = vpop.f32.mrb[0].mxu0
        %v3398 = vadd.f32 0.0, %v3397
        %v3399 = vpop.f32.mrb[0].mxu0
        %3400 = vmatprep.mubr.bf16.mxu0 0
        %3401 = vmatmul.mubr.bf16.gmra.mrb[0].mxu0 %v3268
        %v3402 = vpop.f32.mrb[0].mxu0
        %v3403 = vadd.f32 0.0, %v3402
        %v3404 = vpop.f32.mrb[0].mxu0
        %v3405 = vpop.f32.mrb[0].mxu0
        %v3406 = vadd.f32 0.0, %v3405
        %v3407 = vpop.f32.mrb[0].mxu0
        %3408 = vmatprep.mubr.bf16.mxu0 0
        %3409 = vmatmul.mubr.bf16.gmra.mrb[0].mxu0 %v3271
        %v3410 = vpop.f32.mrb[0].mxu0
        %v3411 = vadd.f32 0.0, %v3410
        %v3412 = vpop.f32.mrb[0].mxu0
        %v3413 = vpop.f32.mrb[0].mxu0
        %v3414 = vadd.f32 0.0, %v3413
        %v3415 = vpop.f32.mrb[0].mxu0
        %3416 = vmatprep.mubr.bf16.mxu0 0
        %3417 = vmatmul.mubr.bf16.gmra.mrb[0].mxu0 %v3274
        %v3418 = vpop.f32.mrb[0].mxu0
        %v3419 = vadd.f32 0.0, %v3418
        %v3420 = vpop.f32.mrb[0].mxu0
        %v3421 = vpop.f32.mrb[0].mxu0
        %v3422 = vadd.f32 0.0, %v3421
        %v3423 = vpop.f32.mrb[0].mxu0
        %3424 = vmatprep.mubr.bf16.mxu0 0
        %3425 = vmatmul.mubr.bf16.gmra.mrb[0].mxu0 %v3277
        %v3426 = vpop.f32.mrb[0].mxu0
        %v3427 = vadd.f32 0.0, %v3426
        %v3428 = vpop.f32.mrb[0].mxu0
        %v3429 = vpop.f32.mrb[0].mxu0
        %v3430 = vadd.f32 0.0, %v3429
        %v3431 = vpop.f32.mrb[0].mxu0
        %3432 = vmatprep.mubr.bf16.mxu0 0
        %3433 = vmatmul.mubr.bf16.gmra.mrb[0].mxu0 %v3280
        %v3434 = vpop.f32.mrb[0].mxu0
        %v3435 = vadd.f32 0.0, %v3434
        %v3436 = vpop.f32.mrb[0].mxu0
        %v3437 = vpop.f32.mrb[0].mxu0
        %v3438 = vadd.f32 0.0, %v3437
        %v3439 = vpop.f32.mrb[0].mxu0
        %3440 = vmatprep.mubr.bf16.mxu0 0
        %3441 = vmatmul.mubr.bf16.gmra.mrb[0].mxu0 %v3283
        %v3442 = vpop.f32.mrb[0].mxu0
        %v3443 = vadd.f32 0.0, %v3442
        %v3444 = vpop.f32.mrb[0].mxu0
        %v3445 = vpop.f32.mrb[0].mxu0
        %v3446 = vadd.f32 0.0, %v3445
        %v3447 = vpop.f32.mrb[0].mxu0
        %3448 = vdwg.mxu0
        %v3449 = vadd.f32 %v2960, %v3323
        %v3450 = vadd.f32 %v2961, %v3326
        %v3451 = vadd.f32 %v2962, %v3331
        %v3452 = vadd.f32 %v2963, %v3334
        %v3453 = vadd.f32 %v2964, %v3339
        %v3454 = vadd.f32 %v2965, %v3342
        %v3455 = vadd.f32 %v2966, %v3347
        %v3456 = vadd.f32 %v2967, %v3350
        %v3457 = vadd.f32 %v2968, %v3355
        %v3458 = vadd.f32 %v2969, %v3358
        %v3459 = vadd.f32 %v2970, %v3363
        %v3460 = vadd.f32 %v2971, %v3366
        %v3461 = vadd.f32 %v2972, %v3371
        %v3462 = vadd.f32 %v2973, %v3374
        %v3463 = vadd.f32 %v2974, %v3379
        %v3464 = vadd.f32 %v2975, %v3382
        %v3465 = vadd.f32 %v2976, %v3387
        %v3466 = vadd.f32 %v2977, %v3390
        %v3467 = vadd.f32 %v2978, %v3395
        %v3468 = vadd.f32 %v2979, %v3398
        %v3469 = vadd.f32 %v2980, %v3403
        %v3470 = vadd.f32 %v2981, %v3406
        %v3471 = vadd.f32 %v2982, %v3411
        %v3472 = vadd.f32 %v2983, %v3414
        %v3473 = vadd.f32 %v2984, %v3419
        %v3474 = vadd.f32 %v2985, %v3422
        %v3475 = vadd.f32 %v2986, %v3427
        %v3476 = vadd.f32 %v2987, %v3430
        %v3477 = vadd.f32 %v2988, %v3435
        %v3478 = vadd.f32 %v2989, %v3438
        %v3479 = vadd.f32 %v2990, %v3443
        %v3480 = vadd.f32 %v2991, %v3446
        %s3481 = scalar_lea.vmem %s237, 24
        %v3482 = vld [vmem:[%s3481] sm:$0xf]
        %v3483 = vld [vmem:[%s3481 + $0x4] sm:$0xf]
        %v3484 = vld [vmem:[%s3481 + $0xc] sm:$0xf]
        %v3485 = vld [vmem:[%s3481 + $0x10] sm:$0xf]
        %v3486 = vld [vmem:[%s3481 + $0x18] sm:$0xf]
        %v3487 = vld [vmem:[%s3481 + $0x1c] sm:$0xf]
        %v3488 = vld [vmem:[%s3481 + $0x24] sm:$0xf]
        %v3489 = vld [vmem:[%s3481 + $0x28] sm:$0xf]
        %v3490 = vld [vmem:[%s3481 + $0x30] sm:$0xf]
        %v3491 = vld [vmem:[%s3481 + $0x34] sm:$0xf]
        %v3492 = vld [vmem:[%s3481 + $0x3c] sm:$0xf]
        %v3493 = vld [vmem:[%s3481 + $0x40] sm:$0xf]
        %v3494 = vld [vmem:[%s3481 + $0x48] sm:$0xf]
        %v3495 = vld [vmem:[%s3481 + $0x4c] sm:$0xf]
        %v3496 = vld [vmem:[%s3481 + $0x54] sm:$0xf]
        %v3497 = vld [vmem:[%s3481 + $0x58] sm:$0xf]
        %v3498 = vld [vmem:[%s3481 + $0x60] sm:$0xf]
        %v3499 = vld [vmem:[%s3481 + $0x64] sm:$0xf]
        %v3500 = vld [vmem:[%s3481 + $0x6c] sm:$0xf]
        %v3501 = vld [vmem:[%s3481 + $0x70] sm:$0xf]
        %v3502 = vld [vmem:[%s3481 + $0x78] sm:$0xf]
        %v3503 = vld [vmem:[%s3481 + $0x7c] sm:$0xf]
        %v3504 = vld [vmem:[%s3481 + $0x84] sm:$0xf]
        %v3505 = vld [vmem:[%s3481 + $0x88] sm:$0xf]
        %v3506 = vld [vmem:[%s3481 + $0x90] sm:$0xf]
        %v3507 = vld [vmem:[%s3481 + $0x94] sm:$0xf]
        %v3508 = vld [vmem:[%s3481 + $0x9c] sm:$0xf]
        %v3509 = vld [vmem:[%s3481 + $0xa0] sm:$0xf]
        %v3510 = vld [vmem:[%s3481 + $0xa8] sm:$0xf]
        %v3511 = vld [vmem:[%s3481 + $0xac] sm:$0xf]
        %v3512 = vld [vmem:[%s3481 + $0xb4] sm:$0xf]
        %v3513 = vld [vmem:[%s3481 + $0xb8] sm:$0xf]
        %s3514 = scalar_lea.vmem %s2, 120
        %v3515 = vld [vmem:[%s3514] sm:$0xf]
        %v3516 = vld [vmem:[%s3514 + $0x4] sm:$0xf]
        %v3517 = vld [vmem:[%s3514 + $0x8] sm:$0xf]
        %v3518 = vld [vmem:[%s3514 + $0xc] sm:$0xf]
        %v3519 = vld [vmem:[%s3514 + $0x10] sm:$0xf]
        %v3552 = vunpack.c.l.b16 %v3482
        %v3553 = vunpack.c.l.b16 %v3483
        %v3554 = vunpack.c.l.b16 %v3484
        %v3555 = vunpack.c.l.b16 %v3485
        %v3556 = vunpack.c.l.b16 %v3486
        %v3557 = vunpack.c.l.b16 %v3487
        %v3558 = vunpack.c.l.b16 %v3488
        %v3559 = vunpack.c.l.b16 %v3489
        %v3560 = vunpack.c.l.b16 %v3490
        %v3561 = vunpack.c.l.b16 %v3491
        %v3562 = vunpack.c.l.b16 %v3492
        %v3563 = vunpack.c.l.b16 %v3493
        %v3564 = vunpack.c.l.b16 %v3494
        %v3565 = vunpack.c.l.b16 %v3495
        %v3566 = vunpack.c.l.b16 %v3496
        %v3567 = vunpack.c.l.b16 %v3497
        %v3568 = vunpack.c.l.b16 %v3498
        %v3569 = vunpack.c.l.b16 %v3499
        %v3570 = vunpack.c.l.b16 %v3500
        %v3571 = vunpack.c.l.b16 %v3501
        %v3572 = vunpack.c.l.b16 %v3502
        %v3573 = vunpack.c.l.b16 %v3503
        %v3574 = vunpack.c.l.b16 %v3504
        %v3575 = vunpack.c.l.b16 %v3505
        %v3576 = vunpack.c.l.b16 %v3506
        %v3577 = vunpack.c.l.b16 %v3507
        %v3578 = vunpack.c.l.b16 %v3508
        %v3579 = vunpack.c.l.b16 %v3509
        %v3580 = vunpack.c.l.b16 %v3510
        %v3581 = vunpack.c.l.b16 %v3511
        %v3582 = vunpack.c.l.b16 %v3512
        %v3583 = vunpack.c.l.b16 %v3513
        %v3584 = vpack.c.b16 %v3553, %v3552
        %v3585 = vpack.c.b16 %v3555, %v3554
        %v3586 = vpack.c.b16 %v3557, %v3556
        %v3587 = vpack.c.b16 %v3559, %v3558
        %v3588 = vpack.c.b16 %v3561, %v3560
        %v3589 = vpack.c.b16 %v3563, %v3562
        %v3590 = vpack.c.b16 %v3565, %v3564
        %v3591 = vpack.c.b16 %v3567, %v3566
        %v3592 = vpack.c.b16 %v3569, %v3568
        %v3593 = vpack.c.b16 %v3571, %v3570
        %v3594 = vpack.c.b16 %v3573, %v3572
        %v3595 = vpack.c.b16 %v3575, %v3574
        %v3596 = vpack.c.b16 %v3577, %v3576
        %v3597 = vpack.c.b16 %v3579, %v3578
        %v3598 = vpack.c.b16 %v3581, %v3580
        %v3599 = vpack.c.b16 %v3583, %v3582
        %v3605 = vunpack.c.l.b16 %v3515
        %v3606 = vunpack.c.l.b16 %v3516
        %v3607 = vunpack.c.l.b16 %v3517
        %v3608 = vunpack.c.l.b16 %v3518
        %v3609 = vunpack.c.l.b16 %v3519
        %v3610 = vpack.c.b16 %v3606, %v3605
        %v3611 = vpack.c.b16 %v3608, %v3607
        %v3612 = vpack.c.b16 %v3609, %v3609
        %v3616 = vsel %vm383, %v3584, 0
        %v3619 = vsel %vm383, %v3585, 0
        %v3622 = vsel %vm383, %v3586, 0
        %v3625 = vsel %vm383, %v3587, 0
        %v3628 = vsel %vm383, %v3588, 0
        %v3631 = vsel %vm383, %v3589, 0
        %v3634 = vsel %vm383, %v3590, 0
        %v3637 = vsel %vm383, %v3591, 0
        %v3640 = vsel %vm383, %v3592, 0
        %v3643 = vsel %vm383, %v3593, 0
        %v3646 = vsel %vm383, %v3594, 0
        %v3649 = vsel %vm383, %v3595, 0
        %v3652 = vsel %vm383, %v3596, 0
        %v3655 = vsel %vm383, %v3597, 0
        %v3658 = vsel %vm383, %v3598, 0
        %v3661 = vsel %vm383, %v3599, 0
        %v3664 = vsel %vm432, %v3612, 0
        %3666 = vmatprep.subr.bf16.mxu0 0
        %3667 = vmatpush1.bf16.msra.mxu0 %v3610
        %3668 = vmatprep.subr.bf16.mxu0 0
        %3669 = vmatpush1.bf16.msra.mxu0 %v3611
        %3670 = vmatprep.subr.bf16.mxu0 0
        %3671 = vmatpush1.bf16.msra.mxu0 %v3664
        %3672 = vmatprep.subr.bf16.mxu0 0
        %3673 = vmatpush1.bf16.msra.mxu0 0
        %3674 = vmatprep.subr.bf16.mxu0 0
        %3675 = vmatpush1.bf16.msra.mxu0 0
        %3676 = vmatprep.subr.bf16.mxu0 0
        %3677 = vmatpush1.bf16.msra.mxu0 0
        %3678 = vmatprep.subr.bf16.mxu0 0
        %3679 = vmatpush1.bf16.msra.mxu0 0
        %3680 = vmatprep.subr.bf16.mxu0 0
        %3681 = vmatpush1.bf16.msra.mxu0 0
        %3682 = vmatprep.subr.bf16.mxu0 0
        %3683 = vmatpush1.bf16.msra.mxu0 0
        %3684 = vmatprep.subr.bf16.mxu0 0
        %3685 = vmatpush1.bf16.msra.mxu0 0
        %3686 = vmatprep.subr.bf16.mxu0 0
        %3687 = vmatpush1.bf16.msra.mxu0 0
        %3688 = vmatprep.subr.bf16.mxu0 0
        %3689 = vmatpush1.bf16.msra.mxu0 0
        %3690 = vmatprep.subr.bf16.mxu0 0
        %3691 = vmatpush1.bf16.msra.mxu0 0
        %3692 = vmatprep.subr.bf16.mxu0 0
        %3693 = vmatpush1.bf16.msra.mxu0 0
        %3694 = vmatprep.subr.bf16.mxu0 0
        %3695 = vmatpush1.bf16.msra.mxu0 0
        %3696 = vmatprep.subr.bf16.mxu0 0
        %3697 = vmatpush1.bf16.msra.mxu0 0
        %3698 = vmatprep.mubr.bf16.mxu0 0
        %3699 = vmatmul.mubr.bf16.gmra.mrb[0].mxu0 %v3616
        %v3700 = vpop.f32.mrb[0].mxu0
        %v3701 = vadd.f32 0.0, %v3700
        %v3702 = vpop.f32.mrb[0].mxu0
        %v3703 = vpop.f32.mrb[0].mxu0
        %v3704 = vadd.f32 0.0, %v3703
        %v3705 = vpop.f32.mrb[0].mxu0
        %3706 = vmatprep.mubr.bf16.mxu0 0
        %3707 = vmatmul.mubr.bf16.gmra.mrb[0].mxu0 %v3619
        %v3708 = vpop.f32.mrb[0].mxu0
        %v3709 = vadd.f32 0.0, %v3708
        %v3710 = vpop.f32.mrb[0].mxu0
        %v3711 = vpop.f32.mrb[0].mxu0
        %v3712 = vadd.f32 0.0, %v3711
        %v3713 = vpop.f32.mrb[0].mxu0
        %3714 = vmatprep.mubr.bf16.mxu0 0
        %3715 = vmatmul.mubr.bf16.gmra.mrb[0].mxu0 %v3622
        %v3716 = vpop.f32.mrb[0].mxu0
        %v3717 = vadd.f32 0.0, %v3716
        %v3718 = vpop.f32.mrb[0].mxu0
        %v3719 = vpop.f32.mrb[0].mxu0
        %v3720 = vadd.f32 0.0, %v3719
        %v3721 = vpop.f32.mrb[0].mxu0
        %3722 = vmatprep.mubr.bf16.mxu0 0
        %3723 = vmatmul.mubr.bf16.gmra.mrb[0].mxu0 %v3625
        %v3724 = vpop.f32.mrb[0].mxu0
        %v3725 = vadd.f32 0.0, %v3724
        %v3726 = vpop.f32.mrb[0].mxu0
        %v3727 = vpop.f32.mrb[0].mxu0
        %v3728 = vadd.f32 0.0, %v3727
        %v3729 = vpop.f32.mrb[0].mxu0
        %3730 = vmatprep.mubr.bf16.mxu0 0
        %3731 = vmatmul.mubr.bf16.gmra.mrb[0].mxu0 %v3628
        %v3732 = vpop.f32.mrb[0].mxu0
        %v3733 = vadd.f32 0.0, %v3732
        %v3734 = vpop.f32.mrb[0].mxu0
        %v3735 = vpop.f32.mrb[0].mxu0
        %v3736 = vadd.f32 0.0, %v3735
        %v3737 = vpop.f32.mrb[0].mxu0
        %3738 = vmatprep.mubr.bf16.mxu0 0
        %3739 = vmatmul.mubr.bf16.gmra.mrb[0].mxu0 %v3631
        %v3740 = vpop.f32.mrb[0].mxu0
        %v3741 = vadd.f32 0.0, %v3740
        %v3742 = vpop.f32.mrb[0].mxu0
        %v3743 = vpop.f32.mrb[0].mxu0
        %v3744 = vadd.f32 0.0, %v3743
        %v3745 = vpop.f32.mrb[0].mxu0
        %3746 = vmatprep.mubr.bf16.mxu0 0
        %3747 = vmatmul.mubr.bf16.gmra.mrb[0].mxu0 %v3634
        %v3748 = vpop.f32.mrb[0].mxu0
        %v3749 = vadd.f32 0.0, %v3748
        %v3750 = vpop.f32.mrb[0].mxu0
        %v3751 = vpop.f32.mrb[0].mxu0
        %v3752 = vadd.f32 0.0, %v3751
        %v3753 = vpop.f32.mrb[0].mxu0
        %3754 = vmatprep.mubr.bf16.mxu0 0
        %3755 = vmatmul.mubr.bf16.gmra.mrb[0].mxu0 %v3637
        %v3756 = vpop.f32.mrb[0].mxu0
        %v3757 = vadd.f32 0.0, %v3756
        %v3758 = vpop.f32.mrb[0].mxu0
        %v3759 = vpop.f32.mrb[0].mxu0
        %v3760 = vadd.f32 0.0, %v3759
        %v3761 = vpop.f32.mrb[0].mxu0
        %3762 = vmatprep.mubr.bf16.mxu0 0
        %3763 = vmatmul.mubr.bf16.gmra.mrb[0].mxu0 %v3640
        %v3764 = vpop.f32.mrb[0].mxu0
        %v3765 = vadd.f32 0.0, %v3764
        %v3766 = vpop.f32.mrb[0].mxu0
        %v3767 = vpop.f32.mrb[0].mxu0
        %v3768 = vadd.f32 0.0, %v3767
        %v3769 = vpop.f32.mrb[0].mxu0
        %3770 = vmatprep.mubr.bf16.mxu0 0
        %3771 = vmatmul.mubr.bf16.gmra.mrb[0].mxu0 %v3643
        %v3772 = vpop.f32.mrb[0].mxu0
        %v3773 = vadd.f32 0.0, %v3772
        %v3774 = vpop.f32.mrb[0].mxu0
        %v3775 = vpop.f32.mrb[0].mxu0
        %v3776 = vadd.f32 0.0, %v3775
        %v3777 = vpop.f32.mrb[0].mxu0
        %3778 = vmatprep.mubr.bf16.mxu0 0
        %3779 = vmatmul.mubr.bf16.gmra.mrb[0].mxu0 %v3646
        %v3780 = vpop.f32.mrb[0].mxu0
        %v3781 = vadd.f32 0.0, %v3780
        %v3782 = vpop.f32.mrb[0].mxu0
        %v3783 = vpop.f32.mrb[0].mxu0
        %v3784 = vadd.f32 0.0, %v3783
        %v3785 = vpop.f32.mrb[0].mxu0
        %3786 = vmatprep.mubr.bf16.mxu0 0
        %3787 = vmatmul.mubr.bf16.gmra.mrb[0].mxu0 %v3649
        %v3788 = vpop.f32.mrb[0].mxu0
        %v3789 = vadd.f32 0.0, %v3788
        %v3790 = vpop.f32.mrb[0].mxu0
        %v3791 = vpop.f32.mrb[0].mxu0
        %v3792 = vadd.f32 0.0, %v3791
        %v3793 = vpop.f32.mrb[0].mxu0
        %3794 = vmatprep.mubr.bf16.mxu0 0
        %3795 = vmatmul.mubr.bf16.gmra.mrb[0].mxu0 %v3652
        %v3796 = vpop.f32.mrb[0].mxu0
        %v3797 = vadd.f32 0.0, %v3796
        %v3798 = vpop.f32.mrb[0].mxu0
        %v3799 = vpop.f32.mrb[0].mxu0
        %v3800 = vadd.f32 0.0, %v3799
        %v3801 = vpop.f32.mrb[0].mxu0
        %3802 = vmatprep.mubr.bf16.mxu0 0
        %3803 = vmatmul.mubr.bf16.gmra.mrb[0].mxu0 %v3655
        %v3804 = vpop.f32.mrb[0].mxu0
        %v3805 = vadd.f32 0.0, %v3804
        %v3806 = vpop.f32.mrb[0].mxu0
        %v3807 = vpop.f32.mrb[0].mxu0
        %v3808 = vadd.f32 0.0, %v3807
        %v3809 = vpop.f32.mrb[0].mxu0
        %3810 = vmatprep.mubr.bf16.mxu0 0
        %3811 = vmatmul.mubr.bf16.gmra.mrb[0].mxu0 %v3658
        %v3812 = vpop.f32.mrb[0].mxu0
        %v3813 = vadd.f32 0.0, %v3812
        %v3814 = vpop.f32.mrb[0].mxu0
        %v3815 = vpop.f32.mrb[0].mxu0
        %v3816 = vadd.f32 0.0, %v3815
        %v3817 = vpop.f32.mrb[0].mxu0
        %3818 = vmatprep.mubr.bf16.mxu0 0
        %3819 = vmatmul.mubr.bf16.gmra.mrb[0].mxu0 %v3661
        %v3820 = vpop.f32.mrb[0].mxu0
        %v3821 = vadd.f32 0.0, %v3820
        %v3822 = vpop.f32.mrb[0].mxu0
        %v3823 = vpop.f32.mrb[0].mxu0
        %v3824 = vadd.f32 0.0, %v3823
        %v3825 = vpop.f32.mrb[0].mxu0
        %3826 = vdwg.mxu0
        %v3827 = vadd.f32 %v3449, %v3701
        %v3828 = vadd.f32 %v3450, %v3704
        %v3829 = vadd.f32 %v3451, %v3709
        %v3830 = vadd.f32 %v3452, %v3712
        %v3831 = vadd.f32 %v3453, %v3717
        %v3832 = vadd.f32 %v3454, %v3720
        %v3833 = vadd.f32 %v3455, %v3725
        %v3834 = vadd.f32 %v3456, %v3728
        %v3835 = vadd.f32 %v3457, %v3733
        %v3836 = vadd.f32 %v3458, %v3736
        %v3837 = vadd.f32 %v3459, %v3741
        %v3838 = vadd.f32 %v3460, %v3744
        %v3839 = vadd.f32 %v3461, %v3749
        %v3840 = vadd.f32 %v3462, %v3752
        %v3841 = vadd.f32 %v3463, %v3757
        %v3842 = vadd.f32 %v3464, %v3760
        %v3843 = vadd.f32 %v3465, %v3765
        %v3844 = vadd.f32 %v3466, %v3768
        %v3845 = vadd.f32 %v3467, %v3773
        %v3846 = vadd.f32 %v3468, %v3776
        %v3847 = vadd.f32 %v3469, %v3781
        %v3848 = vadd.f32 %v3470, %v3784
        %v3849 = vadd.f32 %v3471, %v3789
        %v3850 = vadd.f32 %v3472, %v3792
        %v3851 = vadd.f32 %v3473, %v3797
        %v3852 = vadd.f32 %v3474, %v3800
        %v3853 = vadd.f32 %v3475, %v3805
        %v3854 = vadd.f32 %v3476, %v3808
        %v3855 = vadd.f32 %v3477, %v3813
        %v3856 = vadd.f32 %v3478, %v3816
        %v3857 = vadd.f32 %v3479, %v3821
        %v3858 = vadd.f32 %v3480, %v3824
        %v3859 = vld [vmem:[%s3481] sm:$0xf]
        %v3860 = vld [vmem:[%s3481 + $0x4] sm:$0xf]
        %v3861 = vld [vmem:[%s3481 + $0x8] sm:$0x1]
        %v3862 = vld [vmem:[%s3481 + $0xc] sm:$0xf]
        %v3863 = vld [vmem:[%s3481 + $0x10] sm:$0xf]
        %v3864 = vld [vmem:[%s3481 + $0x14] sm:$0x1]
        %v3865 = vld [vmem:[%s3481 + $0x18] sm:$0xf]
        %v3866 = vld [vmem:[%s3481 + $0x1c] sm:$0xf]
        %v3867 = vld [vmem:[%s3481 + $0x20] sm:$0x1]
        %v3868 = vld [vmem:[%s3481 + $0x24] sm:$0xf]
        %v3869 = vld [vmem:[%s3481 + $0x28] sm:$0xf]
        %v3870 = vld [vmem:[%s3481 + $0x2c] sm:$0x1]
        %v3871 = vld [vmem:[%s3481 + $0x30] sm:$0xf]
        %v3872 = vld [vmem:[%s3481 + $0x34] sm:$0xf]
        %v3873 = vld [vmem:[%s3481 + $0x38] sm:$0x1]
        %v3874 = vld [vmem:[%s3481 + $0x3c] sm:$0xf]
        %v3875 = vld [vmem:[%s3481 + $0x40] sm:$0xf]
        %v3876 = vld [vmem:[%s3481 + $0x44] sm:$0x1]
        %v3877 = vld [vmem:[%s3481 + $0x48] sm:$0xf]
        %v3878 = vld [vmem:[%s3481 + $0x4c] sm:$0xf]
        %v3879 = vld [vmem:[%s3481 + $0x50] sm:$0x1]
        %v3880 = vld [vmem:[%s3481 + $0x54] sm:$0xf]
        %v3881 = vld [vmem:[%s3481 + $0x58] sm:$0xf]
        %v3882 = vld [vmem:[%s3481 + $0x5c] sm:$0x1]
        %v3883 = vld [vmem:[%s3481 + $0x60] sm:$0xf]
        %v3884 = vld [vmem:[%s3481 + $0x64] sm:$0xf]
        %v3885 = vld [vmem:[%s3481 + $0x68] sm:$0x1]
        %v3886 = vld [vmem:[%s3481 + $0x6c] sm:$0xf]
        %v3887 = vld [vmem:[%s3481 + $0x70] sm:$0xf]
        %v3888 = vld [vmem:[%s3481 + $0x74] sm:$0x1]
        %v3889 = vld [vmem:[%s3481 + $0x78] sm:$0xf]
        %v3890 = vld [vmem:[%s3481 + $0x7c] sm:$0xf]
        %v3891 = vld [vmem:[%s3481 + $0x80] sm:$0x1]
        %v3892 = vld [vmem:[%s3481 + $0x84] sm:$0xf]
        %v3893 = vld [vmem:[%s3481 + $0x88] sm:$0xf]
        %v3894 = vld [vmem:[%s3481 + $0x8c] sm:$0x1]
        %v3895 = vld [vmem:[%s3481 + $0x90] sm:$0xf]
        %v3896 = vld [vmem:[%s3481 + $0x94] sm:$0xf]
        %v3897 = vld [vmem:[%s3481 + $0x98] sm:$0x1]
        %v3898 = vld [vmem:[%s3481 + $0x9c] sm:$0xf]
        %v3899 = vld [vmem:[%s3481 + $0xa0] sm:$0xf]
        %v3900 = vld [vmem:[%s3481 + $0xa4] sm:$0x1]
        %v3901 = vld [vmem:[%s3481 + $0xa8] sm:$0xf]
        %v3902 = vld [vmem:[%s3481 + $0xac] sm:$0xf]
        %v3903 = vld [vmem:[%s3481 + $0xb0] sm:$0x1]
        %v3904 = vld [vmem:[%s3481 + $0xb4] sm:$0xf]
        %v3905 = vld [vmem:[%s3481 + $0xb8] sm:$0xf]
        %v3906 = vld [vmem:[%s3481 + $0xbc] sm:$0x1]
        %v3908 = vshrl.u32 %v3859, 16
        %v3910 = vrot.slane %v3908, 4
        %v3911 = vshll.u32 %v3859, 16
        %v3913 = vrot.slane %v3911, 5
        %v3914 = vor.u32 %v3910, %v3913
        %v3915 = vrot.slane %v3914, 4
        %v3917 = vshll.u32 %v3860, 16
        %v3919 = vrot.slane %v3917, 5
        %v3920 = vsel %vm679, %v3915, %v3919
        %v3921 = vshrl.u32 %v3860, 16
        %v3923 = vrot.slane %v3921, 4
        %v3924 = vor.u32 %v3923, %v3919
        %v3925 = vrot.slane %v3924, 4
        %v3927 = vshll.u32 %v3861, 16
        %v3929 = vrot.slane %v3927, 5
        %v3930 = vsel %vm679, %v3925, %v3929
        %v3932 = vshrl.u32 %v3862, 16
        %v3934 = vrot.slane %v3932, 4
        %v3935 = vshll.u32 %v3862, 16
        %v3937 = vrot.slane %v3935, 5
        %v3938 = vor.u32 %v3934, %v3937
        %v3939 = vrot.slane %v3938, 4
        %v3941 = vshll.u32 %v3863, 16
        %v3943 = vrot.slane %v3941, 5
        %v3944 = vsel %vm679, %v3939, %v3943
        %v3945 = vshrl.u32 %v3863, 16
        %v3947 = vrot.slane %v3945, 4
        %v3948 = vor.u32 %v3947, %v3943
        %v3949 = vrot.slane %v3948, 4
        %v3951 = vshll.u32 %v3864, 16
        %v3953 = vrot.slane %v3951, 5
        %v3954 = vsel %vm679, %v3949, %v3953
        %v3956 = vshrl.u32 %v3865, 16
        %v3958 = vrot.slane %v3956, 4
        %v3959 = vshll.u32 %v3865, 16
        %v3961 = vrot.slane %v3959, 5
        %v3962 = vor.u32 %v3958, %v3961
        %v3963 = vrot.slane %v3962, 4
        %v3965 = vshll.u32 %v3866, 16
        %v3967 = vrot.slane %v3965, 5
        %v3968 = vsel %vm679, %v3963, %v3967
        %v3969 = vshrl.u32 %v3866, 16
        %v3971 = vrot.slane %v3969, 4
        %v3972 = vor.u32 %v3971, %v3967
        %v3973 = vrot.slane %v3972, 4
        %v3975 = vshll.u32 %v3867, 16
        %v3977 = vrot.slane %v3975, 5
        %v3978 = vsel %vm679, %v3973, %v3977
        %v3980 = vshrl.u32 %v3868, 16
        %v3982 = vrot.slane %v3980, 4
        %v3983 = vshll.u32 %v3868, 16
        %v3985 = vrot.slane %v3983, 5
        %v3986 = vor.u32 %v3982, %v3985
        %v3987 = vrot.slane %v3986, 4
        %v3989 = vshll.u32 %v3869, 16
        %v3991 = vrot.slane %v3989, 5
        %v3992 = vsel %vm679, %v3987, %v3991
        %v3993 = vshrl.u32 %v3869, 16
        %v3995 = vrot.slane %v3993, 4
        %v3996 = vor.u32 %v3995, %v3991
        %v3997 = vrot.slane %v3996, 4
        %v3999 = vshll.u32 %v3870, 16
        %v4001 = vrot.slane %v3999, 5
        %v4002 = vsel %vm679, %v3997, %v4001
        %v4004 = vshrl.u32 %v3871, 16
        %v4006 = vrot.slane %v4004, 4
        %v4007 = vshll.u32 %v3871, 16
        %v4009 = vrot.slane %v4007, 5
        %v4010 = vor.u32 %v4006, %v4009
        %v4011 = vrot.slane %v4010, 4
        %v4013 = vshll.u32 %v3872, 16
        %v4015 = vrot.slane %v4013, 5
        %v4016 = vsel %vm679, %v4011, %v4015
        %v4017 = vshrl.u32 %v3872, 16
        %v4019 = vrot.slane %v4017, 4
        %v4020 = vor.u32 %v4019, %v4015
        %v4021 = vrot.slane %v4020, 4
        %v4023 = vshll.u32 %v3873, 16
        %v4025 = vrot.slane %v4023, 5
        %v4026 = vsel %vm679, %v4021, %v4025
        %v4028 = vshrl.u32 %v3874, 16
        %v4030 = vrot.slane %v4028, 4
        %v4031 = vshll.u32 %v3874, 16
        %v4033 = vrot.slane %v4031, 5
        %v4034 = vor.u32 %v4030, %v4033
        %v4035 = vrot.slane %v4034, 4
        %v4037 = vshll.u32 %v3875, 16
        %v4039 = vrot.slane %v4037, 5
        %v4040 = vsel %vm679, %v4035, %v4039
        %v4041 = vshrl.u32 %v3875, 16
        %v4043 = vrot.slane %v4041, 4
        %v4044 = vor.u32 %v4043, %v4039
        %v4045 = vrot.slane %v4044, 4
        %v4047 = vshll.u32 %v3876, 16
        %v4049 = vrot.slane %v4047, 5
        %v4050 = vsel %vm679, %v4045, %v4049
        %v4052 = vshrl.u32 %v3877, 16
        %v4054 = vrot.slane %v4052, 4
        %v4055 = vshll.u32 %v3877, 16
        %v4057 = vrot.slane %v4055, 5
        %v4058 = vor.u32 %v4054, %v4057
        %v4059 = vrot.slane %v4058, 4
        %v4061 = vshll.u32 %v3878, 16
        %v4063 = vrot.slane %v4061, 5
        %v4064 = vsel %vm679, %v4059, %v4063
        %v4065 = vshrl.u32 %v3878, 16
        %v4067 = vrot.slane %v4065, 4
        %v4068 = vor.u32 %v4067, %v4063
        %v4069 = vrot.slane %v4068, 4
        %v4071 = vshll.u32 %v3879, 16
        %v4073 = vrot.slane %v4071, 5
        %v4074 = vsel %vm679, %v4069, %v4073
        %v4076 = vshrl.u32 %v3880, 16
        %v4078 = vrot.slane %v4076, 4
        %v4079 = vshll.u32 %v3880, 16
        %v4081 = vrot.slane %v4079, 5
        %v4082 = vor.u32 %v4078, %v4081
        %v4083 = vrot.slane %v4082, 4
        %v4085 = vshll.u32 %v3881, 16
        %v4087 = vrot.slane %v4085, 5
        %v4088 = vsel %vm679, %v4083, %v4087
        %v4089 = vshrl.u32 %v3881, 16
        %v4091 = vrot.slane %v4089, 4
        %v4092 = vor.u32 %v4091, %v4087
        %v4093 = vrot.slane %v4092, 4
        %v4095 = vshll.u32 %v3882, 16
        %v4097 = vrot.slane %v4095, 5
        %v4098 = vsel %vm679, %v4093, %v4097
        %v4100 = vshrl.u32 %v3883, 16
        %v4102 = vrot.slane %v4100, 4
        %v4103 = vshll.u32 %v3883, 16
        %v4105 = vrot.slane %v4103, 5
        %v4106 = vor.u32 %v4102, %v4105
        %v4107 = vrot.slane %v4106, 4
        %v4109 = vshll.u32 %v3884, 16
        %v4111 = vrot.slane %v4109, 5
        %v4112 = vsel %vm679, %v4107, %v4111
        %v4113 = vshrl.u32 %v3884, 16
        %v4115 = vrot.slane %v4113, 4
        %v4116 = vor.u32 %v4115, %v4111
        %v4117 = vrot.slane %v4116, 4
        %v4119 = vshll.u32 %v3885, 16
        %v4121 = vrot.slane %v4119, 5
        %v4122 = vsel %vm679, %v4117, %v4121
        %v4124 = vshrl.u32 %v3886, 16
        %v4126 = vrot.slane %v4124, 4
        %v4127 = vshll.u32 %v3886, 16
        %v4129 = vrot.slane %v4127, 5
        %v4130 = vor.u32 %v4126, %v4129
        %v4131 = vrot.slane %v4130, 4
        %v4133 = vshll.u32 %v3887, 16
        %v4135 = vrot.slane %v4133, 5
        %v4136 = vsel %vm679, %v4131, %v4135
        %v4137 = vshrl.u32 %v3887, 16
        %v4139 = vrot.slane %v4137, 4
        %v4140 = vor.u32 %v4139, %v4135
        %v4141 = vrot.slane %v4140, 4
        %v4143 = vshll.u32 %v3888, 16
        %v4145 = vrot.slane %v4143, 5
        %v4146 = vsel %vm679, %v4141, %v4145
        %v4148 = vshrl.u32 %v3889, 16
        %v4150 = vrot.slane %v4148, 4
        %v4151 = vshll.u32 %v3889, 16
        %v4153 = vrot.slane %v4151, 5
        %v4154 = vor.u32 %v4150, %v4153
        %v4155 = vrot.slane %v4154, 4
        %v4157 = vshll.u32 %v3890, 16
        %v4159 = vrot.slane %v4157, 5
        %v4160 = vsel %vm679, %v4155, %v4159
        %v4161 = vshrl.u32 %v3890, 16
        %v4163 = vrot.slane %v4161, 4
        %v4164 = vor.u32 %v4163, %v4159
        %v4165 = vrot.slane %v4164, 4
        %v4167 = vshll.u32 %v3891, 16
        %v4169 = vrot.slane %v4167, 5
        %v4170 = vsel %vm679, %v4165, %v4169
        %v4172 = vshrl.u32 %v3892, 16
        %v4174 = vrot.slane %v4172, 4
        %v4175 = vshll.u32 %v3892, 16
        %v4177 = vrot.slane %v4175, 5
        %v4178 = vor.u32 %v4174, %v4177
        %v4179 = vrot.slane %v4178, 4
        %v4181 = vshll.u32 %v3893, 16
        %v4183 = vrot.slane %v4181, 5
        %v4184 = vsel %vm679, %v4179, %v4183
        %v4185 = vshrl.u32 %v3893, 16
        %v4187 = vrot.slane %v4185, 4
        %v4188 = vor.u32 %v4187, %v4183
        %v4189 = vrot.slane %v4188, 4
        %v4191 = vshll.u32 %v3894, 16
        %v4193 = vrot.slane %v4191, 5
        %v4194 = vsel %vm679, %v4189, %v4193
        %v4196 = vshrl.u32 %v3895, 16
        %v4198 = vrot.slane %v4196, 4
        %v4199 = vshll.u32 %v3895, 16
        %v4201 = vrot.slane %v4199, 5
        %v4202 = vor.u32 %v4198, %v4201
        %v4203 = vrot.slane %v4202, 4
        %v4205 = vshll.u32 %v3896, 16
        %v4207 = vrot.slane %v4205, 5
        %v4208 = vsel %vm679, %v4203, %v4207
        %v4209 = vshrl.u32 %v3896, 16
        %v4211 = vrot.slane %v4209, 4
        %v4212 = vor.u32 %v4211, %v4207
        %v4213 = vrot.slane %v4212, 4
        %v4215 = vshll.u32 %v3897, 16
        %v4217 = vrot.slane %v4215, 5
        %v4218 = vsel %vm679, %v4213, %v4217
        %v4220 = vshrl.u32 %v3898, 16
        %v4222 = vrot.slane %v4220, 4
        %v4223 = vshll.u32 %v3898, 16
        %v4225 = vrot.slane %v4223, 5
        %v4226 = vor.u32 %v4222, %v4225
        %v4227 = vrot.slane %v4226, 4
        %v4229 = vshll.u32 %v3899, 16
        %v4231 = vrot.slane %v4229, 5
        %v4232 = vsel %vm679, %v4227, %v4231
        %v4233 = vshrl.u32 %v3899, 16
        %v4235 = vrot.slane %v4233, 4
        %v4236 = vor.u32 %v4235, %v4231
        %v4237 = vrot.slane %v4236, 4
        %v4239 = vshll.u32 %v3900, 16
        %v4241 = vrot.slane %v4239, 5
        %v4242 = vsel %vm679, %v4237, %v4241
        %v4244 = vshrl.u32 %v3901, 16
        %v4246 = vrot.slane %v4244, 4
        %v4247 = vshll.u32 %v3901, 16
        %v4249 = vrot.slane %v4247, 5
        %v4250 = vor.u32 %v4246, %v4249
        %v4251 = vrot.slane %v4250, 4
        %v4253 = vshll.u32 %v3902, 16
        %v4255 = vrot.slane %v4253, 5
        %v4256 = vsel %vm679, %v4251, %v4255
        %v4257 = vshrl.u32 %v3902, 16
        %v4259 = vrot.slane %v4257, 4
        %v4260 = vor.u32 %v4259, %v4255
        %v4261 = vrot.slane %v4260, 4
        %v4263 = vshll.u32 %v3903, 16
        %v4265 = vrot.slane %v4263, 5
        %v4266 = vsel %vm679, %v4261, %v4265
        %v4268 = vshrl.u32 %v3904, 16
        %v4270 = vrot.slane %v4268, 4
        %v4271 = vshll.u32 %v3904, 16
        %v4273 = vrot.slane %v4271, 5
        %v4274 = vor.u32 %v4270, %v4273
        %v4275 = vrot.slane %v4274, 4
        %v4277 = vshll.u32 %v3905, 16
        %v4279 = vrot.slane %v4277, 5
        %v4280 = vsel %vm679, %v4275, %v4279
        %v4281 = vshrl.u32 %v3905, 16
        %v4283 = vrot.slane %v4281, 4
        %v4284 = vor.u32 %v4283, %v4279
        %v4285 = vrot.slane %v4284, 4
        %v4287 = vshll.u32 %v3906, 16
        %v4289 = vrot.slane %v4287, 5
        %v4290 = vsel %vm679, %v4285, %v4289
        %s4291 = scalar_lea.vmem %s2, 140
        %v4292 = vld [vmem:[%s4291] sm:$0xf]
        %v4293 = vld [vmem:[%s4291 + $0x4] sm:$0xf]
        %v4294 = vld [vmem:[%s4291 + $0x8] sm:$0xf]
        %v4295 = vld [vmem:[%s4291 + $0xc] sm:$0xf]
        %v4296 = vld [vmem:[%s4291 + $0x10] sm:$0xf]
        %v4297 = vunpack.c.l.b16 %v3920
        %v4298 = vunpack.c.l.b16 %v3930
        %v4299 = vunpack.c.l.b16 %v3944
        %v4300 = vunpack.c.l.b16 %v3954
        %v4301 = vunpack.c.l.b16 %v3968
        %v4302 = vunpack.c.l.b16 %v3978
        %v4303 = vunpack.c.l.b16 %v3992
        %v4304 = vunpack.c.l.b16 %v4002
        %v4305 = vunpack.c.l.b16 %v4016
        %v4306 = vunpack.c.l.b16 %v4026
        %v4307 = vunpack.c.l.b16 %v4040
        %v4308 = vunpack.c.l.b16 %v4050
        %v4309 = vunpack.c.l.b16 %v4064
        %v4310 = vunpack.c.l.b16 %v4074
        %v4311 = vunpack.c.l.b16 %v4088
        %v4312 = vunpack.c.l.b16 %v4098
        %v4313 = vunpack.c.l.b16 %v4112
        %v4314 = vunpack.c.l.b16 %v4122
        %v4315 = vunpack.c.l.b16 %v4136
        %v4316 = vunpack.c.l.b16 %v4146
        %v4317 = vunpack.c.l.b16 %v4160
        %v4318 = vunpack.c.l.b16 %v4170
        %v4319 = vunpack.c.l.b16 %v4184
        %v4320 = vunpack.c.l.b16 %v4194
        %v4321 = vunpack.c.l.b16 %v4208
        %v4322 = vunpack.c.l.b16 %v4218
        %v4323 = vunpack.c.l.b16 %v4232
        %v4324 = vunpack.c.l.b16 %v4242
        %v4325 = vunpack.c.l.b16 %v4256
        %v4326 = vunpack.c.l.b16 %v4266
        %v4327 = vunpack.c.l.b16 %v4280
        %v4328 = vunpack.c.l.b16 %v4290
        %v4329 = vpack.c.b16 %v4298, %v4297
        %v4330 = vpack.c.b16 %v4300, %v4299
        %v4331 = vpack.c.b16 %v4302, %v4301
        %v4332 = vpack.c.b16 %v4304, %v4303
        %v4333 = vpack.c.b16 %v4306, %v4305
        %v4334 = vpack.c.b16 %v4308, %v4307
        %v4335 = vpack.c.b16 %v4310, %v4309
        %v4336 = vpack.c.b16 %v4312, %v4311
        %v4337 = vpack.c.b16 %v4314, %v4313
        %v4338 = vpack.c.b16 %v4316, %v4315
        %v4339 = vpack.c.b16 %v4318, %v4317
        %v4340 = vpack.c.b16 %v4320, %v4319
        %v4341 = vpack.c.b16 %v4322, %v4321
        %v4342 = vpack.c.b16 %v4324, %v4323
        %v4343 = vpack.c.b16 %v4326, %v4325
        %v4344 = vpack.c.b16 %v4328, %v4327
        %v4350 = vunpack.c.l.b16 %v4292
        %v4351 = vunpack.c.l.b16 %v4293
        %v4352 = vunpack.c.l.b16 %v4294
        %v4353 = vunpack.c.l.b16 %v4295
        %v4354 = vunpack.c.l.b16 %v4296
        %v4355 = vpack.c.b16 %v4351, %v4350
        %v4356 = vpack.c.b16 %v4353, %v4352
        %v4357 = vpack.c.b16 %v4354, %v4354
        %v4361 = vsel %vm383, %v4329, 0
        %v4364 = vsel %vm383, %v4330, 0
        %v4367 = vsel %vm383, %v4331, 0
        %v4370 = vsel %vm383, %v4332, 0
        %v4373 = vsel %vm383, %v4333, 0
        %v4376 = vsel %vm383, %v4334, 0
        %v4379 = vsel %vm383, %v4335, 0
        %v4382 = vsel %vm383, %v4336, 0
        %v4385 = vsel %vm383, %v4337, 0
        %v4388 = vsel %vm383, %v4338, 0
        %v4391 = vsel %vm383, %v4339, 0
        %v4394 = vsel %vm383, %v4340, 0
        %v4397 = vsel %vm383, %v4341, 0
        %v4400 = vsel %vm383, %v4342, 0
        %v4403 = vsel %vm383, %v4343, 0
        %v4406 = vsel %vm383, %v4344, 0
        %v4409 = vsel %vm432, %v4357, 0
        %4411 = vmatprep.subr.bf16.mxu0 0
        %4412 = vmatpush1.bf16.msra.mxu0 %v4355
        %4413 = vmatprep.subr.bf16.mxu0 0
        %4414 = vmatpush1.bf16.msra.mxu0 %v4356
        %4415 = vmatprep.subr.bf16.mxu0 0
        %4416 = vmatpush1.bf16.msra.mxu0 %v4409
        %4417 = vmatprep.subr.bf16.mxu0 0
        %4418 = vmatpush1.bf16.msra.mxu0 0
        %4419 = vmatprep.subr.bf16.mxu0 0
        %4420 = vmatpush1.bf16.msra.mxu0 0
        %4421 = vmatprep.subr.bf16.mxu0 0
        %4422 = vmatpush1.bf16.msra.mxu0 0
        %4423 = vmatprep.subr.bf16.mxu0 0
        %4424 = vmatpush1.bf16.msra.mxu0 0
        %4425 = vmatprep.subr.bf16.mxu0 0
        %4426 = vmatpush1.bf16.msra.mxu0 0
        %4427 = vmatprep.subr.bf16.mxu0 0
        %4428 = vmatpush1.bf16.msra.mxu0 0
        %4429 = vmatprep.subr.bf16.mxu0 0
        %4430 = vmatpush1.bf16.msra.mxu0 0
        %4431 = vmatprep.subr.bf16.mxu0 0
        %4432 = vmatpush1.bf16.msra.mxu0 0
        %4433 = vmatprep.subr.bf16.mxu0 0
        %4434 = vmatpush1.bf16.msra.mxu0 0
        %4435 = vmatprep.subr.bf16.mxu0 0
        %4436 = vmatpush1.bf16.msra.mxu0 0
        %4437 = vmatprep.subr.bf16.mxu0 0
        %4438 = vmatpush1.bf16.msra.mxu0 0
        %4439 = vmatprep.subr.bf16.mxu0 0
        %4440 = vmatpush1.bf16.msra.mxu0 0
        %4441 = vmatprep.subr.bf16.mxu0 0
        %4442 = vmatpush1.bf16.msra.mxu0 0
        %4443 = vmatprep.mubr.bf16.mxu0 0
        %4444 = vmatmul.mubr.bf16.gmra.mrb[0].mxu0 %v4361
        %v4445 = vpop.f32.mrb[0].mxu0
        %v4446 = vadd.f32 0.0, %v4445
        %v4447 = vpop.f32.mrb[0].mxu0
        %v4448 = vpop.f32.mrb[0].mxu0
        %v4449 = vadd.f32 0.0, %v4448
        %v4450 = vpop.f32.mrb[0].mxu0
        %4451 = vmatprep.mubr.bf16.mxu0 0
        %4452 = vmatmul.mubr.bf16.gmra.mrb[0].mxu0 %v4364
        %v4453 = vpop.f32.mrb[0].mxu0
        %v4454 = vadd.f32 0.0, %v4453
        %v4455 = vpop.f32.mrb[0].mxu0
        %v4456 = vpop.f32.mrb[0].mxu0
        %v4457 = vadd.f32 0.0, %v4456
        %v4458 = vpop.f32.mrb[0].mxu0
        %4459 = vmatprep.mubr.bf16.mxu0 0
        %4460 = vmatmul.mubr.bf16.gmra.mrb[0].mxu0 %v4367
        %v4461 = vpop.f32.mrb[0].mxu0
        %v4462 = vadd.f32 0.0, %v4461
        %v4463 = vpop.f32.mrb[0].mxu0
        %v4464 = vpop.f32.mrb[0].mxu0
        %v4465 = vadd.f32 0.0, %v4464
        %v4466 = vpop.f32.mrb[0].mxu0
        %4467 = vmatprep.mubr.bf16.mxu0 0
        %4468 = vmatmul.mubr.bf16.gmra.mrb[0].mxu0 %v4370
        %v4469 = vpop.f32.mrb[0].mxu0
        %v4470 = vadd.f32 0.0, %v4469
        %v4471 = vpop.f32.mrb[0].mxu0
        %v4472 = vpop.f32.mrb[0].mxu0
        %v4473 = vadd.f32 0.0, %v4472
        %v4474 = vpop.f32.mrb[0].mxu0
        %4475 = vmatprep.mubr.bf16.mxu0 0
        %4476 = vmatmul.mubr.bf16.gmra.mrb[0].mxu0 %v4373
        %v4477 = vpop.f32.mrb[0].mxu0
        %v4478 = vadd.f32 0.0, %v4477
        %v4479 = vpop.f32.mrb[0].mxu0
        %v4480 = vpop.f32.mrb[0].mxu0
        %v4481 = vadd.f32 0.0, %v4480
        %v4482 = vpop.f32.mrb[0].mxu0
        %4483 = vmatprep.mubr.bf16.mxu0 0
        %4484 = vmatmul.mubr.bf16.gmra.mrb[0].mxu0 %v4376
        %v4485 = vpop.f32.mrb[0].mxu0
        %v4486 = vadd.f32 0.0, %v4485
        %v4487 = vpop.f32.mrb[0].mxu0
        %v4488 = vpop.f32.mrb[0].mxu0
        %v4489 = vadd.f32 0.0, %v4488
        %v4490 = vpop.f32.mrb[0].mxu0
        %4491 = vmatprep.mubr.bf16.mxu0 0
        %4492 = vmatmul.mubr.bf16.gmra.mrb[0].mxu0 %v4379
        %v4493 = vpop.f32.mrb[0].mxu0
        %v4494 = vadd.f32 0.0, %v4493
        %v4495 = vpop.f32.mrb[0].mxu0
        %v4496 = vpop.f32.mrb[0].mxu0
        %v4497 = vadd.f32 0.0, %v4496
        %v4498 = vpop.f32.mrb[0].mxu0
        %4499 = vmatprep.mubr.bf16.mxu0 0
        %4500 = vmatmul.mubr.bf16.gmra.mrb[0].mxu0 %v4382
        %v4501 = vpop.f32.mrb[0].mxu0
        %v4502 = vadd.f32 0.0, %v4501
        %v4503 = vpop.f32.mrb[0].mxu0
        %v4504 = vpop.f32.mrb[0].mxu0
        %v4505 = vadd.f32 0.0, %v4504
        %v4506 = vpop.f32.mrb[0].mxu0
        %4507 = vmatprep.mubr.bf16.mxu0 0
        %4508 = vmatmul.mubr.bf16.gmra.mrb[0].mxu0 %v4385
        %v4509 = vpop.f32.mrb[0].mxu0
        %v4510 = vadd.f32 0.0, %v4509
        %v4511 = vpop.f32.mrb[0].mxu0
        %v4512 = vpop.f32.mrb[0].mxu0
        %v4513 = vadd.f32 0.0, %v4512
        %v4514 = vpop.f32.mrb[0].mxu0
        %4515 = vmatprep.mubr.bf16.mxu0 0
        %4516 = vmatmul.mubr.bf16.gmra.mrb[0].mxu0 %v4388
        %v4517 = vpop.f32.mrb[0].mxu0
        %v4518 = vadd.f32 0.0, %v4517
        %v4519 = vpop.f32.mrb[0].mxu0
        %v4520 = vpop.f32.mrb[0].mxu0
        %v4521 = vadd.f32 0.0, %v4520
        %v4522 = vpop.f32.mrb[0].mxu0
        %4523 = vmatprep.mubr.bf16.mxu0 0
        %4524 = vmatmul.mubr.bf16.gmra.mrb[0].mxu0 %v4391
        %v4525 = vpop.f32.mrb[0].mxu0
        %v4526 = vadd.f32 0.0, %v4525
        %v4527 = vpop.f32.mrb[0].mxu0
        %v4528 = vpop.f32.mrb[0].mxu0
        %v4529 = vadd.f32 0.0, %v4528
        %v4530 = vpop.f32.mrb[0].mxu0
        %4531 = vmatprep.mubr.bf16.mxu0 0
        %4532 = vmatmul.mubr.bf16.gmra.mrb[0].mxu0 %v4394
        %v4533 = vpop.f32.mrb[0].mxu0
        %v4534 = vadd.f32 0.0, %v4533
        %v4535 = vpop.f32.mrb[0].mxu0
        %v4536 = vpop.f32.mrb[0].mxu0
        %v4537 = vadd.f32 0.0, %v4536
        %v4538 = vpop.f32.mrb[0].mxu0
        %4539 = vmatprep.mubr.bf16.mxu0 0
        %4540 = vmatmul.mubr.bf16.gmra.mrb[0].mxu0 %v4397
        %v4541 = vpop.f32.mrb[0].mxu0
        %v4542 = vadd.f32 0.0, %v4541
        %v4543 = vpop.f32.mrb[0].mxu0
        %v4544 = vpop.f32.mrb[0].mxu0
        %v4545 = vadd.f32 0.0, %v4544
        %v4546 = vpop.f32.mrb[0].mxu0
        %4547 = vmatprep.mubr.bf16.mxu0 0
        %4548 = vmatmul.mubr.bf16.gmra.mrb[0].mxu0 %v4400
        %v4549 = vpop.f32.mrb[0].mxu0
        %v4550 = vadd.f32 0.0, %v4549
        %v4551 = vpop.f32.mrb[0].mxu0
        %v4552 = vpop.f32.mrb[0].mxu0
        %v4553 = vadd.f32 0.0, %v4552
        %v4554 = vpop.f32.mrb[0].mxu0
        %4555 = vmatprep.mubr.bf16.mxu0 0
        %4556 = vmatmul.mubr.bf16.gmra.mrb[0].mxu0 %v4403
        %v4557 = vpop.f32.mrb[0].mxu0
        %v4558 = vadd.f32 0.0, %v4557
        %v4559 = vpop.f32.mrb[0].mxu0
        %v4560 = vpop.f32.mrb[0].mxu0
        %v4561 = vadd.f32 0.0, %v4560
        %v4562 = vpop.f32.mrb[0].mxu0
        %4563 = vmatprep.mubr.bf16.mxu0 0
        %4564 = vmatmul.mubr.bf16.gmra.mrb[0].mxu0 %v4406
        %v4565 = vpop.f32.mrb[0].mxu0
        %v4566 = vadd.f32 0.0, %v4565
        %v4567 = vpop.f32.mrb[0].mxu0
        %v4568 = vpop.f32.mrb[0].mxu0
        %v4569 = vadd.f32 0.0, %v4568
        %v4570 = vpop.f32.mrb[0].mxu0
        %4571 = vdwg.mxu0
        %v4572 = vadd.f32 %v3827, %v4446
        %v4573 = vadd.f32 %v3828, %v4449
        %v4574 = vadd.f32 %v3829, %v4454
        %v4575 = vadd.f32 %v3830, %v4457
        %v4576 = vadd.f32 %v3831, %v4462
        %v4577 = vadd.f32 %v3832, %v4465
        %v4578 = vadd.f32 %v3833, %v4470
        %v4579 = vadd.f32 %v3834, %v4473
        %v4580 = vadd.f32 %v3835, %v4478
        %v4581 = vadd.f32 %v3836, %v4481
        %v4582 = vadd.f32 %v3837, %v4486
        %v4583 = vadd.f32 %v3838, %v4489
        %v4584 = vadd.f32 %v3839, %v4494
        %v4585 = vadd.f32 %v3840, %v4497
        %v4586 = vadd.f32 %v3841, %v4502
        %v4587 = vadd.f32 %v3842, %v4505
        %v4588 = vadd.f32 %v3843, %v4510
        %v4589 = vadd.f32 %v3844, %v4513
        %v4590 = vadd.f32 %v3845, %v4518
        %v4591 = vadd.f32 %v3846, %v4521
        %v4592 = vadd.f32 %v3847, %v4526
        %v4593 = vadd.f32 %v3848, %v4529
        %v4594 = vadd.f32 %v3849, %v4534
        %v4595 = vadd.f32 %v3850, %v4537
        %v4596 = vadd.f32 %v3851, %v4542
        %v4597 = vadd.f32 %v3852, %v4545
        %v4598 = vadd.f32 %v3853, %v4550
        %v4599 = vadd.f32 %v3854, %v4553
        %v4600 = vadd.f32 %v3855, %v4558
        %v4601 = vadd.f32 %v3856, %v4561
        %v4602 = vadd.f32 %v3857, %v4566
        %v4603 = vadd.f32 %v3858, %v4569
        %v4604 = vld [vmem:[%s3481] sm:$0xe]
        %v4605 = vld [vmem:[%s3481 + $0xc] sm:$0xe]
        %v4606 = vld [vmem:[%s3481 + $0x18] sm:$0xe]
        %v4607 = vld [vmem:[%s3481 + $0x24] sm:$0xe]
        %v4608 = vld [vmem:[%s3481 + $0x30] sm:$0xe]
        %v4609 = vld [vmem:[%s3481 + $0x3c] sm:$0xe]
        %v4610 = vld [vmem:[%s3481 + $0x48] sm:$0xe]
        %v4611 = vld [vmem:[%s3481 + $0x54] sm:$0xe]
        %v4612 = vld [vmem:[%s3481 + $0x60] sm:$0xe]
        %v4613 = vld [vmem:[%s3481 + $0x6c] sm:$0xe]
        %v4614 = vld [vmem:[%s3481 + $0x78] sm:$0xe]
        %v4615 = vld [vmem:[%s3481 + $0x84] sm:$0xe]
        %v4616 = vld [vmem:[%s3481 + $0x90] sm:$0xe]
        %v4617 = vld [vmem:[%s3481 + $0x9c] sm:$0xe]
        %v4618 = vld [vmem:[%s3481 + $0xa8] sm:$0xe]
        %v4619 = vld [vmem:[%s3481 + $0xb4] sm:$0xe]
        %v4668 = vrot.slane %v4604, 5
        %v4669 = vrot.slane %v4668, 4
        %v4670 = vrot.slane %v3860, 5
        %v4671 = vsel %vm1443, %v4669, %v4670
        %v4672 = vrot.slane %v4670, 4
        %v4673 = vrot.slane %v3861, 5
        %v4674 = vsel %vm1443, %v4672, %v4673
        %v4675 = vrot.slane %v4605, 5
        %v4676 = vrot.slane %v4675, 4
        %v4677 = vrot.slane %v3863, 5
        %v4678 = vsel %vm1443, %v4676, %v4677
        %v4679 = vrot.slane %v4677, 4
        %v4680 = vrot.slane %v3864, 5
        %v4681 = vsel %vm1443, %v4679, %v4680
        %v4682 = vrot.slane %v4606, 5
        %v4683 = vrot.slane %v4682, 4
        %v4684 = vrot.slane %v3866, 5
        %v4685 = vsel %vm1443, %v4683, %v4684
        %v4686 = vrot.slane %v4684, 4
        %v4687 = vrot.slane %v3867, 5
        %v4688 = vsel %vm1443, %v4686, %v4687
        %v4689 = vrot.slane %v4607, 5
        %v4690 = vrot.slane %v4689, 4
        %v4691 = vrot.slane %v3869, 5
        %v4692 = vsel %vm1443, %v4690, %v4691
        %v4693 = vrot.slane %v4691, 4
        %v4694 = vrot.slane %v3870, 5
        %v4695 = vsel %vm1443, %v4693, %v4694
        %v4696 = vrot.slane %v4608, 5
        %v4697 = vrot.slane %v4696, 4
        %v4698 = vrot.slane %v3872, 5
        %v4699 = vsel %vm1443, %v4697, %v4698
        %v4700 = vrot.slane %v4698, 4
        %v4701 = vrot.slane %v3873, 5
        %v4702 = vsel %vm1443, %v4700, %v4701
        %v4703 = vrot.slane %v4609, 5
        %v4704 = vrot.slane %v4703, 4
        %v4705 = vrot.slane %v3875, 5
        %v4706 = vsel %vm1443, %v4704, %v4705
        %v4707 = vrot.slane %v4705, 4
        %v4708 = vrot.slane %v3876, 5
        %v4709 = vsel %vm1443, %v4707, %v4708
        %v4710 = vrot.slane %v4610, 5
        %v4711 = vrot.slane %v4710, 4
        %v4712 = vrot.slane %v3878, 5
        %v4713 = vsel %vm1443, %v4711, %v4712
        %v4714 = vrot.slane %v4712, 4
        %v4715 = vrot.slane %v3879, 5
        %v4716 = vsel %vm1443, %v4714, %v4715
        %v4717 = vrot.slane %v4611, 5
        %v4718 = vrot.slane %v4717, 4
        %v4719 = vrot.slane %v3881, 5
        %v4720 = vsel %vm1443, %v4718, %v4719
        %v4721 = vrot.slane %v4719, 4
        %v4722 = vrot.slane %v3882, 5
        %v4723 = vsel %vm1443, %v4721, %v4722
        %v4724 = vrot.slane %v4612, 5
        %v4725 = vrot.slane %v4724, 4
        %v4726 = vrot.slane %v3884, 5
        %v4727 = vsel %vm1443, %v4725, %v4726
        %v4728 = vrot.slane %v4726, 4
        %v4729 = vrot.slane %v3885, 5
        %v4730 = vsel %vm1443, %v4728, %v4729
        %v4731 = vrot.slane %v4613, 5
        %v4732 = vrot.slane %v4731, 4
        %v4733 = vrot.slane %v3887, 5
        %v4734 = vsel %vm1443, %v4732, %v4733
        %v4735 = vrot.slane %v4733, 4
        %v4736 = vrot.slane %v3888, 5
        %v4737 = vsel %vm1443, %v4735, %v4736
        %v4738 = vrot.slane %v4614, 5
        %v4739 = vrot.slane %v4738, 4
        %v4740 = vrot.slane %v3890, 5
        %v4741 = vsel %vm1443, %v4739, %v4740
        %v4742 = vrot.slane %v4740, 4
        %v4743 = vrot.slane %v3891, 5
        %v4744 = vsel %vm1443, %v4742, %v4743
        %v4745 = vrot.slane %v4615, 5
        %v4746 = vrot.slane %v4745, 4
        %v4747 = vrot.slane %v3893, 5
        %v4748 = vsel %vm1443, %v4746, %v4747
        %v4749 = vrot.slane %v4747, 4
        %v4750 = vrot.slane %v3894, 5
        %v4751 = vsel %vm1443, %v4749, %v4750
        %v4752 = vrot.slane %v4616, 5
        %v4753 = vrot.slane %v4752, 4
        %v4754 = vrot.slane %v3896, 5
        %v4755 = vsel %vm1443, %v4753, %v4754
        %v4756 = vrot.slane %v4754, 4
        %v4757 = vrot.slane %v3897, 5
        %v4758 = vsel %vm1443, %v4756, %v4757
        %v4759 = vrot.slane %v4617, 5
        %v4760 = vrot.slane %v4759, 4
        %v4761 = vrot.slane %v3899, 5
        %v4762 = vsel %vm1443, %v4760, %v4761
        %v4763 = vrot.slane %v4761, 4
        %v4764 = vrot.slane %v3900, 5
        %v4765 = vsel %vm1443, %v4763, %v4764
        %v4766 = vrot.slane %v4618, 5
        %v4767 = vrot.slane %v4766, 4
        %v4768 = vrot.slane %v3902, 5
        %v4769 = vsel %vm1443, %v4767, %v4768
        %v4770 = vrot.slane %v4768, 4
        %v4771 = vrot.slane %v3903, 5
        %v4772 = vsel %vm1443, %v4770, %v4771
        %v4773 = vrot.slane %v4619, 5
        %v4774 = vrot.slane %v4773, 4
        %v4775 = vrot.slane %v3905, 5
        %v4776 = vsel %vm1443, %v4774, %v4775
        %v4777 = vrot.slane %v4775, 4
        %v4778 = vrot.slane %v3906, 5
        %v4779 = vsel %vm1443, %v4777, %v4778
        %s4780 = scalar_lea.vmem %s2, 160
        %v4781 = vld [vmem:[%s4780] sm:$0xf]
        %v4782 = vld [vmem:[%s4780 + $0x4] sm:$0xf]
        %v4783 = vld [vmem:[%s4780 + $0x8] sm:$0xf]
        %v4784 = vld [vmem:[%s4780 + $0xc] sm:$0xf]
        %v4785 = vld [vmem:[%s4780 + $0x10] sm:$0xf]
        %v4786 = vunpack.c.l.b16 %v4671
        %v4787 = vunpack.c.l.b16 %v4674
        %v4788 = vunpack.c.l.b16 %v4678
        %v4789 = vunpack.c.l.b16 %v4681
        %v4790 = vunpack.c.l.b16 %v4685
        %v4791 = vunpack.c.l.b16 %v4688
        %v4792 = vunpack.c.l.b16 %v4692
        %v4793 = vunpack.c.l.b16 %v4695
        %v4794 = vunpack.c.l.b16 %v4699
        %v4795 = vunpack.c.l.b16 %v4702
        %v4796 = vunpack.c.l.b16 %v4706
        %v4797 = vunpack.c.l.b16 %v4709
        %v4798 = vunpack.c.l.b16 %v4713
        %v4799 = vunpack.c.l.b16 %v4716
        %v4800 = vunpack.c.l.b16 %v4720
        %v4801 = vunpack.c.l.b16 %v4723
        %v4802 = vunpack.c.l.b16 %v4727
        %v4803 = vunpack.c.l.b16 %v4730
        %v4804 = vunpack.c.l.b16 %v4734
        %v4805 = vunpack.c.l.b16 %v4737
        %v4806 = vunpack.c.l.b16 %v4741
        %v4807 = vunpack.c.l.b16 %v4744
        %v4808 = vunpack.c.l.b16 %v4748
        %v4809 = vunpack.c.l.b16 %v4751
        %v4810 = vunpack.c.l.b16 %v4755
        %v4811 = vunpack.c.l.b16 %v4758
        %v4812 = vunpack.c.l.b16 %v4762
        %v4813 = vunpack.c.l.b16 %v4765
        %v4814 = vunpack.c.l.b16 %v4769
        %v4815 = vunpack.c.l.b16 %v4772
        %v4816 = vunpack.c.l.b16 %v4776
        %v4817 = vunpack.c.l.b16 %v4779
        %v4818 = vpack.c.b16 %v4787, %v4786
        %v4819 = vpack.c.b16 %v4789, %v4788
        %v4820 = vpack.c.b16 %v4791, %v4790
        %v4821 = vpack.c.b16 %v4793, %v4792
        %v4822 = vpack.c.b16 %v4795, %v4794
        %v4823 = vpack.c.b16 %v4797, %v4796
        %v4824 = vpack.c.b16 %v4799, %v4798
        %v4825 = vpack.c.b16 %v4801, %v4800
        %v4826 = vpack.c.b16 %v4803, %v4802
        %v4827 = vpack.c.b16 %v4805, %v4804
        %v4828 = vpack.c.b16 %v4807, %v4806
        %v4829 = vpack.c.b16 %v4809, %v4808
        %v4830 = vpack.c.b16 %v4811, %v4810
        %v4831 = vpack.c.b16 %v4813, %v4812
        %v4832 = vpack.c.b16 %v4815, %v4814
        %v4833 = vpack.c.b16 %v4817, %v4816
        %v4839 = vunpack.c.l.b16 %v4781
        %v4840 = vunpack.c.l.b16 %v4782
        %v4841 = vunpack.c.l.b16 %v4783
        %v4842 = vunpack.c.l.b16 %v4784
        %v4843 = vunpack.c.l.b16 %v4785
        %v4844 = vpack.c.b16 %v4840, %v4839
        %v4845 = vpack.c.b16 %v4842, %v4841
        %v4846 = vpack.c.b16 %v4843, %v4843
        %v4850 = vsel %vm383, %v4818, 0
        %v4853 = vsel %vm383, %v4819, 0
        %v4856 = vsel %vm383, %v4820, 0
        %v4859 = vsel %vm383, %v4821, 0
        %v4862 = vsel %vm383, %v4822, 0
        %v4865 = vsel %vm383, %v4823, 0
        %v4868 = vsel %vm383, %v4824, 0
        %v4871 = vsel %vm383, %v4825, 0
        %v4874 = vsel %vm383, %v4826, 0
        %v4877 = vsel %vm383, %v4827, 0
        %v4880 = vsel %vm383, %v4828, 0
        %v4883 = vsel %vm383, %v4829, 0
        %v4886 = vsel %vm383, %v4830, 0
        %v4889 = vsel %vm383, %v4831, 0
        %v4892 = vsel %vm383, %v4832, 0
        %v4895 = vsel %vm383, %v4833, 0
        %v4898 = vsel %vm432, %v4846, 0
        %4900 = vmatprep.subr.bf16.mxu0 0
        %4901 = vmatpush1.bf16.msra.mxu0 %v4844
        %4902 = vmatprep.subr.bf16.mxu0 0
        %4903 = vmatpush1.bf16.msra.mxu0 %v4845
        %4904 = vmatprep.subr.bf16.mxu0 0
        %4905 = vmatpush1.bf16.msra.mxu0 %v4898
        %4906 = vmatprep.subr.bf16.mxu0 0
        %4907 = vmatpush1.bf16.msra.mxu0 0
        %4908 = vmatprep.subr.bf16.mxu0 0
        %4909 = vmatpush1.bf16.msra.mxu0 0
        %4910 = vmatprep.subr.bf16.mxu0 0
        %4911 = vmatpush1.bf16.msra.mxu0 0
        %4912 = vmatprep.subr.bf16.mxu0 0
        %4913 = vmatpush1.bf16.msra.mxu0 0
        %4914 = vmatprep.subr.bf16.mxu0 0
        %4915 = vmatpush1.bf16.msra.mxu0 0
        %4916 = vmatprep.subr.bf16.mxu0 0
        %4917 = vmatpush1.bf16.msra.mxu0 0
        %4918 = vmatprep.subr.bf16.mxu0 0
        %4919 = vmatpush1.bf16.msra.mxu0 0
        %4920 = vmatprep.subr.bf16.mxu0 0
        %4921 = vmatpush1.bf16.msra.mxu0 0
        %4922 = vmatprep.subr.bf16.mxu0 0
        %4923 = vmatpush1.bf16.msra.mxu0 0
        %4924 = vmatprep.subr.bf16.mxu0 0
        %4925 = vmatpush1.bf16.msra.mxu0 0
        %4926 = vmatprep.subr.bf16.mxu0 0
        %4927 = vmatpush1.bf16.msra.mxu0 0
        %4928 = vmatprep.subr.bf16.mxu0 0
        %4929 = vmatpush1.bf16.msra.mxu0 0
        %4930 = vmatprep.subr.bf16.mxu0 0
        %4931 = vmatpush1.bf16.msra.mxu0 0
        %4932 = vmatprep.mubr.bf16.mxu0 0
        %4933 = vmatmul.mubr.bf16.gmra.mrb[0].mxu0 %v4850
        %v4934 = vpop.f32.mrb[0].mxu0
        %v4935 = vadd.f32 0.0, %v4934
        %v4936 = vpop.f32.mrb[0].mxu0
        %v4937 = vpop.f32.mrb[0].mxu0
        %v4938 = vadd.f32 0.0, %v4937
        %v4939 = vpop.f32.mrb[0].mxu0
        %4940 = vmatprep.mubr.bf16.mxu0 0
        %4941 = vmatmul.mubr.bf16.gmra.mrb[0].mxu0 %v4853
        %v4942 = vpop.f32.mrb[0].mxu0
        %v4943 = vadd.f32 0.0, %v4942
        %v4944 = vpop.f32.mrb[0].mxu0
        %v4945 = vpop.f32.mrb[0].mxu0
        %v4946 = vadd.f32 0.0, %v4945
        %v4947 = vpop.f32.mrb[0].mxu0
        %4948 = vmatprep.mubr.bf16.mxu0 0
        %4949 = vmatmul.mubr.bf16.gmra.mrb[0].mxu0 %v4856
        %v4950 = vpop.f32.mrb[0].mxu0
        %v4951 = vadd.f32 0.0, %v4950
        %v4952 = vpop.f32.mrb[0].mxu0
        %v4953 = vpop.f32.mrb[0].mxu0
        %v4954 = vadd.f32 0.0, %v4953
        %v4955 = vpop.f32.mrb[0].mxu0
        %4956 = vmatprep.mubr.bf16.mxu0 0
        %4957 = vmatmul.mubr.bf16.gmra.mrb[0].mxu0 %v4859
        %v4958 = vpop.f32.mrb[0].mxu0
        %v4959 = vadd.f32 0.0, %v4958
        %v4960 = vpop.f32.mrb[0].mxu0
        %v4961 = vpop.f32.mrb[0].mxu0
        %v4962 = vadd.f32 0.0, %v4961
        %v4963 = vpop.f32.mrb[0].mxu0
        %4964 = vmatprep.mubr.bf16.mxu0 0
        %4965 = vmatmul.mubr.bf16.gmra.mrb[0].mxu0 %v4862
        %v4966 = vpop.f32.mrb[0].mxu0
        %v4967 = vadd.f32 0.0, %v4966
        %v4968 = vpop.f32.mrb[0].mxu0
        %v4969 = vpop.f32.mrb[0].mxu0
        %v4970 = vadd.f32 0.0, %v4969
        %v4971 = vpop.f32.mrb[0].mxu0
        %4972 = vmatprep.mubr.bf16.mxu0 0
        %4973 = vmatmul.mubr.bf16.gmra.mrb[0].mxu0 %v4865
        %v4974 = vpop.f32.mrb[0].mxu0
        %v4975 = vadd.f32 0.0, %v4974
        %v4976 = vpop.f32.mrb[0].mxu0
        %v4977 = vpop.f32.mrb[0].mxu0
        %v4978 = vadd.f32 0.0, %v4977
        %v4979 = vpop.f32.mrb[0].mxu0
        %4980 = vmatprep.mubr.bf16.mxu0 0
        %4981 = vmatmul.mubr.bf16.gmra.mrb[0].mxu0 %v4868
        %v4982 = vpop.f32.mrb[0].mxu0
        %v4983 = vadd.f32 0.0, %v4982
        %v4984 = vpop.f32.mrb[0].mxu0
        %v4985 = vpop.f32.mrb[0].mxu0
        %v4986 = vadd.f32 0.0, %v4985
        %v4987 = vpop.f32.mrb[0].mxu0
        %4988 = vmatprep.mubr.bf16.mxu0 0
        %4989 = vmatmul.mubr.bf16.gmra.mrb[0].mxu0 %v4871
        %v4990 = vpop.f32.mrb[0].mxu0
        %v4991 = vadd.f32 0.0, %v4990
        %v4992 = vpop.f32.mrb[0].mxu0
        %v4993 = vpop.f32.mrb[0].mxu0
        %v4994 = vadd.f32 0.0, %v4993
        %v4995 = vpop.f32.mrb[0].mxu0
        %4996 = vmatprep.mubr.bf16.mxu0 0
        %4997 = vmatmul.mubr.bf16.gmra.mrb[0].mxu0 %v4874
        %v4998 = vpop.f32.mrb[0].mxu0
        %v4999 = vadd.f32 0.0, %v4998
        %v5000 = vpop.f32.mrb[0].mxu0
        %v5001 = vpop.f32.mrb[0].mxu0
        %v5002 = vadd.f32 0.0, %v5001
        %v5003 = vpop.f32.mrb[0].mxu0
        %5004 = vmatprep.mubr.bf16.mxu0 0
        %5005 = vmatmul.mubr.bf16.gmra.mrb[0].mxu0 %v4877
        %v5006 = vpop.f32.mrb[0].mxu0
        %v5007 = vadd.f32 0.0, %v5006
        %v5008 = vpop.f32.mrb[0].mxu0
        %v5009 = vpop.f32.mrb[0].mxu0
        %v5010 = vadd.f32 0.0, %v5009
        %v5011 = vpop.f32.mrb[0].mxu0
        %5012 = vmatprep.mubr.bf16.mxu0 0
        %5013 = vmatmul.mubr.bf16.gmra.mrb[0].mxu0 %v4880
        %v5014 = vpop.f32.mrb[0].mxu0
        %v5015 = vadd.f32 0.0, %v5014
        %v5016 = vpop.f32.mrb[0].mxu0
        %v5017 = vpop.f32.mrb[0].mxu0
        %v5018 = vadd.f32 0.0, %v5017
        %v5019 = vpop.f32.mrb[0].mxu0
        %5020 = vmatprep.mubr.bf16.mxu0 0
        %5021 = vmatmul.mubr.bf16.gmra.mrb[0].mxu0 %v4883
        %v5022 = vpop.f32.mrb[0].mxu0
        %v5023 = vadd.f32 0.0, %v5022
        %v5024 = vpop.f32.mrb[0].mxu0
        %v5025 = vpop.f32.mrb[0].mxu0
        %v5026 = vadd.f32 0.0, %v5025
        %v5027 = vpop.f32.mrb[0].mxu0
        %5028 = vmatprep.mubr.bf16.mxu0 0
        %5029 = vmatmul.mubr.bf16.gmra.mrb[0].mxu0 %v4886
        %v5030 = vpop.f32.mrb[0].mxu0
        %v5031 = vadd.f32 0.0, %v5030
        %v5032 = vpop.f32.mrb[0].mxu0
        %v5033 = vpop.f32.mrb[0].mxu0
        %v5034 = vadd.f32 0.0, %v5033
        %v5035 = vpop.f32.mrb[0].mxu0
        %5036 = vmatprep.mubr.bf16.mxu0 0
        %5037 = vmatmul.mubr.bf16.gmra.mrb[0].mxu0 %v4889
        %v5038 = vpop.f32.mrb[0].mxu0
        %v5039 = vadd.f32 0.0, %v5038
        %v5040 = vpop.f32.mrb[0].mxu0
        %v5041 = vpop.f32.mrb[0].mxu0
        %v5042 = vadd.f32 0.0, %v5041
        %v5043 = vpop.f32.mrb[0].mxu0
        %5044 = vmatprep.mubr.bf16.mxu0 0
        %5045 = vmatmul.mubr.bf16.gmra.mrb[0].mxu0 %v4892
        %v5046 = vpop.f32.mrb[0].mxu0
        %v5047 = vadd.f32 0.0, %v5046
        %v5048 = vpop.f32.mrb[0].mxu0
        %v5049 = vpop.f32.mrb[0].mxu0
        %v5050 = vadd.f32 0.0, %v5049
        %v5051 = vpop.f32.mrb[0].mxu0
        %5052 = vmatprep.mubr.bf16.mxu0 0
        %5053 = vmatmul.mubr.bf16.gmra.mrb[0].mxu0 %v4895
        %v5054 = vpop.f32.mrb[0].mxu0
        %v5055 = vadd.f32 0.0, %v5054
        %v5056 = vpop.f32.mrb[0].mxu0
        %v5057 = vpop.f32.mrb[0].mxu0
        %v5058 = vadd.f32 0.0, %v5057
        %v5059 = vpop.f32.mrb[0].mxu0
        %5060 = vdwg.mxu0
        %v5061 = vadd.f32 %v4572, %v4935
        %v5062 = vadd.f32 %v4573, %v4938
        %v5063 = vadd.f32 %v4574, %v4943
        %v5064 = vadd.f32 %v4575, %v4946
        %v5065 = vadd.f32 %v4576, %v4951
        %v5066 = vadd.f32 %v4577, %v4954
        %v5067 = vadd.f32 %v4578, %v4959
        %v5068 = vadd.f32 %v4579, %v4962
        %v5069 = vadd.f32 %v4580, %v4967
        %v5070 = vadd.f32 %v4581, %v4970
        %v5071 = vadd.f32 %v4582, %v4975
        %v5072 = vadd.f32 %v4583, %v4978
        %v5073 = vadd.f32 %v4584, %v4983
        %v5074 = vadd.f32 %v4585, %v4986
        %v5075 = vadd.f32 %v4586, %v4991
        %v5076 = vadd.f32 %v4587, %v4994
        %v5077 = vadd.f32 %v4588, %v4999
        %v5078 = vadd.f32 %v4589, %v5002
        %v5079 = vadd.f32 %v4590, %v5007
        %v5080 = vadd.f32 %v4591, %v5010
        %v5081 = vadd.f32 %v4592, %v5015
        %v5082 = vadd.f32 %v4593, %v5018
        %v5083 = vadd.f32 %v4594, %v5023
        %v5084 = vadd.f32 %v4595, %v5026
        %v5085 = vadd.f32 %v4596, %v5031
        %v5086 = vadd.f32 %v4597, %v5034
        %v5087 = vadd.f32 %v4598, %v5039
        %v5088 = vadd.f32 %v4599, %v5042
        %v5089 = vadd.f32 %v4600, %v5047
        %v5090 = vadd.f32 %v4601, %v5050
        %v5091 = vadd.f32 %v4602, %v5055
        %v5092 = vadd.f32 %v4603, %v5058
        %v5093 = vxor.u32 %v5061, 2147483648
        %v5094 = vxor.u32 %v5062, 2147483648
        %v5095 = vxor.u32 %v5063, 2147483648
        %v5096 = vxor.u32 %v5064, 2147483648
        %v5097 = vxor.u32 %v5065, 2147483648
        %v5098 = vxor.u32 %v5066, 2147483648
        %v5099 = vxor.u32 %v5067, 2147483648
        %v5100 = vxor.u32 %v5068, 2147483648
        %v5101 = vxor.u32 %v5069, 2147483648
        %v5102 = vxor.u32 %v5070, 2147483648
        %v5103 = vxor.u32 %v5071, 2147483648
        %v5104 = vxor.u32 %v5072, 2147483648
        %v5105 = vxor.u32 %v5073, 2147483648
        %v5106 = vxor.u32 %v5074, 2147483648
        %v5107 = vxor.u32 %v5075, 2147483648
        %v5108 = vxor.u32 %v5076, 2147483648
        %v5109 = vxor.u32 %v5077, 2147483648
        %v5110 = vxor.u32 %v5078, 2147483648
        %v5111 = vxor.u32 %v5079, 2147483648
        %v5112 = vxor.u32 %v5080, 2147483648
        %v5113 = vxor.u32 %v5081, 2147483648
        %v5114 = vxor.u32 %v5082, 2147483648
        %v5115 = vxor.u32 %v5083, 2147483648
        %v5116 = vxor.u32 %v5084, 2147483648
        %v5117 = vxor.u32 %v5085, 2147483648
        %v5118 = vxor.u32 %v5086, 2147483648
        %v5119 = vxor.u32 %v5087, 2147483648
        %v5120 = vxor.u32 %v5088, 2147483648
        %v5121 = vxor.u32 %v5089, 2147483648
        %v5122 = vxor.u32 %v5090, 2147483648
        %v5123 = vxor.u32 %v5091, 2147483648
        %v5124 = vxor.u32 %v5092, 2147483648
        %v5125 = vmul.f32 %v5093, 1.442695
        %v5126 = vpow.pop %v5125
        %v5127 = vmul.f32 %v5094, 1.442695
        %v5128 = vpow.pop %v5127
        %v5129 = vmul.f32 %v5095, 1.442695
        %v5130 = vpow.pop %v5129
        %v5131 = vmul.f32 %v5096, 1.442695
        %v5132 = vpow.pop %v5131
        %v5133 = vmul.f32 %v5097, 1.442695
        %v5134 = vpow.pop %v5133
        %v5135 = vmul.f32 %v5098, 1.442695
        %v5136 = vpow.pop %v5135
        %v5137 = vmul.f32 %v5099, 1.442695
        %v5138 = vpow.pop %v5137
        %v5139 = vmul.f32 %v5100, 1.442695
        %v5140 = vpow.pop %v5139
        %v5141 = vmul.f32 %v5101, 1.442695
        %v5142 = vpow.pop %v5141
        %v5143 = vmul.f32 %v5102, 1.442695
        %v5144 = vpow.pop %v5143
        %v5145 = vmul.f32 %v5103, 1.442695
        %v5146 = vpow.pop %v5145
        %v5147 = vmul.f32 %v5104, 1.442695
        %v5148 = vpow.pop %v5147
        %v5149 = vmul.f32 %v5105, 1.442695
        %v5150 = vpow.pop %v5149
        %v5151 = vmul.f32 %v5106, 1.442695
        %v5152 = vpow.pop %v5151
        %v5153 = vmul.f32 %v5107, 1.442695
        %v5154 = vpow.pop %v5153
        %v5155 = vmul.f32 %v5108, 1.442695
        %v5156 = vpow.pop %v5155
        %v5157 = vmul.f32 %v5109, 1.442695
        %v5158 = vpow.pop %v5157
        %v5159 = vmul.f32 %v5110, 1.442695
        %v5160 = vpow.pop %v5159
        %v5161 = vmul.f32 %v5111, 1.442695
        %v5162 = vpow.pop %v5161
        %v5163 = vmul.f32 %v5112, 1.442695
        %v5164 = vpow.pop %v5163
        %v5165 = vmul.f32 %v5113, 1.442695
        %v5166 = vpow.pop %v5165
        %v5167 = vmul.f32 %v5114, 1.442695
        %v5168 = vpow.pop %v5167
        %v5169 = vmul.f32 %v5115, 1.442695
        %v5170 = vpow.pop %v5169
        %v5171 = vmul.f32 %v5116, 1.442695
        %v5172 = vpow.pop %v5171
        %v5173 = vmul.f32 %v5117, 1.442695
        %v5174 = vpow.pop %v5173
        %v5175 = vmul.f32 %v5118, 1.442695
        %v5176 = vpow.pop %v5175
        %v5177 = vmul.f32 %v5119, 1.442695
        %v5178 = vpow.pop %v5177
        %v5179 = vmul.f32 %v5120, 1.442695
        %v5180 = vpow.pop %v5179
        %v5181 = vmul.f32 %v5121, 1.442695
        %v5182 = vpow.pop %v5181
        %v5183 = vmul.f32 %v5122, 1.442695
        %v5184 = vpow.pop %v5183
        %v5185 = vmul.f32 %v5123, 1.442695
        %v5186 = vpow.pop %v5185
        %v5187 = vmul.f32 %v5124, 1.442695
        %v5188 = vpow.pop %v5187
        %v5189 = vadd.f32 %v5126, 1.0
        %v5190 = vadd.f32 %v5128, 1.0
        %v5191 = vadd.f32 %v5130, 1.0
        %v5192 = vadd.f32 %v5132, 1.0
        %v5193 = vadd.f32 %v5134, 1.0
        %v5194 = vadd.f32 %v5136, 1.0
        %v5195 = vadd.f32 %v5138, 1.0
        %v5196 = vadd.f32 %v5140, 1.0
        %v5197 = vadd.f32 %v5142, 1.0
        %v5198 = vadd.f32 %v5144, 1.0
        %v5199 = vadd.f32 %v5146, 1.0
        %v5200 = vadd.f32 %v5148, 1.0
        %v5201 = vadd.f32 %v5150, 1.0
        %v5202 = vadd.f32 %v5152, 1.0
        %v5203 = vadd.f32 %v5154, 1.0
        %v5204 = vadd.f32 %v5156, 1.0
        %v5205 = vadd.f32 %v5158, 1.0
        %v5206 = vadd.f32 %v5160, 1.0
        %v5207 = vadd.f32 %v5162, 1.0
        %v5208 = vadd.f32 %v5164, 1.0
        %v5209 = vadd.f32 %v5166, 1.0
        %v5210 = vadd.f32 %v5168, 1.0
        %v5211 = vadd.f32 %v5170, 1.0
        %v5212 = vadd.f32 %v5172, 1.0
        %v5213 = vadd.f32 %v5174, 1.0
        %v5214 = vadd.f32 %v5176, 1.0
        %v5215 = vadd.f32 %v5178, 1.0
        %v5216 = vadd.f32 %v5180, 1.0
        %v5217 = vadd.f32 %v5182, 1.0
        %v5218 = vadd.f32 %v5184, 1.0
        %v5219 = vadd.f32 %v5186, 1.0
        %v5220 = vadd.f32 %v5188, 1.0
        %v5221 = vrcp.pop %v5189
        %v5222 = vmul.f32 1.0, %v5221
        %v5223 = vrcp.pop %v5190
        %v5224 = vmul.f32 1.0, %v5223
        %v5225 = vrcp.pop %v5191
        %v5226 = vmul.f32 1.0, %v5225
        %v5227 = vrcp.pop %v5192
        %v5228 = vmul.f32 1.0, %v5227
        %v5229 = vrcp.pop %v5193
        %v5230 = vmul.f32 1.0, %v5229
        %v5231 = vrcp.pop %v5194
        %v5232 = vmul.f32 1.0, %v5231
        %v5233 = vrcp.pop %v5195
        %v5234 = vmul.f32 1.0, %v5233
        %v5235 = vrcp.pop %v5196
        %v5236 = vmul.f32 1.0, %v5235
        %v5237 = vrcp.pop %v5197
        %v5238 = vmul.f32 1.0, %v5237
        %v5239 = vrcp.pop %v5198
        %v5240 = vmul.f32 1.0, %v5239
        %v5241 = vrcp.pop %v5199
        %v5242 = vmul.f32 1.0, %v5241
        %v5243 = vrcp.pop %v5200
        %v5244 = vmul.f32 1.0, %v5243
        %v5245 = vrcp.pop %v5201
        %v5246 = vmul.f32 1.0, %v5245
        %v5247 = vrcp.pop %v5202
        %v5248 = vmul.f32 1.0, %v5247
        %v5249 = vrcp.pop %v5203
        %v5250 = vmul.f32 1.0, %v5249
        %v5251 = vrcp.pop %v5204
        %v5252 = vmul.f32 1.0, %v5251
        %v5253 = vrcp.pop %v5205
        %v5254 = vmul.f32 1.0, %v5253
        %v5255 = vrcp.pop %v5206
        %v5256 = vmul.f32 1.0, %v5255
        %v5257 = vrcp.pop %v5207
        %v5258 = vmul.f32 1.0, %v5257
        %v5259 = vrcp.pop %v5208
        %v5260 = vmul.f32 1.0, %v5259
        %v5261 = vrcp.pop %v5209
        %v5262 = vmul.f32 1.0, %v5261
        %v5263 = vrcp.pop %v5210
        %v5264 = vmul.f32 1.0, %v5263
        %v5265 = vrcp.pop %v5211
        %v5266 = vmul.f32 1.0, %v5265
        %v5267 = vrcp.pop %v5212
        %v5268 = vmul.f32 1.0, %v5267
        %v5269 = vrcp.pop %v5213
        %v5270 = vmul.f32 1.0, %v5269
        %v5271 = vrcp.pop %v5214
        %v5272 = vmul.f32 1.0, %v5271
        %v5273 = vrcp.pop %v5215
        %v5274 = vmul.f32 1.0, %v5273
        %v5275 = vrcp.pop %v5216
        %v5276 = vmul.f32 1.0, %v5275
        %v5277 = vrcp.pop %v5217
        %v5278 = vmul.f32 1.0, %v5277
        %v5279 = vrcp.pop %v5218
        %v5280 = vmul.f32 1.0, %v5279
        %v5281 = vrcp.pop %v5219
        %v5282 = vmul.f32 1.0, %v5281
        %v5283 = vrcp.pop %v5220
        %v5284 = vmul.f32 1.0, %v5283
        %v5285 = vld [vmem:[%s242] sm:$0xff]
        %v5286 = vld [vmem:[%s242 + $0x8] sm:$0xff]
        %v5287 = vld [vmem:[%s242 + $0x10] sm:$0xff]
        %v5288 = vld [vmem:[%s242 + $0x18] sm:$0xff]
        %v5289 = vld [vmem:[%s242 + $0x20] sm:$0xff]
        %v5290 = vld [vmem:[%s242 + $0x28] sm:$0xff]
        %v5291 = vld [vmem:[%s242 + $0x30] sm:$0xff]
        %v5292 = vld [vmem:[%s242 + $0x38] sm:$0xff]
        %v5293 = vld [vmem:[%s242 + $0x40] sm:$0xff]
        %v5294 = vld [vmem:[%s242 + $0x48] sm:$0xff]
        %v5295 = vld [vmem:[%s242 + $0x50] sm:$0xff]
        %v5296 = vld [vmem:[%s242 + $0x58] sm:$0xff]
        %v5297 = vld [vmem:[%s242 + $0x60] sm:$0xff]
        %v5298 = vld [vmem:[%s242 + $0x68] sm:$0xff]
        %v5299 = vld [vmem:[%s242 + $0x70] sm:$0xff]
        %v5300 = vld [vmem:[%s242 + $0x78] sm:$0xff]
        %v5301 = vld [vmem:[%s242 + $0x80] sm:$0xff]
        %v5302 = vld [vmem:[%s242 + $0x88] sm:$0xff]
        %v5303 = vld [vmem:[%s242 + $0x90] sm:$0xff]
        %v5304 = vld [vmem:[%s242 + $0x98] sm:$0xff]
        %v5305 = vld [vmem:[%s242 + $0xa0] sm:$0xff]
        %v5306 = vld [vmem:[%s242 + $0xa8] sm:$0xff]
        %v5307 = vld [vmem:[%s242 + $0xb0] sm:$0xff]
        %v5308 = vld [vmem:[%s242 + $0xb8] sm:$0xff]
        %v5309 = vld [vmem:[%s242 + $0xc0] sm:$0xff]
        %v5310 = vld [vmem:[%s242 + $0xc8] sm:$0xff]
        %v5311 = vld [vmem:[%s242 + $0xd0] sm:$0xff]
        %v5312 = vld [vmem:[%s242 + $0xd8] sm:$0xff]
        %v5313 = vld [vmem:[%s242 + $0xe0] sm:$0xff]
        %v5314 = vld [vmem:[%s242 + $0xe8] sm:$0xff]
        %v5315 = vld [vmem:[%s242 + $0xf0] sm:$0xff]
        %v5316 = vld [vmem:[%s242 + $0xf8] sm:$0xff]
        %vm5317 = vcmask 257024
        %5318 = vst.msk [vmem:[#allocation2] sm:$0xf] %vm5317, 0
        %5319 = vst.msk [vmem:[#allocation2 + $0x4] sm:$0xf] %vm5317, 0
        %vm5320 = vcmask 253952
        %5321 = vst.msk [vmem:[#allocation2 + $0x8] sm:$0x1] %vm5320, 0
        %s5322 = scalar_lea.vmem [#allocation2], 204
        %5323 = vst.msk [vmem:[%s5322] sm:$0xf] %vm5317, 0
        %5324 = vst.msk [vmem:[%s5322 + $0x4] sm:$0xf] %vm5317, 0
        %5325 = vst.msk [vmem:[%s5322 + $0x8] sm:$0x1] %vm5320, 0
        %vm5326 = vcmask 253952
        %vm5327 = vsmask.f32 256
        %vm5328 = vmand %vm5326, %vm5327
        %v5329 = vld [vmem:[#allocation2] sm:$0x1]
        %v5330 = vsel %vm5328, 0, %v5329
        %5331 = vst [vmem:[#allocation2] sm:$0x1] %v5330
        %v5332 = vld [vmem:[#allocation2 + $0xc] sm:$0x1]
        %v5333 = vsel %vm5328, 0, %v5332
        %5334 = vst [vmem:[#allocation2 + $0xc] sm:$0x1] %v5333
        %v5335 = vld [vmem:[#allocation2 + $0x18] sm:$0x1]
        %v5336 = vsel %vm5328, 0, %v5335
        %5337 = vst [vmem:[#allocation2 + $0x18] sm:$0x1] %v5336
        %v5338 = vld [vmem:[#allocation2 + $0x24] sm:$0x1]
        %v5339 = vsel %vm5328, 0, %v5338
        %5340 = vst [vmem:[#allocation2 + $0x24] sm:$0x1] %v5339
        %v5341 = vld [vmem:[#allocation2 + $0x30] sm:$0x1]
        %v5342 = vsel %vm5328, 0, %v5341
        %5343 = vst [vmem:[#allocation2 + $0x30] sm:$0x1] %v5342
        %v5344 = vld [vmem:[#allocation2 + $0x3c] sm:$0x1]
        %v5345 = vsel %vm5328, 0, %v5344
        %5346 = vst [vmem:[#allocation2 + $0x3c] sm:$0x1] %v5345
        %v5347 = vld [vmem:[#allocation2 + $0x48] sm:$0x1]
        %v5348 = vsel %vm5328, 0, %v5347
        %5349 = vst [vmem:[#allocation2 + $0x48] sm:$0x1] %v5348
        %v5350 = vld [vmem:[#allocation2 + $0x54] sm:$0x1]
        %v5351 = vsel %vm5328, 0, %v5350
        %5352 = vst [vmem:[#allocation2 + $0x54] sm:$0x1] %v5351
        %v5353 = vld [vmem:[#allocation2 + $0x60] sm:$0x1]
        %v5354 = vsel %vm5328, 0, %v5353
        %5355 = vst [vmem:[#allocation2 + $0x60] sm:$0x1] %v5354
        %v5356 = vld [vmem:[#allocation2 + $0x6c] sm:$0x1]
        %v5357 = vsel %vm5328, 0, %v5356
        %5358 = vst [vmem:[#allocation2 + $0x6c] sm:$0x1] %v5357
        %v5359 = vld [vmem:[#allocation2 + $0x78] sm:$0x1]
        %v5360 = vsel %vm5328, 0, %v5359
        %5361 = vst [vmem:[#allocation2 + $0x78] sm:$0x1] %v5360
        %v5362 = vld [vmem:[#allocation2 + $0x84] sm:$0x1]
        %v5363 = vsel %vm5328, 0, %v5362
        %5364 = vst [vmem:[#allocation2 + $0x84] sm:$0x1] %v5363
        %v5365 = vld [vmem:[#allocation2 + $0x90] sm:$0x1]
        %v5366 = vsel %vm5328, 0, %v5365
        %5367 = vst [vmem:[#allocation2 + $0x90] sm:$0x1] %v5366
        %v5368 = vld [vmem:[#allocation2 + $0x9c] sm:$0x1]
        %v5369 = vsel %vm5328, 0, %v5368
        %5370 = vst [vmem:[#allocation2 + $0x9c] sm:$0x1] %v5369
        %v5371 = vld [vmem:[#allocation2 + $0xa8] sm:$0x1]
        %v5372 = vsel %vm5328, 0, %v5371
        %5373 = vst [vmem:[#allocation2 + $0xa8] sm:$0x1] %v5372
        %v5374 = vld [vmem:[#allocation2 + $0xb4] sm:$0x1]
        %v5375 = vsel %vm5328, 0, %v5374
        %5376 = vst [vmem:[#allocation2 + $0xb4] sm:$0x1] %v5375
        %v5377 = vld [vmem:[#allocation2 + $0xc0] sm:$0x1]
        %v5378 = vsel %vm5328, 0, %v5377
        %5379 = vst [vmem:[#allocation2 + $0xc0] sm:$0x1] %v5378
        %v5380 = vld [vmem:[#allocation2 + $0xcc] sm:$0x1]
        %v5381 = vsel %vm5328, 0, %v5380
        %5382 = vst [vmem:[#allocation2 + $0xcc] sm:$0x1] %v5381
        %vm5383 = vsmask.f32 7938
        %vm5384 = vmand %vm5326, %vm5383
        %v5385 = vld [vmem:[#allocation2 + $0x8] sm:$0x1]
        %v5386 = vsel %vm5384, 0, %v5385
        %5387 = vst [vmem:[#allocation2 + $0x8] sm:$0x1] %v5386
        %v5388 = vld [vmem:[#allocation2 + $0x14] sm:$0x1]
        %v5389 = vsel %vm5384, 0, %v5388
        %5390 = vst [vmem:[#allocation2 + $0x14] sm:$0x1] %v5389
        %v5391 = vld [vmem:[#allocation2 + $0x20] sm:$0x1]
        %v5392 = vsel %vm5384, 0, %v5391
        %5393 = vst [vmem:[#allocation2 + $0x20] sm:$0x1] %v5392
        %v5394 = vld [vmem:[#allocation2 + $0x2c] sm:$0x1]
        %v5395 = vsel %vm5384, 0, %v5394
        %5396 = vst [vmem:[#allocation2 + $0x2c] sm:$0x1] %v5395
        %v5397 = vld [vmem:[#allocation2 + $0x38] sm:$0x1]
        %v5398 = vsel %vm5384, 0, %v5397
        %5399 = vst [vmem:[#allocation2 + $0x38] sm:$0x1] %v5398
        %v5400 = vld [vmem:[#allocation2 + $0x44] sm:$0x1]
        %v5401 = vsel %vm5384, 0, %v5400
        %5402 = vst [vmem:[#allocation2 + $0x44] sm:$0x1] %v5401
        %v5403 = vld [vmem:[#allocation2 + $0x50] sm:$0x1]
        %v5404 = vsel %vm5384, 0, %v5403
        %5405 = vst [vmem:[#allocation2 + $0x50] sm:$0x1] %v5404
        %v5406 = vld [vmem:[#allocation2 + $0x5c] sm:$0x1]
        %v5407 = vsel %vm5384, 0, %v5406
        %5408 = vst [vmem:[#allocation2 + $0x5c] sm:$0x1] %v5407
        %v5409 = vld [vmem:[#allocation2 + $0x68] sm:$0x1]
        %v5410 = vsel %vm5384, 0, %v5409
        %5411 = vst [vmem:[#allocation2 + $0x68] sm:$0x1] %v5410
        %v5412 = vld [vmem:[#allocation2 + $0x74] sm:$0x1]
        %v5413 = vsel %vm5384, 0, %v5412
        %5414 = vst [vmem:[#allocation2 + $0x74] sm:$0x1] %v5413
        %v5415 = vld [vmem:[#allocation2 + $0x80] sm:$0x1]
        %v5416 = vsel %vm5384, 0, %v5415
        %5417 = vst [vmem:[#allocation2 + $0x80] sm:$0x1] %v5416
        %v5418 = vld [vmem:[#allocation2 + $0x8c] sm:$0x1]
        %v5419 = vsel %vm5384, 0, %v5418
        %5420 = vst [vmem:[#allocation2 + $0x8c] sm:$0x1] %v5419
        %v5421 = vld [vmem:[#allocation2 + $0x98] sm:$0x1]
        %v5422 = vsel %vm5384, 0, %v5421
        %5423 = vst [vmem:[#allocation2 + $0x98] sm:$0x1] %v5422
        %v5424 = vld [vmem:[#allocation2 + $0xa4] sm:$0x1]
        %v5425 = vsel %vm5384, 0, %v5424
        %5426 = vst [vmem:[#allocation2 + $0xa4] sm:$0x1] %v5425
        %v5427 = vld [vmem:[#allocation2 + $0xb0] sm:$0x1]
        %v5428 = vsel %vm5384, 0, %v5427
        %5429 = vst [vmem:[#allocation2 + $0xb0] sm:$0x1] %v5428
        %v5430 = vld [vmem:[#allocation2 + $0xbc] sm:$0x1]
        %v5431 = vsel %vm5384, 0, %v5430
        %5432 = vst [vmem:[#allocation2 + $0xbc] sm:$0x1] %v5431
        %v5433 = vld [vmem:[#allocation2 + $0xc8] sm:$0x1]
        %v5434 = vsel %vm5384, 0, %v5433
        %5435 = vst [vmem:[#allocation2 + $0xc8] sm:$0x1] %v5434
        %v5436 = vld [vmem:[#allocation2 + $0xd4] sm:$0x1]
        %v5437 = vsel %vm5384, 0, %v5436
        %5438 = vst [vmem:[#allocation2 + $0xd4] sm:$0x1] %v5437
        %5471 = vrot.lane.b32.xlu0 %v5285, 32
        %v5472 = vpop.permute.xlu0 %5471
        %5473 = vrot.lane.b32.xlu0 %v5286, 32
        %v5474 = vpop.permute.xlu0 %5473
        %5475 = vrot.lane.b32.xlu0 %v5287, 32
        %v5476 = vpop.permute.xlu0 %5475
        %5477 = vrot.lane.b32.xlu0 %v5288, 32
        %v5478 = vpop.permute.xlu0 %5477
        %5479 = vrot.lane.b32.xlu0 %v5289, 32
        %v5480 = vpop.permute.xlu0 %5479
        %5481 = vrot.lane.b32.xlu0 %v5290, 32
        %v5482 = vpop.permute.xlu0 %5481
        %5483 = vrot.lane.b32.xlu0 %v5291, 32
        %v5484 = vpop.permute.xlu0 %5483
        %5485 = vrot.lane.b32.xlu0 %v5292, 32
        %v5486 = vpop.permute.xlu0 %5485
        %5487 = vrot.lane.b32.xlu0 %v5293, 32
        %v5488 = vpop.permute.xlu0 %5487
        %5489 = vrot.lane.b32.xlu0 %v5294, 32
        %v5490 = vpop.permute.xlu0 %5489
        %5491 = vrot.lane.b32.xlu0 %v5295, 32
        %v5492 = vpop.permute.xlu0 %5491
        %5493 = vrot.lane.b32.xlu0 %v5296, 32
        %v5494 = vpop.permute.xlu0 %5493
        %5495 = vrot.lane.b32.xlu0 %v5297, 32
        %v5496 = vpop.permute.xlu0 %5495
        %5497 = vrot.lane.b32.xlu0 %v5298, 32
        %v5498 = vpop.permute.xlu0 %5497
        %5499 = vrot.lane.b32.xlu0 %v5299, 32
        %v5500 = vpop.permute.xlu0 %5499
        %5501 = vrot.lane.b32.xlu0 %v5300, 32
        %v5502 = vpop.permute.xlu0 %5501
        %5503 = vrot.lane.b32.xlu0 %v5301, 32
        %v5504 = vpop.permute.xlu0 %5503
        %5505 = vrot.lane.b32.xlu0 %v5302, 32
        %v5506 = vpop.permute.xlu0 %5505
        %5507 = vrot.lane.b32.xlu0 %v5303, 32
        %v5508 = vpop.permute.xlu0 %5507
        %5509 = vrot.lane.b32.xlu0 %v5304, 32
        %v5510 = vpop.permute.xlu0 %5509
        %5511 = vrot.lane.b32.xlu0 %v5305, 32
        %v5512 = vpop.permute.xlu0 %5511
        %5513 = vrot.lane.b32.xlu0 %v5306, 32
        %v5514 = vpop.permute.xlu0 %5513
        %5515 = vrot.lane.b32.xlu0 %v5307, 32
        %v5516 = vpop.permute.xlu0 %5515
        %5517 = vrot.lane.b32.xlu0 %v5308, 32
        %v5518 = vpop.permute.xlu0 %5517
        %5519 = vrot.lane.b32.xlu0 %v5309, 32
        %v5520 = vpop.permute.xlu0 %5519
        %5521 = vrot.lane.b32.xlu0 %v5310, 32
        %v5522 = vpop.permute.xlu0 %5521
        %5523 = vrot.lane.b32.xlu0 %v5311, 32
        %v5524 = vpop.permute.xlu0 %5523
        %5525 = vrot.lane.b32.xlu0 %v5312, 32
        %v5526 = vpop.permute.xlu0 %5525
        %5527 = vrot.lane.b32.xlu0 %v5313, 32
        %v5528 = vpop.permute.xlu0 %5527
        %5529 = vrot.lane.b32.xlu0 %v5314, 32
        %v5530 = vpop.permute.xlu0 %5529
        %5531 = vrot.lane.b32.xlu0 %v5315, 32
        %v5532 = vpop.permute.xlu0 %5531
        %5533 = vrot.lane.b32.xlu0 %v5316, 32
        %v5534 = vpop.permute.xlu0 %5533
        %v5567 = vmul.f32 %v5222, %v5472
        %v5568 = vmul.f32 %v5224, %v5474
        %v5569 = vmul.f32 %v5226, %v5476
        %v5570 = vmul.f32 %v5228, %v5478
        %v5571 = vmul.f32 %v5230, %v5480
        %v5572 = vmul.f32 %v5232, %v5482
        %v5573 = vmul.f32 %v5234, %v5484
        %v5574 = vmul.f32 %v5236, %v5486
        %v5575 = vmul.f32 %v5238, %v5488
        %v5576 = vmul.f32 %v5240, %v5490
        %v5577 = vmul.f32 %v5242, %v5492
        %v5578 = vmul.f32 %v5244, %v5494
        %v5579 = vmul.f32 %v5246, %v5496
        %v5580 = vmul.f32 %v5248, %v5498
        %v5581 = vmul.f32 %v5250, %v5500
        %v5582 = vmul.f32 %v5252, %v5502
        %v5583 = vmul.f32 %v5254, %v5504
        %v5584 = vmul.f32 %v5256, %v5506
        %v5585 = vmul.f32 %v5258, %v5508
        %v5586 = vmul.f32 %v5260, %v5510
        %v5587 = vmul.f32 %v5262, %v5512
        %v5588 = vmul.f32 %v5264, %v5514
        %v5589 = vmul.f32 %v5266, %v5516
        %v5590 = vmul.f32 %v5268, %v5518
        %v5591 = vmul.f32 %v5270, %v5520
        %v5592 = vmul.f32 %v5272, %v5522
        %v5593 = vmul.f32 %v5274, %v5524
        %v5594 = vmul.f32 %v5276, %v5526
        %v5595 = vmul.f32 %v5278, %v5528
        %v5596 = vmul.f32 %v5280, %v5530
        %v5597 = vmul.f32 %v5282, %v5532
        %v5598 = vmul.f32 %v5284, %v5534
        %v5599 = vpack.c.bf16 %v5568, %v5567
        %v5600 = vpack.c.bf16 %v5570, %v5569
        %v5601 = vpack.c.bf16 %v5572, %v5571
        %v5602 = vpack.c.bf16 %v5574, %v5573
        %v5603 = vpack.c.bf16 %v5576, %v5575
        %v5604 = vpack.c.bf16 %v5578, %v5577
        %v5605 = vpack.c.bf16 %v5580, %v5579
        %v5606 = vpack.c.bf16 %v5582, %v5581
        %v5607 = vpack.c.bf16 %v5584, %v5583
        %v5608 = vpack.c.bf16 %v5586, %v5585
        %v5609 = vpack.c.bf16 %v5588, %v5587
        %v5610 = vpack.c.bf16 %v5590, %v5589
        %v5611 = vpack.c.bf16 %v5592, %v5591
        %v5612 = vpack.c.bf16 %v5594, %v5593
        %v5613 = vpack.c.bf16 %v5596, %v5595
        %v5614 = vpack.c.bf16 %v5598, %v5597
        %v5631 = vunpack.c.l.b16 %v5599
        %v5632 = vunpack.c.h.b16 %v5599
        %v5633 = vunpack.c.l.b16 %v5600
        %v5634 = vunpack.c.h.b16 %v5600
        %v5635 = vunpack.c.l.b16 %v5601
        %v5636 = vunpack.c.h.b16 %v5601
        %v5637 = vunpack.c.l.b16 %v5602
        %v5638 = vunpack.c.h.b16 %v5602
        %v5639 = vunpack.c.l.b16 %v5603
        %v5640 = vunpack.c.h.b16 %v5603
        %v5641 = vunpack.c.l.b16 %v5604
        %v5642 = vunpack.c.h.b16 %v5604
        %v5643 = vunpack.c.l.b16 %v5605
        %v5644 = vunpack.c.h.b16 %v5605
        %v5645 = vunpack.c.l.b16 %v5606
        %v5646 = vunpack.c.h.b16 %v5606
        %v5647 = vunpack.c.l.b16 %v5607
        %v5648 = vunpack.c.h.b16 %v5607
        %v5649 = vunpack.c.l.b16 %v5608
        %v5650 = vunpack.c.h.b16 %v5608
        %v5651 = vunpack.c.l.b16 %v5609
        %v5652 = vunpack.c.h.b16 %v5609
        %v5653 = vunpack.c.l.b16 %v5610
        %v5654 = vunpack.c.h.b16 %v5610
        %v5655 = vunpack.c.l.b16 %v5611
        %v5656 = vunpack.c.h.b16 %v5611
        %v5657 = vunpack.c.l.b16 %v5612
        %v5658 = vunpack.c.h.b16 %v5612
        %v5659 = vunpack.c.l.b16 %v5613
        %v5660 = vunpack.c.h.b16 %v5613
        %v5661 = vunpack.c.l.b16 %v5614
        %v5662 = vunpack.c.h.b16 %v5614
        %v5663 = vpack.c.b16 %v5631, %v5631
        %v5664 = vpack.c.b16 %v5632, %v5632
        %v5665 = vpack.c.b16 %v5633, %v5633
        %v5666 = vpack.c.b16 %v5634, %v5634
        %v5667 = vpack.c.b16 %v5635, %v5635
        %v5668 = vpack.c.b16 %v5636, %v5636
        %v5669 = vpack.c.b16 %v5637, %v5637
        %v5670 = vpack.c.b16 %v5638, %v5638
        %v5671 = vpack.c.b16 %v5639, %v5639
        %v5672 = vpack.c.b16 %v5640, %v5640
        %v5673 = vpack.c.b16 %v5641, %v5641
        %v5674 = vpack.c.b16 %v5642, %v5642
        %v5675 = vpack.c.b16 %v5643, %v5643
        %v5676 = vpack.c.b16 %v5644, %v5644
        %v5677 = vpack.c.b16 %v5645, %v5645
        %v5678 = vpack.c.b16 %v5646, %v5646
        %v5679 = vpack.c.b16 %v5647, %v5647
        %v5680 = vpack.c.b16 %v5648, %v5648
        %v5681 = vpack.c.b16 %v5649, %v5649
        %v5682 = vpack.c.b16 %v5650, %v5650
        %v5683 = vpack.c.b16 %v5651, %v5651
        %v5684 = vpack.c.b16 %v5652, %v5652
        %v5685 = vpack.c.b16 %v5653, %v5653
        %v5686 = vpack.c.b16 %v5654, %v5654
        %v5687 = vpack.c.b16 %v5655, %v5655
        %v5688 = vpack.c.b16 %v5656, %v5656
        %v5689 = vpack.c.b16 %v5657, %v5657
        %v5690 = vpack.c.b16 %v5658, %v5658
        %v5691 = vpack.c.b16 %v5659, %v5659
        %v5692 = vpack.c.b16 %v5660, %v5660
        %v5693 = vpack.c.b16 %v5661, %v5661
        %v5694 = vpack.c.b16 %v5662, %v5662
        %vm5695 = vsmask.f32 4368
        %vm5696 = vmor %vm5327, %vm5695
        %v5698 = vshrl.u32 %v5663, 16
        %v5700 = vrot.slane %v5698, 7
        %v5701 = vshll.u32 %v5663, 16
        %v5703 = vor.u32 %v5700, %v5701
        %v5704 = vrot.slane %v5700, 4
        %v5706 = vshrl.u32 %v5664, 16
        %v5708 = vrot.slane %v5706, 7
        %v5709 = vshll.u32 %v5664, 16
        %v5711 = vor.u32 %v5708, %v5709
        %v5712 = vsel %vm5696, %v5704, %v5711
        %v5713 = vrot.slane %v5708, 4
        %v5715 = vshrl.u32 %v5665, 16
        %v5717 = vrot.slane %v5715, 7
        %v5718 = vshll.u32 %v5665, 16
        %v5720 = vor.u32 %v5717, %v5718
        %v5721 = vrot.slane %v5717, 4
        %v5723 = vshrl.u32 %v5666, 16
        %v5725 = vrot.slane %v5723, 7
        %v5726 = vshll.u32 %v5666, 16
        %v5728 = vor.u32 %v5725, %v5726
        %v5729 = vsel %vm5696, %v5721, %v5728
        %v5730 = vrot.slane %v5725, 4
        %v5732 = vshrl.u32 %v5667, 16
        %v5734 = vrot.slane %v5732, 7
        %v5735 = vshll.u32 %v5667, 16
        %v5737 = vor.u32 %v5734, %v5735
        %v5738 = vrot.slane %v5734, 4
        %v5740 = vshrl.u32 %v5668, 16
        %v5742 = vrot.slane %v5740, 7
        %v5743 = vshll.u32 %v5668, 16
        %v5745 = vor.u32 %v5742, %v5743
        %v5746 = vsel %vm5696, %v5738, %v5745
        %v5747 = vrot.slane %v5742, 4
        %v5749 = vshrl.u32 %v5669, 16
        %v5751 = vrot.slane %v5749, 7
        %v5752 = vshll.u32 %v5669, 16
        %v5754 = vor.u32 %v5751, %v5752
        %v5755 = vrot.slane %v5751, 4
        %v5757 = vshrl.u32 %v5670, 16
        %v5759 = vrot.slane %v5757, 7
        %v5760 = vshll.u32 %v5670, 16
        %v5762 = vor.u32 %v5759, %v5760
        %v5763 = vsel %vm5696, %v5755, %v5762
        %v5764 = vrot.slane %v5759, 4
        %v5766 = vshrl.u32 %v5671, 16
        %v5768 = vrot.slane %v5766, 7
        %v5769 = vshll.u32 %v5671, 16
        %v5771 = vor.u32 %v5768, %v5769
        %v5772 = vrot.slane %v5768, 4
        %v5774 = vshrl.u32 %v5672, 16
        %v5776 = vrot.slane %v5774, 7
        %v5777 = vshll.u32 %v5672, 16
        %v5779 = vor.u32 %v5776, %v5777
        %v5780 = vsel %vm5696, %v5772, %v5779
        %v5781 = vrot.slane %v5776, 4
        %v5783 = vshrl.u32 %v5673, 16
        %v5785 = vrot.slane %v5783, 7
        %v5786 = vshll.u32 %v5673, 16
        %v5788 = vor.u32 %v5785, %v5786
        %v5789 = vrot.slane %v5785, 4
        %v5791 = vshrl.u32 %v5674, 16
        %v5793 = vrot.slane %v5791, 7
        %v5794 = vshll.u32 %v5674, 16
        %v5796 = vor.u32 %v5793, %v5794
        %v5797 = vsel %vm5696, %v5789, %v5796
        %v5798 = vrot.slane %v5793, 4
        %v5800 = vshrl.u32 %v5675, 16
        %v5802 = vrot.slane %v5800, 7
        %v5803 = vshll.u32 %v5675, 16
        %v5805 = vor.u32 %v5802, %v5803
        %v5806 = vrot.slane %v5802, 4
        %v5808 = vshrl.u32 %v5676, 16
        %v5810 = vrot.slane %v5808, 7
        %v5811 = vshll.u32 %v5676, 16
        %v5813 = vor.u32 %v5810, %v5811
        %v5814 = vsel %vm5696, %v5806, %v5813
        %v5815 = vrot.slane %v5810, 4
        %v5817 = vshrl.u32 %v5677, 16
        %v5819 = vrot.slane %v5817, 7
        %v5820 = vshll.u32 %v5677, 16
        %v5822 = vor.u32 %v5819, %v5820
        %v5823 = vrot.slane %v5819, 4
        %v5825 = vshrl.u32 %v5678, 16
        %v5827 = vrot.slane %v5825, 7
        %v5828 = vshll.u32 %v5678, 16
        %v5830 = vor.u32 %v5827, %v5828
        %v5831 = vsel %vm5696, %v5823, %v5830
        %v5832 = vrot.slane %v5827, 4
        %v5834 = vshrl.u32 %v5679, 16
        %v5836 = vrot.slane %v5834, 7
        %v5837 = vshll.u32 %v5679, 16
        %v5839 = vor.u32 %v5836, %v5837
        %v5840 = vrot.slane %v5836, 4
        %v5842 = vshrl.u32 %v5680, 16
        %v5844 = vrot.slane %v5842, 7
        %v5845 = vshll.u32 %v5680, 16
        %v5847 = vor.u32 %v5844, %v5845
        %v5848 = vsel %vm5696, %v5840, %v5847
        %v5849 = vrot.slane %v5844, 4
        %v5851 = vshrl.u32 %v5681, 16
        %v5853 = vrot.slane %v5851, 7
        %v5854 = vshll.u32 %v5681, 16
        %v5856 = vor.u32 %v5853, %v5854
        %v5857 = vrot.slane %v5853, 4
        %v5859 = vshrl.u32 %v5682, 16
        %v5861 = vrot.slane %v5859, 7
        %v5862 = vshll.u32 %v5682, 16
        %v5864 = vor.u32 %v5861, %v5862
        %v5865 = vsel %vm5696, %v5857, %v5864
        %v5866 = vrot.slane %v5861, 4
        %v5868 = vshrl.u32 %v5683, 16
        %v5870 = vrot.slane %v5868, 7
        %v5871 = vshll.u32 %v5683, 16
        %v5873 = vor.u32 %v5870, %v5871
        %v5874 = vrot.slane %v5870, 4
        %v5876 = vshrl.u32 %v5684, 16
        %v5878 = vrot.slane %v5876, 7
        %v5879 = vshll.u32 %v5684, 16
        %v5881 = vor.u32 %v5878, %v5879
        %v5882 = vsel %vm5696, %v5874, %v5881
        %v5883 = vrot.slane %v5878, 4
        %v5885 = vshrl.u32 %v5685, 16
        %v5887 = vrot.slane %v5885, 7
        %v5888 = vshll.u32 %v5685, 16
        %v5890 = vor.u32 %v5887, %v5888
        %v5891 = vrot.slane %v5887, 4
        %v5893 = vshrl.u32 %v5686, 16
        %v5895 = vrot.slane %v5893, 7
        %v5896 = vshll.u32 %v5686, 16
        %v5898 = vor.u32 %v5895, %v5896
        %v5899 = vsel %vm5696, %v5891, %v5898
        %v5900 = vrot.slane %v5895, 4
        %v5902 = vshrl.u32 %v5687, 16
        %v5904 = vrot.slane %v5902, 7
        %v5905 = vshll.u32 %v5687, 16
        %v5907 = vor.u32 %v5904, %v5905
        %v5908 = vrot.slane %v5904, 4
        %v5910 = vshrl.u32 %v5688, 16
        %v5912 = vrot.slane %v5910, 7
        %v5913 = vshll.u32 %v5688, 16
        %v5915 = vor.u32 %v5912, %v5913
        %v5916 = vsel %vm5696, %v5908, %v5915
        %v5917 = vrot.slane %v5912, 4
        %v5919 = vshrl.u32 %v5689, 16
        %v5921 = vrot.slane %v5919, 7
        %v5922 = vshll.u32 %v5689, 16
        %v5924 = vor.u32 %v5921, %v5922
        %v5925 = vrot.slane %v5921, 4
        %v5927 = vshrl.u32 %v5690, 16
        %v5929 = vrot.slane %v5927, 7
        %v5930 = vshll.u32 %v5690, 16
        %v5932 = vor.u32 %v5929, %v5930
        %v5933 = vsel %vm5696, %v5925, %v5932
        %v5934 = vrot.slane %v5929, 4
        %v5936 = vshrl.u32 %v5691, 16
        %v5938 = vrot.slane %v5936, 7
        %v5939 = vshll.u32 %v5691, 16
        %v5941 = vor.u32 %v5938, %v5939
        %v5942 = vrot.slane %v5938, 4
        %v5944 = vshrl.u32 %v5692, 16
        %v5946 = vrot.slane %v5944, 7
        %v5947 = vshll.u32 %v5692, 16
        %v5949 = vor.u32 %v5946, %v5947
        %v5950 = vsel %vm5696, %v5942, %v5949
        %v5951 = vrot.slane %v5946, 4
        %v5953 = vshrl.u32 %v5693, 16
        %v5955 = vrot.slane %v5953, 7
        %v5956 = vshll.u32 %v5693, 16
        %v5958 = vor.u32 %v5955, %v5956
        %v5959 = vrot.slane %v5955, 4
        %v5961 = vshrl.u32 %v5694, 16
        %v5963 = vrot.slane %v5961, 7
        %v5964 = vshll.u32 %v5694, 16
        %v5966 = vor.u32 %v5963, %v5964
        %v5967 = vsel %vm5696, %v5959, %v5966
        %v5968 = vrot.slane %v5963, 4
        %5969 = vrot.lane.b32.xlu0 %v5703, 96
        %v5970 = vpop.permute.xlu0 %5969
        %5971 = vrot.lane.b32.xlu0 %v5712, 96
        %v5972 = vpop.permute.xlu0 %5971
        %5973 = vrot.lane.b32.xlu0 %v5713, 96
        %v5974 = vpop.permute.xlu0 %5973
        %5975 = vrot.lane.b32.xlu0 %v5720, 96
        %v5976 = vpop.permute.xlu0 %5975
        %5977 = vrot.lane.b32.xlu0 %v5729, 96
        %v5978 = vpop.permute.xlu0 %5977
        %5979 = vrot.lane.b32.xlu0 %v5730, 96
        %v5980 = vpop.permute.xlu0 %5979
        %5981 = vrot.lane.b32.xlu0 %v5737, 96
        %v5982 = vpop.permute.xlu0 %5981
        %5983 = vrot.lane.b32.xlu0 %v5746, 96
        %v5984 = vpop.permute.xlu0 %5983
        %5985 = vrot.lane.b32.xlu0 %v5747, 96
        %v5986 = vpop.permute.xlu0 %5985
        %5987 = vrot.lane.b32.xlu0 %v5754, 96
        %v5988 = vpop.permute.xlu0 %5987
        %5989 = vrot.lane.b32.xlu0 %v5763, 96
        %v5990 = vpop.permute.xlu0 %5989
        %5991 = vrot.lane.b32.xlu0 %v5764, 96
        %v5992 = vpop.permute.xlu0 %5991
        %5993 = vrot.lane.b32.xlu0 %v5771, 96
        %v5994 = vpop.permute.xlu0 %5993
        %5995 = vrot.lane.b32.xlu0 %v5780, 96
        %v5996 = vpop.permute.xlu0 %5995
        %5997 = vrot.lane.b32.xlu0 %v5781, 96
        %v5998 = vpop.permute.xlu0 %5997
        %5999 = vrot.lane.b32.xlu0 %v5788, 96
        %v6000 = vpop.permute.xlu0 %5999
        %6001 = vrot.lane.b32.xlu0 %v5797, 96
        %v6002 = vpop.permute.xlu0 %6001
        %6003 = vrot.lane.b32.xlu0 %v5798, 96
        %v6004 = vpop.permute.xlu0 %6003
        %6005 = vrot.lane.b32.xlu0 %v5805, 96
        %v6006 = vpop.permute.xlu0 %6005
        %6007 = vrot.lane.b32.xlu0 %v5814, 96
        %v6008 = vpop.permute.xlu0 %6007
        %6009 = vrot.lane.b32.xlu0 %v5815, 96
        %v6010 = vpop.permute.xlu0 %6009
        %6011 = vrot.lane.b32.xlu0 %v5822, 96
        %v6012 = vpop.permute.xlu0 %6011
        %6013 = vrot.lane.b32.xlu0 %v5831, 96
        %v6014 = vpop.permute.xlu0 %6013
        %6015 = vrot.lane.b32.xlu0 %v5832, 96
        %v6016 = vpop.permute.xlu0 %6015
        %6017 = vrot.lane.b32.xlu0 %v5839, 96
        %v6018 = vpop.permute.xlu0 %6017
        %6019 = vrot.lane.b32.xlu0 %v5848, 96
        %v6020 = vpop.permute.xlu0 %6019
        %6021 = vrot.lane.b32.xlu0 %v5849, 96
        %v6022 = vpop.permute.xlu0 %6021
        %6023 = vrot.lane.b32.xlu0 %v5856, 96
        %v6024 = vpop.permute.xlu0 %6023
        %6025 = vrot.lane.b32.xlu0 %v5865, 96
        %v6026 = vpop.permute.xlu0 %6025
        %6027 = vrot.lane.b32.xlu0 %v5866, 96
        %v6028 = vpop.permute.xlu0 %6027
        %6029 = vrot.lane.b32.xlu0 %v5873, 96
        %v6030 = vpop.permute.xlu0 %6029
        %6031 = vrot.lane.b32.xlu0 %v5882, 96
        %v6032 = vpop.permute.xlu0 %6031
        %6033 = vrot.lane.b32.xlu0 %v5883, 96
        %v6034 = vpop.permute.xlu0 %6033
        %6035 = vrot.lane.b32.xlu0 %v5890, 96
        %v6036 = vpop.permute.xlu0 %6035
        %6037 = vrot.lane.b32.xlu0 %v5899, 96
        %v6038 = vpop.permute.xlu0 %6037
        %6039 = vrot.lane.b32.xlu0 %v5900, 96
        %v6040 = vpop.permute.xlu0 %6039
        %6041 = vrot.lane.b32.xlu0 %v5907, 96
        %v6042 = vpop.permute.xlu0 %6041
        %6043 = vrot.lane.b32.xlu0 %v5916, 96
        %v6044 = vpop.permute.xlu0 %6043
        %6045 = vrot.lane.b32.xlu0 %v5917, 96
        %v6046 = vpop.permute.xlu0 %6045
        %6047 = vrot.lane.b32.xlu0 %v5924, 96
        %v6048 = vpop.permute.xlu0 %6047
        %6049 = vrot.lane.b32.xlu0 %v5933, 96
        %v6050 = vpop.permute.xlu0 %6049
        %6051 = vrot.lane.b32.xlu0 %v5934, 96
        %v6052 = vpop.permute.xlu0 %6051
        %6053 = vrot.lane.b32.xlu0 %v5941, 96
        %v6054 = vpop.permute.xlu0 %6053
        %6055 = vrot.lane.b32.xlu0 %v5950, 96
        %v6056 = vpop.permute.xlu0 %6055
        %6057 = vrot.lane.b32.xlu0 %v5951, 96
        %v6058 = vpop.permute.xlu0 %6057
        %6059 = vrot.lane.b32.xlu0 %v5958, 96
        %v6060 = vpop.permute.xlu0 %6059
        %6061 = vrot.lane.b32.xlu0 %v5967, 96
        %v6062 = vpop.permute.xlu0 %6061
        %6063 = vrot.lane.b32.xlu0 %v5968, 96
        %v6064 = vpop.permute.xlu0 %6063
        %s6113 = scalar_lea.vmem [#allocation2], 12
        %vm6114 = vcmask 257024
        %vm6115 = vmand %vm6114, %vm5383
        %v6116 = vld [vmem:[%s6113] sm:$0xf]
        %v6117 = vsel %vm6115, %v5970, %v6116
        %6118 = vst [vmem:[%s6113] sm:$0xf] %v6117
        %6119 = vst.msk [vmem:[%s6113 + $0x4] sm:$0xf] %vm5317, %v5972
        %v6120 = vld [vmem:[%s6113 + $0x8] sm:$0x1]
        %v6121 = vsel %vm5328, %v5974, %v6120
        %6122 = vst [vmem:[%s6113 + $0x8] sm:$0x1] %v6121
        %v6123 = vld [vmem:[%s6113 + $0xc] sm:$0xf]
        %v6124 = vsel %vm6115, %v5976, %v6123
        %6125 = vst [vmem:[%s6113 + $0xc] sm:$0xf] %v6124
        %6126 = vst.msk [vmem:[%s6113 + $0x10] sm:$0xf] %vm5317, %v5978
        %v6127 = vld [vmem:[%s6113 + $0x14] sm:$0x1]
        %v6128 = vsel %vm5328, %v5980, %v6127
        %6129 = vst [vmem:[%s6113 + $0x14] sm:$0x1] %v6128
        %v6130 = vld [vmem:[%s6113 + $0x18] sm:$0xf]
        %v6131 = vsel %vm6115, %v5982, %v6130
        %6132 = vst [vmem:[%s6113 + $0x18] sm:$0xf] %v6131
        %6133 = vst.msk [vmem:[%s6113 + $0x1c] sm:$0xf] %vm5317, %v5984
        %v6134 = vld [vmem:[%s6113 + $0x20] sm:$0x1]
        %v6135 = vsel %vm5328, %v5986, %v6134
        %6136 = vst [vmem:[%s6113 + $0x20] sm:$0x1] %v6135
        %v6137 = vld [vmem:[%s6113 + $0x24] sm:$0xf]
        %v6138 = vsel %vm6115, %v5988, %v6137
        %6139 = vst [vmem:[%s6113 + $0x24] sm:$0xf] %v6138
        %6140 = vst.msk [vmem:[%s6113 + $0x28] sm:$0xf] %vm5317, %v5990
        %v6141 = vld [vmem:[%s6113 + $0x2c] sm:$0x1]
        %v6142 = vsel %vm5328, %v5992, %v6141
        %6143 = vst [vmem:[%s6113 + $0x2c] sm:$0x1] %v6142
        %v6144 = vld [vmem:[%s6113 + $0x30] sm:$0xf]
        %v6145 = vsel %vm6115, %v5994, %v6144
        %6146 = vst [vmem:[%s6113 + $0x30] sm:$0xf] %v6145
        %6147 = vst.msk [vmem:[%s6113 + $0x34] sm:$0xf] %vm5317, %v5996
        %v6148 = vld [vmem:[%s6113 + $0x38] sm:$0x1]
        %v6149 = vsel %vm5328, %v5998, %v6148
        %6150 = vst [vmem:[%s6113 + $0x38] sm:$0x1] %v6149
        %v6151 = vld [vmem:[%s6113 + $0x3c] sm:$0xf]
        %v6152 = vsel %vm6115, %v6000, %v6151
        %6153 = vst [vmem:[%s6113 + $0x3c] sm:$0xf] %v6152
        %6154 = vst.msk [vmem:[%s6113 + $0x40] sm:$0xf] %vm5317, %v6002
        %v6155 = vld [vmem:[%s6113 + $0x44] sm:$0x1]
        %v6156 = vsel %vm5328, %v6004, %v6155
        %6157 = vst [vmem:[%s6113 + $0x44] sm:$0x1] %v6156
        %v6158 = vld [vmem:[%s6113 + $0x48] sm:$0xf]
        %v6159 = vsel %vm6115, %v6006, %v6158
        %6160 = vst [vmem:[%s6113 + $0x48] sm:$0xf] %v6159
        %6161 = vst.msk [vmem:[%s6113 + $0x4c] sm:$0xf] %vm5317, %v6008
        %v6162 = vld [vmem:[%s6113 + $0x50] sm:$0x1]
        %v6163 = vsel %vm5328, %v6010, %v6162
        %6164 = vst [vmem:[%s6113 + $0x50] sm:$0x1] %v6163
        %v6165 = vld [vmem:[%s6113 + $0x54] sm:$0xf]
        %v6166 = vsel %vm6115, %v6012, %v6165
        %6167 = vst [vmem:[%s6113 + $0x54] sm:$0xf] %v6166
        %6168 = vst.msk [vmem:[%s6113 + $0x58] sm:$0xf] %vm5317, %v6014
        %v6169 = vld [vmem:[%s6113 + $0x5c] sm:$0x1]
        %v6170 = vsel %vm5328, %v6016, %v6169
        %6171 = vst [vmem:[%s6113 + $0x5c] sm:$0x1] %v6170
        %v6172 = vld [vmem:[%s6113 + $0x60] sm:$0xf]
        %v6173 = vsel %vm6115, %v6018, %v6172
        %6174 = vst [vmem:[%s6113 + $0x60] sm:$0xf] %v6173
        %6175 = vst.msk [vmem:[%s6113 + $0x64] sm:$0xf] %vm5317, %v6020
        %v6176 = vld [vmem:[%s6113 + $0x68] sm:$0x1]
        %v6177 = vsel %vm5328, %v6022, %v6176
        %6178 = vst [vmem:[%s6113 + $0x68] sm:$0x1] %v6177
        %v6179 = vld [vmem:[%s6113 + $0x6c] sm:$0xf]
        %v6180 = vsel %vm6115, %v6024, %v6179
        %6181 = vst [vmem:[%s6113 + $0x6c] sm:$0xf] %v6180
        %6182 = vst.msk [vmem:[%s6113 + $0x70] sm:$0xf] %vm5317, %v6026
        %v6183 = vld [vmem:[%s6113 + $0x74] sm:$0x1]
        %v6184 = vsel %vm5328, %v6028, %v6183
        %6185 = vst [vmem:[%s6113 + $0x74] sm:$0x1] %v6184
        %v6186 = vld [vmem:[%s6113 + $0x78] sm:$0xf]
        %v6187 = vsel %vm6115, %v6030, %v6186
        %6188 = vst [vmem:[%s6113 + $0x78] sm:$0xf] %v6187
        %6189 = vst.msk [vmem:[%s6113 + $0x7c] sm:$0xf] %vm5317, %v6032
        %v6190 = vld [vmem:[%s6113 + $0x80] sm:$0x1]
        %v6191 = vsel %vm5328, %v6034, %v6190
        %6192 = vst [vmem:[%s6113 + $0x80] sm:$0x1] %v6191
        %v6193 = vld [vmem:[%s6113 + $0x84] sm:$0xf]
        %v6194 = vsel %vm6115, %v6036, %v6193
        %6195 = vst [vmem:[%s6113 + $0x84] sm:$0xf] %v6194
        %6196 = vst.msk [vmem:[%s6113 + $0x88] sm:$0xf] %vm5317, %v6038
        %v6197 = vld [vmem:[%s6113 + $0x8c] sm:$0x1]
        %v6198 = vsel %vm5328, %v6040, %v6197
        %6199 = vst [vmem:[%s6113 + $0x8c] sm:$0x1] %v6198
        %v6200 = vld [vmem:[%s6113 + $0x90] sm:$0xf]
        %v6201 = vsel %vm6115, %v6042, %v6200
        %6202 = vst [vmem:[%s6113 + $0x90] sm:$0xf] %v6201
        %6203 = vst.msk [vmem:[%s6113 + $0x94] sm:$0xf] %vm5317, %v6044
        %v6204 = vld [vmem:[%s6113 + $0x98] sm:$0x1]
        %v6205 = vsel %vm5328, %v6046, %v6204
        %6206 = vst [vmem:[%s6113 + $0x98] sm:$0x1] %v6205
        %v6207 = vld [vmem:[%s6113 + $0x9c] sm:$0xf]
        %v6208 = vsel %vm6115, %v6048, %v6207
        %6209 = vst [vmem:[%s6113 + $0x9c] sm:$0xf] %v6208
        %6210 = vst.msk [vmem:[%s6113 + $0xa0] sm:$0xf] %vm5317, %v6050
        %v6211 = vld [vmem:[%s6113 + $0xa4] sm:$0x1]
        %v6212 = vsel %vm5328, %v6052, %v6211
        %6213 = vst [vmem:[%s6113 + $0xa4] sm:$0x1] %v6212
        %v6214 = vld [vmem:[%s6113 + $0xa8] sm:$0xf]
        %v6215 = vsel %vm6115, %v6054, %v6214
        %6216 = vst [vmem:[%s6113 + $0xa8] sm:$0xf] %v6215
        %6217 = vst.msk [vmem:[%s6113 + $0xac] sm:$0xf] %vm5317, %v6056
        %v6218 = vld [vmem:[%s6113 + $0xb0] sm:$0x1]
        %v6219 = vsel %vm5328, %v6058, %v6218
        %6220 = vst [vmem:[%s6113 + $0xb0] sm:$0x1] %v6219
        %v6221 = vld [vmem:[%s6113 + $0xb4] sm:$0xf]
        %v6222 = vsel %vm6115, %v6060, %v6221
        %6223 = vst [vmem:[%s6113 + $0xb4] sm:$0xf] %v6222
        %6224 = vst.msk [vmem:[%s6113 + $0xb8] sm:$0xf] %vm5317, %v6062
        %v6225 = vld [vmem:[%s6113 + $0xbc] sm:$0x1]
        %v6226 = vsel %vm5328, %v6064, %v6225
        %6227 = vst [vmem:[%s6113 + $0xbc] sm:$0x1] %v6226
        %v6228 = vld [vmem:[#allocation2] sm:$0xf]
        %v6229 = vld [vmem:[#allocation2 + $0x4] sm:$0xf]
        %v6230 = vld [vmem:[#allocation2 + $0xc] sm:$0xf]
        %v6231 = vld [vmem:[#allocation2 + $0x10] sm:$0xf]
        %v6232 = vld [vmem:[#allocation2 + $0x18] sm:$0xf]
        %v6233 = vld [vmem:[#allocation2 + $0x1c] sm:$0xf]
        %v6234 = vld [vmem:[#allocation2 + $0x24] sm:$0xf]
        %v6235 = vld [vmem:[#allocation2 + $0x28] sm:$0xf]
        %v6236 = vld [vmem:[#allocation2 + $0x30] sm:$0xf]
        %v6237 = vld [vmem:[#allocation2 + $0x34] sm:$0xf]
        %v6238 = vld [vmem:[#allocation2 + $0x3c] sm:$0xf]
        %v6239 = vld [vmem:[#allocation2 + $0x40] sm:$0xf]
        %v6240 = vld [vmem:[#allocation2 + $0x48] sm:$0xf]
        %v6241 = vld [vmem:[#allocation2 + $0x4c] sm:$0xf]
        %v6242 = vld [vmem:[#allocation2 + $0x54] sm:$0xf]
        %v6243 = vld [vmem:[#allocation2 + $0x58] sm:$0xf]
        %v6244 = vld [vmem:[#allocation2 + $0x60] sm:$0xf]
        %v6245 = vld [vmem:[#allocation2 + $0x64] sm:$0xf]
        %v6246 = vld [vmem:[#allocation2 + $0x6c] sm:$0xf]
        %v6247 = vld [vmem:[#allocation2 + $0x70] sm:$0xf]
        %v6248 = vld [vmem:[#allocation2 + $0x78] sm:$0xf]
        %v6249 = vld [vmem:[#allocation2 + $0x7c] sm:$0xf]
        %v6250 = vld [vmem:[#allocation2 + $0x84] sm:$0xf]
        %v6251 = vld [vmem:[#allocation2 + $0x88] sm:$0xf]
        %v6252 = vld [vmem:[#allocation2 + $0x90] sm:$0xf]
        %v6253 = vld [vmem:[#allocation2 + $0x94] sm:$0xf]
        %v6254 = vld [vmem:[#allocation2 + $0x9c] sm:$0xf]
        %v6255 = vld [vmem:[#allocation2 + $0xa0] sm:$0xf]
        %v6256 = vld [vmem:[#allocation2 + $0xa8] sm:$0xf]
        %v6257 = vld [vmem:[#allocation2 + $0xac] sm:$0xf]
        %v6258 = vld [vmem:[#allocation2 + $0xb4] sm:$0xf]
        %v6259 = vld [vmem:[#allocation2 + $0xb8] sm:$0xf]
        %v6260 = vld [vmem:[%s3] sm:$0xf]
        %v6261 = vld [vmem:[%s3 + $0x4] sm:$0xf]
        %v6262 = vld [vmem:[%s3 + $0x8] sm:$0xf]
        %v6263 = vld [vmem:[%s3 + $0xc] sm:$0xf]
        %v6296 = vunpack.c.l.b16 %v6228
        %v6297 = vunpack.c.l.b16 %v6229
        %v6298 = vunpack.c.l.b16 %v6230
        %v6299 = vunpack.c.l.b16 %v6231
        %v6300 = vunpack.c.l.b16 %v6232
        %v6301 = vunpack.c.l.b16 %v6233
        %v6302 = vunpack.c.l.b16 %v6234
        %v6303 = vunpack.c.l.b16 %v6235
        %v6304 = vunpack.c.l.b16 %v6236
        %v6305 = vunpack.c.l.b16 %v6237
        %v6306 = vunpack.c.l.b16 %v6238
        %v6307 = vunpack.c.l.b16 %v6239
        %v6308 = vunpack.c.l.b16 %v6240
        %v6309 = vunpack.c.l.b16 %v6241
        %v6310 = vunpack.c.l.b16 %v6242
        %v6311 = vunpack.c.l.b16 %v6243
        %v6312 = vunpack.c.l.b16 %v6244
        %v6313 = vunpack.c.l.b16 %v6245
        %v6314 = vunpack.c.l.b16 %v6246
        %v6315 = vunpack.c.l.b16 %v6247
        %v6316 = vunpack.c.l.b16 %v6248
        %v6317 = vunpack.c.l.b16 %v6249
        %v6318 = vunpack.c.l.b16 %v6250
        %v6319 = vunpack.c.l.b16 %v6251
        %v6320 = vunpack.c.l.b16 %v6252
        %v6321 = vunpack.c.l.b16 %v6253
        %v6322 = vunpack.c.l.b16 %v6254
        %v6323 = vunpack.c.l.b16 %v6255
        %v6324 = vunpack.c.l.b16 %v6256
        %v6325 = vunpack.c.l.b16 %v6257
        %v6326 = vunpack.c.l.b16 %v6258
        %v6327 = vunpack.c.l.b16 %v6259
        %v6328 = vpack.c.b16 %v6297, %v6296
        %v6329 = vpack.c.b16 %v6299, %v6298
        %v6330 = vpack.c.b16 %v6301, %v6300
        %v6331 = vpack.c.b16 %v6303, %v6302
        %v6332 = vpack.c.b16 %v6305, %v6304
        %v6333 = vpack.c.b16 %v6307, %v6306
        %v6334 = vpack.c.b16 %v6309, %v6308
        %v6335 = vpack.c.b16 %v6311, %v6310
        %v6336 = vpack.c.b16 %v6313, %v6312
        %v6337 = vpack.c.b16 %v6315, %v6314
        %v6338 = vpack.c.b16 %v6317, %v6316
        %v6339 = vpack.c.b16 %v6319, %v6318
        %v6340 = vpack.c.b16 %v6321, %v6320
        %v6341 = vpack.c.b16 %v6323, %v6322
        %v6342 = vpack.c.b16 %v6325, %v6324
        %v6343 = vpack.c.b16 %v6327, %v6326
        %v6348 = vunpack.c.l.b16 %v6260
        %v6349 = vunpack.c.l.b16 %v6261
        %v6350 = vunpack.c.l.b16 %v6262
        %v6351 = vunpack.c.l.b16 %v6263
        %v6352 = vpack.c.b16 %v6349, %v6348
        %v6353 = vpack.c.b16 %v6351, %v6350
        %vm6356 = vcmask 261120
        %v6358 = vsel %vm6356, %v6328, 0
        %v6361 = vsel %vm6356, %v6329, 0
        %v6364 = vsel %vm6356, %v6330, 0
        %v6367 = vsel %vm6356, %v6331, 0
        %v6370 = vsel %vm6356, %v6332, 0
        %v6373 = vsel %vm6356, %v6333, 0
        %v6376 = vsel %vm6356, %v6334, 0
        %v6379 = vsel %vm6356, %v6335, 0
        %v6382 = vsel %vm6356, %v6336, 0
        %v6385 = vsel %vm6356, %v6337, 0
        %v6388 = vsel %vm6356, %v6338, 0
        %v6391 = vsel %vm6356, %v6339, 0
        %v6394 = vsel %vm6356, %v6340, 0
        %v6397 = vsel %vm6356, %v6341, 0
        %v6400 = vsel %vm6356, %v6342, 0
        %v6403 = vsel %vm6356, %v6343, 0
        %6405 = vmatprep.subr.bf16.mxu0 0
        %6406 = vmatpush1.bf16.msra.mxu0 %v6352
        %6407 = vmatprep.subr.bf16.mxu0 0
        %6408 = vmatpush1.bf16.msra.mxu0 %v6353
        %6409 = vmatprep.subr.bf16.mxu0 0
        %6410 = vmatpush1.bf16.msra.mxu0 0
        %6411 = vmatprep.subr.bf16.mxu0 0
        %6412 = vmatpush1.bf16.msra.mxu0 0
        %6413 = vmatprep.subr.bf16.mxu0 0
        %6414 = vmatpush1.bf16.msra.mxu0 0
        %6415 = vmatprep.subr.bf16.mxu0 0
        %6416 = vmatpush1.bf16.msra.mxu0 0
        %6417 = vmatprep.subr.bf16.mxu0 0
        %6418 = vmatpush1.bf16.msra.mxu0 0
        %6419 = vmatprep.subr.bf16.mxu0 0
        %6420 = vmatpush1.bf16.msra.mxu0 0
        %6421 = vmatprep.subr.bf16.mxu0 0
        %6422 = vmatpush1.bf16.msra.mxu0 0
        %6423 = vmatprep.subr.bf16.mxu0 0
        %6424 = vmatpush1.bf16.msra.mxu0 0
        %6425 = vmatprep.subr.bf16.mxu0 0
        %6426 = vmatpush1.bf16.msra.mxu0 0
        %6427 = vmatprep.subr.bf16.mxu0 0
        %6428 = vmatpush1.bf16.msra.mxu0 0
        %6429 = vmatprep.subr.bf16.mxu0 0
        %6430 = vmatpush1.bf16.msra.mxu0 0
        %6431 = vmatprep.subr.bf16.mxu0 0
        %6432 = vmatpush1.bf16.msra.mxu0 0
        %6433 = vmatprep.subr.bf16.mxu0 0
        %6434 = vmatpush1.bf16.msra.mxu0 0
        %6435 = vmatprep.subr.bf16.mxu0 0
        %6436 = vmatpush1.bf16.msra.mxu0 0
        %6437 = vmatprep.mubr.bf16.mxu0 0
        %6438 = vmatmul.mubr.bf16.gmra.mrb[0].mxu0 %v6358
        %v6439 = vpop.f32.mrb[0].mxu0
        %v6440 = vadd.f32 0.0, %v6439
        %v6441 = vpop.f32.mrb[0].mxu0
        %v6442 = vpop.f32.mrb[0].mxu0
        %v6443 = vadd.f32 0.0, %v6442
        %v6444 = vpop.f32.mrb[0].mxu0
        %6445 = vmatprep.mubr.bf16.mxu0 0
        %6446 = vmatmul.mubr.bf16.gmra.mrb[0].mxu0 %v6361
        %v6447 = vpop.f32.mrb[0].mxu0
        %v6448 = vadd.f32 0.0, %v6447
        %v6449 = vpop.f32.mrb[0].mxu0
        %v6450 = vpop.f32.mrb[0].mxu0
        %v6451 = vadd.f32 0.0, %v6450
        %v6452 = vpop.f32.mrb[0].mxu0
        %6453 = vmatprep.mubr.bf16.mxu0 0
        %6454 = vmatmul.mubr.bf16.gmra.mrb[0].mxu0 %v6364
        %v6455 = vpop.f32.mrb[0].mxu0
        %v6456 = vadd.f32 0.0, %v6455
        %v6457 = vpop.f32.mrb[0].mxu0
        %v6458 = vpop.f32.mrb[0].mxu0
        %v6459 = vadd.f32 0.0, %v6458
        %v6460 = vpop.f32.mrb[0].mxu0
        %6461 = vmatprep.mubr.bf16.mxu0 0
        %6462 = vmatmul.mubr.bf16.gmra.mrb[0].mxu0 %v6367
        %v6463 = vpop.f32.mrb[0].mxu0
        %v6464 = vadd.f32 0.0, %v6463
        %v6465 = vpop.f32.mrb[0].mxu0
        %v6466 = vpop.f32.mrb[0].mxu0
        %v6467 = vadd.f32 0.0, %v6466
        %v6468 = vpop.f32.mrb[0].mxu0
        %6469 = vmatprep.mubr.bf16.mxu0 0
        %6470 = vmatmul.mubr.bf16.gmra.mrb[0].mxu0 %v6370
        %v6471 = vpop.f32.mrb[0].mxu0
        %v6472 = vadd.f32 0.0, %v6471
        %v6473 = vpop.f32.mrb[0].mxu0
        %v6474 = vpop.f32.mrb[0].mxu0
        %v6475 = vadd.f32 0.0, %v6474
        %v6476 = vpop.f32.mrb[0].mxu0
        %6477 = vmatprep.mubr.bf16.mxu0 0
        %6478 = vmatmul.mubr.bf16.gmra.mrb[0].mxu0 %v6373
        %v6479 = vpop.f32.mrb[0].mxu0
        %v6480 = vadd.f32 0.0, %v6479
        %v6481 = vpop.f32.mrb[0].mxu0
        %v6482 = vpop.f32.mrb[0].mxu0
        %v6483 = vadd.f32 0.0, %v6482
        %v6484 = vpop.f32.mrb[0].mxu0
        %6485 = vmatprep.mubr.bf16.mxu0 0
        %6486 = vmatmul.mubr.bf16.gmra.mrb[0].mxu0 %v6376
        %v6487 = vpop.f32.mrb[0].mxu0
        %v6488 = vadd.f32 0.0, %v6487
        %v6489 = vpop.f32.mrb[0].mxu0
        %v6490 = vpop.f32.mrb[0].mxu0
        %v6491 = vadd.f32 0.0, %v6490
        %v6492 = vpop.f32.mrb[0].mxu0
        %6493 = vmatprep.mubr.bf16.mxu0 0
        %6494 = vmatmul.mubr.bf16.gmra.mrb[0].mxu0 %v6379
        %v6495 = vpop.f32.mrb[0].mxu0
        %v6496 = vadd.f32 0.0, %v6495
        %v6497 = vpop.f32.mrb[0].mxu0
        %v6498 = vpop.f32.mrb[0].mxu0
        %v6499 = vadd.f32 0.0, %v6498
        %v6500 = vpop.f32.mrb[0].mxu0
        %6501 = vmatprep.mubr.bf16.mxu0 0
        %6502 = vmatmul.mubr.bf16.gmra.mrb[0].mxu0 %v6382
        %v6503 = vpop.f32.mrb[0].mxu0
        %v6504 = vadd.f32 0.0, %v6503
        %v6505 = vpop.f32.mrb[0].mxu0
        %v6506 = vpop.f32.mrb[0].mxu0
        %v6507 = vadd.f32 0.0, %v6506
        %v6508 = vpop.f32.mrb[0].mxu0
        %6509 = vmatprep.mubr.bf16.mxu0 0
        %6510 = vmatmul.mubr.bf16.gmra.mrb[0].mxu0 %v6385
        %v6511 = vpop.f32.mrb[0].mxu0
        %v6512 = vadd.f32 0.0, %v6511
        %v6513 = vpop.f32.mrb[0].mxu0
        %v6514 = vpop.f32.mrb[0].mxu0
        %v6515 = vadd.f32 0.0, %v6514
        %v6516 = vpop.f32.mrb[0].mxu0
        %6517 = vmatprep.mubr.bf16.mxu0 0
        %6518 = vmatmul.mubr.bf16.gmra.mrb[0].mxu0 %v6388
        %v6519 = vpop.f32.mrb[0].mxu0
        %v6520 = vadd.f32 0.0, %v6519
        %v6521 = vpop.f32.mrb[0].mxu0
        %v6522 = vpop.f32.mrb[0].mxu0
        %v6523 = vadd.f32 0.0, %v6522
        %v6524 = vpop.f32.mrb[0].mxu0
        %6525 = vmatprep.mubr.bf16.mxu0 0
        %6526 = vmatmul.mubr.bf16.gmra.mrb[0].mxu0 %v6391
        %v6527 = vpop.f32.mrb[0].mxu0
        %v6528 = vadd.f32 0.0, %v6527
        %v6529 = vpop.f32.mrb[0].mxu0
        %v6530 = vpop.f32.mrb[0].mxu0
        %v6531 = vadd.f32 0.0, %v6530
        %v6532 = vpop.f32.mrb[0].mxu0
        %6533 = vmatprep.mubr.bf16.mxu0 0
        %6534 = vmatmul.mubr.bf16.gmra.mrb[0].mxu0 %v6394
        %v6535 = vpop.f32.mrb[0].mxu0
        %v6536 = vadd.f32 0.0, %v6535
        %v6537 = vpop.f32.mrb[0].mxu0
        %v6538 = vpop.f32.mrb[0].mxu0
        %v6539 = vadd.f32 0.0, %v6538
        %v6540 = vpop.f32.mrb[0].mxu0
        %6541 = vmatprep.mubr.bf16.mxu0 0
        %6542 = vmatmul.mubr.bf16.gmra.mrb[0].mxu0 %v6397
        %v6543 = vpop.f32.mrb[0].mxu0
        %v6544 = vadd.f32 0.0, %v6543
        %v6545 = vpop.f32.mrb[0].mxu0
        %v6546 = vpop.f32.mrb[0].mxu0
        %v6547 = vadd.f32 0.0, %v6546
        %v6548 = vpop.f32.mrb[0].mxu0
        %6549 = vmatprep.mubr.bf16.mxu0 0
        %6550 = vmatmul.mubr.bf16.gmra.mrb[0].mxu0 %v6400
        %v6551 = vpop.f32.mrb[0].mxu0
        %v6552 = vadd.f32 0.0, %v6551
        %v6553 = vpop.f32.mrb[0].mxu0
        %v6554 = vpop.f32.mrb[0].mxu0
        %v6555 = vadd.f32 0.0, %v6554
        %v6556 = vpop.f32.mrb[0].mxu0
        %6557 = vmatprep.mubr.bf16.mxu0 0
        %6558 = vmatmul.mubr.bf16.gmra.mrb[0].mxu0 %v6403
        %v6559 = vpop.f32.mrb[0].mxu0
        %v6560 = vadd.f32 0.0, %v6559
        %v6561 = vpop.f32.mrb[0].mxu0
        %v6562 = vpop.f32.mrb[0].mxu0
        %v6563 = vadd.f32 0.0, %v6562
        %v6564 = vpop.f32.mrb[0].mxu0
        %6565 = vdwg.mxu0
        %6598 = vrot.lane.b32.xlu0 %v6440, 64
        %v6599 = vpop.permute.xlu0 %6598
        %6600 = vrot.lane.b32.xlu0 %v6443, 64
        %v6601 = vpop.permute.xlu0 %6600
        %6602 = vrot.lane.b32.xlu0 %v6448, 64
        %v6603 = vpop.permute.xlu0 %6602
        %6604 = vrot.lane.b32.xlu0 %v6451, 64
        %v6605 = vpop.permute.xlu0 %6604
        %6606 = vrot.lane.b32.xlu0 %v6456, 64
        %v6607 = vpop.permute.xlu0 %6606
        %6608 = vrot.lane.b32.xlu0 %v6459, 64
        %v6609 = vpop.permute.xlu0 %6608
        %6610 = vrot.lane.b32.xlu0 %v6464, 64
        %v6611 = vpop.permute.xlu0 %6610
        %6612 = vrot.lane.b32.xlu0 %v6467, 64
        %v6613 = vpop.permute.xlu0 %6612
        %6614 = vrot.lane.b32.xlu0 %v6472, 64
        %v6615 = vpop.permute.xlu0 %6614
        %6616 = vrot.lane.b32.xlu0 %v6475, 64
        %v6617 = vpop.permute.xlu0 %6616
        %6618 = vrot.lane.b32.xlu0 %v6480, 64
        %v6619 = vpop.permute.xlu0 %6618
        %6620 = vrot.lane.b32.xlu0 %v6483, 64
        %v6621 = vpop.permute.xlu0 %6620
        %6622 = vrot.lane.b32.xlu0 %v6488, 64
        %v6623 = vpop.permute.xlu0 %6622
        %6624 = vrot.lane.b32.xlu0 %v6491, 64
        %v6625 = vpop.permute.xlu0 %6624
        %6626 = vrot.lane.b32.xlu0 %v6496, 64
        %v6627 = vpop.permute.xlu0 %6626
        %6628 = vrot.lane.b32.xlu0 %v6499, 64
        %v6629 = vpop.permute.xlu0 %6628
        %6630 = vrot.lane.b32.xlu0 %v6504, 64
        %v6631 = vpop.permute.xlu0 %6630
        %6632 = vrot.lane.b32.xlu0 %v6507, 64
        %v6633 = vpop.permute.xlu0 %6632
        %6634 = vrot.lane.b32.xlu0 %v6512, 64
        %v6635 = vpop.permute.xlu0 %6634
        %6636 = vrot.lane.b32.xlu0 %v6515, 64
        %v6637 = vpop.permute.xlu0 %6636
        %6638 = vrot.lane.b32.xlu0 %v6520, 64
        %v6639 = vpop.permute.xlu0 %6638
        %6640 = vrot.lane.b32.xlu0 %v6523, 64
        %v6641 = vpop.permute.xlu0 %6640
        %6642 = vrot.lane.b32.xlu0 %v6528, 64
        %v6643 = vpop.permute.xlu0 %6642
        %6644 = vrot.lane.b32.xlu0 %v6531, 64
        %v6645 = vpop.permute.xlu0 %6644
        %6646 = vrot.lane.b32.xlu0 %v6536, 64
        %v6647 = vpop.permute.xlu0 %6646
        %6648 = vrot.lane.b32.xlu0 %v6539, 64
        %v6649 = vpop.permute.xlu0 %6648
        %6650 = vrot.lane.b32.xlu0 %v6544, 64
        %v6651 = vpop.permute.xlu0 %6650
        %6652 = vrot.lane.b32.xlu0 %v6547, 64
        %v6653 = vpop.permute.xlu0 %6652
        %6654 = vrot.lane.b32.xlu0 %v6552, 64
        %v6655 = vpop.permute.xlu0 %6654
        %6656 = vrot.lane.b32.xlu0 %v6555, 64
        %v6657 = vpop.permute.xlu0 %6656
        %6658 = vrot.lane.b32.xlu0 %v6560, 64
        %v6659 = vpop.permute.xlu0 %6658
        %6660 = vrot.lane.b32.xlu0 %v6563, 64
        %v6661 = vpop.permute.xlu0 %6660
        %v6694 = vadd.f32 %v5061, %v6599
        %v6695 = vadd.f32 %v5062, %v6601
        %v6696 = vadd.f32 %v5063, %v6603
        %v6697 = vadd.f32 %v5064, %v6605
        %v6698 = vadd.f32 %v5065, %v6607
        %v6699 = vadd.f32 %v5066, %v6609
        %v6700 = vadd.f32 %v5067, %v6611
        %v6701 = vadd.f32 %v5068, %v6613
        %v6702 = vadd.f32 %v5069, %v6615
        %v6703 = vadd.f32 %v5070, %v6617
        %v6704 = vadd.f32 %v5071, %v6619
        %v6705 = vadd.f32 %v5072, %v6621
        %v6706 = vadd.f32 %v5073, %v6623
        %v6707 = vadd.f32 %v5074, %v6625
        %v6708 = vadd.f32 %v5075, %v6627
        %v6709 = vadd.f32 %v5076, %v6629
        %v6710 = vadd.f32 %v5077, %v6631
        %v6711 = vadd.f32 %v5078, %v6633
        %v6712 = vadd.f32 %v5079, %v6635
        %v6713 = vadd.f32 %v5080, %v6637
        %v6714 = vadd.f32 %v5081, %v6639
        %v6715 = vadd.f32 %v5082, %v6641
        %v6716 = vadd.f32 %v5083, %v6643
        %v6717 = vadd.f32 %v5084, %v6645
        %v6718 = vadd.f32 %v5085, %v6647
        %v6719 = vadd.f32 %v5086, %v6649
        %v6720 = vadd.f32 %v5087, %v6651
        %v6721 = vadd.f32 %v5088, %v6653
        %v6722 = vadd.f32 %v5089, %v6655
        %v6723 = vadd.f32 %v5090, %v6657
        %v6724 = vadd.f32 %v5091, %v6659
        %v6725 = vadd.f32 %v5092, %v6661
        %v6726 = vld [vmem:[#allocation2] sm:$0xf]
        %v6727 = vld [vmem:[#allocation2 + $0x4] sm:$0xf]
        %v6728 = vld [vmem:[#allocation2 + $0x8] sm:$0x1]
        %v6729 = vld [vmem:[#allocation2 + $0xc] sm:$0xf]
        %v6730 = vld [vmem:[#allocation2 + $0x10] sm:$0xf]
        %v6731 = vld [vmem:[#allocation2 + $0x14] sm:$0x1]
        %v6732 = vld [vmem:[#allocation2 + $0x18] sm:$0xf]
        %v6733 = vld [vmem:[#allocation2 + $0x1c] sm:$0xf]
        %v6734 = vld [vmem:[#allocation2 + $0x20] sm:$0x1]
        %v6735 = vld [vmem:[#allocation2 + $0x24] sm:$0xf]
        %v6736 = vld [vmem:[#allocation2 + $0x28] sm:$0xf]
        %v6737 = vld [vmem:[#allocation2 + $0x2c] sm:$0x1]
        %v6738 = vld [vmem:[#allocation2 + $0x30] sm:$0xf]
        %v6739 = vld [vmem:[#allocation2 + $0x34] sm:$0xf]
        %v6740 = vld [vmem:[#allocation2 + $0x38] sm:$0x1]
        %v6741 = vld [vmem:[#allocation2 + $0x3c] sm:$0xf]
        %v6742 = vld [vmem:[#allocation2 + $0x40] sm:$0xf]
        %v6743 = vld [vmem:[#allocation2 + $0x44] sm:$0x1]
        %v6744 = vld [vmem:[#allocation2 + $0x48] sm:$0xf]
        %v6745 = vld [vmem:[#allocation2 + $0x4c] sm:$0xf]
        %v6746 = vld [vmem:[#allocation2 + $0x50] sm:$0x1]
        %v6747 = vld [vmem:[#allocation2 + $0x54] sm:$0xf]
        %v6748 = vld [vmem:[#allocation2 + $0x58] sm:$0xf]
        %v6749 = vld [vmem:[#allocation2 + $0x5c] sm:$0x1]
        %v6750 = vld [vmem:[#allocation2 + $0x60] sm:$0xf]
        %v6751 = vld [vmem:[#allocation2 + $0x64] sm:$0xf]
        %v6752 = vld [vmem:[#allocation2 + $0x68] sm:$0x1]
        %v6753 = vld [vmem:[#allocation2 + $0x6c] sm:$0xf]
        %v6754 = vld [vmem:[#allocation2 + $0x70] sm:$0xf]
        %v6755 = vld [vmem:[#allocation2 + $0x74] sm:$0x1]
        %v6756 = vld [vmem:[#allocation2 + $0x78] sm:$0xf]
        %v6757 = vld [vmem:[#allocation2 + $0x7c] sm:$0xf]
        %v6758 = vld [vmem:[#allocation2 + $0x80] sm:$0x1]
        %v6759 = vld [vmem:[#allocation2 + $0x84] sm:$0xf]
        %v6760 = vld [vmem:[#allocation2 + $0x88] sm:$0xf]
        %v6761 = vld [vmem:[#allocation2 + $0x8c] sm:$0x1]
        %v6762 = vld [vmem:[#allocation2 + $0x90] sm:$0xf]
        %v6763 = vld [vmem:[#allocation2 + $0x94] sm:$0xf]
        %v6764 = vld [vmem:[#allocation2 + $0x98] sm:$0x1]
        %v6765 = vld [vmem:[#allocation2 + $0x9c] sm:$0xf]
        %v6766 = vld [vmem:[#allocation2 + $0xa0] sm:$0xf]
        %v6767 = vld [vmem:[#allocation2 + $0xa4] sm:$0x1]
        %v6768 = vld [vmem:[#allocation2 + $0xa8] sm:$0xf]
        %v6769 = vld [vmem:[#allocation2 + $0xac] sm:$0xf]
        %v6770 = vld [vmem:[#allocation2 + $0xb0] sm:$0x1]
        %v6771 = vld [vmem:[#allocation2 + $0xb4] sm:$0xf]
        %v6772 = vld [vmem:[#allocation2 + $0xb8] sm:$0xf]
        %v6773 = vld [vmem:[#allocation2 + $0xbc] sm:$0x1]
        %v6775 = vshrl.u32 %v6726, 16
        %v6777 = vrot.slane %v6775, 4
        %v6778 = vshll.u32 %v6726, 16
        %v6780 = vrot.slane %v6778, 5
        %v6781 = vor.u32 %v6777, %v6780
        %v6782 = vrot.slane %v6781, 4
        %v6784 = vshll.u32 %v6727, 16
        %v6786 = vrot.slane %v6784, 5
        %v6787 = vsel %vm679, %v6782, %v6786
        %v6788 = vshrl.u32 %v6727, 16
        %v6790 = vrot.slane %v6788, 4
        %v6791 = vor.u32 %v6790, %v6786
        %v6792 = vrot.slane %v6791, 4
        %v6794 = vshll.u32 %v6728, 16
        %v6796 = vrot.slane %v6794, 5
        %v6797 = vsel %vm679, %v6792, %v6796
        %v6799 = vshrl.u32 %v6729, 16
        %v6801 = vrot.slane %v6799, 4
        %v6802 = vshll.u32 %v6729, 16
        %v6804 = vrot.slane %v6802, 5
        %v6805 = vor.u32 %v6801, %v6804
        %v6806 = vrot.slane %v6805, 4
        %v6808 = vshll.u32 %v6730, 16
        %v6810 = vrot.slane %v6808, 5
        %v6811 = vsel %vm679, %v6806, %v6810
        %v6812 = vshrl.u32 %v6730, 16
        %v6814 = vrot.slane %v6812, 4
        %v6815 = vor.u32 %v6814, %v6810
        %v6816 = vrot.slane %v6815, 4
        %v6818 = vshll.u32 %v6731, 16
        %v6820 = vrot.slane %v6818, 5
        %v6821 = vsel %vm679, %v6816, %v6820
        %v6823 = vshrl.u32 %v6732, 16
        %v6825 = vrot.slane %v6823, 4
        %v6826 = vshll.u32 %v6732, 16
        %v6828 = vrot.slane %v6826, 5
        %v6829 = vor.u32 %v6825, %v6828
        %v6830 = vrot.slane %v6829, 4
        %v6832 = vshll.u32 %v6733, 16
        %v6834 = vrot.slane %v6832, 5
        %v6835 = vsel %vm679, %v6830, %v6834
        %v6836 = vshrl.u32 %v6733, 16
        %v6838 = vrot.slane %v6836, 4
        %v6839 = vor.u32 %v6838, %v6834
        %v6840 = vrot.slane %v6839, 4
        %v6842 = vshll.u32 %v6734, 16
        %v6844 = vrot.slane %v6842, 5
        %v6845 = vsel %vm679, %v6840, %v6844
        %v6847 = vshrl.u32 %v6735, 16
        %v6849 = vrot.slane %v6847, 4
        %v6850 = vshll.u32 %v6735, 16
        %v6852 = vrot.slane %v6850, 5
        %v6853 = vor.u32 %v6849, %v6852
        %v6854 = vrot.slane %v6853, 4
        %v6856 = vshll.u32 %v6736, 16
        %v6858 = vrot.slane %v6856, 5
        %v6859 = vsel %vm679, %v6854, %v6858
        %v6860 = vshrl.u32 %v6736, 16
        %v6862 = vrot.slane %v6860, 4
        %v6863 = vor.u32 %v6862, %v6858
        %v6864 = vrot.slane %v6863, 4
        %v6866 = vshll.u32 %v6737, 16
        %v6868 = vrot.slane %v6866, 5
        %v6869 = vsel %vm679, %v6864, %v6868
        %v6871 = vshrl.u32 %v6738, 16
        %v6873 = vrot.slane %v6871, 4
        %v6874 = vshll.u32 %v6738, 16
        %v6876 = vrot.slane %v6874, 5
        %v6877 = vor.u32 %v6873, %v6876
        %v6878 = vrot.slane %v6877, 4
        %v6880 = vshll.u32 %v6739, 16
        %v6882 = vrot.slane %v6880, 5
        %v6883 = vsel %vm679, %v6878, %v6882
        %v6884 = vshrl.u32 %v6739, 16
        %v6886 = vrot.slane %v6884, 4
        %v6887 = vor.u32 %v6886, %v6882
        %v6888 = vrot.slane %v6887, 4
        %v6890 = vshll.u32 %v6740, 16
        %v6892 = vrot.slane %v6890, 5
        %v6893 = vsel %vm679, %v6888, %v6892
        %v6895 = vshrl.u32 %v6741, 16
        %v6897 = vrot.slane %v6895, 4
        %v6898 = vshll.u32 %v6741, 16
        %v6900 = vrot.slane %v6898, 5
        %v6901 = vor.u32 %v6897, %v6900
        %v6902 = vrot.slane %v6901, 4
        %v6904 = vshll.u32 %v6742, 16
        %v6906 = vrot.slane %v6904, 5
        %v6907 = vsel %vm679, %v6902, %v6906
        %v6908 = vshrl.u32 %v6742, 16
        %v6910 = vrot.slane %v6908, 4
        %v6911 = vor.u32 %v6910, %v6906
        %v6912 = vrot.slane %v6911, 4
        %v6914 = vshll.u32 %v6743, 16
        %v6916 = vrot.slane %v6914, 5
        %v6917 = vsel %vm679, %v6912, %v6916
        %v6919 = vshrl.u32 %v6744, 16
        %v6921 = vrot.slane %v6919, 4
        %v6922 = vshll.u32 %v6744, 16
        %v6924 = vrot.slane %v6922, 5
        %v6925 = vor.u32 %v6921, %v6924
        %v6926 = vrot.slane %v6925, 4
        %v6928 = vshll.u32 %v6745, 16
        %v6930 = vrot.slane %v6928, 5
        %v6931 = vsel %vm679, %v6926, %v6930
        %v6932 = vshrl.u32 %v6745, 16
        %v6934 = vrot.slane %v6932, 4
        %v6935 = vor.u32 %v6934, %v6930
        %v6936 = vrot.slane %v6935, 4
        %v6938 = vshll.u32 %v6746, 16
        %v6940 = vrot.slane %v6938, 5
        %v6941 = vsel %vm679, %v6936, %v6940
        %v6943 = vshrl.u32 %v6747, 16
        %v6945 = vrot.slane %v6943, 4
        %v6946 = vshll.u32 %v6747, 16
        %v6948 = vrot.slane %v6946, 5
        %v6949 = vor.u32 %v6945, %v6948
        %v6950 = vrot.slane %v6949, 4
        %v6952 = vshll.u32 %v6748, 16
        %v6954 = vrot.slane %v6952, 5
        %v6955 = vsel %vm679, %v6950, %v6954
        %v6956 = vshrl.u32 %v6748, 16
        %v6958 = vrot.slane %v6956, 4
        %v6959 = vor.u32 %v6958, %v6954
        %v6960 = vrot.slane %v6959, 4
        %v6962 = vshll.u32 %v6749, 16
        %v6964 = vrot.slane %v6962, 5
        %v6965 = vsel %vm679, %v6960, %v6964
        %v6967 = vshrl.u32 %v6750, 16
        %v6969 = vrot.slane %v6967, 4
        %v6970 = vshll.u32 %v6750, 16
        %v6972 = vrot.slane %v6970, 5
        %v6973 = vor.u32 %v6969, %v6972
        %v6974 = vrot.slane %v6973, 4
        %v6976 = vshll.u32 %v6751, 16
        %v6978 = vrot.slane %v6976, 5
        %v6979 = vsel %vm679, %v6974, %v6978
        %v6980 = vshrl.u32 %v6751, 16
        %v6982 = vrot.slane %v6980, 4
        %v6983 = vor.u32 %v6982, %v6978
        %v6984 = vrot.slane %v6983, 4
        %v6986 = vshll.u32 %v6752, 16
        %v6988 = vrot.slane %v6986, 5
        %v6989 = vsel %vm679, %v6984, %v6988
        %v6991 = vshrl.u32 %v6753, 16
        %v6993 = vrot.slane %v6991, 4
        %v6994 = vshll.u32 %v6753, 16
        %v6996 = vrot.slane %v6994, 5
        %v6997 = vor.u32 %v6993, %v6996
        %v6998 = vrot.slane %v6997, 4
        %v7000 = vshll.u32 %v6754, 16
        %v7002 = vrot.slane %v7000, 5
        %v7003 = vsel %vm679, %v6998, %v7002
        %v7004 = vshrl.u32 %v6754, 16
        %v7006 = vrot.slane %v7004, 4
        %v7007 = vor.u32 %v7006, %v7002
        %v7008 = vrot.slane %v7007, 4
        %v7010 = vshll.u32 %v6755, 16
        %v7012 = vrot.slane %v7010, 5
        %v7013 = vsel %vm679, %v7008, %v7012
        %v7015 = vshrl.u32 %v6756, 16
        %v7017 = vrot.slane %v7015, 4
        %v7018 = vshll.u32 %v6756, 16
        %v7020 = vrot.slane %v7018, 5
        %v7021 = vor.u32 %v7017, %v7020
        %v7022 = vrot.slane %v7021, 4
        %v7024 = vshll.u32 %v6757, 16
        %v7026 = vrot.slane %v7024, 5
        %v7027 = vsel %vm679, %v7022, %v7026
        %v7028 = vshrl.u32 %v6757, 16
        %v7030 = vrot.slane %v7028, 4
        %v7031 = vor.u32 %v7030, %v7026
        %v7032 = vrot.slane %v7031, 4
        %v7034 = vshll.u32 %v6758, 16
        %v7036 = vrot.slane %v7034, 5
        %v7037 = vsel %vm679, %v7032, %v7036
        %v7039 = vshrl.u32 %v6759, 16
        %v7041 = vrot.slane %v7039, 4
        %v7042 = vshll.u32 %v6759, 16
        %v7044 = vrot.slane %v7042, 5
        %v7045 = vor.u32 %v7041, %v7044
        %v7046 = vrot.slane %v7045, 4
        %v7048 = vshll.u32 %v6760, 16
        %v7050 = vrot.slane %v7048, 5
        %v7051 = vsel %vm679, %v7046, %v7050
        %v7052 = vshrl.u32 %v6760, 16
        %v7054 = vrot.slane %v7052, 4
        %v7055 = vor.u32 %v7054, %v7050
        %v7056 = vrot.slane %v7055, 4
        %v7058 = vshll.u32 %v6761, 16
        %v7060 = vrot.slane %v7058, 5
        %v7061 = vsel %vm679, %v7056, %v7060
        %v7063 = vshrl.u32 %v6762, 16
        %v7065 = vrot.slane %v7063, 4
        %v7066 = vshll.u32 %v6762, 16
        %v7068 = vrot.slane %v7066, 5
        %v7069 = vor.u32 %v7065, %v7068
        %v7070 = vrot.slane %v7069, 4
        %v7072 = vshll.u32 %v6763, 16
        %v7074 = vrot.slane %v7072, 5
        %v7075 = vsel %vm679, %v7070, %v7074
        %v7076 = vshrl.u32 %v6763, 16
        %v7078 = vrot.slane %v7076, 4
        %v7079 = vor.u32 %v7078, %v7074
        %v7080 = vrot.slane %v7079, 4
        %v7082 = vshll.u32 %v6764, 16
        %v7084 = vrot.slane %v7082, 5
        %v7085 = vsel %vm679, %v7080, %v7084
        %v7087 = vshrl.u32 %v6765, 16
        %v7089 = vrot.slane %v7087, 4
        %v7090 = vshll.u32 %v6765, 16
        %v7092 = vrot.slane %v7090, 5
        %v7093 = vor.u32 %v7089, %v7092
        %v7094 = vrot.slane %v7093, 4
        %v7096 = vshll.u32 %v6766, 16
        %v7098 = vrot.slane %v7096, 5
        %v7099 = vsel %vm679, %v7094, %v7098
        %v7100 = vshrl.u32 %v6766, 16
        %v7102 = vrot.slane %v7100, 4
        %v7103 = vor.u32 %v7102, %v7098
        %v7104 = vrot.slane %v7103, 4
        %v7106 = vshll.u32 %v6767, 16
        %v7108 = vrot.slane %v7106, 5
        %v7109 = vsel %vm679, %v7104, %v7108
        %v7111 = vshrl.u32 %v6768, 16
        %v7113 = vrot.slane %v7111, 4
        %v7114 = vshll.u32 %v6768, 16
        %v7116 = vrot.slane %v7114, 5
        %v7117 = vor.u32 %v7113, %v7116
        %v7118 = vrot.slane %v7117, 4
        %v7120 = vshll.u32 %v6769, 16
        %v7122 = vrot.slane %v7120, 5
        %v7123 = vsel %vm679, %v7118, %v7122
        %v7124 = vshrl.u32 %v6769, 16
        %v7126 = vrot.slane %v7124, 4
        %v7127 = vor.u32 %v7126, %v7122
        %v7128 = vrot.slane %v7127, 4
        %v7130 = vshll.u32 %v6770, 16
        %v7132 = vrot.slane %v7130, 5
        %v7133 = vsel %vm679, %v7128, %v7132
        %v7135 = vshrl.u32 %v6771, 16
        %v7137 = vrot.slane %v7135, 4
        %v7138 = vshll.u32 %v6771, 16
        %v7140 = vrot.slane %v7138, 5
        %v7141 = vor.u32 %v7137, %v7140
        %v7142 = vrot.slane %v7141, 4
        %v7144 = vshll.u32 %v6772, 16
        %v7146 = vrot.slane %v7144, 5
        %v7147 = vsel %vm679, %v7142, %v7146
        %v7148 = vshrl.u32 %v6772, 16
        %v7150 = vrot.slane %v7148, 4
        %v7151 = vor.u32 %v7150, %v7146
        %v7152 = vrot.slane %v7151, 4
        %v7154 = vshll.u32 %v6773, 16
        %v7156 = vrot.slane %v7154, 5
        %v7157 = vsel %vm679, %v7152, %v7156
        %s7158 = scalar_lea.vmem %s3, 16
        %v7159 = vld [vmem:[%s7158] sm:$0xf]
        %v7160 = vld [vmem:[%s7158 + $0x4] sm:$0xf]
        %v7161 = vld [vmem:[%s7158 + $0x8] sm:$0xf]
        %v7162 = vld [vmem:[%s7158 + $0xc] sm:$0xf]
        %v7163 = vunpack.c.l.b16 %v6787
        %v7164 = vunpack.c.l.b16 %v6797
        %v7165 = vunpack.c.l.b16 %v6811
        %v7166 = vunpack.c.l.b16 %v6821
        %v7167 = vunpack.c.l.b16 %v6835
        %v7168 = vunpack.c.l.b16 %v6845
        %v7169 = vunpack.c.l.b16 %v6859
        %v7170 = vunpack.c.l.b16 %v6869
        %v7171 = vunpack.c.l.b16 %v6883
        %v7172 = vunpack.c.l.b16 %v6893
        %v7173 = vunpack.c.l.b16 %v6907
        %v7174 = vunpack.c.l.b16 %v6917
        %v7175 = vunpack.c.l.b16 %v6931
        %v7176 = vunpack.c.l.b16 %v6941
        %v7177 = vunpack.c.l.b16 %v6955
        %v7178 = vunpack.c.l.b16 %v6965
        %v7179 = vunpack.c.l.b16 %v6979
        %v7180 = vunpack.c.l.b16 %v6989
        %v7181 = vunpack.c.l.b16 %v7003
        %v7182 = vunpack.c.l.b16 %v7013
        %v7183 = vunpack.c.l.b16 %v7027
        %v7184 = vunpack.c.l.b16 %v7037
        %v7185 = vunpack.c.l.b16 %v7051
        %v7186 = vunpack.c.l.b16 %v7061
        %v7187 = vunpack.c.l.b16 %v7075
        %v7188 = vunpack.c.l.b16 %v7085
        %v7189 = vunpack.c.l.b16 %v7099
        %v7190 = vunpack.c.l.b16 %v7109
        %v7191 = vunpack.c.l.b16 %v7123
        %v7192 = vunpack.c.l.b16 %v7133
        %v7193 = vunpack.c.l.b16 %v7147
        %v7194 = vunpack.c.l.b16 %v7157
        %v7195 = vpack.c.b16 %v7164, %v7163
        %v7196 = vpack.c.b16 %v7166, %v7165
        %v7197 = vpack.c.b16 %v7168, %v7167
        %v7198 = vpack.c.b16 %v7170, %v7169
        %v7199 = vpack.c.b16 %v7172, %v7171
        %v7200 = vpack.c.b16 %v7174, %v7173
        %v7201 = vpack.c.b16 %v7176, %v7175
        %v7202 = vpack.c.b16 %v7178, %v7177
        %v7203 = vpack.c.b16 %v7180, %v7179
        %v7204 = vpack.c.b16 %v7182, %v7181
        %v7205 = vpack.c.b16 %v7184, %v7183
        %v7206 = vpack.c.b16 %v7186, %v7185
        %v7207 = vpack.c.b16 %v7188, %v7187
        %v7208 = vpack.c.b16 %v7190, %v7189
        %v7209 = vpack.c.b16 %v7192, %v7191
        %v7210 = vpack.c.b16 %v7194, %v7193
        %v7215 = vunpack.c.l.b16 %v7159
        %v7216 = vunpack.c.l.b16 %v7160
        %v7217 = vunpack.c.l.b16 %v7161
        %v7218 = vunpack.c.l.b16 %v7162
        %v7219 = vpack.c.b16 %v7216, %v7215
        %v7220 = vpack.c.b16 %v7218, %v7217
        %v7224 = vsel %vm6356, %v7195, 0
        %v7227 = vsel %vm6356, %v7196, 0
        %v7230 = vsel %vm6356, %v7197, 0
        %v7233 = vsel %vm6356, %v7198, 0
        %v7236 = vsel %vm6356, %v7199, 0
        %v7239 = vsel %vm6356, %v7200, 0
        %v7242 = vsel %vm6356, %v7201, 0
        %v7245 = vsel %vm6356, %v7202, 0
        %v7248 = vsel %vm6356, %v7203, 0
        %v7251 = vsel %vm6356, %v7204, 0
        %v7254 = vsel %vm6356, %v7205, 0
        %v7257 = vsel %vm6356, %v7206, 0
        %v7260 = vsel %vm6356, %v7207, 0
        %v7263 = vsel %vm6356, %v7208, 0
        %v7266 = vsel %vm6356, %v7209, 0
        %v7269 = vsel %vm6356, %v7210, 0
        %7271 = vmatprep.subr.bf16.mxu0 0
        %7272 = vmatpush1.bf16.msra.mxu0 %v7219
        %7273 = vmatprep.subr.bf16.mxu0 0
        %7274 = vmatpush1.bf16.msra.mxu0 %v7220
        %7275 = vmatprep.subr.bf16.mxu0 0
        %7276 = vmatpush1.bf16.msra.mxu0 0
        %7277 = vmatprep.subr.bf16.mxu0 0
        %7278 = vmatpush1.bf16.msra.mxu0 0
        %7279 = vmatprep.subr.bf16.mxu0 0
        %7280 = vmatpush1.bf16.msra.mxu0 0
        %7281 = vmatprep.subr.bf16.mxu0 0
        %7282 = vmatpush1.bf16.msra.mxu0 0
        %7283 = vmatprep.subr.bf16.mxu0 0
        %7284 = vmatpush1.bf16.msra.mxu0 0
        %7285 = vmatprep.subr.bf16.mxu0 0
        %7286 = vmatpush1.bf16.msra.mxu0 0
        %7287 = vmatprep.subr.bf16.mxu0 0
        %7288 = vmatpush1.bf16.msra.mxu0 0
        %7289 = vmatprep.subr.bf16.mxu0 0
        %7290 = vmatpush1.bf16.msra.mxu0 0
        %7291 = vmatprep.subr.bf16.mxu0 0
        %7292 = vmatpush1.bf16.msra.mxu0 0
        %7293 = vmatprep.subr.bf16.mxu0 0
        %7294 = vmatpush1.bf16.msra.mxu0 0
        %7295 = vmatprep.subr.bf16.mxu0 0
        %7296 = vmatpush1.bf16.msra.mxu0 0
        %7297 = vmatprep.subr.bf16.mxu0 0
        %7298 = vmatpush1.bf16.msra.mxu0 0
        %7299 = vmatprep.subr.bf16.mxu0 0
        %7300 = vmatpush1.bf16.msra.mxu0 0
        %7301 = vmatprep.subr.bf16.mxu0 0
        %7302 = vmatpush1.bf16.msra.mxu0 0
        %7303 = vmatprep.mubr.bf16.mxu0 0
        %7304 = vmatmul.mubr.bf16.gmra.mrb[0].mxu0 %v7224
        %v7305 = vpop.f32.mrb[0].mxu0
        %v7306 = vadd.f32 0.0, %v7305
        %v7307 = vpop.f32.mrb[0].mxu0
        %v7308 = vpop.f32.mrb[0].mxu0
        %v7309 = vadd.f32 0.0, %v7308
        %v7310 = vpop.f32.mrb[0].mxu0
        %7311 = vmatprep.mubr.bf16.mxu0 0
        %7312 = vmatmul.mubr.bf16.gmra.mrb[0].mxu0 %v7227
        %v7313 = vpop.f32.mrb[0].mxu0
        %v7314 = vadd.f32 0.0, %v7313
        %v7315 = vpop.f32.mrb[0].mxu0
        %v7316 = vpop.f32.mrb[0].mxu0
        %v7317 = vadd.f32 0.0, %v7316
        %v7318 = vpop.f32.mrb[0].mxu0
        %7319 = vmatprep.mubr.bf16.mxu0 0
        %7320 = vmatmul.mubr.bf16.gmra.mrb[0].mxu0 %v7230
        %v7321 = vpop.f32.mrb[0].mxu0
        %v7322 = vadd.f32 0.0, %v7321
        %v7323 = vpop.f32.mrb[0].mxu0
        %v7324 = vpop.f32.mrb[0].mxu0
        %v7325 = vadd.f32 0.0, %v7324
        %v7326 = vpop.f32.mrb[0].mxu0
        %7327 = vmatprep.mubr.bf16.mxu0 0
        %7328 = vmatmul.mubr.bf16.gmra.mrb[0].mxu0 %v7233
        %v7329 = vpop.f32.mrb[0].mxu0
        %v7330 = vadd.f32 0.0, %v7329
        %v7331 = vpop.f32.mrb[0].mxu0
        %v7332 = vpop.f32.mrb[0].mxu0
        %v7333 = vadd.f32 0.0, %v7332
        %v7334 = vpop.f32.mrb[0].mxu0
        %7335 = vmatprep.mubr.bf16.mxu0 0
        %7336 = vmatmul.mubr.bf16.gmra.mrb[0].mxu0 %v7236
        %v7337 = vpop.f32.mrb[0].mxu0
        %v7338 = vadd.f32 0.0, %v7337
        %v7339 = vpop.f32.mrb[0].mxu0
        %v7340 = vpop.f32.mrb[0].mxu0
        %v7341 = vadd.f32 0.0, %v7340
        %v7342 = vpop.f32.mrb[0].mxu0
        %7343 = vmatprep.mubr.bf16.mxu0 0
        %7344 = vmatmul.mubr.bf16.gmra.mrb[0].mxu0 %v7239
        %v7345 = vpop.f32.mrb[0].mxu0
        %v7346 = vadd.f32 0.0, %v7345
        %v7347 = vpop.f32.mrb[0].mxu0
        %v7348 = vpop.f32.mrb[0].mxu0
        %v7349 = vadd.f32 0.0, %v7348
        %v7350 = vpop.f32.mrb[0].mxu0
        %7351 = vmatprep.mubr.bf16.mxu0 0
        %7352 = vmatmul.mubr.bf16.gmra.mrb[0].mxu0 %v7242
        %v7353 = vpop.f32.mrb[0].mxu0
        %v7354 = vadd.f32 0.0, %v7353
        %v7355 = vpop.f32.mrb[0].mxu0
        %v7356 = vpop.f32.mrb[0].mxu0
        %v7357 = vadd.f32 0.0, %v7356
        %v7358 = vpop.f32.mrb[0].mxu0
        %7359 = vmatprep.mubr.bf16.mxu0 0
        %7360 = vmatmul.mubr.bf16.gmra.mrb[0].mxu0 %v7245
        %v7361 = vpop.f32.mrb[0].mxu0
        %v7362 = vadd.f32 0.0, %v7361
        %v7363 = vpop.f32.mrb[0].mxu0
        %v7364 = vpop.f32.mrb[0].mxu0
        %v7365 = vadd.f32 0.0, %v7364
        %v7366 = vpop.f32.mrb[0].mxu0
        %7367 = vmatprep.mubr.bf16.mxu0 0
        %7368 = vmatmul.mubr.bf16.gmra.mrb[0].mxu0 %v7248
        %v7369 = vpop.f32.mrb[0].mxu0
        %v7370 = vadd.f32 0.0, %v7369
        %v7371 = vpop.f32.mrb[0].mxu0
        %v7372 = vpop.f32.mrb[0].mxu0
        %v7373 = vadd.f32 0.0, %v7372
        %v7374 = vpop.f32.mrb[0].mxu0
        %7375 = vmatprep.mubr.bf16.mxu0 0
        %7376 = vmatmul.mubr.bf16.gmra.mrb[0].mxu0 %v7251
        %v7377 = vpop.f32.mrb[0].mxu0
        %v7378 = vadd.f32 0.0, %v7377
        %v7379 = vpop.f32.mrb[0].mxu0
        %v7380 = vpop.f32.mrb[0].mxu0
        %v7381 = vadd.f32 0.0, %v7380
        %v7382 = vpop.f32.mrb[0].mxu0
        %7383 = vmatprep.mubr.bf16.mxu0 0
        %7384 = vmatmul.mubr.bf16.gmra.mrb[0].mxu0 %v7254
        %v7385 = vpop.f32.mrb[0].mxu0
        %v7386 = vadd.f32 0.0, %v7385
        %v7387 = vpop.f32.mrb[0].mxu0
        %v7388 = vpop.f32.mrb[0].mxu0
        %v7389 = vadd.f32 0.0, %v7388
        %v7390 = vpop.f32.mrb[0].mxu0
        %7391 = vmatprep.mubr.bf16.mxu0 0
        %7392 = vmatmul.mubr.bf16.gmra.mrb[0].mxu0 %v7257
        %v7393 = vpop.f32.mrb[0].mxu0
        %v7394 = vadd.f32 0.0, %v7393
        %v7395 = vpop.f32.mrb[0].mxu0
        %v7396 = vpop.f32.mrb[0].mxu0
        %v7397 = vadd.f32 0.0, %v7396
        %v7398 = vpop.f32.mrb[0].mxu0
        %7399 = vmatprep.mubr.bf16.mxu0 0
        %7400 = vmatmul.mubr.bf16.gmra.mrb[0].mxu0 %v7260
        %v7401 = vpop.f32.mrb[0].mxu0
        %v7402 = vadd.f32 0.0, %v7401
        %v7403 = vpop.f32.mrb[0].mxu0
        %v7404 = vpop.f32.mrb[0].mxu0
        %v7405 = vadd.f32 0.0, %v7404
        %v7406 = vpop.f32.mrb[0].mxu0
        %7407 = vmatprep.mubr.bf16.mxu0 0
        %7408 = vmatmul.mubr.bf16.gmra.mrb[0].mxu0 %v7263
        %v7409 = vpop.f32.mrb[0].mxu0
        %v7410 = vadd.f32 0.0, %v7409
        %v7411 = vpop.f32.mrb[0].mxu0
        %v7412 = vpop.f32.mrb[0].mxu0
        %v7413 = vadd.f32 0.0, %v7412
        %v7414 = vpop.f32.mrb[0].mxu0
        %7415 = vmatprep.mubr.bf16.mxu0 0
        %7416 = vmatmul.mubr.bf16.gmra.mrb[0].mxu0 %v7266
        %v7417 = vpop.f32.mrb[0].mxu0
        %v7418 = vadd.f32 0.0, %v7417
        %v7419 = vpop.f32.mrb[0].mxu0
        %v7420 = vpop.f32.mrb[0].mxu0
        %v7421 = vadd.f32 0.0, %v7420
        %v7422 = vpop.f32.mrb[0].mxu0
        %7423 = vmatprep.mubr.bf16.mxu0 0
        %7424 = vmatmul.mubr.bf16.gmra.mrb[0].mxu0 %v7269
        %v7425 = vpop.f32.mrb[0].mxu0
        %v7426 = vadd.f32 0.0, %v7425
        %v7427 = vpop.f32.mrb[0].mxu0
        %v7428 = vpop.f32.mrb[0].mxu0
        %v7429 = vadd.f32 0.0, %v7428
        %v7430 = vpop.f32.mrb[0].mxu0
        %7431 = vdwg.mxu0
        %7464 = vrot.lane.b32.xlu0 %v7306, 64
        %v7465 = vpop.permute.xlu0 %7464
        %7466 = vrot.lane.b32.xlu0 %v7309, 64
        %v7467 = vpop.permute.xlu0 %7466
        %7468 = vrot.lane.b32.xlu0 %v7314, 64
        %v7469 = vpop.permute.xlu0 %7468
        %7470 = vrot.lane.b32.xlu0 %v7317, 64
        %v7471 = vpop.permute.xlu0 %7470
        %7472 = vrot.lane.b32.xlu0 %v7322, 64
        %v7473 = vpop.permute.xlu0 %7472
        %7474 = vrot.lane.b32.xlu0 %v7325, 64
        %v7475 = vpop.permute.xlu0 %7474
        %7476 = vrot.lane.b32.xlu0 %v7330, 64
        %v7477 = vpop.permute.xlu0 %7476
        %7478 = vrot.lane.b32.xlu0 %v7333, 64
        %v7479 = vpop.permute.xlu0 %7478
        %7480 = vrot.lane.b32.xlu0 %v7338, 64
        %v7481 = vpop.permute.xlu0 %7480
        %7482 = vrot.lane.b32.xlu0 %v7341, 64
        %v7483 = vpop.permute.xlu0 %7482
        %7484 = vrot.lane.b32.xlu0 %v7346, 64
        %v7485 = vpop.permute.xlu0 %7484
        %7486 = vrot.lane.b32.xlu0 %v7349, 64
        %v7487 = vpop.permute.xlu0 %7486
        %7488 = vrot.lane.b32.xlu0 %v7354, 64
        %v7489 = vpop.permute.xlu0 %7488
        %7490 = vrot.lane.b32.xlu0 %v7357, 64
        %v7491 = vpop.permute.xlu0 %7490
        %7492 = vrot.lane.b32.xlu0 %v7362, 64
        %v7493 = vpop.permute.xlu0 %7492
        %7494 = vrot.lane.b32.xlu0 %v7365, 64
        %v7495 = vpop.permute.xlu0 %7494
        %7496 = vrot.lane.b32.xlu0 %v7370, 64
        %v7497 = vpop.permute.xlu0 %7496
        %7498 = vrot.lane.b32.xlu0 %v7373, 64
        %v7499 = vpop.permute.xlu0 %7498
        %7500 = vrot.lane.b32.xlu0 %v7378, 64
        %v7501 = vpop.permute.xlu0 %7500
        %7502 = vrot.lane.b32.xlu0 %v7381, 64
        %v7503 = vpop.permute.xlu0 %7502
        %7504 = vrot.lane.b32.xlu0 %v7386, 64
        %v7505 = vpop.permute.xlu0 %7504
        %7506 = vrot.lane.b32.xlu0 %v7389, 64
        %v7507 = vpop.permute.xlu0 %7506
        %7508 = vrot.lane.b32.xlu0 %v7394, 64
        %v7509 = vpop.permute.xlu0 %7508
        %7510 = vrot.lane.b32.xlu0 %v7397, 64
        %v7511 = vpop.permute.xlu0 %7510
        %7512 = vrot.lane.b32.xlu0 %v7402, 64
        %v7513 = vpop.permute.xlu0 %7512
        %7514 = vrot.lane.b32.xlu0 %v7405, 64
        %v7515 = vpop.permute.xlu0 %7514
        %7516 = vrot.lane.b32.xlu0 %v7410, 64
        %v7517 = vpop.permute.xlu0 %7516
        %7518 = vrot.lane.b32.xlu0 %v7413, 64
        %v7519 = vpop.permute.xlu0 %7518
        %7520 = vrot.lane.b32.xlu0 %v7418, 64
        %v7521 = vpop.permute.xlu0 %7520
        %7522 = vrot.lane.b32.xlu0 %v7421, 64
        %v7523 = vpop.permute.xlu0 %7522
        %7524 = vrot.lane.b32.xlu0 %v7426, 64
        %v7525 = vpop.permute.xlu0 %7524
        %7526 = vrot.lane.b32.xlu0 %v7429, 64
        %v7527 = vpop.permute.xlu0 %7526
        %v7560 = vadd.f32 %v6694, %v7465
        %v7561 = vadd.f32 %v6695, %v7467
        %v7562 = vadd.f32 %v6696, %v7469
        %v7563 = vadd.f32 %v6697, %v7471
        %v7564 = vadd.f32 %v6698, %v7473
        %v7565 = vadd.f32 %v6699, %v7475
        %v7566 = vadd.f32 %v6700, %v7477
        %v7567 = vadd.f32 %v6701, %v7479
        %v7568 = vadd.f32 %v6702, %v7481
        %v7569 = vadd.f32 %v6703, %v7483
        %v7570 = vadd.f32 %v6704, %v7485
        %v7571 = vadd.f32 %v6705, %v7487
        %v7572 = vadd.f32 %v6706, %v7489
        %v7573 = vadd.f32 %v6707, %v7491
        %v7574 = vadd.f32 %v6708, %v7493
        %v7575 = vadd.f32 %v6709, %v7495
        %v7576 = vadd.f32 %v6710, %v7497
        %v7577 = vadd.f32 %v6711, %v7499
        %v7578 = vadd.f32 %v6712, %v7501
        %v7579 = vadd.f32 %v6713, %v7503
        %v7580 = vadd.f32 %v6714, %v7505
        %v7581 = vadd.f32 %v6715, %v7507
        %v7582 = vadd.f32 %v6716, %v7509
        %v7583 = vadd.f32 %v6717, %v7511
        %v7584 = vadd.f32 %v6718, %v7513
        %v7585 = vadd.f32 %v6719, %v7515
        %v7586 = vadd.f32 %v6720, %v7517
        %v7587 = vadd.f32 %v6721, %v7519
        %v7588 = vadd.f32 %v6722, %v7521
        %v7589 = vadd.f32 %v6723, %v7523
        %v7590 = vadd.f32 %v6724, %v7525
        %v7591 = vadd.f32 %v6725, %v7527
        %v7592 = vld [vmem:[#allocation2] sm:$0xe]
        %v7593 = vld [vmem:[#allocation2 + $0xc] sm:$0xe]
        %v7594 = vld [vmem:[#allocation2 + $0x18] sm:$0xe]
        %v7595 = vld [vmem:[#allocation2 + $0x24] sm:$0xe]
        %v7596 = vld [vmem:[#allocation2 + $0x30] sm:$0xe]
        %v7597 = vld [vmem:[#allocation2 + $0x3c] sm:$0xe]
        %v7598 = vld [vmem:[#allocation2 + $0x48] sm:$0xe]
        %v7599 = vld [vmem:[#allocation2 + $0x54] sm:$0xe]
        %v7600 = vld [vmem:[#allocation2 + $0x60] sm:$0xe]
        %v7601 = vld [vmem:[#allocation2 + $0x6c] sm:$0xe]
        %v7602 = vld [vmem:[#allocation2 + $0x78] sm:$0xe]
        %v7603 = vld [vmem:[#allocation2 + $0x84] sm:$0xe]
        %v7604 = vld [vmem:[#allocation2 + $0x90] sm:$0xe]
        %v7605 = vld [vmem:[#allocation2 + $0x9c] sm:$0xe]
        %v7606 = vld [vmem:[#allocation2 + $0xa8] sm:$0xe]
        %v7607 = vld [vmem:[#allocation2 + $0xb4] sm:$0xe]
        %v7656 = vrot.slane %v7592, 5
        %v7657 = vrot.slane %v7656, 4
        %v7658 = vrot.slane %v6727, 5
        %v7659 = vsel %vm1443, %v7657, %v7658
        %v7660 = vrot.slane %v7658, 4
        %v7661 = vrot.slane %v6728, 5
        %v7662 = vsel %vm1443, %v7660, %v7661
        %v7663 = vrot.slane %v7593, 5
        %v7664 = vrot.slane %v7663, 4
        %v7665 = vrot.slane %v6730, 5
        %v7666 = vsel %vm1443, %v7664, %v7665
        %v7667 = vrot.slane %v7665, 4
        %v7668 = vrot.slane %v6731, 5
        %v7669 = vsel %vm1443, %v7667, %v7668
        %v7670 = vrot.slane %v7594, 5
        %v7671 = vrot.slane %v7670, 4
        %v7672 = vrot.slane %v6733, 5
        %v7673 = vsel %vm1443, %v7671, %v7672
        %v7674 = vrot.slane %v7672, 4
        %v7675 = vrot.slane %v6734, 5
        %v7676 = vsel %vm1443, %v7674, %v7675
        %v7677 = vrot.slane %v7595, 5
        %v7678 = vrot.slane %v7677, 4
        %v7679 = vrot.slane %v6736, 5
        %v7680 = vsel %vm1443, %v7678, %v7679
        %v7681 = vrot.slane %v7679, 4
        %v7682 = vrot.slane %v6737, 5
        %v7683 = vsel %vm1443, %v7681, %v7682
        %v7684 = vrot.slane %v7596, 5
        %v7685 = vrot.slane %v7684, 4
        %v7686 = vrot.slane %v6739, 5
        %v7687 = vsel %vm1443, %v7685, %v7686
        %v7688 = vrot.slane %v7686, 4
        %v7689 = vrot.slane %v6740, 5
        %v7690 = vsel %vm1443, %v7688, %v7689
        %v7691 = vrot.slane %v7597, 5
        %v7692 = vrot.slane %v7691, 4
        %v7693 = vrot.slane %v6742, 5
        %v7694 = vsel %vm1443, %v7692, %v7693
        %v7695 = vrot.slane %v7693, 4
        %v7696 = vrot.slane %v6743, 5
        %v7697 = vsel %vm1443, %v7695, %v7696
        %v7698 = vrot.slane %v7598, 5
        %v7699 = vrot.slane %v7698, 4
        %v7700 = vrot.slane %v6745, 5
        %v7701 = vsel %vm1443, %v7699, %v7700
        %v7702 = vrot.slane %v7700, 4
        %v7703 = vrot.slane %v6746, 5
        %v7704 = vsel %vm1443, %v7702, %v7703
        %v7705 = vrot.slane %v7599, 5
        %v7706 = vrot.slane %v7705, 4
        %v7707 = vrot.slane %v6748, 5
        %v7708 = vsel %vm1443, %v7706, %v7707
        %v7709 = vrot.slane %v7707, 4
        %v7710 = vrot.slane %v6749, 5
        %v7711 = vsel %vm1443, %v7709, %v7710
        %v7712 = vrot.slane %v7600, 5
        %v7713 = vrot.slane %v7712, 4
        %v7714 = vrot.slane %v6751, 5
        %v7715 = vsel %vm1443, %v7713, %v7714
        %v7716 = vrot.slane %v7714, 4
        %v7717 = vrot.slane %v6752, 5
        %v7718 = vsel %vm1443, %v7716, %v7717
        %v7719 = vrot.slane %v7601, 5
        %v7720 = vrot.slane %v7719, 4
        %v7721 = vrot.slane %v6754, 5
        %v7722 = vsel %vm1443, %v7720, %v7721
        %v7723 = vrot.slane %v7721, 4
        %v7724 = vrot.slane %v6755, 5
        %v7725 = vsel %vm1443, %v7723, %v7724
        %v7726 = vrot.slane %v7602, 5
        %v7727 = vrot.slane %v7726, 4
        %v7728 = vrot.slane %v6757, 5
        %v7729 = vsel %vm1443, %v7727, %v7728
        %v7730 = vrot.slane %v7728, 4
        %v7731 = vrot.slane %v6758, 5
        %v7732 = vsel %vm1443, %v7730, %v7731
        %v7733 = vrot.slane %v7603, 5
        %v7734 = vrot.slane %v7733, 4
        %v7735 = vrot.slane %v6760, 5
        %v7736 = vsel %vm1443, %v7734, %v7735
        %v7737 = vrot.slane %v7735, 4
        %v7738 = vrot.slane %v6761, 5
        %v7739 = vsel %vm1443, %v7737, %v7738
        %v7740 = vrot.slane %v7604, 5
        %v7741 = vrot.slane %v7740, 4
        %v7742 = vrot.slane %v6763, 5
        %v7743 = vsel %vm1443, %v7741, %v7742
        %v7744 = vrot.slane %v7742, 4
        %v7745 = vrot.slane %v6764, 5
        %v7746 = vsel %vm1443, %v7744, %v7745
        %v7747 = vrot.slane %v7605, 5
        %v7748 = vrot.slane %v7747, 4
        %v7749 = vrot.slane %v6766, 5
        %v7750 = vsel %vm1443, %v7748, %v7749
        %v7751 = vrot.slane %v7749, 4
        %v7752 = vrot.slane %v6767, 5
        %v7753 = vsel %vm1443, %v7751, %v7752
        %v7754 = vrot.slane %v7606, 5
        %v7755 = vrot.slane %v7754, 4
        %v7756 = vrot.slane %v6769, 5
        %v7757 = vsel %vm1443, %v7755, %v7756
        %v7758 = vrot.slane %v7756, 4
        %v7759 = vrot.slane %v6770, 5
        %v7760 = vsel %vm1443, %v7758, %v7759
        %v7761 = vrot.slane %v7607, 5
        %v7762 = vrot.slane %v7761, 4
        %v7763 = vrot.slane %v6772, 5
        %v7764 = vsel %vm1443, %v7762, %v7763
        %v7765 = vrot.slane %v7763, 4
        %v7766 = vrot.slane %v6773, 5
        %v7767 = vsel %vm1443, %v7765, %v7766
        %s7768 = scalar_lea.vmem %s3, 32
        %v7769 = vld [vmem:[%s7768] sm:$0xf]
        %v7770 = vld [vmem:[%s7768 + $0x4] sm:$0xf]
        %v7771 = vld [vmem:[%s7768 + $0x8] sm:$0xf]
        %v7772 = vld [vmem:[%s7768 + $0xc] sm:$0xf]
        %v7773 = vunpack.c.l.b16 %v7659
        %v7774 = vunpack.c.l.b16 %v7662
        %v7775 = vunpack.c.l.b16 %v7666
        %v7776 = vunpack.c.l.b16 %v7669
        %v7777 = vunpack.c.l.b16 %v7673
        %v7778 = vunpack.c.l.b16 %v7676
        %v7779 = vunpack.c.l.b16 %v7680
        %v7780 = vunpack.c.l.b16 %v7683
        %v7781 = vunpack.c.l.b16 %v7687
        %v7782 = vunpack.c.l.b16 %v7690
        %v7783 = vunpack.c.l.b16 %v7694
        %v7784 = vunpack.c.l.b16 %v7697
        %v7785 = vunpack.c.l.b16 %v7701
        %v7786 = vunpack.c.l.b16 %v7704
        %v7787 = vunpack.c.l.b16 %v7708
        %v7788 = vunpack.c.l.b16 %v7711
        %v7789 = vunpack.c.l.b16 %v7715
        %v7790 = vunpack.c.l.b16 %v7718
        %v7791 = vunpack.c.l.b16 %v7722
        %v7792 = vunpack.c.l.b16 %v7725
        %v7793 = vunpack.c.l.b16 %v7729
        %v7794 = vunpack.c.l.b16 %v7732
        %v7795 = vunpack.c.l.b16 %v7736
        %v7796 = vunpack.c.l.b16 %v7739
        %v7797 = vunpack.c.l.b16 %v7743
        %v7798 = vunpack.c.l.b16 %v7746
        %v7799 = vunpack.c.l.b16 %v7750
        %v7800 = vunpack.c.l.b16 %v7753
        %v7801 = vunpack.c.l.b16 %v7757
        %v7802 = vunpack.c.l.b16 %v7760
        %v7803 = vunpack.c.l.b16 %v7764
        %v7804 = vunpack.c.l.b16 %v7767
        %v7805 = vpack.c.b16 %v7774, %v7773
        %v7806 = vpack.c.b16 %v7776, %v7775
        %v7807 = vpack.c.b16 %v7778, %v7777
        %v7808 = vpack.c.b16 %v7780, %v7779
        %v7809 = vpack.c.b16 %v7782, %v7781
        %v7810 = vpack.c.b16 %v7784, %v7783
        %v7811 = vpack.c.b16 %v7786, %v7785
        %v7812 = vpack.c.b16 %v7788, %v7787
        %v7813 = vpack.c.b16 %v7790, %v7789
        %v7814 = vpack.c.b16 %v7792, %v7791
        %v7815 = vpack.c.b16 %v7794, %v7793
        %v7816 = vpack.c.b16 %v7796, %v7795
        %v7817 = vpack.c.b16 %v7798, %v7797
        %v7818 = vpack.c.b16 %v7800, %v7799
        %v7819 = vpack.c.b16 %v7802, %v7801
        %v7820 = vpack.c.b16 %v7804, %v7803
        %v7825 = vunpack.c.l.b16 %v7769
        %v7826 = vunpack.c.l.b16 %v7770
        %v7827 = vunpack.c.l.b16 %v7771
        %v7828 = vunpack.c.l.b16 %v7772
        %v7829 = vpack.c.b16 %v7826, %v7825
        %v7830 = vpack.c.b16 %v7828, %v7827
        %v7834 = vsel %vm6356, %v7805, 0
        %v7837 = vsel %vm6356, %v7806, 0
        %v7840 = vsel %vm6356, %v7807, 0
        %v7843 = vsel %vm6356, %v7808, 0
        %v7846 = vsel %vm6356, %v7809, 0
        %v7849 = vsel %vm6356, %v7810, 0
        %v7852 = vsel %vm6356, %v7811, 0
        %v7855 = vsel %vm6356, %v7812, 0
        %v7858 = vsel %vm6356, %v7813, 0
        %v7861 = vsel %vm6356, %v7814, 0
        %v7864 = vsel %vm6356, %v7815, 0
        %v7867 = vsel %vm6356, %v7816, 0
        %v7870 = vsel %vm6356, %v7817, 0
        %v7873 = vsel %vm6356, %v7818, 0
        %v7876 = vsel %vm6356, %v7819, 0
        %v7879 = vsel %vm6356, %v7820, 0
        %7881 = vmatprep.subr.bf16.mxu0 0
        %7882 = vmatpush1.bf16.msra.mxu0 %v7829
        %7883 = vmatprep.subr.bf16.mxu0 0
        %7884 = vmatpush1.bf16.msra.mxu0 %v7830
        %7885 = vmatprep.subr.bf16.mxu0 0
        %7886 = vmatpush1.bf16.msra.mxu0 0
        %7887 = vmatprep.subr.bf16.mxu0 0
        %7888 = vmatpush1.bf16.msra.mxu0 0
        %7889 = vmatprep.subr.bf16.mxu0 0
        %7890 = vmatpush1.bf16.msra.mxu0 0
        %7891 = vmatprep.subr.bf16.mxu0 0
        %7892 = vmatpush1.bf16.msra.mxu0 0
        %7893 = vmatprep.subr.bf16.mxu0 0
        %7894 = vmatpush1.bf16.msra.mxu0 0
        %7895 = vmatprep.subr.bf16.mxu0 0
        %7896 = vmatpush1.bf16.msra.mxu0 0
        %7897 = vmatprep.subr.bf16.mxu0 0
        %7898 = vmatpush1.bf16.msra.mxu0 0
        %7899 = vmatprep.subr.bf16.mxu0 0
        %7900 = vmatpush1.bf16.msra.mxu0 0
        %7901 = vmatprep.subr.bf16.mxu0 0
        %7902 = vmatpush1.bf16.msra.mxu0 0
        %7903 = vmatprep.subr.bf16.mxu0 0
        %7904 = vmatpush1.bf16.msra.mxu0 0
        %7905 = vmatprep.subr.bf16.mxu0 0
        %7906 = vmatpush1.bf16.msra.mxu0 0
        %7907 = vmatprep.subr.bf16.mxu0 0
        %7908 = vmatpush1.bf16.msra.mxu0 0
        %7909 = vmatprep.subr.bf16.mxu0 0
        %7910 = vmatpush1.bf16.msra.mxu0 0
        %7911 = vmatprep.subr.bf16.mxu0 0
        %7912 = vmatpush1.bf16.msra.mxu0 0
        %7913 = vmatprep.mubr.bf16.mxu0 0
        %7914 = vmatmul.mubr.bf16.gmra.mrb[0].mxu0 %v7834
        %v7915 = vpop.f32.mrb[0].mxu0
        %v7916 = vadd.f32 0.0, %v7915
        %v7917 = vpop.f32.mrb[0].mxu0
        %v7918 = vpop.f32.mrb[0].mxu0
        %v7919 = vadd.f32 0.0, %v7918
        %v7920 = vpop.f32.mrb[0].mxu0
        %7921 = vmatprep.mubr.bf16.mxu0 0
        %7922 = vmatmul.mubr.bf16.gmra.mrb[0].mxu0 %v7837
        %v7923 = vpop.f32.mrb[0].mxu0
        %v7924 = vadd.f32 0.0, %v7923
        %v7925 = vpop.f32.mrb[0].mxu0
        %v7926 = vpop.f32.mrb[0].mxu0
        %v7927 = vadd.f32 0.0, %v7926
        %v7928 = vpop.f32.mrb[0].mxu0
        %7929 = vmatprep.mubr.bf16.mxu0 0
        %7930 = vmatmul.mubr.bf16.gmra.mrb[0].mxu0 %v7840
        %v7931 = vpop.f32.mrb[0].mxu0
        %v7932 = vadd.f32 0.0, %v7931
        %v7933 = vpop.f32.mrb[0].mxu0
        %v7934 = vpop.f32.mrb[0].mxu0
        %v7935 = vadd.f32 0.0, %v7934
        %v7936 = vpop.f32.mrb[0].mxu0
        %7937 = vmatprep.mubr.bf16.mxu0 0
        %7938 = vmatmul.mubr.bf16.gmra.mrb[0].mxu0 %v7843
        %v7939 = vpop.f32.mrb[0].mxu0
        %v7940 = vadd.f32 0.0, %v7939
        %v7941 = vpop.f32.mrb[0].mxu0
        %v7942 = vpop.f32.mrb[0].mxu0
        %v7943 = vadd.f32 0.0, %v7942
        %v7944 = vpop.f32.mrb[0].mxu0
        %7945 = vmatprep.mubr.bf16.mxu0 0
        %7946 = vmatmul.mubr.bf16.gmra.mrb[0].mxu0 %v7846
        %v7947 = vpop.f32.mrb[0].mxu0
        %v7948 = vadd.f32 0.0, %v7947
        %v7949 = vpop.f32.mrb[0].mxu0
        %v7950 = vpop.f32.mrb[0].mxu0
        %v7951 = vadd.f32 0.0, %v7950
        %v7952 = vpop.f32.mrb[0].mxu0
        %7953 = vmatprep.mubr.bf16.mxu0 0
        %7954 = vmatmul.mubr.bf16.gmra.mrb[0].mxu0 %v7849
        %v7955 = vpop.f32.mrb[0].mxu0
        %v7956 = vadd.f32 0.0, %v7955
        %v7957 = vpop.f32.mrb[0].mxu0
        %v7958 = vpop.f32.mrb[0].mxu0
        %v7959 = vadd.f32 0.0, %v7958
        %v7960 = vpop.f32.mrb[0].mxu0
        %7961 = vmatprep.mubr.bf16.mxu0 0
        %7962 = vmatmul.mubr.bf16.gmra.mrb[0].mxu0 %v7852
        %v7963 = vpop.f32.mrb[0].mxu0
        %v7964 = vadd.f32 0.0, %v7963
        %v7965 = vpop.f32.mrb[0].mxu0
        %v7966 = vpop.f32.mrb[0].mxu0
        %v7967 = vadd.f32 0.0, %v7966
        %v7968 = vpop.f32.mrb[0].mxu0
        %7969 = vmatprep.mubr.bf16.mxu0 0
        %7970 = vmatmul.mubr.bf16.gmra.mrb[0].mxu0 %v7855
        %v7971 = vpop.f32.mrb[0].mxu0
        %v7972 = vadd.f32 0.0, %v7971
        %v7973 = vpop.f32.mrb[0].mxu0
        %v7974 = vpop.f32.mrb[0].mxu0
        %v7975 = vadd.f32 0.0, %v7974
        %v7976 = vpop.f32.mrb[0].mxu0
        %7977 = vmatprep.mubr.bf16.mxu0 0
        %7978 = vmatmul.mubr.bf16.gmra.mrb[0].mxu0 %v7858
        %v7979 = vpop.f32.mrb[0].mxu0
        %v7980 = vadd.f32 0.0, %v7979
        %v7981 = vpop.f32.mrb[0].mxu0
        %v7982 = vpop.f32.mrb[0].mxu0
        %v7983 = vadd.f32 0.0, %v7982
        %v7984 = vpop.f32.mrb[0].mxu0
        %7985 = vmatprep.mubr.bf16.mxu0 0
        %7986 = vmatmul.mubr.bf16.gmra.mrb[0].mxu0 %v7861
        %v7987 = vpop.f32.mrb[0].mxu0
        %v7988 = vadd.f32 0.0, %v7987
        %v7989 = vpop.f32.mrb[0].mxu0
        %v7990 = vpop.f32.mrb[0].mxu0
        %v7991 = vadd.f32 0.0, %v7990
        %v7992 = vpop.f32.mrb[0].mxu0
        %7993 = vmatprep.mubr.bf16.mxu0 0
        %7994 = vmatmul.mubr.bf16.gmra.mrb[0].mxu0 %v7864
        %v7995 = vpop.f32.mrb[0].mxu0
        %v7996 = vadd.f32 0.0, %v7995
        %v7997 = vpop.f32.mrb[0].mxu0
        %v7998 = vpop.f32.mrb[0].mxu0
        %v7999 = vadd.f32 0.0, %v7998
        %v8000 = vpop.f32.mrb[0].mxu0
        %8001 = vmatprep.mubr.bf16.mxu0 0
        %8002 = vmatmul.mubr.bf16.gmra.mrb[0].mxu0 %v7867
        %v8003 = vpop.f32.mrb[0].mxu0
        %v8004 = vadd.f32 0.0, %v8003
        %v8005 = vpop.f32.mrb[0].mxu0
        %v8006 = vpop.f32.mrb[0].mxu0
        %v8007 = vadd.f32 0.0, %v8006
        %v8008 = vpop.f32.mrb[0].mxu0
        %8009 = vmatprep.mubr.bf16.mxu0 0
        %8010 = vmatmul.mubr.bf16.gmra.mrb[0].mxu0 %v7870
        %v8011 = vpop.f32.mrb[0].mxu0
        %v8012 = vadd.f32 0.0, %v8011
        %v8013 = vpop.f32.mrb[0].mxu0
        %v8014 = vpop.f32.mrb[0].mxu0
        %v8015 = vadd.f32 0.0, %v8014
        %v8016 = vpop.f32.mrb[0].mxu0
        %8017 = vmatprep.mubr.bf16.mxu0 0
        %8018 = vmatmul.mubr.bf16.gmra.mrb[0].mxu0 %v7873
        %v8019 = vpop.f32.mrb[0].mxu0
        %v8020 = vadd.f32 0.0, %v8019
        %v8021 = vpop.f32.mrb[0].mxu0
        %v8022 = vpop.f32.mrb[0].mxu0
        %v8023 = vadd.f32 0.0, %v8022
        %v8024 = vpop.f32.mrb[0].mxu0
        %8025 = vmatprep.mubr.bf16.mxu0 0
        %8026 = vmatmul.mubr.bf16.gmra.mrb[0].mxu0 %v7876
        %v8027 = vpop.f32.mrb[0].mxu0
        %v8028 = vadd.f32 0.0, %v8027
        %v8029 = vpop.f32.mrb[0].mxu0
        %v8030 = vpop.f32.mrb[0].mxu0
        %v8031 = vadd.f32 0.0, %v8030
        %v8032 = vpop.f32.mrb[0].mxu0
        %8033 = vmatprep.mubr.bf16.mxu0 0
        %8034 = vmatmul.mubr.bf16.gmra.mrb[0].mxu0 %v7879
        %v8035 = vpop.f32.mrb[0].mxu0
        %v8036 = vadd.f32 0.0, %v8035
        %v8037 = vpop.f32.mrb[0].mxu0
        %v8038 = vpop.f32.mrb[0].mxu0
        %v8039 = vadd.f32 0.0, %v8038
        %v8040 = vpop.f32.mrb[0].mxu0
        %8041 = vdwg.mxu0
        %8074 = vrot.lane.b32.xlu0 %v7916, 64
        %v8075 = vpop.permute.xlu0 %8074
        %8076 = vrot.lane.b32.xlu0 %v7919, 64
        %v8077 = vpop.permute.xlu0 %8076
        %8078 = vrot.lane.b32.xlu0 %v7924, 64
        %v8079 = vpop.permute.xlu0 %8078
        %8080 = vrot.lane.b32.xlu0 %v7927, 64
        %v8081 = vpop.permute.xlu0 %8080
        %8082 = vrot.lane.b32.xlu0 %v7932, 64
        %v8083 = vpop.permute.xlu0 %8082
        %8084 = vrot.lane.b32.xlu0 %v7935, 64
        %v8085 = vpop.permute.xlu0 %8084
        %8086 = vrot.lane.b32.xlu0 %v7940, 64
        %v8087 = vpop.permute.xlu0 %8086
        %8088 = vrot.lane.b32.xlu0 %v7943, 64
        %v8089 = vpop.permute.xlu0 %8088
        %8090 = vrot.lane.b32.xlu0 %v7948, 64
        %v8091 = vpop.permute.xlu0 %8090
        %8092 = vrot.lane.b32.xlu0 %v7951, 64
        %v8093 = vpop.permute.xlu0 %8092
        %8094 = vrot.lane.b32.xlu0 %v7956, 64
        %v8095 = vpop.permute.xlu0 %8094
        %8096 = vrot.lane.b32.xlu0 %v7959, 64
        %v8097 = vpop.permute.xlu0 %8096
        %8098 = vrot.lane.b32.xlu0 %v7964, 64
        %v8099 = vpop.permute.xlu0 %8098
        %8100 = vrot.lane.b32.xlu0 %v7967, 64
        %v8101 = vpop.permute.xlu0 %8100
        %8102 = vrot.lane.b32.xlu0 %v7972, 64
        %v8103 = vpop.permute.xlu0 %8102
        %8104 = vrot.lane.b32.xlu0 %v7975, 64
        %v8105 = vpop.permute.xlu0 %8104
        %8106 = vrot.lane.b32.xlu0 %v7980, 64
        %v8107 = vpop.permute.xlu0 %8106
        %8108 = vrot.lane.b32.xlu0 %v7983, 64
        %v8109 = vpop.permute.xlu0 %8108
        %8110 = vrot.lane.b32.xlu0 %v7988, 64
        %v8111 = vpop.permute.xlu0 %8110
        %8112 = vrot.lane.b32.xlu0 %v7991, 64
        %v8113 = vpop.permute.xlu0 %8112
        %8114 = vrot.lane.b32.xlu0 %v7996, 64
        %v8115 = vpop.permute.xlu0 %8114
        %8116 = vrot.lane.b32.xlu0 %v7999, 64
        %v8117 = vpop.permute.xlu0 %8116
        %8118 = vrot.lane.b32.xlu0 %v8004, 64
        %v8119 = vpop.permute.xlu0 %8118
        %8120 = vrot.lane.b32.xlu0 %v8007, 64
        %v8121 = vpop.permute.xlu0 %8120
        %8122 = vrot.lane.b32.xlu0 %v8012, 64
        %v8123 = vpop.permute.xlu0 %8122
        %8124 = vrot.lane.b32.xlu0 %v8015, 64
        %v8125 = vpop.permute.xlu0 %8124
        %8126 = vrot.lane.b32.xlu0 %v8020, 64
        %v8127 = vpop.permute.xlu0 %8126
        %8128 = vrot.lane.b32.xlu0 %v8023, 64
        %v8129 = vpop.permute.xlu0 %8128
        %8130 = vrot.lane.b32.xlu0 %v8028, 64
        %v8131 = vpop.permute.xlu0 %8130
        %8132 = vrot.lane.b32.xlu0 %v8031, 64
        %v8133 = vpop.permute.xlu0 %8132
        %8134 = vrot.lane.b32.xlu0 %v8036, 64
        %v8135 = vpop.permute.xlu0 %8134
        %8136 = vrot.lane.b32.xlu0 %v8039, 64
        %v8137 = vpop.permute.xlu0 %8136
        %v8170 = vadd.f32 %v7560, %v8075
        %v8171 = vadd.f32 %v7561, %v8077
        %v8172 = vadd.f32 %v7562, %v8079
        %v8173 = vadd.f32 %v7563, %v8081
        %v8174 = vadd.f32 %v7564, %v8083
        %v8175 = vadd.f32 %v7565, %v8085
        %v8176 = vadd.f32 %v7566, %v8087
        %v8177 = vadd.f32 %v7567, %v8089
        %v8178 = vadd.f32 %v7568, %v8091
        %v8179 = vadd.f32 %v7569, %v8093
        %v8180 = vadd.f32 %v7570, %v8095
        %v8181 = vadd.f32 %v7571, %v8097
        %v8182 = vadd.f32 %v7572, %v8099
        %v8183 = vadd.f32 %v7573, %v8101
        %v8184 = vadd.f32 %v7574, %v8103
        %v8185 = vadd.f32 %v7575, %v8105
        %v8186 = vadd.f32 %v7576, %v8107
        %v8187 = vadd.f32 %v7577, %v8109
        %v8188 = vadd.f32 %v7578, %v8111
        %v8189 = vadd.f32 %v7579, %v8113
        %v8190 = vadd.f32 %v7580, %v8115
        %v8191 = vadd.f32 %v7581, %v8117
        %v8192 = vadd.f32 %v7582, %v8119
        %v8193 = vadd.f32 %v7583, %v8121
        %v8194 = vadd.f32 %v7584, %v8123
        %v8195 = vadd.f32 %v7585, %v8125
        %v8196 = vadd.f32 %v7586, %v8127
        %v8197 = vadd.f32 %v7587, %v8129
        %v8198 = vadd.f32 %v7588, %v8131
        %v8199 = vadd.f32 %v7589, %v8133
        %v8200 = vadd.f32 %v7590, %v8135
        %v8201 = vadd.f32 %v7591, %v8137
        %v8202 = vld [vmem:[%s6113] sm:$0xf]
        %v8203 = vld [vmem:[%s6113 + $0x4] sm:$0xf]
        %v8204 = vld [vmem:[%s6113 + $0xc] sm:$0xf]
        %v8205 = vld [vmem:[%s6113 + $0x10] sm:$0xf]
        %v8206 = vld [vmem:[%s6113 + $0x18] sm:$0xf]
        %v8207 = vld [vmem:[%s6113 + $0x1c] sm:$0xf]
        %v8208 = vld [vmem:[%s6113 + $0x24] sm:$0xf]
        %v8209 = vld [vmem:[%s6113 + $0x28] sm:$0xf]
        %v8210 = vld [vmem:[%s6113 + $0x30] sm:$0xf]
        %v8211 = vld [vmem:[%s6113 + $0x34] sm:$0xf]
        %v8212 = vld [vmem:[%s6113 + $0x3c] sm:$0xf]
        %v8213 = vld [vmem:[%s6113 + $0x40] sm:$0xf]
        %v8214 = vld [vmem:[%s6113 + $0x48] sm:$0xf]
        %v8215 = vld [vmem:[%s6113 + $0x4c] sm:$0xf]
        %v8216 = vld [vmem:[%s6113 + $0x54] sm:$0xf]
        %v8217 = vld [vmem:[%s6113 + $0x58] sm:$0xf]
        %v8218 = vld [vmem:[%s6113 + $0x60] sm:$0xf]
        %v8219 = vld [vmem:[%s6113 + $0x64] sm:$0xf]
        %v8220 = vld [vmem:[%s6113 + $0x6c] sm:$0xf]
        %v8221 = vld [vmem:[%s6113 + $0x70] sm:$0xf]
        %v8222 = vld [vmem:[%s6113 + $0x78] sm:$0xf]
        %v8223 = vld [vmem:[%s6113 + $0x7c] sm:$0xf]
        %v8224 = vld [vmem:[%s6113 + $0x84] sm:$0xf]
        %v8225 = vld [vmem:[%s6113 + $0x88] sm:$0xf]
        %v8226 = vld [vmem:[%s6113 + $0x90] sm:$0xf]
        %v8227 = vld [vmem:[%s6113 + $0x94] sm:$0xf]
        %v8228 = vld [vmem:[%s6113 + $0x9c] sm:$0xf]
        %v8229 = vld [vmem:[%s6113 + $0xa0] sm:$0xf]
        %v8230 = vld [vmem:[%s6113 + $0xa8] sm:$0xf]
        %v8231 = vld [vmem:[%s6113 + $0xac] sm:$0xf]
        %v8232 = vld [vmem:[%s6113 + $0xb4] sm:$0xf]
        %v8233 = vld [vmem:[%s6113 + $0xb8] sm:$0xf]
        %s8234 = scalar_lea.vmem %s3, 48
        %v8235 = vld [vmem:[%s8234] sm:$0xf]
        %v8236 = vld [vmem:[%s8234 + $0x4] sm:$0xf]
        %v8237 = vld [vmem:[%s8234 + $0x8] sm:$0xf]
        %v8238 = vld [vmem:[%s8234 + $0xc] sm:$0xf]
        %v8271 = vunpack.c.l.b16 %v8202
        %v8272 = vunpack.c.l.b16 %v8203
        %v8273 = vunpack.c.l.b16 %v8204
        %v8274 = vunpack.c.l.b16 %v8205
        %v8275 = vunpack.c.l.b16 %v8206
        %v8276 = vunpack.c.l.b16 %v8207
        %v8277 = vunpack.c.l.b16 %v8208
        %v8278 = vunpack.c.l.b16 %v8209
        %v8279 = vunpack.c.l.b16 %v8210
        %v8280 = vunpack.c.l.b16 %v8211
        %v8281 = vunpack.c.l.b16 %v8212
        %v8282 = vunpack.c.l.b16 %v8213
        %v8283 = vunpack.c.l.b16 %v8214
        %v8284 = vunpack.c.l.b16 %v8215
        %v8285 = vunpack.c.l.b16 %v8216
        %v8286 = vunpack.c.l.b16 %v8217
        %v8287 = vunpack.c.l.b16 %v8218
        %v8288 = vunpack.c.l.b16 %v8219
        %v8289 = vunpack.c.l.b16 %v8220
        %v8290 = vunpack.c.l.b16 %v8221
        %v8291 = vunpack.c.l.b16 %v8222
        %v8292 = vunpack.c.l.b16 %v8223
        %v8293 = vunpack.c.l.b16 %v8224
        %v8294 = vunpack.c.l.b16 %v8225
        %v8295 = vunpack.c.l.b16 %v8226
        %v8296 = vunpack.c.l.b16 %v8227
        %v8297 = vunpack.c.l.b16 %v8228
        %v8298 = vunpack.c.l.b16 %v8229
        %v8299 = vunpack.c.l.b16 %v8230
        %v8300 = vunpack.c.l.b16 %v8231
        %v8301 = vunpack.c.l.b16 %v8232
        %v8302 = vunpack.c.l.b16 %v8233
        %v8303 = vpack.c.b16 %v8272, %v8271
        %v8304 = vpack.c.b16 %v8274, %v8273
        %v8305 = vpack.c.b16 %v8276, %v8275
        %v8306 = vpack.c.b16 %v8278, %v8277
        %v8307 = vpack.c.b16 %v8280, %v8279
        %v8308 = vpack.c.b16 %v8282, %v8281
        %v8309 = vpack.c.b16 %v8284, %v8283
        %v8310 = vpack.c.b16 %v8286, %v8285
        %v8311 = vpack.c.b16 %v8288, %v8287
        %v8312 = vpack.c.b16 %v8290, %v8289
        %v8313 = vpack.c.b16 %v8292, %v8291
        %v8314 = vpack.c.b16 %v8294, %v8293
        %v8315 = vpack.c.b16 %v8296, %v8295
        %v8316 = vpack.c.b16 %v8298, %v8297
        %v8317 = vpack.c.b16 %v8300, %v8299
        %v8318 = vpack.c.b16 %v8302, %v8301
        %v8323 = vunpack.c.l.b16 %v8235
        %v8324 = vunpack.c.l.b16 %v8236
        %v8325 = vunpack.c.l.b16 %v8237
        %v8326 = vunpack.c.l.b16 %v8238
        %v8327 = vpack.c.b16 %v8324, %v8323
        %v8328 = vpack.c.b16 %v8326, %v8325
        %v8332 = vsel %vm6356, %v8303, 0
        %v8335 = vsel %vm6356, %v8304, 0
        %v8338 = vsel %vm6356, %v8305, 0
        %v8341 = vsel %vm6356, %v8306, 0
        %v8344 = vsel %vm6356, %v8307, 0
        %v8347 = vsel %vm6356, %v8308, 0
        %v8350 = vsel %vm6356, %v8309, 0
        %v8353 = vsel %vm6356, %v8310, 0
        %v8356 = vsel %vm6356, %v8311, 0
        %v8359 = vsel %vm6356, %v8312, 0
        %v8362 = vsel %vm6356, %v8313, 0
        %v8365 = vsel %vm6356, %v8314, 0
        %v8368 = vsel %vm6356, %v8315, 0
        %v8371 = vsel %vm6356, %v8316, 0
        %v8374 = vsel %vm6356, %v8317, 0
        %v8377 = vsel %vm6356, %v8318, 0
        %8379 = vmatprep.subr.bf16.mxu0 0
        %8380 = vmatpush1.bf16.msra.mxu0 %v8327
        %8381 = vmatprep.subr.bf16.mxu0 0
        %8382 = vmatpush1.bf16.msra.mxu0 %v8328
        %8383 = vmatprep.subr.bf16.mxu0 0
        %8384 = vmatpush1.bf16.msra.mxu0 0
        %8385 = vmatprep.subr.bf16.mxu0 0
        %8386 = vmatpush1.bf16.msra.mxu0 0
        %8387 = vmatprep.subr.bf16.mxu0 0
        %8388 = vmatpush1.bf16.msra.mxu0 0
        %8389 = vmatprep.subr.bf16.mxu0 0
        %8390 = vmatpush1.bf16.msra.mxu0 0
        %8391 = vmatprep.subr.bf16.mxu0 0
        %8392 = vmatpush1.bf16.msra.mxu0 0
        %8393 = vmatprep.subr.bf16.mxu0 0
        %8394 = vmatpush1.bf16.msra.mxu0 0
        %8395 = vmatprep.subr.bf16.mxu0 0
        %8396 = vmatpush1.bf16.msra.mxu0 0
        %8397 = vmatprep.subr.bf16.mxu0 0
        %8398 = vmatpush1.bf16.msra.mxu0 0
        %8399 = vmatprep.subr.bf16.mxu0 0
        %8400 = vmatpush1.bf16.msra.mxu0 0
        %8401 = vmatprep.subr.bf16.mxu0 0
        %8402 = vmatpush1.bf16.msra.mxu0 0
        %8403 = vmatprep.subr.bf16.mxu0 0
        %8404 = vmatpush1.bf16.msra.mxu0 0
        %8405 = vmatprep.subr.bf16.mxu0 0
        %8406 = vmatpush1.bf16.msra.mxu0 0
        %8407 = vmatprep.subr.bf16.mxu0 0
        %8408 = vmatpush1.bf16.msra.mxu0 0
        %8409 = vmatprep.subr.bf16.mxu0 0
        %8410 = vmatpush1.bf16.msra.mxu0 0
        %8411 = vmatprep.mubr.bf16.mxu0 0
        %8412 = vmatmul.mubr.bf16.gmra.mrb[0].mxu0 %v8332
        %v8413 = vpop.f32.mrb[0].mxu0
        %v8414 = vadd.f32 0.0, %v8413
        %v8415 = vpop.f32.mrb[0].mxu0
        %v8416 = vpop.f32.mrb[0].mxu0
        %v8417 = vadd.f32 0.0, %v8416
        %v8418 = vpop.f32.mrb[0].mxu0
        %8419 = vmatprep.mubr.bf16.mxu0 0
        %8420 = vmatmul.mubr.bf16.gmra.mrb[0].mxu0 %v8335
        %v8421 = vpop.f32.mrb[0].mxu0
        %v8422 = vadd.f32 0.0, %v8421
        %v8423 = vpop.f32.mrb[0].mxu0
        %v8424 = vpop.f32.mrb[0].mxu0
        %v8425 = vadd.f32 0.0, %v8424
        %v8426 = vpop.f32.mrb[0].mxu0
        %8427 = vmatprep.mubr.bf16.mxu0 0
        %8428 = vmatmul.mubr.bf16.gmra.mrb[0].mxu0 %v8338
        %v8429 = vpop.f32.mrb[0].mxu0
        %v8430 = vadd.f32 0.0, %v8429
        %v8431 = vpop.f32.mrb[0].mxu0
        %v8432 = vpop.f32.mrb[0].mxu0
        %v8433 = vadd.f32 0.0, %v8432
        %v8434 = vpop.f32.mrb[0].mxu0
        %8435 = vmatprep.mubr.bf16.mxu0 0
        %8436 = vmatmul.mubr.bf16.gmra.mrb[0].mxu0 %v8341
        %v8437 = vpop.f32.mrb[0].mxu0
        %v8438 = vadd.f32 0.0, %v8437
        %v8439 = vpop.f32.mrb[0].mxu0
        %v8440 = vpop.f32.mrb[0].mxu0
        %v8441 = vadd.f32 0.0, %v8440
        %v8442 = vpop.f32.mrb[0].mxu0
        %8443 = vmatprep.mubr.bf16.mxu0 0
        %8444 = vmatmul.mubr.bf16.gmra.mrb[0].mxu0 %v8344
        %v8445 = vpop.f32.mrb[0].mxu0
        %v8446 = vadd.f32 0.0, %v8445
        %v8447 = vpop.f32.mrb[0].mxu0
        %v8448 = vpop.f32.mrb[0].mxu0
        %v8449 = vadd.f32 0.0, %v8448
        %v8450 = vpop.f32.mrb[0].mxu0
        %8451 = vmatprep.mubr.bf16.mxu0 0
        %8452 = vmatmul.mubr.bf16.gmra.mrb[0].mxu0 %v8347
        %v8453 = vpop.f32.mrb[0].mxu0
        %v8454 = vadd.f32 0.0, %v8453
        %v8455 = vpop.f32.mrb[0].mxu0
        %v8456 = vpop.f32.mrb[0].mxu0
        %v8457 = vadd.f32 0.0, %v8456
        %v8458 = vpop.f32.mrb[0].mxu0
        %8459 = vmatprep.mubr.bf16.mxu0 0
        %8460 = vmatmul.mubr.bf16.gmra.mrb[0].mxu0 %v8350
        %v8461 = vpop.f32.mrb[0].mxu0
        %v8462 = vadd.f32 0.0, %v8461
        %v8463 = vpop.f32.mrb[0].mxu0
        %v8464 = vpop.f32.mrb[0].mxu0
        %v8465 = vadd.f32 0.0, %v8464
        %v8466 = vpop.f32.mrb[0].mxu0
        %8467 = vmatprep.mubr.bf16.mxu0 0
        %8468 = vmatmul.mubr.bf16.gmra.mrb[0].mxu0 %v8353
        %v8469 = vpop.f32.mrb[0].mxu0
        %v8470 = vadd.f32 0.0, %v8469
        %v8471 = vpop.f32.mrb[0].mxu0
        %v8472 = vpop.f32.mrb[0].mxu0
        %v8473 = vadd.f32 0.0, %v8472
        %v8474 = vpop.f32.mrb[0].mxu0
        %8475 = vmatprep.mubr.bf16.mxu0 0
        %8476 = vmatmul.mubr.bf16.gmra.mrb[0].mxu0 %v8356
        %v8477 = vpop.f32.mrb[0].mxu0
        %v8478 = vadd.f32 0.0, %v8477
        %v8479 = vpop.f32.mrb[0].mxu0
        %v8480 = vpop.f32.mrb[0].mxu0
        %v8481 = vadd.f32 0.0, %v8480
        %v8482 = vpop.f32.mrb[0].mxu0
        %8483 = vmatprep.mubr.bf16.mxu0 0
        %8484 = vmatmul.mubr.bf16.gmra.mrb[0].mxu0 %v8359
        %v8485 = vpop.f32.mrb[0].mxu0
        %v8486 = vadd.f32 0.0, %v8485
        %v8487 = vpop.f32.mrb[0].mxu0
        %v8488 = vpop.f32.mrb[0].mxu0
        %v8489 = vadd.f32 0.0, %v8488
        %v8490 = vpop.f32.mrb[0].mxu0
        %8491 = vmatprep.mubr.bf16.mxu0 0
        %8492 = vmatmul.mubr.bf16.gmra.mrb[0].mxu0 %v8362
        %v8493 = vpop.f32.mrb[0].mxu0
        %v8494 = vadd.f32 0.0, %v8493
        %v8495 = vpop.f32.mrb[0].mxu0
        %v8496 = vpop.f32.mrb[0].mxu0
        %v8497 = vadd.f32 0.0, %v8496
        %v8498 = vpop.f32.mrb[0].mxu0
        %8499 = vmatprep.mubr.bf16.mxu0 0
        %8500 = vmatmul.mubr.bf16.gmra.mrb[0].mxu0 %v8365
        %v8501 = vpop.f32.mrb[0].mxu0
        %v8502 = vadd.f32 0.0, %v8501
        %v8503 = vpop.f32.mrb[0].mxu0
        %v8504 = vpop.f32.mrb[0].mxu0
        %v8505 = vadd.f32 0.0, %v8504
        %v8506 = vpop.f32.mrb[0].mxu0
        %8507 = vmatprep.mubr.bf16.mxu0 0
        %8508 = vmatmul.mubr.bf16.gmra.mrb[0].mxu0 %v8368
        %v8509 = vpop.f32.mrb[0].mxu0
        %v8510 = vadd.f32 0.0, %v8509
        %v8511 = vpop.f32.mrb[0].mxu0
        %v8512 = vpop.f32.mrb[0].mxu0
        %v8513 = vadd.f32 0.0, %v8512
        %v8514 = vpop.f32.mrb[0].mxu0
        %8515 = vmatprep.mubr.bf16.mxu0 0
        %8516 = vmatmul.mubr.bf16.gmra.mrb[0].mxu0 %v8371
        %v8517 = vpop.f32.mrb[0].mxu0
        %v8518 = vadd.f32 0.0, %v8517
        %v8519 = vpop.f32.mrb[0].mxu0
        %v8520 = vpop.f32.mrb[0].mxu0
        %v8521 = vadd.f32 0.0, %v8520
        %v8522 = vpop.f32.mrb[0].mxu0
        %8523 = vmatprep.mubr.bf16.mxu0 0
        %8524 = vmatmul.mubr.bf16.gmra.mrb[0].mxu0 %v8374
        %v8525 = vpop.f32.mrb[0].mxu0
        %v8526 = vadd.f32 0.0, %v8525
        %v8527 = vpop.f32.mrb[0].mxu0
        %v8528 = vpop.f32.mrb[0].mxu0
        %v8529 = vadd.f32 0.0, %v8528
        %v8530 = vpop.f32.mrb[0].mxu0
        %8531 = vmatprep.mubr.bf16.mxu0 0
        %8532 = vmatmul.mubr.bf16.gmra.mrb[0].mxu0 %v8377
        %v8533 = vpop.f32.mrb[0].mxu0
        %v8534 = vadd.f32 0.0, %v8533
        %v8535 = vpop.f32.mrb[0].mxu0
        %v8536 = vpop.f32.mrb[0].mxu0
        %v8537 = vadd.f32 0.0, %v8536
        %v8538 = vpop.f32.mrb[0].mxu0
        %8539 = vdwg.mxu0
        %8572 = vrot.lane.b32.xlu0 %v8414, 64
        %v8573 = vpop.permute.xlu0 %8572
        %8574 = vrot.lane.b32.xlu0 %v8417, 64
        %v8575 = vpop.permute.xlu0 %8574
        %8576 = vrot.lane.b32.xlu0 %v8422, 64
        %v8577 = vpop.permute.xlu0 %8576
        %8578 = vrot.lane.b32.xlu0 %v8425, 64
        %v8579 = vpop.permute.xlu0 %8578
        %8580 = vrot.lane.b32.xlu0 %v8430, 64
        %v8581 = vpop.permute.xlu0 %8580
        %8582 = vrot.lane.b32.xlu0 %v8433, 64
        %v8583 = vpop.permute.xlu0 %8582
        %8584 = vrot.lane.b32.xlu0 %v8438, 64
        %v8585 = vpop.permute.xlu0 %8584
        %8586 = vrot.lane.b32.xlu0 %v8441, 64
        %v8587 = vpop.permute.xlu0 %8586
        %8588 = vrot.lane.b32.xlu0 %v8446, 64
        %v8589 = vpop.permute.xlu0 %8588
        %8590 = vrot.lane.b32.xlu0 %v8449, 64
        %v8591 = vpop.permute.xlu0 %8590
        %8592 = vrot.lane.b32.xlu0 %v8454, 64
        %v8593 = vpop.permute.xlu0 %8592
        %8594 = vrot.lane.b32.xlu0 %v8457, 64
        %v8595 = vpop.permute.xlu0 %8594
        %8596 = vrot.lane.b32.xlu0 %v8462, 64
        %v8597 = vpop.permute.xlu0 %8596
        %8598 = vrot.lane.b32.xlu0 %v8465, 64
        %v8599 = vpop.permute.xlu0 %8598
        %8600 = vrot.lane.b32.xlu0 %v8470, 64
        %v8601 = vpop.permute.xlu0 %8600
        %8602 = vrot.lane.b32.xlu0 %v8473, 64
        %v8603 = vpop.permute.xlu0 %8602
        %8604 = vrot.lane.b32.xlu0 %v8478, 64
        %v8605 = vpop.permute.xlu0 %8604
        %8606 = vrot.lane.b32.xlu0 %v8481, 64
        %v8607 = vpop.permute.xlu0 %8606
        %8608 = vrot.lane.b32.xlu0 %v8486, 64
        %v8609 = vpop.permute.xlu0 %8608
        %8610 = vrot.lane.b32.xlu0 %v8489, 64
        %v8611 = vpop.permute.xlu0 %8610
        %8612 = vrot.lane.b32.xlu0 %v8494, 64
        %v8613 = vpop.permute.xlu0 %8612
        %8614 = vrot.lane.b32.xlu0 %v8497, 64
        %v8615 = vpop.permute.xlu0 %8614
        %8616 = vrot.lane.b32.xlu0 %v8502, 64
        %v8617 = vpop.permute.xlu0 %8616
        %8618 = vrot.lane.b32.xlu0 %v8505, 64
        %v8619 = vpop.permute.xlu0 %8618
        %8620 = vrot.lane.b32.xlu0 %v8510, 64
        %v8621 = vpop.permute.xlu0 %8620
        %8622 = vrot.lane.b32.xlu0 %v8513, 64
        %v8623 = vpop.permute.xlu0 %8622
        %8624 = vrot.lane.b32.xlu0 %v8518, 64
        %v8625 = vpop.permute.xlu0 %8624
        %8626 = vrot.lane.b32.xlu0 %v8521, 64
        %v8627 = vpop.permute.xlu0 %8626
        %8628 = vrot.lane.b32.xlu0 %v8526, 64
        %v8629 = vpop.permute.xlu0 %8628
        %8630 = vrot.lane.b32.xlu0 %v8529, 64
        %v8631 = vpop.permute.xlu0 %8630
        %8632 = vrot.lane.b32.xlu0 %v8534, 64
        %v8633 = vpop.permute.xlu0 %8632
        %8634 = vrot.lane.b32.xlu0 %v8537, 64
        %v8635 = vpop.permute.xlu0 %8634
        %v8668 = vadd.f32 %v8170, %v8573
        %v8669 = vadd.f32 %v8171, %v8575
        %v8670 = vadd.f32 %v8172, %v8577
        %v8671 = vadd.f32 %v8173, %v8579
        %v8672 = vadd.f32 %v8174, %v8581
        %v8673 = vadd.f32 %v8175, %v8583
        %v8674 = vadd.f32 %v8176, %v8585
        %v8675 = vadd.f32 %v8177, %v8587
        %v8676 = vadd.f32 %v8178, %v8589
        %v8677 = vadd.f32 %v8179, %v8591
        %v8678 = vadd.f32 %v8180, %v8593
        %v8679 = vadd.f32 %v8181, %v8595
        %v8680 = vadd.f32 %v8182, %v8597
        %v8681 = vadd.f32 %v8183, %v8599
        %v8682 = vadd.f32 %v8184, %v8601
        %v8683 = vadd.f32 %v8185, %v8603
        %v8684 = vadd.f32 %v8186, %v8605
        %v8685 = vadd.f32 %v8187, %v8607
        %v8686 = vadd.f32 %v8188, %v8609
        %v8687 = vadd.f32 %v8189, %v8611
        %v8688 = vadd.f32 %v8190, %v8613
        %v8689 = vadd.f32 %v8191, %v8615
        %v8690 = vadd.f32 %v8192, %v8617
        %v8691 = vadd.f32 %v8193, %v8619
        %v8692 = vadd.f32 %v8194, %v8621
        %v8693 = vadd.f32 %v8195, %v8623
        %v8694 = vadd.f32 %v8196, %v8625
        %v8695 = vadd.f32 %v8197, %v8627
        %v8696 = vadd.f32 %v8198, %v8629
        %v8697 = vadd.f32 %v8199, %v8631
        %v8698 = vadd.f32 %v8200, %v8633
        %v8699 = vadd.f32 %v8201, %v8635
        %v8700 = vld [vmem:[%s6113] sm:$0xf]
        %v8701 = vld [vmem:[%s6113 + $0x4] sm:$0xf]
        %v8702 = vld [vmem:[%s6113 + $0x8] sm:$0x1]
        %v8703 = vld [vmem:[%s6113 + $0xc] sm:$0xf]
        %v8704 = vld [vmem:[%s6113 + $0x10] sm:$0xf]
        %v8705 = vld [vmem:[%s6113 + $0x14] sm:$0x1]
        %v8706 = vld [vmem:[%s6113 + $0x18] sm:$0xf]
        %v8707 = vld [vmem:[%s6113 + $0x1c] sm:$0xf]
        %v8708 = vld [vmem:[%s6113 + $0x20] sm:$0x1]
        %v8709 = vld [vmem:[%s6113 + $0x24] sm:$0xf]
        %v8710 = vld [vmem:[%s6113 + $0x28] sm:$0xf]
        %v8711 = vld [vmem:[%s6113 + $0x2c] sm:$0x1]
        %v8712 = vld [vmem:[%s6113 + $0x30] sm:$0xf]
        %v8713 = vld [vmem:[%s6113 + $0x34] sm:$0xf]
        %v8714 = vld [vmem:[%s6113 + $0x38] sm:$0x1]
        %v8715 = vld [vmem:[%s6113 + $0x3c] sm:$0xf]
        %v8716 = vld [vmem:[%s6113 + $0x40] sm:$0xf]
        %v8717 = vld [vmem:[%s6113 + $0x44] sm:$0x1]
        %v8718 = vld [vmem:[%s6113 + $0x48] sm:$0xf]
        %v8719 = vld [vmem:[%s6113 + $0x4c] sm:$0xf]
        %v8720 = vld [vmem:[%s6113 + $0x50] sm:$0x1]
        %v8721 = vld [vmem:[%s6113 + $0x54] sm:$0xf]
        %v8722 = vld [vmem:[%s6113 + $0x58] sm:$0xf]
        %v8723 = vld [vmem:[%s6113 + $0x5c] sm:$0x1]
        %v8724 = vld [vmem:[%s6113 + $0x60] sm:$0xf]
        %v8725 = vld [vmem:[%s6113 + $0x64] sm:$0xf]
        %v8726 = vld [vmem:[%s6113 + $0x68] sm:$0x1]
        %v8727 = vld [vmem:[%s6113 + $0x6c] sm:$0xf]
        %v8728 = vld [vmem:[%s6113 + $0x70] sm:$0xf]
        %v8729 = vld [vmem:[%s6113 + $0x74] sm:$0x1]
        %v8730 = vld [vmem:[%s6113 + $0x78] sm:$0xf]
        %v8731 = vld [vmem:[%s6113 + $0x7c] sm:$0xf]
        %v8732 = vld [vmem:[%s6113 + $0x80] sm:$0x1]
        %v8733 = vld [vmem:[%s6113 + $0x84] sm:$0xf]
        %v8734 = vld [vmem:[%s6113 + $0x88] sm:$0xf]
        %v8735 = vld [vmem:[%s6113 + $0x8c] sm:$0x1]
        %v8736 = vld [vmem:[%s6113 + $0x90] sm:$0xf]
        %v8737 = vld [vmem:[%s6113 + $0x94] sm:$0xf]
        %v8738 = vld [vmem:[%s6113 + $0x98] sm:$0x1]
        %v8739 = vld [vmem:[%s6113 + $0x9c] sm:$0xf]
        %v8740 = vld [vmem:[%s6113 + $0xa0] sm:$0xf]
        %v8741 = vld [vmem:[%s6113 + $0xa4] sm:$0x1]
        %v8742 = vld [vmem:[%s6113 + $0xa8] sm:$0xf]
        %v8743 = vld [vmem:[%s6113 + $0xac] sm:$0xf]
        %v8744 = vld [vmem:[%s6113 + $0xb0] sm:$0x1]
        %v8745 = vld [vmem:[%s6113 + $0xb4] sm:$0xf]
        %v8746 = vld [vmem:[%s6113 + $0xb8] sm:$0xf]
        %v8747 = vld [vmem:[%s6113 + $0xbc] sm:$0x1]
        %v8749 = vshrl.u32 %v8700, 16
        %v8751 = vrot.slane %v8749, 4
        %v8752 = vshll.u32 %v8700, 16
        %v8754 = vrot.slane %v8752, 5
        %v8755 = vor.u32 %v8751, %v8754
        %v8756 = vrot.slane %v8755, 4
        %v8758 = vshll.u32 %v8701, 16
        %v8760 = vrot.slane %v8758, 5
        %v8761 = vsel %vm679, %v8756, %v8760
        %v8762 = vshrl.u32 %v8701, 16
        %v8764 = vrot.slane %v8762, 4
        %v8765 = vor.u32 %v8764, %v8760
        %v8766 = vrot.slane %v8765, 4
        %v8768 = vshll.u32 %v8702, 16
        %v8770 = vrot.slane %v8768, 5
        %v8771 = vsel %vm679, %v8766, %v8770
        %v8773 = vshrl.u32 %v8703, 16
        %v8775 = vrot.slane %v8773, 4
        %v8776 = vshll.u32 %v8703, 16
        %v8778 = vrot.slane %v8776, 5
        %v8779 = vor.u32 %v8775, %v8778
        %v8780 = vrot.slane %v8779, 4
        %v8782 = vshll.u32 %v8704, 16
        %v8784 = vrot.slane %v8782, 5
        %v8785 = vsel %vm679, %v8780, %v8784
        %v8786 = vshrl.u32 %v8704, 16
        %v8788 = vrot.slane %v8786, 4
        %v8789 = vor.u32 %v8788, %v8784
        %v8790 = vrot.slane %v8789, 4
        %v8792 = vshll.u32 %v8705, 16
        %v8794 = vrot.slane %v8792, 5
        %v8795 = vsel %vm679, %v8790, %v8794
        %v8797 = vshrl.u32 %v8706, 16
        %v8799 = vrot.slane %v8797, 4
        %v8800 = vshll.u32 %v8706, 16
        %v8802 = vrot.slane %v8800, 5
        %v8803 = vor.u32 %v8799, %v8802
        %v8804 = vrot.slane %v8803, 4
        %v8806 = vshll.u32 %v8707, 16
        %v8808 = vrot.slane %v8806, 5
        %v8809 = vsel %vm679, %v8804, %v8808
        %v8810 = vshrl.u32 %v8707, 16
        %v8812 = vrot.slane %v8810, 4
        %v8813 = vor.u32 %v8812, %v8808
        %v8814 = vrot.slane %v8813, 4
        %v8816 = vshll.u32 %v8708, 16
        %v8818 = vrot.slane %v8816, 5
        %v8819 = vsel %vm679, %v8814, %v8818
        %v8821 = vshrl.u32 %v8709, 16
        %v8823 = vrot.slane %v8821, 4
        %v8824 = vshll.u32 %v8709, 16
        %v8826 = vrot.slane %v8824, 5
        %v8827 = vor.u32 %v8823, %v8826
        %v8828 = vrot.slane %v8827, 4
        %v8830 = vshll.u32 %v8710, 16
        %v8832 = vrot.slane %v8830, 5
        %v8833 = vsel %vm679, %v8828, %v8832
        %v8834 = vshrl.u32 %v8710, 16
        %v8836 = vrot.slane %v8834, 4
        %v8837 = vor.u32 %v8836, %v8832
        %v8838 = vrot.slane %v8837, 4
        %v8840 = vshll.u32 %v8711, 16
        %v8842 = vrot.slane %v8840, 5
        %v8843 = vsel %vm679, %v8838, %v8842
        %v8845 = vshrl.u32 %v8712, 16
        %v8847 = vrot.slane %v8845, 4
        %v8848 = vshll.u32 %v8712, 16
        %v8850 = vrot.slane %v8848, 5
        %v8851 = vor.u32 %v8847, %v8850
        %v8852 = vrot.slane %v8851, 4
        %v8854 = vshll.u32 %v8713, 16
        %v8856 = vrot.slane %v8854, 5
        %v8857 = vsel %vm679, %v8852, %v8856
        %v8858 = vshrl.u32 %v8713, 16
        %v8860 = vrot.slane %v8858, 4
        %v8861 = vor.u32 %v8860, %v8856
        %v8862 = vrot.slane %v8861, 4
        %v8864 = vshll.u32 %v8714, 16
        %v8866 = vrot.slane %v8864, 5
        %v8867 = vsel %vm679, %v8862, %v8866
        %v8869 = vshrl.u32 %v8715, 16
        %v8871 = vrot.slane %v8869, 4
        %v8872 = vshll.u32 %v8715, 16
        %v8874 = vrot.slane %v8872, 5
        %v8875 = vor.u32 %v8871, %v8874
        %v8876 = vrot.slane %v8875, 4
        %v8878 = vshll.u32 %v8716, 16
        %v8880 = vrot.slane %v8878, 5
        %v8881 = vsel %vm679, %v8876, %v8880
        %v8882 = vshrl.u32 %v8716, 16
        %v8884 = vrot.slane %v8882, 4
        %v8885 = vor.u32 %v8884, %v8880
        %v8886 = vrot.slane %v8885, 4
        %v8888 = vshll.u32 %v8717, 16
        %v8890 = vrot.slane %v8888, 5
        %v8891 = vsel %vm679, %v8886, %v8890
        %v8893 = vshrl.u32 %v8718, 16
        %v8895 = vrot.slane %v8893, 4
        %v8896 = vshll.u32 %v8718, 16
        %v8898 = vrot.slane %v8896, 5
        %v8899 = vor.u32 %v8895, %v8898
        %v8900 = vrot.slane %v8899, 4
        %v8902 = vshll.u32 %v8719, 16
        %v8904 = vrot.slane %v8902, 5
        %v8905 = vsel %vm679, %v8900, %v8904
        %v8906 = vshrl.u32 %v8719, 16
        %v8908 = vrot.slane %v8906, 4
        %v8909 = vor.u32 %v8908, %v8904
        %v8910 = vrot.slane %v8909, 4
        %v8912 = vshll.u32 %v8720, 16
        %v8914 = vrot.slane %v8912, 5
        %v8915 = vsel %vm679, %v8910, %v8914
        %v8917 = vshrl.u32 %v8721, 16
        %v8919 = vrot.slane %v8917, 4
        %v8920 = vshll.u32 %v8721, 16
        %v8922 = vrot.slane %v8920, 5
        %v8923 = vor.u32 %v8919, %v8922
        %v8924 = vrot.slane %v8923, 4
        %v8926 = vshll.u32 %v8722, 16
        %v8928 = vrot.slane %v8926, 5
        %v8929 = vsel %vm679, %v8924, %v8928
        %v8930 = vshrl.u32 %v8722, 16
        %v8932 = vrot.slane %v8930, 4
        %v8933 = vor.u32 %v8932, %v8928
        %v8934 = vrot.slane %v8933, 4
        %v8936 = vshll.u32 %v8723, 16
        %v8938 = vrot.slane %v8936, 5
        %v8939 = vsel %vm679, %v8934, %v8938
        %v8941 = vshrl.u32 %v8724, 16
        %v8943 = vrot.slane %v8941, 4
        %v8944 = vshll.u32 %v8724, 16
        %v8946 = vrot.slane %v8944, 5
        %v8947 = vor.u32 %v8943, %v8946
        %v8948 = vrot.slane %v8947, 4
        %v8950 = vshll.u32 %v8725, 16
        %v8952 = vrot.slane %v8950, 5
        %v8953 = vsel %vm679, %v8948, %v8952
        %v8954 = vshrl.u32 %v8725, 16
        %v8956 = vrot.slane %v8954, 4
        %v8957 = vor.u32 %v8956, %v8952
        %v8958 = vrot.slane %v8957, 4
        %v8960 = vshll.u32 %v8726, 16
        %v8962 = vrot.slane %v8960, 5
        %v8963 = vsel %vm679, %v8958, %v8962
        %v8965 = vshrl.u32 %v8727, 16
        %v8967 = vrot.slane %v8965, 4
        %v8968 = vshll.u32 %v8727, 16
        %v8970 = vrot.slane %v8968, 5
        %v8971 = vor.u32 %v8967, %v8970
        %v8972 = vrot.slane %v8971, 4
        %v8974 = vshll.u32 %v8728, 16
        %v8976 = vrot.slane %v8974, 5
        %v8977 = vsel %vm679, %v8972, %v8976
        %v8978 = vshrl.u32 %v8728, 16
        %v8980 = vrot.slane %v8978, 4
        %v8981 = vor.u32 %v8980, %v8976
        %v8982 = vrot.slane %v8981, 4
        %v8984 = vshll.u32 %v8729, 16
        %v8986 = vrot.slane %v8984, 5
        %v8987 = vsel %vm679, %v8982, %v8986
        %v8989 = vshrl.u32 %v8730, 16
        %v8991 = vrot.slane %v8989, 4
        %v8992 = vshll.u32 %v8730, 16
        %v8994 = vrot.slane %v8992, 5
        %v8995 = vor.u32 %v8991, %v8994
        %v8996 = vrot.slane %v8995, 4
        %v8998 = vshll.u32 %v8731, 16
        %v9000 = vrot.slane %v8998, 5
        %v9001 = vsel %vm679, %v8996, %v9000
        %v9002 = vshrl.u32 %v8731, 16
        %v9004 = vrot.slane %v9002, 4
        %v9005 = vor.u32 %v9004, %v9000
        %v9006 = vrot.slane %v9005, 4
        %v9008 = vshll.u32 %v8732, 16
        %v9010 = vrot.slane %v9008, 5
        %v9011 = vsel %vm679, %v9006, %v9010
        %v9013 = vshrl.u32 %v8733, 16
        %v9015 = vrot.slane %v9013, 4
        %v9016 = vshll.u32 %v8733, 16
        %v9018 = vrot.slane %v9016, 5
        %v9019 = vor.u32 %v9015, %v9018
        %v9020 = vrot.slane %v9019, 4
        %v9022 = vshll.u32 %v8734, 16
        %v9024 = vrot.slane %v9022, 5
        %v9025 = vsel %vm679, %v9020, %v9024
        %v9026 = vshrl.u32 %v8734, 16
        %v9028 = vrot.slane %v9026, 4
        %v9029 = vor.u32 %v9028, %v9024
        %v9030 = vrot.slane %v9029, 4
        %v9032 = vshll.u32 %v8735, 16
        %v9034 = vrot.slane %v9032, 5
        %v9035 = vsel %vm679, %v9030, %v9034
        %v9037 = vshrl.u32 %v8736, 16
        %v9039 = vrot.slane %v9037, 4
        %v9040 = vshll.u32 %v8736, 16
        %v9042 = vrot.slane %v9040, 5
        %v9043 = vor.u32 %v9039, %v9042
        %v9044 = vrot.slane %v9043, 4
        %v9046 = vshll.u32 %v8737, 16
        %v9048 = vrot.slane %v9046, 5
        %v9049 = vsel %vm679, %v9044, %v9048
        %v9050 = vshrl.u32 %v8737, 16
        %v9052 = vrot.slane %v9050, 4
        %v9053 = vor.u32 %v9052, %v9048
        %v9054 = vrot.slane %v9053, 4
        %v9056 = vshll.u32 %v8738, 16
        %v9058 = vrot.slane %v9056, 5
        %v9059 = vsel %vm679, %v9054, %v9058
        %v9061 = vshrl.u32 %v8739, 16
        %v9063 = vrot.slane %v9061, 4
        %v9064 = vshll.u32 %v8739, 16
        %v9066 = vrot.slane %v9064, 5
        %v9067 = vor.u32 %v9063, %v9066
        %v9068 = vrot.slane %v9067, 4
        %v9070 = vshll.u32 %v8740, 16
        %v9072 = vrot.slane %v9070, 5
        %v9073 = vsel %vm679, %v9068, %v9072
        %v9074 = vshrl.u32 %v8740, 16
        %v9076 = vrot.slane %v9074, 4
        %v9077 = vor.u32 %v9076, %v9072
        %v9078 = vrot.slane %v9077, 4
        %v9080 = vshll.u32 %v8741, 16
        %v9082 = vrot.slane %v9080, 5
        %v9083 = vsel %vm679, %v9078, %v9082
        %v9085 = vshrl.u32 %v8742, 16
        %v9087 = vrot.slane %v9085, 4
        %v9088 = vshll.u32 %v8742, 16
        %v9090 = vrot.slane %v9088, 5
        %v9091 = vor.u32 %v9087, %v9090
        %v9092 = vrot.slane %v9091, 4
        %v9094 = vshll.u32 %v8743, 16
        %v9096 = vrot.slane %v9094, 5
        %v9097 = vsel %vm679, %v9092, %v9096
        %v9098 = vshrl.u32 %v8743, 16
        %v9100 = vrot.slane %v9098, 4
        %v9101 = vor.u32 %v9100, %v9096
        %v9102 = vrot.slane %v9101, 4
        %v9104 = vshll.u32 %v8744, 16
        %v9106 = vrot.slane %v9104, 5
        %v9107 = vsel %vm679, %v9102, %v9106
        %v9109 = vshrl.u32 %v8745, 16
        %v9111 = vrot.slane %v9109, 4
        %v9112 = vshll.u32 %v8745, 16
        %v9114 = vrot.slane %v9112, 5
        %v9115 = vor.u32 %v9111, %v9114
        %v9116 = vrot.slane %v9115, 4
        %v9118 = vshll.u32 %v8746, 16
        %v9120 = vrot.slane %v9118, 5
        %v9121 = vsel %vm679, %v9116, %v9120
        %v9122 = vshrl.u32 %v8746, 16
        %v9124 = vrot.slane %v9122, 4
        %v9125 = vor.u32 %v9124, %v9120
        %v9126 = vrot.slane %v9125, 4
        %v9128 = vshll.u32 %v8747, 16
        %v9130 = vrot.slane %v9128, 5
        %v9131 = vsel %vm679, %v9126, %v9130
        %s9132 = scalar_lea.vmem %s3, 64
        %v9133 = vld [vmem:[%s9132] sm:$0xf]
        %v9134 = vld [vmem:[%s9132 + $0x4] sm:$0xf]
        %v9135 = vld [vmem:[%s9132 + $0x8] sm:$0xf]
        %v9136 = vld [vmem:[%s9132 + $0xc] sm:$0xf]
        %v9137 = vunpack.c.l.b16 %v8761
        %v9138 = vunpack.c.l.b16 %v8771
        %v9139 = vunpack.c.l.b16 %v8785
        %v9140 = vunpack.c.l.b16 %v8795
        %v9141 = vunpack.c.l.b16 %v8809
        %v9142 = vunpack.c.l.b16 %v8819
        %v9143 = vunpack.c.l.b16 %v8833
        %v9144 = vunpack.c.l.b16 %v8843
        %v9145 = vunpack.c.l.b16 %v8857
        %v9146 = vunpack.c.l.b16 %v8867
        %v9147 = vunpack.c.l.b16 %v8881
        %v9148 = vunpack.c.l.b16 %v8891
        %v9149 = vunpack.c.l.b16 %v8905
        %v9150 = vunpack.c.l.b16 %v8915
        %v9151 = vunpack.c.l.b16 %v8929
        %v9152 = vunpack.c.l.b16 %v8939
        %v9153 = vunpack.c.l.b16 %v8953
        %v9154 = vunpack.c.l.b16 %v8963
        %v9155 = vunpack.c.l.b16 %v8977
        %v9156 = vunpack.c.l.b16 %v8987
        %v9157 = vunpack.c.l.b16 %v9001
        %v9158 = vunpack.c.l.b16 %v9011
        %v9159 = vunpack.c.l.b16 %v9025
        %v9160 = vunpack.c.l.b16 %v9035
        %v9161 = vunpack.c.l.b16 %v9049
        %v9162 = vunpack.c.l.b16 %v9059
        %v9163 = vunpack.c.l.b16 %v9073
        %v9164 = vunpack.c.l.b16 %v9083
        %v9165 = vunpack.c.l.b16 %v9097
        %v9166 = vunpack.c.l.b16 %v9107
        %v9167 = vunpack.c.l.b16 %v9121
        %v9168 = vunpack.c.l.b16 %v9131
        %v9169 = vpack.c.b16 %v9138, %v9137
        %v9170 = vpack.c.b16 %v9140, %v9139
        %v9171 = vpack.c.b16 %v9142, %v9141
        %v9172 = vpack.c.b16 %v9144, %v9143
        %v9173 = vpack.c.b16 %v9146, %v9145
        %v9174 = vpack.c.b16 %v9148, %v9147
        %v9175 = vpack.c.b16 %v9150, %v9149
        %v9176 = vpack.c.b16 %v9152, %v9151
        %v9177 = vpack.c.b16 %v9154, %v9153
        %v9178 = vpack.c.b16 %v9156, %v9155
        %v9179 = vpack.c.b16 %v9158, %v9157
        %v9180 = vpack.c.b16 %v9160, %v9159
        %v9181 = vpack.c.b16 %v9162, %v9161
        %v9182 = vpack.c.b16 %v9164, %v9163
        %v9183 = vpack.c.b16 %v9166, %v9165
        %v9184 = vpack.c.b16 %v9168, %v9167
        %v9189 = vunpack.c.l.b16 %v9133
        %v9190 = vunpack.c.l.b16 %v9134
        %v9191 = vunpack.c.l.b16 %v9135
        %v9192 = vunpack.c.l.b16 %v9136
        %v9193 = vpack.c.b16 %v9190, %v9189
        %v9194 = vpack.c.b16 %v9192, %v9191
        %v9198 = vsel %vm6356, %v9169, 0
        %v9201 = vsel %vm6356, %v9170, 0
        %v9204 = vsel %vm6356, %v9171, 0
        %v9207 = vsel %vm6356, %v9172, 0
        %v9210 = vsel %vm6356, %v9173, 0
        %v9213 = vsel %vm6356, %v9174, 0
        %v9216 = vsel %vm6356, %v9175, 0
        %v9219 = vsel %vm6356, %v9176, 0
        %v9222 = vsel %vm6356, %v9177, 0
        %v9225 = vsel %vm6356, %v9178, 0
        %v9228 = vsel %vm6356, %v9179, 0
        %v9231 = vsel %vm6356, %v9180, 0
        %v9234 = vsel %vm6356, %v9181, 0
        %v9237 = vsel %vm6356, %v9182, 0
        %v9240 = vsel %vm6356, %v9183, 0
        %v9243 = vsel %vm6356, %v9184, 0
        %9245 = vmatprep.subr.bf16.mxu0 0
        %9246 = vmatpush1.bf16.msra.mxu0 %v9193
        %9247 = vmatprep.subr.bf16.mxu0 0
        %9248 = vmatpush1.bf16.msra.mxu0 %v9194
        %9249 = vmatprep.subr.bf16.mxu0 0
        %9250 = vmatpush1.bf16.msra.mxu0 0
        %9251 = vmatprep.subr.bf16.mxu0 0
        %9252 = vmatpush1.bf16.msra.mxu0 0
        %9253 = vmatprep.subr.bf16.mxu0 0
        %9254 = vmatpush1.bf16.msra.mxu0 0
        %9255 = vmatprep.subr.bf16.mxu0 0
        %9256 = vmatpush1.bf16.msra.mxu0 0
        %9257 = vmatprep.subr.bf16.mxu0 0
        %9258 = vmatpush1.bf16.msra.mxu0 0
        %9259 = vmatprep.subr.bf16.mxu0 0
        %9260 = vmatpush1.bf16.msra.mxu0 0
        %9261 = vmatprep.subr.bf16.mxu0 0
        %9262 = vmatpush1.bf16.msra.mxu0 0
        %9263 = vmatprep.subr.bf16.mxu0 0
        %9264 = vmatpush1.bf16.msra.mxu0 0
        %9265 = vmatprep.subr.bf16.mxu0 0
        %9266 = vmatpush1.bf16.msra.mxu0 0
        %9267 = vmatprep.subr.bf16.mxu0 0
        %9268 = vmatpush1.bf16.msra.mxu0 0
        %9269 = vmatprep.subr.bf16.mxu0 0
        %9270 = vmatpush1.bf16.msra.mxu0 0
        %9271 = vmatprep.subr.bf16.mxu0 0
        %9272 = vmatpush1.bf16.msra.mxu0 0
        %9273 = vmatprep.subr.bf16.mxu0 0
        %9274 = vmatpush1.bf16.msra.mxu0 0
        %9275 = vmatprep.subr.bf16.mxu0 0
        %9276 = vmatpush1.bf16.msra.mxu0 0
        %9277 = vmatprep.mubr.bf16.mxu0 0
        %9278 = vmatmul.mubr.bf16.gmra.mrb[0].mxu0 %v9198
        %v9279 = vpop.f32.mrb[0].mxu0
        %v9280 = vadd.f32 0.0, %v9279
        %v9281 = vpop.f32.mrb[0].mxu0
        %v9282 = vpop.f32.mrb[0].mxu0
        %v9283 = vadd.f32 0.0, %v9282
        %v9284 = vpop.f32.mrb[0].mxu0
        %9285 = vmatprep.mubr.bf16.mxu0 0
        %9286 = vmatmul.mubr.bf16.gmra.mrb[0].mxu0 %v9201
        %v9287 = vpop.f32.mrb[0].mxu0
        %v9288 = vadd.f32 0.0, %v9287
        %v9289 = vpop.f32.mrb[0].mxu0
        %v9290 = vpop.f32.mrb[0].mxu0
        %v9291 = vadd.f32 0.0, %v9290
        %v9292 = vpop.f32.mrb[0].mxu0
        %9293 = vmatprep.mubr.bf16.mxu0 0
        %9294 = vmatmul.mubr.bf16.gmra.mrb[0].mxu0 %v9204
        %v9295 = vpop.f32.mrb[0].mxu0
        %v9296 = vadd.f32 0.0, %v9295
        %v9297 = vpop.f32.mrb[0].mxu0
        %v9298 = vpop.f32.mrb[0].mxu0
        %v9299 = vadd.f32 0.0, %v9298
        %v9300 = vpop.f32.mrb[0].mxu0
        %9301 = vmatprep.mubr.bf16.mxu0 0
        %9302 = vmatmul.mubr.bf16.gmra.mrb[0].mxu0 %v9207
        %v9303 = vpop.f32.mrb[0].mxu0
        %v9304 = vadd.f32 0.0, %v9303
        %v9305 = vpop.f32.mrb[0].mxu0
        %v9306 = vpop.f32.mrb[0].mxu0
        %v9307 = vadd.f32 0.0, %v9306
        %v9308 = vpop.f32.mrb[0].mxu0
        %9309 = vmatprep.mubr.bf16.mxu0 0
        %9310 = vmatmul.mubr.bf16.gmra.mrb[0].mxu0 %v9210
        %v9311 = vpop.f32.mrb[0].mxu0
        %v9312 = vadd.f32 0.0, %v9311
        %v9313 = vpop.f32.mrb[0].mxu0
        %v9314 = vpop.f32.mrb[0].mxu0
        %v9315 = vadd.f32 0.0, %v9314
        %v9316 = vpop.f32.mrb[0].mxu0
        %9317 = vmatprep.mubr.bf16.mxu0 0
        %9318 = vmatmul.mubr.bf16.gmra.mrb[0].mxu0 %v9213
        %v9319 = vpop.f32.mrb[0].mxu0
        %v9320 = vadd.f32 0.0, %v9319
        %v9321 = vpop.f32.mrb[0].mxu0
        %v9322 = vpop.f32.mrb[0].mxu0
        %v9323 = vadd.f32 0.0, %v9322
        %v9324 = vpop.f32.mrb[0].mxu0
        %9325 = vmatprep.mubr.bf16.mxu0 0
        %9326 = vmatmul.mubr.bf16.gmra.mrb[0].mxu0 %v9216
        %v9327 = vpop.f32.mrb[0].mxu0
        %v9328 = vadd.f32 0.0, %v9327
        %v9329 = vpop.f32.mrb[0].mxu0
        %v9330 = vpop.f32.mrb[0].mxu0
        %v9331 = vadd.f32 0.0, %v9330
        %v9332 = vpop.f32.mrb[0].mxu0
        %9333 = vmatprep.mubr.bf16.mxu0 0
        %9334 = vmatmul.mubr.bf16.gmra.mrb[0].mxu0 %v9219
        %v9335 = vpop.f32.mrb[0].mxu0
        %v9336 = vadd.f32 0.0, %v9335
        %v9337 = vpop.f32.mrb[0].mxu0
        %v9338 = vpop.f32.mrb[0].mxu0
        %v9339 = vadd.f32 0.0, %v9338
        %v9340 = vpop.f32.mrb[0].mxu0
        %9341 = vmatprep.mubr.bf16.mxu0 0
        %9342 = vmatmul.mubr.bf16.gmra.mrb[0].mxu0 %v9222
        %v9343 = vpop.f32.mrb[0].mxu0
        %v9344 = vadd.f32 0.0, %v9343
        %v9345 = vpop.f32.mrb[0].mxu0
        %v9346 = vpop.f32.mrb[0].mxu0
        %v9347 = vadd.f32 0.0, %v9346
        %v9348 = vpop.f32.mrb[0].mxu0
        %9349 = vmatprep.mubr.bf16.mxu0 0
        %9350 = vmatmul.mubr.bf16.gmra.mrb[0].mxu0 %v9225
        %v9351 = vpop.f32.mrb[0].mxu0
        %v9352 = vadd.f32 0.0, %v9351
        %v9353 = vpop.f32.mrb[0].mxu0
        %v9354 = vpop.f32.mrb[0].mxu0
        %v9355 = vadd.f32 0.0, %v9354
        %v9356 = vpop.f32.mrb[0].mxu0
        %9357 = vmatprep.mubr.bf16.mxu0 0
        %9358 = vmatmul.mubr.bf16.gmra.mrb[0].mxu0 %v9228
        %v9359 = vpop.f32.mrb[0].mxu0
        %v9360 = vadd.f32 0.0, %v9359
        %v9361 = vpop.f32.mrb[0].mxu0
        %v9362 = vpop.f32.mrb[0].mxu0
        %v9363 = vadd.f32 0.0, %v9362
        %v9364 = vpop.f32.mrb[0].mxu0
        %9365 = vmatprep.mubr.bf16.mxu0 0
        %9366 = vmatmul.mubr.bf16.gmra.mrb[0].mxu0 %v9231
        %v9367 = vpop.f32.mrb[0].mxu0
        %v9368 = vadd.f32 0.0, %v9367
        %v9369 = vpop.f32.mrb[0].mxu0
        %v9370 = vpop.f32.mrb[0].mxu0
        %v9371 = vadd.f32 0.0, %v9370
        %v9372 = vpop.f32.mrb[0].mxu0
        %9373 = vmatprep.mubr.bf16.mxu0 0
        %9374 = vmatmul.mubr.bf16.gmra.mrb[0].mxu0 %v9234
        %v9375 = vpop.f32.mrb[0].mxu0
        %v9376 = vadd.f32 0.0, %v9375
        %v9377 = vpop.f32.mrb[0].mxu0
        %v9378 = vpop.f32.mrb[0].mxu0
        %v9379 = vadd.f32 0.0, %v9378
        %v9380 = vpop.f32.mrb[0].mxu0
        %9381 = vmatprep.mubr.bf16.mxu0 0
        %9382 = vmatmul.mubr.bf16.gmra.mrb[0].mxu0 %v9237
        %v9383 = vpop.f32.mrb[0].mxu0
        %v9384 = vadd.f32 0.0, %v9383
        %v9385 = vpop.f32.mrb[0].mxu0
        %v9386 = vpop.f32.mrb[0].mxu0
        %v9387 = vadd.f32 0.0, %v9386
        %v9388 = vpop.f32.mrb[0].mxu0
        %9389 = vmatprep.mubr.bf16.mxu0 0
        %9390 = vmatmul.mubr.bf16.gmra.mrb[0].mxu0 %v9240
        %v9391 = vpop.f32.mrb[0].mxu0
        %v9392 = vadd.f32 0.0, %v9391
        %v9393 = vpop.f32.mrb[0].mxu0
        %v9394 = vpop.f32.mrb[0].mxu0
        %v9395 = vadd.f32 0.0, %v9394
        %v9396 = vpop.f32.mrb[0].mxu0
        %9397 = vmatprep.mubr.bf16.mxu0 0
        %9398 = vmatmul.mubr.bf16.gmra.mrb[0].mxu0 %v9243
        %v9399 = vpop.f32.mrb[0].mxu0
        %v9400 = vadd.f32 0.0, %v9399
        %v9401 = vpop.f32.mrb[0].mxu0
        %v9402 = vpop.f32.mrb[0].mxu0
        %v9403 = vadd.f32 0.0, %v9402
        %v9404 = vpop.f32.mrb[0].mxu0
        %9405 = vdwg.mxu0
        %9438 = vrot.lane.b32.xlu0 %v9280, 64
        %v9439 = vpop.permute.xlu0 %9438
        %9440 = vrot.lane.b32.xlu0 %v9283, 64
        %v9441 = vpop.permute.xlu0 %9440
        %9442 = vrot.lane.b32.xlu0 %v9288, 64
        %v9443 = vpop.permute.xlu0 %9442
        %9444 = vrot.lane.b32.xlu0 %v9291, 64
        %v9445 = vpop.permute.xlu0 %9444
        %9446 = vrot.lane.b32.xlu0 %v9296, 64
        %v9447 = vpop.permute.xlu0 %9446
        %9448 = vrot.lane.b32.xlu0 %v9299, 64
        %v9449 = vpop.permute.xlu0 %9448
        %9450 = vrot.lane.b32.xlu0 %v9304, 64
        %v9451 = vpop.permute.xlu0 %9450
        %9452 = vrot.lane.b32.xlu0 %v9307, 64
        %v9453 = vpop.permute.xlu0 %9452
        %9454 = vrot.lane.b32.xlu0 %v9312, 64
        %v9455 = vpop.permute.xlu0 %9454
        %9456 = vrot.lane.b32.xlu0 %v9315, 64
        %v9457 = vpop.permute.xlu0 %9456
        %9458 = vrot.lane.b32.xlu0 %v9320, 64
        %v9459 = vpop.permute.xlu0 %9458
        %9460 = vrot.lane.b32.xlu0 %v9323, 64
        %v9461 = vpop.permute.xlu0 %9460
        %9462 = vrot.lane.b32.xlu0 %v9328, 64
        %v9463 = vpop.permute.xlu0 %9462
        %9464 = vrot.lane.b32.xlu0 %v9331, 64
        %v9465 = vpop.permute.xlu0 %9464
        %9466 = vrot.lane.b32.xlu0 %v9336, 64
        %v9467 = vpop.permute.xlu0 %9466
        %9468 = vrot.lane.b32.xlu0 %v9339, 64
        %v9469 = vpop.permute.xlu0 %9468
        %9470 = vrot.lane.b32.xlu0 %v9344, 64
        %v9471 = vpop.permute.xlu0 %9470
        %9472 = vrot.lane.b32.xlu0 %v9347, 64
        %v9473 = vpop.permute.xlu0 %9472
        %9474 = vrot.lane.b32.xlu0 %v9352, 64
        %v9475 = vpop.permute.xlu0 %9474
        %9476 = vrot.lane.b32.xlu0 %v9355, 64
        %v9477 = vpop.permute.xlu0 %9476
        %9478 = vrot.lane.b32.xlu0 %v9360, 64
        %v9479 = vpop.permute.xlu0 %9478
        %9480 = vrot.lane.b32.xlu0 %v9363, 64
        %v9481 = vpop.permute.xlu0 %9480
        %9482 = vrot.lane.b32.xlu0 %v9368, 64
        %v9483 = vpop.permute.xlu0 %9482
        %9484 = vrot.lane.b32.xlu0 %v9371, 64
        %v9485 = vpop.permute.xlu0 %9484
        %9486 = vrot.lane.b32.xlu0 %v9376, 64
        %v9487 = vpop.permute.xlu0 %9486
        %9488 = vrot.lane.b32.xlu0 %v9379, 64
        %v9489 = vpop.permute.xlu0 %9488
        %9490 = vrot.lane.b32.xlu0 %v9384, 64
        %v9491 = vpop.permute.xlu0 %9490
        %9492 = vrot.lane.b32.xlu0 %v9387, 64
        %v9493 = vpop.permute.xlu0 %9492
        %9494 = vrot.lane.b32.xlu0 %v9392, 64
        %v9495 = vpop.permute.xlu0 %9494
        %9496 = vrot.lane.b32.xlu0 %v9395, 64
        %v9497 = vpop.permute.xlu0 %9496
        %9498 = vrot.lane.b32.xlu0 %v9400, 64
        %v9499 = vpop.permute.xlu0 %9498
        %9500 = vrot.lane.b32.xlu0 %v9403, 64
        %v9501 = vpop.permute.xlu0 %9500
        %v9534 = vadd.f32 %v8668, %v9439
        %v9535 = vadd.f32 %v8669, %v9441
        %v9536 = vadd.f32 %v8670, %v9443
        %v9537 = vadd.f32 %v8671, %v9445
        %v9538 = vadd.f32 %v8672, %v9447
        %v9539 = vadd.f32 %v8673, %v9449
        %v9540 = vadd.f32 %v8674, %v9451
        %v9541 = vadd.f32 %v8675, %v9453
        %v9542 = vadd.f32 %v8676, %v9455
        %v9543 = vadd.f32 %v8677, %v9457
        %v9544 = vadd.f32 %v8678, %v9459
        %v9545 = vadd.f32 %v8679, %v9461
        %v9546 = vadd.f32 %v8680, %v9463
        %v9547 = vadd.f32 %v8681, %v9465
        %v9548 = vadd.f32 %v8682, %v9467
        %v9549 = vadd.f32 %v8683, %v9469
        %v9550 = vadd.f32 %v8684, %v9471
        %v9551 = vadd.f32 %v8685, %v9473
        %v9552 = vadd.f32 %v8686, %v9475
        %v9553 = vadd.f32 %v8687, %v9477
        %v9554 = vadd.f32 %v8688, %v9479
        %v9555 = vadd.f32 %v8689, %v9481
        %v9556 = vadd.f32 %v8690, %v9483
        %v9557 = vadd.f32 %v8691, %v9485
        %v9558 = vadd.f32 %v8692, %v9487
        %v9559 = vadd.f32 %v8693, %v9489
        %v9560 = vadd.f32 %v8694, %v9491
        %v9561 = vadd.f32 %v8695, %v9493
        %v9562 = vadd.f32 %v8696, %v9495
        %v9563 = vadd.f32 %v8697, %v9497
        %v9564 = vadd.f32 %v8698, %v9499
        %v9565 = vadd.f32 %v8699, %v9501
        %v9566 = vld [vmem:[%s6113] sm:$0xe]
        %v9567 = vld [vmem:[%s6113 + $0xc] sm:$0xe]
        %v9568 = vld [vmem:[%s6113 + $0x18] sm:$0xe]
        %v9569 = vld [vmem:[%s6113 + $0x24] sm:$0xe]
        %v9570 = vld [vmem:[%s6113 + $0x30] sm:$0xe]
        %v9571 = vld [vmem:[%s6113 + $0x3c] sm:$0xe]
        %v9572 = vld [vmem:[%s6113 + $0x48] sm:$0xe]
        %v9573 = vld [vmem:[%s6113 + $0x54] sm:$0xe]
        %v9574 = vld [vmem:[%s6113 + $0x60] sm:$0xe]
        %v9575 = vld [vmem:[%s6113 + $0x6c] sm:$0xe]
        %v9576 = vld [vmem:[%s6113 + $0x78] sm:$0xe]
        %v9577 = vld [vmem:[%s6113 + $0x84] sm:$0xe]
        %v9578 = vld [vmem:[%s6113 + $0x90] sm:$0xe]
        %v9579 = vld [vmem:[%s6113 + $0x9c] sm:$0xe]
        %v9580 = vld [vmem:[%s6113 + $0xa8] sm:$0xe]
        %v9581 = vld [vmem:[%s6113 + $0xb4] sm:$0xe]
        %v9630 = vrot.slane %v9566, 5
        %v9631 = vrot.slane %v9630, 4
        %v9632 = vrot.slane %v8701, 5
        %v9633 = vsel %vm1443, %v9631, %v9632
        %v9634 = vrot.slane %v9632, 4
        %v9635 = vrot.slane %v8702, 5
        %v9636 = vsel %vm1443, %v9634, %v9635
        %v9637 = vrot.slane %v9567, 5
        %v9638 = vrot.slane %v9637, 4
        %v9639 = vrot.slane %v8704, 5
        %v9640 = vsel %vm1443, %v9638, %v9639
        %v9641 = vrot.slane %v9639, 4
        %v9642 = vrot.slane %v8705, 5
        %v9643 = vsel %vm1443, %v9641, %v9642
        %v9644 = vrot.slane %v9568, 5
        %v9645 = vrot.slane %v9644, 4
        %v9646 = vrot.slane %v8707, 5
        %v9647 = vsel %vm1443, %v9645, %v9646
        %v9648 = vrot.slane %v9646, 4
        %v9649 = vrot.slane %v8708, 5
        %v9650 = vsel %vm1443, %v9648, %v9649
        %v9651 = vrot.slane %v9569, 5
        %v9652 = vrot.slane %v9651, 4
        %v9653 = vrot.slane %v8710, 5
        %v9654 = vsel %vm1443, %v9652, %v9653
        %v9655 = vrot.slane %v9653, 4
        %v9656 = vrot.slane %v8711, 5
        %v9657 = vsel %vm1443, %v9655, %v9656
        %v9658 = vrot.slane %v9570, 5
        %v9659 = vrot.slane %v9658, 4
        %v9660 = vrot.slane %v8713, 5
        %v9661 = vsel %vm1443, %v9659, %v9660
        %v9662 = vrot.slane %v9660, 4
        %v9663 = vrot.slane %v8714, 5
        %v9664 = vsel %vm1443, %v9662, %v9663
        %v9665 = vrot.slane %v9571, 5
        %v9666 = vrot.slane %v9665, 4
        %v9667 = vrot.slane %v8716, 5
        %v9668 = vsel %vm1443, %v9666, %v9667
        %v9669 = vrot.slane %v9667, 4
        %v9670 = vrot.slane %v8717, 5
        %v9671 = vsel %vm1443, %v9669, %v9670
        %v9672 = vrot.slane %v9572, 5
        %v9673 = vrot.slane %v9672, 4
        %v9674 = vrot.slane %v8719, 5
        %v9675 = vsel %vm1443, %v9673, %v9674
        %v9676 = vrot.slane %v9674, 4
        %v9677 = vrot.slane %v8720, 5
        %v9678 = vsel %vm1443, %v9676, %v9677
        %v9679 = vrot.slane %v9573, 5
        %v9680 = vrot.slane %v9679, 4
        %v9681 = vrot.slane %v8722, 5
        %v9682 = vsel %vm1443, %v9680, %v9681
        %v9683 = vrot.slane %v9681, 4
        %v9684 = vrot.slane %v8723, 5
        %v9685 = vsel %vm1443, %v9683, %v9684
        %v9686 = vrot.slane %v9574, 5
        %v9687 = vrot.slane %v9686, 4
        %v9688 = vrot.slane %v8725, 5
        %v9689 = vsel %vm1443, %v9687, %v9688
        %v9690 = vrot.slane %v9688, 4
        %v9691 = vrot.slane %v8726, 5
        %v9692 = vsel %vm1443, %v9690, %v9691
        %v9693 = vrot.slane %v9575, 5
        %v9694 = vrot.slane %v9693, 4
        %v9695 = vrot.slane %v8728, 5
        %v9696 = vsel %vm1443, %v9694, %v9695
        %v9697 = vrot.slane %v9695, 4
        %v9698 = vrot.slane %v8729, 5
        %v9699 = vsel %vm1443, %v9697, %v9698
        %v9700 = vrot.slane %v9576, 5
        %v9701 = vrot.slane %v9700, 4
        %v9702 = vrot.slane %v8731, 5
        %v9703 = vsel %vm1443, %v9701, %v9702
        %v9704 = vrot.slane %v9702, 4
        %v9705 = vrot.slane %v8732, 5
        %v9706 = vsel %vm1443, %v9704, %v9705
        %v9707 = vrot.slane %v9577, 5
        %v9708 = vrot.slane %v9707, 4
        %v9709 = vrot.slane %v8734, 5
        %v9710 = vsel %vm1443, %v9708, %v9709
        %v9711 = vrot.slane %v9709, 4
        %v9712 = vrot.slane %v8735, 5
        %v9713 = vsel %vm1443, %v9711, %v9712
        %v9714 = vrot.slane %v9578, 5
        %v9715 = vrot.slane %v9714, 4
        %v9716 = vrot.slane %v8737, 5
        %v9717 = vsel %vm1443, %v9715, %v9716
        %v9718 = vrot.slane %v9716, 4
        %v9719 = vrot.slane %v8738, 5
        %v9720 = vsel %vm1443, %v9718, %v9719
        %v9721 = vrot.slane %v9579, 5
        %v9722 = vrot.slane %v9721, 4
        %v9723 = vrot.slane %v8740, 5
        %v9724 = vsel %vm1443, %v9722, %v9723
        %v9725 = vrot.slane %v9723, 4
        %v9726 = vrot.slane %v8741, 5
        %v9727 = vsel %vm1443, %v9725, %v9726
        %v9728 = vrot.slane %v9580, 5
        %v9729 = vrot.slane %v9728, 4
        %v9730 = vrot.slane %v8743, 5
        %v9731 = vsel %vm1443, %v9729, %v9730
        %v9732 = vrot.slane %v9730, 4
        %v9733 = vrot.slane %v8744, 5
        %v9734 = vsel %vm1443, %v9732, %v9733
        %v9735 = vrot.slane %v9581, 5
        %v9736 = vrot.slane %v9735, 4
        %v9737 = vrot.slane %v8746, 5
        %v9738 = vsel %vm1443, %v9736, %v9737
        %v9739 = vrot.slane %v9737, 4
        %v9740 = vrot.slane %v8747, 5
        %v9741 = vsel %vm1443, %v9739, %v9740
        %s9742 = scalar_lea.vmem %s3, 80
        %v9743 = vld [vmem:[%s9742] sm:$0xf]
        %v9744 = vld [vmem:[%s9742 + $0x4] sm:$0xf]
        %v9745 = vld [vmem:[%s9742 + $0x8] sm:$0xf]
        %v9746 = vld [vmem:[%s9742 + $0xc] sm:$0xf]
        %v9747 = vunpack.c.l.b16 %v9633
        %v9748 = vunpack.c.l.b16 %v9636
        %v9749 = vunpack.c.l.b16 %v9640
        %v9750 = vunpack.c.l.b16 %v9643
        %v9751 = vunpack.c.l.b16 %v9647
        %v9752 = vunpack.c.l.b16 %v9650
        %v9753 = vunpack.c.l.b16 %v9654
        %v9754 = vunpack.c.l.b16 %v9657
        %v9755 = vunpack.c.l.b16 %v9661
        %v9756 = vunpack.c.l.b16 %v9664
        %v9757 = vunpack.c.l.b16 %v9668
        %v9758 = vunpack.c.l.b16 %v9671
        %v9759 = vunpack.c.l.b16 %v9675
        %v9760 = vunpack.c.l.b16 %v9678
        %v9761 = vunpack.c.l.b16 %v9682
        %v9762 = vunpack.c.l.b16 %v9685
        %v9763 = vunpack.c.l.b16 %v9689
        %v9764 = vunpack.c.l.b16 %v9692
        %v9765 = vunpack.c.l.b16 %v9696
        %v9766 = vunpack.c.l.b16 %v9699
        %v9767 = vunpack.c.l.b16 %v9703
        %v9768 = vunpack.c.l.b16 %v9706
        %v9769 = vunpack.c.l.b16 %v9710
        %v9770 = vunpack.c.l.b16 %v9713
        %v9771 = vunpack.c.l.b16 %v9717
        %v9772 = vunpack.c.l.b16 %v9720
        %v9773 = vunpack.c.l.b16 %v9724
        %v9774 = vunpack.c.l.b16 %v9727
        %v9775 = vunpack.c.l.b16 %v9731
        %v9776 = vunpack.c.l.b16 %v9734
        %v9777 = vunpack.c.l.b16 %v9738
        %v9778 = vunpack.c.l.b16 %v9741
        %v9779 = vpack.c.b16 %v9748, %v9747
        %v9780 = vpack.c.b16 %v9750, %v9749
        %v9781 = vpack.c.b16 %v9752, %v9751
        %v9782 = vpack.c.b16 %v9754, %v9753
        %v9783 = vpack.c.b16 %v9756, %v9755
        %v9784 = vpack.c.b16 %v9758, %v9757
        %v9785 = vpack.c.b16 %v9760, %v9759
        %v9786 = vpack.c.b16 %v9762, %v9761
        %v9787 = vpack.c.b16 %v9764, %v9763
        %v9788 = vpack.c.b16 %v9766, %v9765
        %v9789 = vpack.c.b16 %v9768, %v9767
        %v9790 = vpack.c.b16 %v9770, %v9769
        %v9791 = vpack.c.b16 %v9772, %v9771
        %v9792 = vpack.c.b16 %v9774, %v9773
        %v9793 = vpack.c.b16 %v9776, %v9775
        %v9794 = vpack.c.b16 %v9778, %v9777
        %v9799 = vunpack.c.l.b16 %v9743
        %v9800 = vunpack.c.l.b16 %v9744
        %v9801 = vunpack.c.l.b16 %v9745
        %v9802 = vunpack.c.l.b16 %v9746
        %v9803 = vpack.c.b16 %v9800, %v9799
        %v9804 = vpack.c.b16 %v9802, %v9801
        %v9808 = vsel %vm6356, %v9779, 0
        %v9811 = vsel %vm6356, %v9780, 0
        %v9814 = vsel %vm6356, %v9781, 0
        %v9817 = vsel %vm6356, %v9782, 0
        %v9820 = vsel %vm6356, %v9783, 0
        %v9823 = vsel %vm6356, %v9784, 0
        %v9826 = vsel %vm6356, %v9785, 0
        %v9829 = vsel %vm6356, %v9786, 0
        %v9832 = vsel %vm6356, %v9787, 0
        %v9835 = vsel %vm6356, %v9788, 0
        %v9838 = vsel %vm6356, %v9789, 0
        %v9841 = vsel %vm6356, %v9790, 0
        %v9844 = vsel %vm6356, %v9791, 0
        %v9847 = vsel %vm6356, %v9792, 0
        %v9850 = vsel %vm6356, %v9793, 0
        %v9853 = vsel %vm6356, %v9794, 0
        %9855 = vmatprep.subr.bf16.mxu0 0
        %9856 = vmatpush1.bf16.msra.mxu0 %v9803
        %9857 = vmatprep.subr.bf16.mxu0 0
        %9858 = vmatpush1.bf16.msra.mxu0 %v9804
        %9859 = vmatprep.subr.bf16.mxu0 0
        %9860 = vmatpush1.bf16.msra.mxu0 0
        %9861 = vmatprep.subr.bf16.mxu0 0
        %9862 = vmatpush1.bf16.msra.mxu0 0
        %9863 = vmatprep.subr.bf16.mxu0 0
        %9864 = vmatpush1.bf16.msra.mxu0 0
        %9865 = vmatprep.subr.bf16.mxu0 0
        %9866 = vmatpush1.bf16.msra.mxu0 0
        %9867 = vmatprep.subr.bf16.mxu0 0
        %9868 = vmatpush1.bf16.msra.mxu0 0
        %9869 = vmatprep.subr.bf16.mxu0 0
        %9870 = vmatpush1.bf16.msra.mxu0 0
        %9871 = vmatprep.subr.bf16.mxu0 0
        %9872 = vmatpush1.bf16.msra.mxu0 0
        %9873 = vmatprep.subr.bf16.mxu0 0
        %9874 = vmatpush1.bf16.msra.mxu0 0
        %9875 = vmatprep.subr.bf16.mxu0 0
        %9876 = vmatpush1.bf16.msra.mxu0 0
        %9877 = vmatprep.subr.bf16.mxu0 0
        %9878 = vmatpush1.bf16.msra.mxu0 0
        %9879 = vmatprep.subr.bf16.mxu0 0
        %9880 = vmatpush1.bf16.msra.mxu0 0
        %9881 = vmatprep.subr.bf16.mxu0 0
        %9882 = vmatpush1.bf16.msra.mxu0 0
        %9883 = vmatprep.subr.bf16.mxu0 0
        %9884 = vmatpush1.bf16.msra.mxu0 0
        %9885 = vmatprep.subr.bf16.mxu0 0
        %9886 = vmatpush1.bf16.msra.mxu0 0
        %9887 = vmatprep.mubr.bf16.mxu0 0
        %9888 = vmatmul.mubr.bf16.gmra.mrb[0].mxu0 %v9808
        %v9889 = vpop.f32.mrb[0].mxu0
        %v9890 = vadd.f32 0.0, %v9889
        %v9891 = vpop.f32.mrb[0].mxu0
        %v9892 = vpop.f32.mrb[0].mxu0
        %v9893 = vadd.f32 0.0, %v9892
        %v9894 = vpop.f32.mrb[0].mxu0
        %9895 = vmatprep.mubr.bf16.mxu0 0
        %9896 = vmatmul.mubr.bf16.gmra.mrb[0].mxu0 %v9811
        %v9897 = vpop.f32.mrb[0].mxu0
        %v9898 = vadd.f32 0.0, %v9897
        %v9899 = vpop.f32.mrb[0].mxu0
        %v9900 = vpop.f32.mrb[0].mxu0
        %v9901 = vadd.f32 0.0, %v9900
        %v9902 = vpop.f32.mrb[0].mxu0
        %9903 = vmatprep.mubr.bf16.mxu0 0
        %9904 = vmatmul.mubr.bf16.gmra.mrb[0].mxu0 %v9814
        %v9905 = vpop.f32.mrb[0].mxu0
        %v9906 = vadd.f32 0.0, %v9905
        %v9907 = vpop.f32.mrb[0].mxu0
        %v9908 = vpop.f32.mrb[0].mxu0
        %v9909 = vadd.f32 0.0, %v9908
        %v9910 = vpop.f32.mrb[0].mxu0
        %9911 = vmatprep.mubr.bf16.mxu0 0
        %9912 = vmatmul.mubr.bf16.gmra.mrb[0].mxu0 %v9817
        %v9913 = vpop.f32.mrb[0].mxu0
        %v9914 = vadd.f32 0.0, %v9913
        %v9915 = vpop.f32.mrb[0].mxu0
        %v9916 = vpop.f32.mrb[0].mxu0
        %v9917 = vadd.f32 0.0, %v9916
        %v9918 = vpop.f32.mrb[0].mxu0
        %9919 = vmatprep.mubr.bf16.mxu0 0
        %9920 = vmatmul.mubr.bf16.gmra.mrb[0].mxu0 %v9820
        %v9921 = vpop.f32.mrb[0].mxu0
        %v9922 = vadd.f32 0.0, %v9921
        %v9923 = vpop.f32.mrb[0].mxu0
        %v9924 = vpop.f32.mrb[0].mxu0
        %v9925 = vadd.f32 0.0, %v9924
        %v9926 = vpop.f32.mrb[0].mxu0
        %9927 = vmatprep.mubr.bf16.mxu0 0
        %9928 = vmatmul.mubr.bf16.gmra.mrb[0].mxu0 %v9823
        %v9929 = vpop.f32.mrb[0].mxu0
        %v9930 = vadd.f32 0.0, %v9929
        %v9931 = vpop.f32.mrb[0].mxu0
        %v9932 = vpop.f32.mrb[0].mxu0
        %v9933 = vadd.f32 0.0, %v9932
        %v9934 = vpop.f32.mrb[0].mxu0
        %9935 = vmatprep.mubr.bf16.mxu0 0
        %9936 = vmatmul.mubr.bf16.gmra.mrb[0].mxu0 %v9826
        %v9937 = vpop.f32.mrb[0].mxu0
        %v9938 = vadd.f32 0.0, %v9937
        %v9939 = vpop.f32.mrb[0].mxu0
        %v9940 = vpop.f32.mrb[0].mxu0
        %v9941 = vadd.f32 0.0, %v9940
        %v9942 = vpop.f32.mrb[0].mxu0
        %9943 = vmatprep.mubr.bf16.mxu0 0
        %9944 = vmatmul.mubr.bf16.gmra.mrb[0].mxu0 %v9829
        %v9945 = vpop.f32.mrb[0].mxu0
        %v9946 = vadd.f32 0.0, %v9945
        %v9947 = vpop.f32.mrb[0].mxu0
        %v9948 = vpop.f32.mrb[0].mxu0
        %v9949 = vadd.f32 0.0, %v9948
        %v9950 = vpop.f32.mrb[0].mxu0
        %9951 = vmatprep.mubr.bf16.mxu0 0
        %9952 = vmatmul.mubr.bf16.gmra.mrb[0].mxu0 %v9832
        %v9953 = vpop.f32.mrb[0].mxu0
        %v9954 = vadd.f32 0.0, %v9953
        %v9955 = vpop.f32.mrb[0].mxu0
        %v9956 = vpop.f32.mrb[0].mxu0
        %v9957 = vadd.f32 0.0, %v9956
        %v9958 = vpop.f32.mrb[0].mxu0
        %9959 = vmatprep.mubr.bf16.mxu0 0
        %9960 = vmatmul.mubr.bf16.gmra.mrb[0].mxu0 %v9835
        %v9961 = vpop.f32.mrb[0].mxu0
        %v9962 = vadd.f32 0.0, %v9961
        %v9963 = vpop.f32.mrb[0].mxu0
        %v9964 = vpop.f32.mrb[0].mxu0
        %v9965 = vadd.f32 0.0, %v9964
        %v9966 = vpop.f32.mrb[0].mxu0
        %9967 = vmatprep.mubr.bf16.mxu0 0
        %9968 = vmatmul.mubr.bf16.gmra.mrb[0].mxu0 %v9838
        %v9969 = vpop.f32.mrb[0].mxu0
        %v9970 = vadd.f32 0.0, %v9969
        %v9971 = vpop.f32.mrb[0].mxu0
        %v9972 = vpop.f32.mrb[0].mxu0
        %v9973 = vadd.f32 0.0, %v9972
        %v9974 = vpop.f32.mrb[0].mxu0
        %9975 = vmatprep.mubr.bf16.mxu0 0
        %9976 = vmatmul.mubr.bf16.gmra.mrb[0].mxu0 %v9841
        %v9977 = vpop.f32.mrb[0].mxu0
        %v9978 = vadd.f32 0.0, %v9977
        %v9979 = vpop.f32.mrb[0].mxu0
        %v9980 = vpop.f32.mrb[0].mxu0
        %v9981 = vadd.f32 0.0, %v9980
        %v9982 = vpop.f32.mrb[0].mxu0
        %9983 = vmatprep.mubr.bf16.mxu0 0
        %9984 = vmatmul.mubr.bf16.gmra.mrb[0].mxu0 %v9844
        %v9985 = vpop.f32.mrb[0].mxu0
        %v9986 = vadd.f32 0.0, %v9985
        %v9987 = vpop.f32.mrb[0].mxu0
        %v9988 = vpop.f32.mrb[0].mxu0
        %v9989 = vadd.f32 0.0, %v9988
        %v9990 = vpop.f32.mrb[0].mxu0
        %9991 = vmatprep.mubr.bf16.mxu0 0
        %9992 = vmatmul.mubr.bf16.gmra.mrb[0].mxu0 %v9847
        %v9993 = vpop.f32.mrb[0].mxu0
        %v9994 = vadd.f32 0.0, %v9993
        %v9995 = vpop.f32.mrb[0].mxu0
        %v9996 = vpop.f32.mrb[0].mxu0
        %v9997 = vadd.f32 0.0, %v9996
        %v9998 = vpop.f32.mrb[0].mxu0
        %9999 = vmatprep.mubr.bf16.mxu0 0
        %10000 = vmatmul.mubr.bf16.gmra.mrb[0].mxu0 %v9850
        %v10001 = vpop.f32.mrb[0].mxu0
        %v10002 = vadd.f32 0.0, %v10001
        %v10003 = vpop.f32.mrb[0].mxu0
        %v10004 = vpop.f32.mrb[0].mxu0
        %v10005 = vadd.f32 0.0, %v10004
        %v10006 = vpop.f32.mrb[0].mxu0
        %10007 = vmatprep.mubr.bf16.mxu0 0
        %10008 = vmatmul.mubr.bf16.gmra.mrb[0].mxu0 %v9853
        %v10009 = vpop.f32.mrb[0].mxu0
        %v10010 = vadd.f32 0.0, %v10009
        %v10011 = vpop.f32.mrb[0].mxu0
        %v10012 = vpop.f32.mrb[0].mxu0
        %v10013 = vadd.f32 0.0, %v10012
        %v10014 = vpop.f32.mrb[0].mxu0
        %10015 = vdwg.mxu0
        %10048 = vrot.lane.b32.xlu0 %v9890, 64
        %v10049 = vpop.permute.xlu0 %10048
        %10050 = vrot.lane.b32.xlu0 %v9893, 64
        %v10051 = vpop.permute.xlu0 %10050
        %10052 = vrot.lane.b32.xlu0 %v9898, 64
        %v10053 = vpop.permute.xlu0 %10052
        %10054 = vrot.lane.b32.xlu0 %v9901, 64
        %v10055 = vpop.permute.xlu0 %10054
        %10056 = vrot.lane.b32.xlu0 %v9906, 64
        %v10057 = vpop.permute.xlu0 %10056
        %10058 = vrot.lane.b32.xlu0 %v9909, 64
        %v10059 = vpop.permute.xlu0 %10058
        %10060 = vrot.lane.b32.xlu0 %v9914, 64
        %v10061 = vpop.permute.xlu0 %10060
        %10062 = vrot.lane.b32.xlu0 %v9917, 64
        %v10063 = vpop.permute.xlu0 %10062
        %10064 = vrot.lane.b32.xlu0 %v9922, 64
        %v10065 = vpop.permute.xlu0 %10064
        %10066 = vrot.lane.b32.xlu0 %v9925, 64
        %v10067 = vpop.permute.xlu0 %10066
        %10068 = vrot.lane.b32.xlu0 %v9930, 64
        %v10069 = vpop.permute.xlu0 %10068
        %10070 = vrot.lane.b32.xlu0 %v9933, 64
        %v10071 = vpop.permute.xlu0 %10070
        %10072 = vrot.lane.b32.xlu0 %v9938, 64
        %v10073 = vpop.permute.xlu0 %10072
        %10074 = vrot.lane.b32.xlu0 %v9941, 64
        %v10075 = vpop.permute.xlu0 %10074
        %10076 = vrot.lane.b32.xlu0 %v9946, 64
        %v10077 = vpop.permute.xlu0 %10076
        %10078 = vrot.lane.b32.xlu0 %v9949, 64
        %v10079 = vpop.permute.xlu0 %10078
        %10080 = vrot.lane.b32.xlu0 %v9954, 64
        %v10081 = vpop.permute.xlu0 %10080
        %10082 = vrot.lane.b32.xlu0 %v9957, 64
        %v10083 = vpop.permute.xlu0 %10082
        %10084 = vrot.lane.b32.xlu0 %v9962, 64
        %v10085 = vpop.permute.xlu0 %10084
        %10086 = vrot.lane.b32.xlu0 %v9965, 64
        %v10087 = vpop.permute.xlu0 %10086
        %10088 = vrot.lane.b32.xlu0 %v9970, 64
        %v10089 = vpop.permute.xlu0 %10088
        %10090 = vrot.lane.b32.xlu0 %v9973, 64
        %v10091 = vpop.permute.xlu0 %10090
        %10092 = vrot.lane.b32.xlu0 %v9978, 64
        %v10093 = vpop.permute.xlu0 %10092
        %10094 = vrot.lane.b32.xlu0 %v9981, 64
        %v10095 = vpop.permute.xlu0 %10094
        %10096 = vrot.lane.b32.xlu0 %v9986, 64
        %v10097 = vpop.permute.xlu0 %10096
        %10098 = vrot.lane.b32.xlu0 %v9989, 64
        %v10099 = vpop.permute.xlu0 %10098
        %10100 = vrot.lane.b32.xlu0 %v9994, 64
        %v10101 = vpop.permute.xlu0 %10100
        %10102 = vrot.lane.b32.xlu0 %v9997, 64
        %v10103 = vpop.permute.xlu0 %10102
        %10104 = vrot.lane.b32.xlu0 %v10002, 64
        %v10105 = vpop.permute.xlu0 %10104
        %10106 = vrot.lane.b32.xlu0 %v10005, 64
        %v10107 = vpop.permute.xlu0 %10106
        %10108 = vrot.lane.b32.xlu0 %v10010, 64
        %v10109 = vpop.permute.xlu0 %10108
        %10110 = vrot.lane.b32.xlu0 %v10013, 64
        %v10111 = vpop.permute.xlu0 %10110
        %v10144 = vadd.f32 %v9534, %v10049
        %v10145 = vadd.f32 %v9535, %v10051
        %v10146 = vadd.f32 %v9536, %v10053
        %v10147 = vadd.f32 %v9537, %v10055
        %v10148 = vadd.f32 %v9538, %v10057
        %v10149 = vadd.f32 %v9539, %v10059
        %v10150 = vadd.f32 %v9540, %v10061
        %v10151 = vadd.f32 %v9541, %v10063
        %v10152 = vadd.f32 %v9542, %v10065
        %v10153 = vadd.f32 %v9543, %v10067
        %v10154 = vadd.f32 %v9544, %v10069
        %v10155 = vadd.f32 %v9545, %v10071
        %v10156 = vadd.f32 %v9546, %v10073
        %v10157 = vadd.f32 %v9547, %v10075
        %v10158 = vadd.f32 %v9548, %v10077
        %v10159 = vadd.f32 %v9549, %v10079
        %v10160 = vadd.f32 %v9550, %v10081
        %v10161 = vadd.f32 %v9551, %v10083
        %v10162 = vadd.f32 %v9552, %v10085
        %v10163 = vadd.f32 %v9553, %v10087
        %v10164 = vadd.f32 %v9554, %v10089
        %v10165 = vadd.f32 %v9555, %v10091
        %v10166 = vadd.f32 %v9556, %v10093
        %v10167 = vadd.f32 %v9557, %v10095
        %v10168 = vadd.f32 %v9558, %v10097
        %v10169 = vadd.f32 %v9559, %v10099
        %v10170 = vadd.f32 %v9560, %v10101
        %v10171 = vadd.f32 %v9561, %v10103
        %v10172 = vadd.f32 %v9562, %v10105
        %v10173 = vadd.f32 %v9563, %v10107
        %v10174 = vadd.f32 %v9564, %v10109
        %v10175 = vadd.f32 %v9565, %v10111
        %s10176 = scalar_lea.vmem [#allocation2], 24
        %v10177 = vld [vmem:[%s10176] sm:$0xf]
        %v10178 = vld [vmem:[%s10176 + $0x4] sm:$0xf]
        %v10179 = vld [vmem:[%s10176 + $0xc] sm:$0xf]
        %v10180 = vld [vmem:[%s10176 + $0x10] sm:$0xf]
        %v10181 = vld [vmem:[%s10176 + $0x18] sm:$0xf]
        %v10182 = vld [vmem:[%s10176 + $0x1c] sm:$0xf]
        %v10183 = vld [vmem:[%s10176 + $0x24] sm:$0xf]
        %v10184 = vld [vmem:[%s10176 + $0x28] sm:$0xf]
        %v10185 = vld [vmem:[%s10176 + $0x30] sm:$0xf]
        %v10186 = vld [vmem:[%s10176 + $0x34] sm:$0xf]
        %v10187 = vld [vmem:[%s10176 + $0x3c] sm:$0xf]
        %v10188 = vld [vmem:[%s10176 + $0x40] sm:$0xf]
        %v10189 = vld [vmem:[%s10176 + $0x48] sm:$0xf]
        %v10190 = vld [vmem:[%s10176 + $0x4c] sm:$0xf]
        %v10191 = vld [vmem:[%s10176 + $0x54] sm:$0xf]
        %v10192 = vld [vmem:[%s10176 + $0x58] sm:$0xf]
        %v10193 = vld [vmem:[%s10176 + $0x60] sm:$0xf]
        %v10194 = vld [vmem:[%s10176 + $0x64] sm:$0xf]
        %v10195 = vld [vmem:[%s10176 + $0x6c] sm:$0xf]
        %v10196 = vld [vmem:[%s10176 + $0x70] sm:$0xf]
        %v10197 = vld [vmem:[%s10176 + $0x78] sm:$0xf]
        %v10198 = vld [vmem:[%s10176 + $0x7c] sm:$0xf]
        %v10199 = vld [vmem:[%s10176 + $0x84] sm:$0xf]
        %v10200 = vld [vmem:[%s10176 + $0x88] sm:$0xf]
        %v10201 = vld [vmem:[%s10176 + $0x90] sm:$0xf]
        %v10202 = vld [vmem:[%s10176 + $0x94] sm:$0xf]
        %v10203 = vld [vmem:[%s10176 + $0x9c] sm:$0xf]
        %v10204 = vld [vmem:[%s10176 + $0xa0] sm:$0xf]
        %v10205 = vld [vmem:[%s10176 + $0xa8] sm:$0xf]
        %v10206 = vld [vmem:[%s10176 + $0xac] sm:$0xf]
        %v10207 = vld [vmem:[%s10176 + $0xb4] sm:$0xf]
        %v10208 = vld [vmem:[%s10176 + $0xb8] sm:$0xf]
        %s10209 = scalar_lea.vmem %s3, 96
        %v10210 = vld [vmem:[%s10209] sm:$0xf]
        %v10211 = vld [vmem:[%s10209 + $0x4] sm:$0xf]
        %v10212 = vld [vmem:[%s10209 + $0x8] sm:$0xf]
        %v10213 = vld [vmem:[%s10209 + $0xc] sm:$0xf]
        %v10246 = vunpack.c.l.b16 %v10177
        %v10247 = vunpack.c.l.b16 %v10178
        %v10248 = vunpack.c.l.b16 %v10179
        %v10249 = vunpack.c.l.b16 %v10180
        %v10250 = vunpack.c.l.b16 %v10181
        %v10251 = vunpack.c.l.b16 %v10182
        %v10252 = vunpack.c.l.b16 %v10183
        %v10253 = vunpack.c.l.b16 %v10184
        %v10254 = vunpack.c.l.b16 %v10185
        %v10255 = vunpack.c.l.b16 %v10186
        %v10256 = vunpack.c.l.b16 %v10187
        %v10257 = vunpack.c.l.b16 %v10188
        %v10258 = vunpack.c.l.b16 %v10189
        %v10259 = vunpack.c.l.b16 %v10190
        %v10260 = vunpack.c.l.b16 %v10191
        %v10261 = vunpack.c.l.b16 %v10192
        %v10262 = vunpack.c.l.b16 %v10193
        %v10263 = vunpack.c.l.b16 %v10194
        %v10264 = vunpack.c.l.b16 %v10195
        %v10265 = vunpack.c.l.b16 %v10196
        %v10266 = vunpack.c.l.b16 %v10197
        %v10267 = vunpack.c.l.b16 %v10198
        %v10268 = vunpack.c.l.b16 %v10199
        %v10269 = vunpack.c.l.b16 %v10200
        %v10270 = vunpack.c.l.b16 %v10201
        %v10271 = vunpack.c.l.b16 %v10202
        %v10272 = vunpack.c.l.b16 %v10203
        %v10273 = vunpack.c.l.b16 %v10204
        %v10274 = vunpack.c.l.b16 %v10205
        %v10275 = vunpack.c.l.b16 %v10206
        %v10276 = vunpack.c.l.b16 %v10207
        %v10277 = vunpack.c.l.b16 %v10208
        %v10278 = vpack.c.b16 %v10247, %v10246
        %v10279 = vpack.c.b16 %v10249, %v10248
        %v10280 = vpack.c.b16 %v10251, %v10250
        %v10281 = vpack.c.b16 %v10253, %v10252
        %v10282 = vpack.c.b16 %v10255, %v10254
        %v10283 = vpack.c.b16 %v10257, %v10256
        %v10284 = vpack.c.b16 %v10259, %v10258
        %v10285 = vpack.c.b16 %v10261, %v10260
        %v10286 = vpack.c.b16 %v10263, %v10262
        %v10287 = vpack.c.b16 %v10265, %v10264
        %v10288 = vpack.c.b16 %v10267, %v10266
        %v10289 = vpack.c.b16 %v10269, %v10268
        %v10290 = vpack.c.b16 %v10271, %v10270
        %v10291 = vpack.c.b16 %v10273, %v10272
        %v10292 = vpack.c.b16 %v10275, %v10274
        %v10293 = vpack.c.b16 %v10277, %v10276
        %v10298 = vunpack.c.l.b16 %v10210
        %v10299 = vunpack.c.l.b16 %v10211
        %v10300 = vunpack.c.l.b16 %v10212
        %v10301 = vunpack.c.l.b16 %v10213
        %v10302 = vpack.c.b16 %v10299, %v10298
        %v10303 = vpack.c.b16 %v10301, %v10300
        %v10307 = vsel %vm6356, %v10278, 0
        %v10310 = vsel %vm6356, %v10279, 0
        %v10313 = vsel %vm6356, %v10280, 0
        %v10316 = vsel %vm6356, %v10281, 0
        %v10319 = vsel %vm6356, %v10282, 0
        %v10322 = vsel %vm6356, %v10283, 0
        %v10325 = vsel %vm6356, %v10284, 0
        %v10328 = vsel %vm6356, %v10285, 0
        %v10331 = vsel %vm6356, %v10286, 0
        %v10334 = vsel %vm6356, %v10287, 0
        %v10337 = vsel %vm6356, %v10288, 0
        %v10340 = vsel %vm6356, %v10289, 0
        %v10343 = vsel %vm6356, %v10290, 0
        %v10346 = vsel %vm6356, %v10291, 0
        %v10349 = vsel %vm6356, %v10292, 0
        %v10352 = vsel %vm6356, %v10293, 0
        %10354 = vmatprep.subr.bf16.mxu0 0
        %10355 = vmatpush1.bf16.msra.mxu0 %v10302
        %10356 = vmatprep.subr.bf16.mxu0 0
        %10357 = vmatpush1.bf16.msra.mxu0 %v10303
        %10358 = vmatprep.subr.bf16.mxu0 0
        %10359 = vmatpush1.bf16.msra.mxu0 0
        %10360 = vmatprep.subr.bf16.mxu0 0
        %10361 = vmatpush1.bf16.msra.mxu0 0
        %10362 = vmatprep.subr.bf16.mxu0 0
        %10363 = vmatpush1.bf16.msra.mxu0 0
        %10364 = vmatprep.subr.bf16.mxu0 0
        %10365 = vmatpush1.bf16.msra.mxu0 0
        %10366 = vmatprep.subr.bf16.mxu0 0
        %10367 = vmatpush1.bf16.msra.mxu0 0
        %10368 = vmatprep.subr.bf16.mxu0 0
        %10369 = vmatpush1.bf16.msra.mxu0 0
        %10370 = vmatprep.subr.bf16.mxu0 0
        %10371 = vmatpush1.bf16.msra.mxu0 0
        %10372 = vmatprep.subr.bf16.mxu0 0
        %10373 = vmatpush1.bf16.msra.mxu0 0
        %10374 = vmatprep.subr.bf16.mxu0 0
        %10375 = vmatpush1.bf16.msra.mxu0 0
        %10376 = vmatprep.subr.bf16.mxu0 0
        %10377 = vmatpush1.bf16.msra.mxu0 0
        %10378 = vmatprep.subr.bf16.mxu0 0
        %10379 = vmatpush1.bf16.msra.mxu0 0
        %10380 = vmatprep.subr.bf16.mxu0 0
        %10381 = vmatpush1.bf16.msra.mxu0 0
        %10382 = vmatprep.subr.bf16.mxu0 0
        %10383 = vmatpush1.bf16.msra.mxu0 0
        %10384 = vmatprep.subr.bf16.mxu0 0
        %10385 = vmatpush1.bf16.msra.mxu0 0
        %10386 = vmatprep.mubr.bf16.mxu0 0
        %10387 = vmatmul.mubr.bf16.gmra.mrb[0].mxu0 %v10307
        %v10388 = vpop.f32.mrb[0].mxu0
        %v10389 = vadd.f32 0.0, %v10388
        %v10390 = vpop.f32.mrb[0].mxu0
        %v10391 = vpop.f32.mrb[0].mxu0
        %v10392 = vadd.f32 0.0, %v10391
        %v10393 = vpop.f32.mrb[0].mxu0
        %10394 = vmatprep.mubr.bf16.mxu0 0
        %10395 = vmatmul.mubr.bf16.gmra.mrb[0].mxu0 %v10310
        %v10396 = vpop.f32.mrb[0].mxu0
        %v10397 = vadd.f32 0.0, %v10396
        %v10398 = vpop.f32.mrb[0].mxu0
        %v10399 = vpop.f32.mrb[0].mxu0
        %v10400 = vadd.f32 0.0, %v10399
        %v10401 = vpop.f32.mrb[0].mxu0
        %10402 = vmatprep.mubr.bf16.mxu0 0
        %10403 = vmatmul.mubr.bf16.gmra.mrb[0].mxu0 %v10313
        %v10404 = vpop.f32.mrb[0].mxu0
        %v10405 = vadd.f32 0.0, %v10404
        %v10406 = vpop.f32.mrb[0].mxu0
        %v10407 = vpop.f32.mrb[0].mxu0
        %v10408 = vadd.f32 0.0, %v10407
        %v10409 = vpop.f32.mrb[0].mxu0
        %10410 = vmatprep.mubr.bf16.mxu0 0
        %10411 = vmatmul.mubr.bf16.gmra.mrb[0].mxu0 %v10316
        %v10412 = vpop.f32.mrb[0].mxu0
        %v10413 = vadd.f32 0.0, %v10412
        %v10414 = vpop.f32.mrb[0].mxu0
        %v10415 = vpop.f32.mrb[0].mxu0
        %v10416 = vadd.f32 0.0, %v10415
        %v10417 = vpop.f32.mrb[0].mxu0
        %10418 = vmatprep.mubr.bf16.mxu0 0
        %10419 = vmatmul.mubr.bf16.gmra.mrb[0].mxu0 %v10319
        %v10420 = vpop.f32.mrb[0].mxu0
        %v10421 = vadd.f32 0.0, %v10420
        %v10422 = vpop.f32.mrb[0].mxu0
        %v10423 = vpop.f32.mrb[0].mxu0
        %v10424 = vadd.f32 0.0, %v10423
        %v10425 = vpop.f32.mrb[0].mxu0
        %10426 = vmatprep.mubr.bf16.mxu0 0
        %10427 = vmatmul.mubr.bf16.gmra.mrb[0].mxu0 %v10322
        %v10428 = vpop.f32.mrb[0].mxu0
        %v10429 = vadd.f32 0.0, %v10428
        %v10430 = vpop.f32.mrb[0].mxu0
        %v10431 = vpop.f32.mrb[0].mxu0
        %v10432 = vadd.f32 0.0, %v10431
        %v10433 = vpop.f32.mrb[0].mxu0
        %10434 = vmatprep.mubr.bf16.mxu0 0
        %10435 = vmatmul.mubr.bf16.gmra.mrb[0].mxu0 %v10325
        %v10436 = vpop.f32.mrb[0].mxu0
        %v10437 = vadd.f32 0.0, %v10436
        %v10438 = vpop.f32.mrb[0].mxu0
        %v10439 = vpop.f32.mrb[0].mxu0
        %v10440 = vadd.f32 0.0, %v10439
        %v10441 = vpop.f32.mrb[0].mxu0
        %10442 = vmatprep.mubr.bf16.mxu0 0
        %10443 = vmatmul.mubr.bf16.gmra.mrb[0].mxu0 %v10328
        %v10444 = vpop.f32.mrb[0].mxu0
        %v10445 = vadd.f32 0.0, %v10444
        %v10446 = vpop.f32.mrb[0].mxu0
        %v10447 = vpop.f32.mrb[0].mxu0
        %v10448 = vadd.f32 0.0, %v10447
        %v10449 = vpop.f32.mrb[0].mxu0
        %10450 = vmatprep.mubr.bf16.mxu0 0
        %10451 = vmatmul.mubr.bf16.gmra.mrb[0].mxu0 %v10331
        %v10452 = vpop.f32.mrb[0].mxu0
        %v10453 = vadd.f32 0.0, %v10452
        %v10454 = vpop.f32.mrb[0].mxu0
        %v10455 = vpop.f32.mrb[0].mxu0
        %v10456 = vadd.f32 0.0, %v10455
        %v10457 = vpop.f32.mrb[0].mxu0
        %10458 = vmatprep.mubr.bf16.mxu0 0
        %10459 = vmatmul.mubr.bf16.gmra.mrb[0].mxu0 %v10334
        %v10460 = vpop.f32.mrb[0].mxu0
        %v10461 = vadd.f32 0.0, %v10460
        %v10462 = vpop.f32.mrb[0].mxu0
        %v10463 = vpop.f32.mrb[0].mxu0
        %v10464 = vadd.f32 0.0, %v10463
        %v10465 = vpop.f32.mrb[0].mxu0
        %10466 = vmatprep.mubr.bf16.mxu0 0
        %10467 = vmatmul.mubr.bf16.gmra.mrb[0].mxu0 %v10337
        %v10468 = vpop.f32.mrb[0].mxu0
        %v10469 = vadd.f32 0.0, %v10468
        %v10470 = vpop.f32.mrb[0].mxu0
        %v10471 = vpop.f32.mrb[0].mxu0
        %v10472 = vadd.f32 0.0, %v10471
        %v10473 = vpop.f32.mrb[0].mxu0
        %10474 = vmatprep.mubr.bf16.mxu0 0
        %10475 = vmatmul.mubr.bf16.gmra.mrb[0].mxu0 %v10340
        %v10476 = vpop.f32.mrb[0].mxu0
        %v10477 = vadd.f32 0.0, %v10476
        %v10478 = vpop.f32.mrb[0].mxu0
        %v10479 = vpop.f32.mrb[0].mxu0
        %v10480 = vadd.f32 0.0, %v10479
        %v10481 = vpop.f32.mrb[0].mxu0
        %10482 = vmatprep.mubr.bf16.mxu0 0
        %10483 = vmatmul.mubr.bf16.gmra.mrb[0].mxu0 %v10343
        %v10484 = vpop.f32.mrb[0].mxu0
        %v10485 = vadd.f32 0.0, %v10484
        %v10486 = vpop.f32.mrb[0].mxu0
        %v10487 = vpop.f32.mrb[0].mxu0
        %v10488 = vadd.f32 0.0, %v10487
        %v10489 = vpop.f32.mrb[0].mxu0
        %10490 = vmatprep.mubr.bf16.mxu0 0
        %10491 = vmatmul.mubr.bf16.gmra.mrb[0].mxu0 %v10346
        %v10492 = vpop.f32.mrb[0].mxu0
        %v10493 = vadd.f32 0.0, %v10492
        %v10494 = vpop.f32.mrb[0].mxu0
        %v10495 = vpop.f32.mrb[0].mxu0
        %v10496 = vadd.f32 0.0, %v10495
        %v10497 = vpop.f32.mrb[0].mxu0
        %10498 = vmatprep.mubr.bf16.mxu0 0
        %10499 = vmatmul.mubr.bf16.gmra.mrb[0].mxu0 %v10349
        %v10500 = vpop.f32.mrb[0].mxu0
        %v10501 = vadd.f32 0.0, %v10500
        %v10502 = vpop.f32.mrb[0].mxu0
        %v10503 = vpop.f32.mrb[0].mxu0
        %v10504 = vadd.f32 0.0, %v10503
        %v10505 = vpop.f32.mrb[0].mxu0
        %10506 = vmatprep.mubr.bf16.mxu0 0
        %10507 = vmatmul.mubr.bf16.gmra.mrb[0].mxu0 %v10352
        %v10508 = vpop.f32.mrb[0].mxu0
        %v10509 = vadd.f32 0.0, %v10508
        %v10510 = vpop.f32.mrb[0].mxu0
        %v10511 = vpop.f32.mrb[0].mxu0
        %v10512 = vadd.f32 0.0, %v10511
        %v10513 = vpop.f32.mrb[0].mxu0
        %10514 = vdwg.mxu0
        %10547 = vrot.lane.b32.xlu0 %v10389, 64
        %v10548 = vpop.permute.xlu0 %10547
        %10549 = vrot.lane.b32.xlu0 %v10392, 64
        %v10550 = vpop.permute.xlu0 %10549
        %10551 = vrot.lane.b32.xlu0 %v10397, 64
        %v10552 = vpop.permute.xlu0 %10551
        %10553 = vrot.lane.b32.xlu0 %v10400, 64
        %v10554 = vpop.permute.xlu0 %10553
        %10555 = vrot.lane.b32.xlu0 %v10405, 64
        %v10556 = vpop.permute.xlu0 %10555
        %10557 = vrot.lane.b32.xlu0 %v10408, 64
        %v10558 = vpop.permute.xlu0 %10557
        %10559 = vrot.lane.b32.xlu0 %v10413, 64
        %v10560 = vpop.permute.xlu0 %10559
        %10561 = vrot.lane.b32.xlu0 %v10416, 64
        %v10562 = vpop.permute.xlu0 %10561
        %10563 = vrot.lane.b32.xlu0 %v10421, 64
        %v10564 = vpop.permute.xlu0 %10563
        %10565 = vrot.lane.b32.xlu0 %v10424, 64
        %v10566 = vpop.permute.xlu0 %10565
        %10567 = vrot.lane.b32.xlu0 %v10429, 64
        %v10568 = vpop.permute.xlu0 %10567
        %10569 = vrot.lane.b32.xlu0 %v10432, 64
        %v10570 = vpop.permute.xlu0 %10569
        %10571 = vrot.lane.b32.xlu0 %v10437, 64
        %v10572 = vpop.permute.xlu0 %10571
        %10573 = vrot.lane.b32.xlu0 %v10440, 64
        %v10574 = vpop.permute.xlu0 %10573
        %10575 = vrot.lane.b32.xlu0 %v10445, 64
        %v10576 = vpop.permute.xlu0 %10575
        %10577 = vrot.lane.b32.xlu0 %v10448, 64
        %v10578 = vpop.permute.xlu0 %10577
        %10579 = vrot.lane.b32.xlu0 %v10453, 64
        %v10580 = vpop.permute.xlu0 %10579
        %10581 = vrot.lane.b32.xlu0 %v10456, 64
        %v10582 = vpop.permute.xlu0 %10581
        %10583 = vrot.lane.b32.xlu0 %v10461, 64
        %v10584 = vpop.permute.xlu0 %10583
        %10585 = vrot.lane.b32.xlu0 %v10464, 64
        %v10586 = vpop.permute.xlu0 %10585
        %10587 = vrot.lane.b32.xlu0 %v10469, 64
        %v10588 = vpop.permute.xlu0 %10587
        %10589 = vrot.lane.b32.xlu0 %v10472, 64
        %v10590 = vpop.permute.xlu0 %10589
        %10591 = vrot.lane.b32.xlu0 %v10477, 64
        %v10592 = vpop.permute.xlu0 %10591
        %10593 = vrot.lane.b32.xlu0 %v10480, 64
        %v10594 = vpop.permute.xlu0 %10593
        %10595 = vrot.lane.b32.xlu0 %v10485, 64
        %v10596 = vpop.permute.xlu0 %10595
        %10597 = vrot.lane.b32.xlu0 %v10488, 64
        %v10598 = vpop.permute.xlu0 %10597
        %10599 = vrot.lane.b32.xlu0 %v10493, 64
        %v10600 = vpop.permute.xlu0 %10599
        %10601 = vrot.lane.b32.xlu0 %v10496, 64
        %v10602 = vpop.permute.xlu0 %10601
        %10603 = vrot.lane.b32.xlu0 %v10501, 64
        %v10604 = vpop.permute.xlu0 %10603
        %10605 = vrot.lane.b32.xlu0 %v10504, 64
        %v10606 = vpop.permute.xlu0 %10605
        %10607 = vrot.lane.b32.xlu0 %v10509, 64
        %v10608 = vpop.permute.xlu0 %10607
        %10609 = vrot.lane.b32.xlu0 %v10512, 64
        %v10610 = vpop.permute.xlu0 %10609
        %v10643 = vadd.f32 %v10144, %v10548
        %v10644 = vadd.f32 %v10145, %v10550
        %v10645 = vadd.f32 %v10146, %v10552
        %v10646 = vadd.f32 %v10147, %v10554
        %v10647 = vadd.f32 %v10148, %v10556
        %v10648 = vadd.f32 %v10149, %v10558
        %v10649 = vadd.f32 %v10150, %v10560
        %v10650 = vadd.f32 %v10151, %v10562
        %v10651 = vadd.f32 %v10152, %v10564
        %v10652 = vadd.f32 %v10153, %v10566
        %v10653 = vadd.f32 %v10154, %v10568
        %v10654 = vadd.f32 %v10155, %v10570
        %v10655 = vadd.f32 %v10156, %v10572
        %v10656 = vadd.f32 %v10157, %v10574
        %v10657 = vadd.f32 %v10158, %v10576
        %v10658 = vadd.f32 %v10159, %v10578
        %v10659 = vadd.f32 %v10160, %v10580
        %v10660 = vadd.f32 %v10161, %v10582
        %v10661 = vadd.f32 %v10162, %v10584
        %v10662 = vadd.f32 %v10163, %v10586
        %v10663 = vadd.f32 %v10164, %v10588
        %v10664 = vadd.f32 %v10165, %v10590
        %v10665 = vadd.f32 %v10166, %v10592
        %v10666 = vadd.f32 %v10167, %v10594
        %v10667 = vadd.f32 %v10168, %v10596
        %v10668 = vadd.f32 %v10169, %v10598
        %v10669 = vadd.f32 %v10170, %v10600
        %v10670 = vadd.f32 %v10171, %v10602
        %v10671 = vadd.f32 %v10172, %v10604
        %v10672 = vadd.f32 %v10173, %v10606
        %v10673 = vadd.f32 %v10174, %v10608
        %v10674 = vadd.f32 %v10175, %v10610
        %v10675 = vld [vmem:[%s10176] sm:$0xf]
        %v10676 = vld [vmem:[%s10176 + $0x4] sm:$0xf]
        %v10677 = vld [vmem:[%s10176 + $0x8] sm:$0x1]
        %v10678 = vld [vmem:[%s10176 + $0xc] sm:$0xf]
        %v10679 = vld [vmem:[%s10176 + $0x10] sm:$0xf]
        %v10680 = vld [vmem:[%s10176 + $0x14] sm:$0x1]
        %v10681 = vld [vmem:[%s10176 + $0x18] sm:$0xf]
        %v10682 = vld [vmem:[%s10176 + $0x1c] sm:$0xf]
        %v10683 = vld [vmem:[%s10176 + $0x20] sm:$0x1]
        %v10684 = vld [vmem:[%s10176 + $0x24] sm:$0xf]
        %v10685 = vld [vmem:[%s10176 + $0x28] sm:$0xf]
        %v10686 = vld [vmem:[%s10176 + $0x2c] sm:$0x1]
        %v10687 = vld [vmem:[%s10176 + $0x30] sm:$0xf]
        %v10688 = vld [vmem:[%s10176 + $0x34] sm:$0xf]
        %v10689 = vld [vmem:[%s10176 + $0x38] sm:$0x1]
        %v10690 = vld [vmem:[%s10176 + $0x3c] sm:$0xf]
        %v10691 = vld [vmem:[%s10176 + $0x40] sm:$0xf]
        %v10692 = vld [vmem:[%s10176 + $0x44] sm:$0x1]
        %v10693 = vld [vmem:[%s10176 + $0x48] sm:$0xf]
        %v10694 = vld [vmem:[%s10176 + $0x4c] sm:$0xf]
        %v10695 = vld [vmem:[%s10176 + $0x50] sm:$0x1]
        %v10696 = vld [vmem:[%s10176 + $0x54] sm:$0xf]
        %v10697 = vld [vmem:[%s10176 + $0x58] sm:$0xf]
        %v10698 = vld [vmem:[%s10176 + $0x5c] sm:$0x1]
        %v10699 = vld [vmem:[%s10176 + $0x60] sm:$0xf]
        %v10700 = vld [vmem:[%s10176 + $0x64] sm:$0xf]
        %v10701 = vld [vmem:[%s10176 + $0x68] sm:$0x1]
        %v10702 = vld [vmem:[%s10176 + $0x6c] sm:$0xf]
        %v10703 = vld [vmem:[%s10176 + $0x70] sm:$0xf]
        %v10704 = vld [vmem:[%s10176 + $0x74] sm:$0x1]
        %v10705 = vld [vmem:[%s10176 + $0x78] sm:$0xf]
        %v10706 = vld [vmem:[%s10176 + $0x7c] sm:$0xf]
        %v10707 = vld [vmem:[%s10176 + $0x80] sm:$0x1]
        %v10708 = vld [vmem:[%s10176 + $0x84] sm:$0xf]
        %v10709 = vld [vmem:[%s10176 + $0x88] sm:$0xf]
        %v10710 = vld [vmem:[%s10176 + $0x8c] sm:$0x1]
        %v10711 = vld [vmem:[%s10176 + $0x90] sm:$0xf]
        %v10712 = vld [vmem:[%s10176 + $0x94] sm:$0xf]
        %v10713 = vld [vmem:[%s10176 + $0x98] sm:$0x1]
        %v10714 = vld [vmem:[%s10176 + $0x9c] sm:$0xf]
        %v10715 = vld [vmem:[%s10176 + $0xa0] sm:$0xf]
        %v10716 = vld [vmem:[%s10176 + $0xa4] sm:$0x1]
        %v10717 = vld [vmem:[%s10176 + $0xa8] sm:$0xf]
        %v10718 = vld [vmem:[%s10176 + $0xac] sm:$0xf]
        %v10719 = vld [vmem:[%s10176 + $0xb0] sm:$0x1]
        %v10720 = vld [vmem:[%s10176 + $0xb4] sm:$0xf]
        %v10721 = vld [vmem:[%s10176 + $0xb8] sm:$0xf]
        %v10722 = vld [vmem:[%s10176 + $0xbc] sm:$0x1]
        %v10724 = vshrl.u32 %v10675, 16
        %v10726 = vrot.slane %v10724, 4
        %v10727 = vshll.u32 %v10675, 16
        %v10729 = vrot.slane %v10727, 5
        %v10730 = vor.u32 %v10726, %v10729
        %v10731 = vrot.slane %v10730, 4
        %v10733 = vshll.u32 %v10676, 16
        %v10735 = vrot.slane %v10733, 5
        %v10736 = vsel %vm679, %v10731, %v10735
        %v10737 = vshrl.u32 %v10676, 16
        %v10739 = vrot.slane %v10737, 4
        %v10740 = vor.u32 %v10739, %v10735
        %v10741 = vrot.slane %v10740, 4
        %v10743 = vshll.u32 %v10677, 16
        %v10745 = vrot.slane %v10743, 5
        %v10746 = vsel %vm679, %v10741, %v10745
        %v10748 = vshrl.u32 %v10678, 16
        %v10750 = vrot.slane %v10748, 4
        %v10751 = vshll.u32 %v10678, 16
        %v10753 = vrot.slane %v10751, 5
        %v10754 = vor.u32 %v10750, %v10753
        %v10755 = vrot.slane %v10754, 4
        %v10757 = vshll.u32 %v10679, 16
        %v10759 = vrot.slane %v10757, 5
        %v10760 = vsel %vm679, %v10755, %v10759
        %v10761 = vshrl.u32 %v10679, 16
        %v10763 = vrot.slane %v10761, 4
        %v10764 = vor.u32 %v10763, %v10759
        %v10765 = vrot.slane %v10764, 4
        %v10767 = vshll.u32 %v10680, 16
        %v10769 = vrot.slane %v10767, 5
        %v10770 = vsel %vm679, %v10765, %v10769
        %v10772 = vshrl.u32 %v10681, 16
        %v10774 = vrot.slane %v10772, 4
        %v10775 = vshll.u32 %v10681, 16
        %v10777 = vrot.slane %v10775, 5
        %v10778 = vor.u32 %v10774, %v10777
        %v10779 = vrot.slane %v10778, 4
        %v10781 = vshll.u32 %v10682, 16
        %v10783 = vrot.slane %v10781, 5
        %v10784 = vsel %vm679, %v10779, %v10783
        %v10785 = vshrl.u32 %v10682, 16
        %v10787 = vrot.slane %v10785, 4
        %v10788 = vor.u32 %v10787, %v10783
        %v10789 = vrot.slane %v10788, 4
        %v10791 = vshll.u32 %v10683, 16
        %v10793 = vrot.slane %v10791, 5
        %v10794 = vsel %vm679, %v10789, %v10793
        %v10796 = vshrl.u32 %v10684, 16
        %v10798 = vrot.slane %v10796, 4
        %v10799 = vshll.u32 %v10684, 16
        %v10801 = vrot.slane %v10799, 5
        %v10802 = vor.u32 %v10798, %v10801
        %v10803 = vrot.slane %v10802, 4
        %v10805 = vshll.u32 %v10685, 16
        %v10807 = vrot.slane %v10805, 5
        %v10808 = vsel %vm679, %v10803, %v10807
        %v10809 = vshrl.u32 %v10685, 16
        %v10811 = vrot.slane %v10809, 4
        %v10812 = vor.u32 %v10811, %v10807
        %v10813 = vrot.slane %v10812, 4
        %v10815 = vshll.u32 %v10686, 16
        %v10817 = vrot.slane %v10815, 5
        %v10818 = vsel %vm679, %v10813, %v10817
        %v10820 = vshrl.u32 %v10687, 16
        %v10822 = vrot.slane %v10820, 4
        %v10823 = vshll.u32 %v10687, 16
        %v10825 = vrot.slane %v10823, 5
        %v10826 = vor.u32 %v10822, %v10825
        %v10827 = vrot.slane %v10826, 4
        %v10829 = vshll.u32 %v10688, 16
        %v10831 = vrot.slane %v10829, 5
        %v10832 = vsel %vm679, %v10827, %v10831
        %v10833 = vshrl.u32 %v10688, 16
        %v10835 = vrot.slane %v10833, 4
        %v10836 = vor.u32 %v10835, %v10831
        %v10837 = vrot.slane %v10836, 4
        %v10839 = vshll.u32 %v10689, 16
        %v10841 = vrot.slane %v10839, 5
        %v10842 = vsel %vm679, %v10837, %v10841
        %v10844 = vshrl.u32 %v10690, 16
        %v10846 = vrot.slane %v10844, 4
        %v10847 = vshll.u32 %v10690, 16
        %v10849 = vrot.slane %v10847, 5
        %v10850 = vor.u32 %v10846, %v10849
        %v10851 = vrot.slane %v10850, 4
        %v10853 = vshll.u32 %v10691, 16
        %v10855 = vrot.slane %v10853, 5
        %v10856 = vsel %vm679, %v10851, %v10855
        %v10857 = vshrl.u32 %v10691, 16
        %v10859 = vrot.slane %v10857, 4
        %v10860 = vor.u32 %v10859, %v10855
        %v10861 = vrot.slane %v10860, 4
        %v10863 = vshll.u32 %v10692, 16
        %v10865 = vrot.slane %v10863, 5
        %v10866 = vsel %vm679, %v10861, %v10865
        %v10868 = vshrl.u32 %v10693, 16
        %v10870 = vrot.slane %v10868, 4
        %v10871 = vshll.u32 %v10693, 16
        %v10873 = vrot.slane %v10871, 5
        %v10874 = vor.u32 %v10870, %v10873
        %v10875 = vrot.slane %v10874, 4
        %v10877 = vshll.u32 %v10694, 16
        %v10879 = vrot.slane %v10877, 5
        %v10880 = vsel %vm679, %v10875, %v10879
        %v10881 = vshrl.u32 %v10694, 16
        %v10883 = vrot.slane %v10881, 4
        %v10884 = vor.u32 %v10883, %v10879
        %v10885 = vrot.slane %v10884, 4
        %v10887 = vshll.u32 %v10695, 16
        %v10889 = vrot.slane %v10887, 5
        %v10890 = vsel %vm679, %v10885, %v10889
        %v10892 = vshrl.u32 %v10696, 16
        %v10894 = vrot.slane %v10892, 4
        %v10895 = vshll.u32 %v10696, 16
        %v10897 = vrot.slane %v10895, 5
        %v10898 = vor.u32 %v10894, %v10897
        %v10899 = vrot.slane %v10898, 4
        %v10901 = vshll.u32 %v10697, 16
        %v10903 = vrot.slane %v10901, 5
        %v10904 = vsel %vm679, %v10899, %v10903
        %v10905 = vshrl.u32 %v10697, 16
        %v10907 = vrot.slane %v10905, 4
        %v10908 = vor.u32 %v10907, %v10903
        %v10909 = vrot.slane %v10908, 4
        %v10911 = vshll.u32 %v10698, 16
        %v10913 = vrot.slane %v10911, 5
        %v10914 = vsel %vm679, %v10909, %v10913
        %v10916 = vshrl.u32 %v10699, 16
        %v10918 = vrot.slane %v10916, 4
        %v10919 = vshll.u32 %v10699, 16
        %v10921 = vrot.slane %v10919, 5
        %v10922 = vor.u32 %v10918, %v10921
        %v10923 = vrot.slane %v10922, 4
        %v10925 = vshll.u32 %v10700, 16
        %v10927 = vrot.slane %v10925, 5
        %v10928 = vsel %vm679, %v10923, %v10927
        %v10929 = vshrl.u32 %v10700, 16
        %v10931 = vrot.slane %v10929, 4
        %v10932 = vor.u32 %v10931, %v10927
        %v10933 = vrot.slane %v10932, 4
        %v10935 = vshll.u32 %v10701, 16
        %v10937 = vrot.slane %v10935, 5
        %v10938 = vsel %vm679, %v10933, %v10937
        %v10940 = vshrl.u32 %v10702, 16
        %v10942 = vrot.slane %v10940, 4
        %v10943 = vshll.u32 %v10702, 16
        %v10945 = vrot.slane %v10943, 5
        %v10946 = vor.u32 %v10942, %v10945
        %v10947 = vrot.slane %v10946, 4
        %v10949 = vshll.u32 %v10703, 16
        %v10951 = vrot.slane %v10949, 5
        %v10952 = vsel %vm679, %v10947, %v10951
        %v10953 = vshrl.u32 %v10703, 16
        %v10955 = vrot.slane %v10953, 4
        %v10956 = vor.u32 %v10955, %v10951
        %v10957 = vrot.slane %v10956, 4
        %v10959 = vshll.u32 %v10704, 16
        %v10961 = vrot.slane %v10959, 5
        %v10962 = vsel %vm679, %v10957, %v10961
        %v10964 = vshrl.u32 %v10705, 16
        %v10966 = vrot.slane %v10964, 4
        %v10967 = vshll.u32 %v10705, 16
        %v10969 = vrot.slane %v10967, 5
        %v10970 = vor.u32 %v10966, %v10969
        %v10971 = vrot.slane %v10970, 4
        %v10973 = vshll.u32 %v10706, 16
        %v10975 = vrot.slane %v10973, 5
        %v10976 = vsel %vm679, %v10971, %v10975
        %v10977 = vshrl.u32 %v10706, 16
        %v10979 = vrot.slane %v10977, 4
        %v10980 = vor.u32 %v10979, %v10975
        %v10981 = vrot.slane %v10980, 4
        %v10983 = vshll.u32 %v10707, 16
        %v10985 = vrot.slane %v10983, 5
        %v10986 = vsel %vm679, %v10981, %v10985
        %v10988 = vshrl.u32 %v10708, 16
        %v10990 = vrot.slane %v10988, 4
        %v10991 = vshll.u32 %v10708, 16
        %v10993 = vrot.slane %v10991, 5
        %v10994 = vor.u32 %v10990, %v10993
        %v10995 = vrot.slane %v10994, 4
        %v10997 = vshll.u32 %v10709, 16
        %v10999 = vrot.slane %v10997, 5
        %v11000 = vsel %vm679, %v10995, %v10999
        %v11001 = vshrl.u32 %v10709, 16
        %v11003 = vrot.slane %v11001, 4
        %v11004 = vor.u32 %v11003, %v10999
        %v11005 = vrot.slane %v11004, 4
        %v11007 = vshll.u32 %v10710, 16
        %v11009 = vrot.slane %v11007, 5
        %v11010 = vsel %vm679, %v11005, %v11009
        %v11012 = vshrl.u32 %v10711, 16
        %v11014 = vrot.slane %v11012, 4
        %v11015 = vshll.u32 %v10711, 16
        %v11017 = vrot.slane %v11015, 5
        %v11018 = vor.u32 %v11014, %v11017
        %v11019 = vrot.slane %v11018, 4
        %v11021 = vshll.u32 %v10712, 16
        %v11023 = vrot.slane %v11021, 5
        %v11024 = vsel %vm679, %v11019, %v11023
        %v11025 = vshrl.u32 %v10712, 16
        %v11027 = vrot.slane %v11025, 4
        %v11028 = vor.u32 %v11027, %v11023
        %v11029 = vrot.slane %v11028, 4
        %v11031 = vshll.u32 %v10713, 16
        %v11033 = vrot.slane %v11031, 5
        %v11034 = vsel %vm679, %v11029, %v11033
        %v11036 = vshrl.u32 %v10714, 16
        %v11038 = vrot.slane %v11036, 4
        %v11039 = vshll.u32 %v10714, 16
        %v11041 = vrot.slane %v11039, 5
        %v11042 = vor.u32 %v11038, %v11041
        %v11043 = vrot.slane %v11042, 4
        %v11045 = vshll.u32 %v10715, 16
        %v11047 = vrot.slane %v11045, 5
        %v11048 = vsel %vm679, %v11043, %v11047
        %v11049 = vshrl.u32 %v10715, 16
        %v11051 = vrot.slane %v11049, 4
        %v11052 = vor.u32 %v11051, %v11047
        %v11053 = vrot.slane %v11052, 4
        %v11055 = vshll.u32 %v10716, 16
        %v11057 = vrot.slane %v11055, 5
        %v11058 = vsel %vm679, %v11053, %v11057
        %v11060 = vshrl.u32 %v10717, 16
        %v11062 = vrot.slane %v11060, 4
        %v11063 = vshll.u32 %v10717, 16
        %v11065 = vrot.slane %v11063, 5
        %v11066 = vor.u32 %v11062, %v11065
        %v11067 = vrot.slane %v11066, 4
        %v11069 = vshll.u32 %v10718, 16
        %v11071 = vrot.slane %v11069, 5
        %v11072 = vsel %vm679, %v11067, %v11071
        %v11073 = vshrl.u32 %v10718, 16
        %v11075 = vrot.slane %v11073, 4
        %v11076 = vor.u32 %v11075, %v11071
        %v11077 = vrot.slane %v11076, 4
        %v11079 = vshll.u32 %v10719, 16
        %v11081 = vrot.slane %v11079, 5
        %v11082 = vsel %vm679, %v11077, %v11081
        %v11084 = vshrl.u32 %v10720, 16
        %v11086 = vrot.slane %v11084, 4
        %v11087 = vshll.u32 %v10720, 16
        %v11089 = vrot.slane %v11087, 5
        %v11090 = vor.u32 %v11086, %v11089
        %v11091 = vrot.slane %v11090, 4
        %v11093 = vshll.u32 %v10721, 16
        %v11095 = vrot.slane %v11093, 5
        %v11096 = vsel %vm679, %v11091, %v11095
        %v11097 = vshrl.u32 %v10721, 16
        %v11099 = vrot.slane %v11097, 4
        %v11100 = vor.u32 %v11099, %v11095
        %v11101 = vrot.slane %v11100, 4
        %v11103 = vshll.u32 %v10722, 16
        %v11105 = vrot.slane %v11103, 5
        %v11106 = vsel %vm679, %v11101, %v11105
        %s11107 = scalar_lea.vmem %s3, 112
        %v11108 = vld [vmem:[%s11107] sm:$0xf]
        %v11109 = vld [vmem:[%s11107 + $0x4] sm:$0xf]
        %v11110 = vld [vmem:[%s11107 + $0x8] sm:$0xf]
        %v11111 = vld [vmem:[%s11107 + $0xc] sm:$0xf]
        %v11112 = vunpack.c.l.b16 %v10736
        %v11113 = vunpack.c.l.b16 %v10746
        %v11114 = vunpack.c.l.b16 %v10760
        %v11115 = vunpack.c.l.b16 %v10770
        %v11116 = vunpack.c.l.b16 %v10784
        %v11117 = vunpack.c.l.b16 %v10794
        %v11118 = vunpack.c.l.b16 %v10808
        %v11119 = vunpack.c.l.b16 %v10818
        %v11120 = vunpack.c.l.b16 %v10832
        %v11121 = vunpack.c.l.b16 %v10842
        %v11122 = vunpack.c.l.b16 %v10856
        %v11123 = vunpack.c.l.b16 %v10866
        %v11124 = vunpack.c.l.b16 %v10880
        %v11125 = vunpack.c.l.b16 %v10890
        %v11126 = vunpack.c.l.b16 %v10904
        %v11127 = vunpack.c.l.b16 %v10914
        %v11128 = vunpack.c.l.b16 %v10928
        %v11129 = vunpack.c.l.b16 %v10938
        %v11130 = vunpack.c.l.b16 %v10952
        %v11131 = vunpack.c.l.b16 %v10962
        %v11132 = vunpack.c.l.b16 %v10976
        %v11133 = vunpack.c.l.b16 %v10986
        %v11134 = vunpack.c.l.b16 %v11000
        %v11135 = vunpack.c.l.b16 %v11010
        %v11136 = vunpack.c.l.b16 %v11024
        %v11137 = vunpack.c.l.b16 %v11034
        %v11138 = vunpack.c.l.b16 %v11048
        %v11139 = vunpack.c.l.b16 %v11058
        %v11140 = vunpack.c.l.b16 %v11072
        %v11141 = vunpack.c.l.b16 %v11082
        %v11142 = vunpack.c.l.b16 %v11096
        %v11143 = vunpack.c.l.b16 %v11106
        %v11144 = vpack.c.b16 %v11113, %v11112
        %v11145 = vpack.c.b16 %v11115, %v11114
        %v11146 = vpack.c.b16 %v11117, %v11116
        %v11147 = vpack.c.b16 %v11119, %v11118
        %v11148 = vpack.c.b16 %v11121, %v11120
        %v11149 = vpack.c.b16 %v11123, %v11122
        %v11150 = vpack.c.b16 %v11125, %v11124
        %v11151 = vpack.c.b16 %v11127, %v11126
        %v11152 = vpack.c.b16 %v11129, %v11128
        %v11153 = vpack.c.b16 %v11131, %v11130
        %v11154 = vpack.c.b16 %v11133, %v11132
        %v11155 = vpack.c.b16 %v11135, %v11134
        %v11156 = vpack.c.b16 %v11137, %v11136
        %v11157 = vpack.c.b16 %v11139, %v11138
        %v11158 = vpack.c.b16 %v11141, %v11140
        %v11159 = vpack.c.b16 %v11143, %v11142
        %v11164 = vunpack.c.l.b16 %v11108
        %v11165 = vunpack.c.l.b16 %v11109
        %v11166 = vunpack.c.l.b16 %v11110
        %v11167 = vunpack.c.l.b16 %v11111
        %v11168 = vpack.c.b16 %v11165, %v11164
        %v11169 = vpack.c.b16 %v11167, %v11166
        %v11173 = vsel %vm6356, %v11144, 0
        %v11176 = vsel %vm6356, %v11145, 0
        %v11179 = vsel %vm6356, %v11146, 0
        %v11182 = vsel %vm6356, %v11147, 0
        %v11185 = vsel %vm6356, %v11148, 0
        %v11188 = vsel %vm6356, %v11149, 0
        %v11191 = vsel %vm6356, %v11150, 0
        %v11194 = vsel %vm6356, %v11151, 0
        %v11197 = vsel %vm6356, %v11152, 0
        %v11200 = vsel %vm6356, %v11153, 0
        %v11203 = vsel %vm6356, %v11154, 0
        %v11206 = vsel %vm6356, %v11155, 0
        %v11209 = vsel %vm6356, %v11156, 0
        %v11212 = vsel %vm6356, %v11157, 0
        %v11215 = vsel %vm6356, %v11158, 0
        %v11218 = vsel %vm6356, %v11159, 0
        %11220 = vmatprep.subr.bf16.mxu0 0
        %11221 = vmatpush1.bf16.msra.mxu0 %v11168
        %11222 = vmatprep.subr.bf16.mxu0 0
        %11223 = vmatpush1.bf16.msra.mxu0 %v11169
        %11224 = vmatprep.subr.bf16.mxu0 0
        %11225 = vmatpush1.bf16.msra.mxu0 0
        %11226 = vmatprep.subr.bf16.mxu0 0
        %11227 = vmatpush1.bf16.msra.mxu0 0
        %11228 = vmatprep.subr.bf16.mxu0 0
        %11229 = vmatpush1.bf16.msra.mxu0 0
        %11230 = vmatprep.subr.bf16.mxu0 0
        %11231 = vmatpush1.bf16.msra.mxu0 0
        %11232 = vmatprep.subr.bf16.mxu0 0
        %11233 = vmatpush1.bf16.msra.mxu0 0
        %11234 = vmatprep.subr.bf16.mxu0 0
        %11235 = vmatpush1.bf16.msra.mxu0 0
        %11236 = vmatprep.subr.bf16.mxu0 0
        %11237 = vmatpush1.bf16.msra.mxu0 0
        %11238 = vmatprep.subr.bf16.mxu0 0
        %11239 = vmatpush1.bf16.msra.mxu0 0
        %11240 = vmatprep.subr.bf16.mxu0 0
        %11241 = vmatpush1.bf16.msra.mxu0 0
        %11242 = vmatprep.subr.bf16.mxu0 0
        %11243 = vmatpush1.bf16.msra.mxu0 0
        %11244 = vmatprep.subr.bf16.mxu0 0
        %11245 = vmatpush1.bf16.msra.mxu0 0
        %11246 = vmatprep.subr.bf16.mxu0 0
        %11247 = vmatpush1.bf16.msra.mxu0 0
        %11248 = vmatprep.subr.bf16.mxu0 0
        %11249 = vmatpush1.bf16.msra.mxu0 0
        %11250 = vmatprep.subr.bf16.mxu0 0
        %11251 = vmatpush1.bf16.msra.mxu0 0
        %11252 = vmatprep.mubr.bf16.mxu0 0
        %11253 = vmatmul.mubr.bf16.gmra.mrb[0].mxu0 %v11173
        %v11254 = vpop.f32.mrb[0].mxu0
        %v11255 = vadd.f32 0.0, %v11254
        %v11256 = vpop.f32.mrb[0].mxu0
        %v11257 = vpop.f32.mrb[0].mxu0
        %v11258 = vadd.f32 0.0, %v11257
        %v11259 = vpop.f32.mrb[0].mxu0
        %11260 = vmatprep.mubr.bf16.mxu0 0
        %11261 = vmatmul.mubr.bf16.gmra.mrb[0].mxu0 %v11176
        %v11262 = vpop.f32.mrb[0].mxu0
        %v11263 = vadd.f32 0.0, %v11262
        %v11264 = vpop.f32.mrb[0].mxu0
        %v11265 = vpop.f32.mrb[0].mxu0
        %v11266 = vadd.f32 0.0, %v11265
        %v11267 = vpop.f32.mrb[0].mxu0
        %11268 = vmatprep.mubr.bf16.mxu0 0
        %11269 = vmatmul.mubr.bf16.gmra.mrb[0].mxu0 %v11179
        %v11270 = vpop.f32.mrb[0].mxu0
        %v11271 = vadd.f32 0.0, %v11270
        %v11272 = vpop.f32.mrb[0].mxu0
        %v11273 = vpop.f32.mrb[0].mxu0
        %v11274 = vadd.f32 0.0, %v11273
        %v11275 = vpop.f32.mrb[0].mxu0
        %11276 = vmatprep.mubr.bf16.mxu0 0
        %11277 = vmatmul.mubr.bf16.gmra.mrb[0].mxu0 %v11182
        %v11278 = vpop.f32.mrb[0].mxu0
        %v11279 = vadd.f32 0.0, %v11278
        %v11280 = vpop.f32.mrb[0].mxu0
        %v11281 = vpop.f32.mrb[0].mxu0
        %v11282 = vadd.f32 0.0, %v11281
        %v11283 = vpop.f32.mrb[0].mxu0
        %11284 = vmatprep.mubr.bf16.mxu0 0
        %11285 = vmatmul.mubr.bf16.gmra.mrb[0].mxu0 %v11185
        %v11286 = vpop.f32.mrb[0].mxu0
        %v11287 = vadd.f32 0.0, %v11286
        %v11288 = vpop.f32.mrb[0].mxu0
        %v11289 = vpop.f32.mrb[0].mxu0
        %v11290 = vadd.f32 0.0, %v11289
        %v11291 = vpop.f32.mrb[0].mxu0
        %11292 = vmatprep.mubr.bf16.mxu0 0
        %11293 = vmatmul.mubr.bf16.gmra.mrb[0].mxu0 %v11188
        %v11294 = vpop.f32.mrb[0].mxu0
        %v11295 = vadd.f32 0.0, %v11294
        %v11296 = vpop.f32.mrb[0].mxu0
        %v11297 = vpop.f32.mrb[0].mxu0
        %v11298 = vadd.f32 0.0, %v11297
        %v11299 = vpop.f32.mrb[0].mxu0
        %11300 = vmatprep.mubr.bf16.mxu0 0
        %11301 = vmatmul.mubr.bf16.gmra.mrb[0].mxu0 %v11191
        %v11302 = vpop.f32.mrb[0].mxu0
        %v11303 = vadd.f32 0.0, %v11302
        %v11304 = vpop.f32.mrb[0].mxu0
        %v11305 = vpop.f32.mrb[0].mxu0
        %v11306 = vadd.f32 0.0, %v11305
        %v11307 = vpop.f32.mrb[0].mxu0
        %11308 = vmatprep.mubr.bf16.mxu0 0
        %11309 = vmatmul.mubr.bf16.gmra.mrb[0].mxu0 %v11194
        %v11310 = vpop.f32.mrb[0].mxu0
        %v11311 = vadd.f32 0.0, %v11310
        %v11312 = vpop.f32.mrb[0].mxu0
        %v11313 = vpop.f32.mrb[0].mxu0
        %v11314 = vadd.f32 0.0, %v11313
        %v11315 = vpop.f32.mrb[0].mxu0
        %11316 = vmatprep.mubr.bf16.mxu0 0
        %11317 = vmatmul.mubr.bf16.gmra.mrb[0].mxu0 %v11197
        %v11318 = vpop.f32.mrb[0].mxu0
        %v11319 = vadd.f32 0.0, %v11318
        %v11320 = vpop.f32.mrb[0].mxu0
        %v11321 = vpop.f32.mrb[0].mxu0
        %v11322 = vadd.f32 0.0, %v11321
        %v11323 = vpop.f32.mrb[0].mxu0
        %11324 = vmatprep.mubr.bf16.mxu0 0
        %11325 = vmatmul.mubr.bf16.gmra.mrb[0].mxu0 %v11200
        %v11326 = vpop.f32.mrb[0].mxu0
        %v11327 = vadd.f32 0.0, %v11326
        %v11328 = vpop.f32.mrb[0].mxu0
        %v11329 = vpop.f32.mrb[0].mxu0
        %v11330 = vadd.f32 0.0, %v11329
        %v11331 = vpop.f32.mrb[0].mxu0
        %11332 = vmatprep.mubr.bf16.mxu0 0
        %11333 = vmatmul.mubr.bf16.gmra.mrb[0].mxu0 %v11203
        %v11334 = vpop.f32.mrb[0].mxu0
        %v11335 = vadd.f32 0.0, %v11334
        %v11336 = vpop.f32.mrb[0].mxu0
        %v11337 = vpop.f32.mrb[0].mxu0
        %v11338 = vadd.f32 0.0, %v11337
        %v11339 = vpop.f32.mrb[0].mxu0
        %11340 = vmatprep.mubr.bf16.mxu0 0
        %11341 = vmatmul.mubr.bf16.gmra.mrb[0].mxu0 %v11206
        %v11342 = vpop.f32.mrb[0].mxu0
        %v11343 = vadd.f32 0.0, %v11342
        %v11344 = vpop.f32.mrb[0].mxu0
        %v11345 = vpop.f32.mrb[0].mxu0
        %v11346 = vadd.f32 0.0, %v11345
        %v11347 = vpop.f32.mrb[0].mxu0
        %11348 = vmatprep.mubr.bf16.mxu0 0
        %11349 = vmatmul.mubr.bf16.gmra.mrb[0].mxu0 %v11209
        %v11350 = vpop.f32.mrb[0].mxu0
        %v11351 = vadd.f32 0.0, %v11350
        %v11352 = vpop.f32.mrb[0].mxu0
        %v11353 = vpop.f32.mrb[0].mxu0
        %v11354 = vadd.f32 0.0, %v11353
        %v11355 = vpop.f32.mrb[0].mxu0
        %11356 = vmatprep.mubr.bf16.mxu0 0
        %11357 = vmatmul.mubr.bf16.gmra.mrb[0].mxu0 %v11212
        %v11358 = vpop.f32.mrb[0].mxu0
        %v11359 = vadd.f32 0.0, %v11358
        %v11360 = vpop.f32.mrb[0].mxu0
        %v11361 = vpop.f32.mrb[0].mxu0
        %v11362 = vadd.f32 0.0, %v11361
        %v11363 = vpop.f32.mrb[0].mxu0
        %11364 = vmatprep.mubr.bf16.mxu0 0
        %11365 = vmatmul.mubr.bf16.gmra.mrb[0].mxu0 %v11215
        %v11366 = vpop.f32.mrb[0].mxu0
        %v11367 = vadd.f32 0.0, %v11366
        %v11368 = vpop.f32.mrb[0].mxu0
        %v11369 = vpop.f32.mrb[0].mxu0
        %v11370 = vadd.f32 0.0, %v11369
        %v11371 = vpop.f32.mrb[0].mxu0
        %11372 = vmatprep.mubr.bf16.mxu0 0
        %11373 = vmatmul.mubr.bf16.gmra.mrb[0].mxu0 %v11218
        %v11374 = vpop.f32.mrb[0].mxu0
        %v11375 = vadd.f32 0.0, %v11374
        %v11376 = vpop.f32.mrb[0].mxu0
        %v11377 = vpop.f32.mrb[0].mxu0
        %v11378 = vadd.f32 0.0, %v11377
        %v11379 = vpop.f32.mrb[0].mxu0
        %11380 = vdwg.mxu0
        %11413 = vrot.lane.b32.xlu0 %v11255, 64
        %v11414 = vpop.permute.xlu0 %11413
        %11415 = vrot.lane.b32.xlu0 %v11258, 64
        %v11416 = vpop.permute.xlu0 %11415
        %11417 = vrot.lane.b32.xlu0 %v11263, 64
        %v11418 = vpop.permute.xlu0 %11417
        %11419 = vrot.lane.b32.xlu0 %v11266, 64
        %v11420 = vpop.permute.xlu0 %11419
        %11421 = vrot.lane.b32.xlu0 %v11271, 64
        %v11422 = vpop.permute.xlu0 %11421
        %11423 = vrot.lane.b32.xlu0 %v11274, 64
        %v11424 = vpop.permute.xlu0 %11423
        %11425 = vrot.lane.b32.xlu0 %v11279, 64
        %v11426 = vpop.permute.xlu0 %11425
        %11427 = vrot.lane.b32.xlu0 %v11282, 64
        %v11428 = vpop.permute.xlu0 %11427
        %11429 = vrot.lane.b32.xlu0 %v11287, 64
        %v11430 = vpop.permute.xlu0 %11429
        %11431 = vrot.lane.b32.xlu0 %v11290, 64
        %v11432 = vpop.permute.xlu0 %11431
        %11433 = vrot.lane.b32.xlu0 %v11295, 64
        %v11434 = vpop.permute.xlu0 %11433
        %11435 = vrot.lane.b32.xlu0 %v11298, 64
        %v11436 = vpop.permute.xlu0 %11435
        %11437 = vrot.lane.b32.xlu0 %v11303, 64
        %v11438 = vpop.permute.xlu0 %11437
        %11439 = vrot.lane.b32.xlu0 %v11306, 64
        %v11440 = vpop.permute.xlu0 %11439
        %11441 = vrot.lane.b32.xlu0 %v11311, 64
        %v11442 = vpop.permute.xlu0 %11441
        %11443 = vrot.lane.b32.xlu0 %v11314, 64
        %v11444 = vpop.permute.xlu0 %11443
        %11445 = vrot.lane.b32.xlu0 %v11319, 64
        %v11446 = vpop.permute.xlu0 %11445
        %11447 = vrot.lane.b32.xlu0 %v11322, 64
        %v11448 = vpop.permute.xlu0 %11447
        %11449 = vrot.lane.b32.xlu0 %v11327, 64
        %v11450 = vpop.permute.xlu0 %11449
        %11451 = vrot.lane.b32.xlu0 %v11330, 64
        %v11452 = vpop.permute.xlu0 %11451
        %11453 = vrot.lane.b32.xlu0 %v11335, 64
        %v11454 = vpop.permute.xlu0 %11453
        %11455 = vrot.lane.b32.xlu0 %v11338, 64
        %v11456 = vpop.permute.xlu0 %11455
        %11457 = vrot.lane.b32.xlu0 %v11343, 64
        %v11458 = vpop.permute.xlu0 %11457
        %11459 = vrot.lane.b32.xlu0 %v11346, 64
        %v11460 = vpop.permute.xlu0 %11459
        %11461 = vrot.lane.b32.xlu0 %v11351, 64
        %v11462 = vpop.permute.xlu0 %11461
        %11463 = vrot.lane.b32.xlu0 %v11354, 64
        %v11464 = vpop.permute.xlu0 %11463
        %11465 = vrot.lane.b32.xlu0 %v11359, 64
        %v11466 = vpop.permute.xlu0 %11465
        %11467 = vrot.lane.b32.xlu0 %v11362, 64
        %v11468 = vpop.permute.xlu0 %11467
        %11469 = vrot.lane.b32.xlu0 %v11367, 64
        %v11470 = vpop.permute.xlu0 %11469
        %11471 = vrot.lane.b32.xlu0 %v11370, 64
        %v11472 = vpop.permute.xlu0 %11471
        %11473 = vrot.lane.b32.xlu0 %v11375, 64
        %v11474 = vpop.permute.xlu0 %11473
        %11475 = vrot.lane.b32.xlu0 %v11378, 64
        %v11476 = vpop.permute.xlu0 %11475
        %v11509 = vadd.f32 %v10643, %v11414
        %v11510 = vadd.f32 %v10644, %v11416
        %v11511 = vadd.f32 %v10645, %v11418
        %v11512 = vadd.f32 %v10646, %v11420
        %v11513 = vadd.f32 %v10647, %v11422
        %v11514 = vadd.f32 %v10648, %v11424
        %v11515 = vadd.f32 %v10649, %v11426
        %v11516 = vadd.f32 %v10650, %v11428
        %v11517 = vadd.f32 %v10651, %v11430
        %v11518 = vadd.f32 %v10652, %v11432
        %v11519 = vadd.f32 %v10653, %v11434
        %v11520 = vadd.f32 %v10654, %v11436
        %v11521 = vadd.f32 %v10655, %v11438
        %v11522 = vadd.f32 %v10656, %v11440
        %v11523 = vadd.f32 %v10657, %v11442
        %v11524 = vadd.f32 %v10658, %v11444
        %v11525 = vadd.f32 %v10659, %v11446
        %v11526 = vadd.f32 %v10660, %v11448
        %v11527 = vadd.f32 %v10661, %v11450
        %v11528 = vadd.f32 %v10662, %v11452
        %v11529 = vadd.f32 %v10663, %v11454
        %v11530 = vadd.f32 %v10664, %v11456
        %v11531 = vadd.f32 %v10665, %v11458
        %v11532 = vadd.f32 %v10666, %v11460
        %v11533 = vadd.f32 %v10667, %v11462
        %v11534 = vadd.f32 %v10668, %v11464
        %v11535 = vadd.f32 %v10669, %v11466
        %v11536 = vadd.f32 %v10670, %v11468
        %v11537 = vadd.f32 %v10671, %v11470
        %v11538 = vadd.f32 %v10672, %v11472
        %v11539 = vadd.f32 %v10673, %v11474
        %v11540 = vadd.f32 %v10674, %v11476
        %v11541 = vld [vmem:[%s10176] sm:$0xe]
        %v11542 = vld [vmem:[%s10176 + $0xc] sm:$0xe]
        %v11543 = vld [vmem:[%s10176 + $0x18] sm:$0xe]
        %v11544 = vld [vmem:[%s10176 + $0x24] sm:$0xe]
        %v11545 = vld [vmem:[%s10176 + $0x30] sm:$0xe]
        %v11546 = vld [vmem:[%s10176 + $0x3c] sm:$0xe]
        %v11547 = vld [vmem:[%s10176 + $0x48] sm:$0xe]
        %v11548 = vld [vmem:[%s10176 + $0x54] sm:$0xe]
        %v11549 = vld [vmem:[%s10176 + $0x60] sm:$0xe]
        %v11550 = vld [vmem:[%s10176 + $0x6c] sm:$0xe]
        %v11551 = vld [vmem:[%s10176 + $0x78] sm:$0xe]
        %v11552 = vld [vmem:[%s10176 + $0x84] sm:$0xe]
        %v11553 = vld [vmem:[%s10176 + $0x90] sm:$0xe]
        %v11554 = vld [vmem:[%s10176 + $0x9c] sm:$0xe]
        %v11555 = vld [vmem:[%s10176 + $0xa8] sm:$0xe]
        %v11556 = vld [vmem:[%s10176 + $0xb4] sm:$0xe]
        %v11605 = vrot.slane %v11541, 5
        %v11606 = vrot.slane %v11605, 4
        %v11607 = vrot.slane %v10676, 5
        %v11608 = vsel %vm1443, %v11606, %v11607
        %v11609 = vrot.slane %v11607, 4
        %v11610 = vrot.slane %v10677, 5
        %v11611 = vsel %vm1443, %v11609, %v11610
        %v11612 = vrot.slane %v11542, 5
        %v11613 = vrot.slane %v11612, 4
        %v11614 = vrot.slane %v10679, 5
        %v11615 = vsel %vm1443, %v11613, %v11614
        %v11616 = vrot.slane %v11614, 4
        %v11617 = vrot.slane %v10680, 5
        %v11618 = vsel %vm1443, %v11616, %v11617
        %v11619 = vrot.slane %v11543, 5
        %v11620 = vrot.slane %v11619, 4
        %v11621 = vrot.slane %v10682, 5
        %v11622 = vsel %vm1443, %v11620, %v11621
        %v11623 = vrot.slane %v11621, 4
        %v11624 = vrot.slane %v10683, 5
        %v11625 = vsel %vm1443, %v11623, %v11624
        %v11626 = vrot.slane %v11544, 5
        %v11627 = vrot.slane %v11626, 4
        %v11628 = vrot.slane %v10685, 5
        %v11629 = vsel %vm1443, %v11627, %v11628
        %v11630 = vrot.slane %v11628, 4
        %v11631 = vrot.slane %v10686, 5
        %v11632 = vsel %vm1443, %v11630, %v11631
        %v11633 = vrot.slane %v11545, 5
        %v11634 = vrot.slane %v11633, 4
        %v11635 = vrot.slane %v10688, 5
        %v11636 = vsel %vm1443, %v11634, %v11635
        %v11637 = vrot.slane %v11635, 4
        %v11638 = vrot.slane %v10689, 5
        %v11639 = vsel %vm1443, %v11637, %v11638
        %v11640 = vrot.slane %v11546, 5
        %v11641 = vrot.slane %v11640, 4
        %v11642 = vrot.slane %v10691, 5
        %v11643 = vsel %vm1443, %v11641, %v11642
        %v11644 = vrot.slane %v11642, 4
        %v11645 = vrot.slane %v10692, 5
        %v11646 = vsel %vm1443, %v11644, %v11645
        %v11647 = vrot.slane %v11547, 5
        %v11648 = vrot.slane %v11647, 4
        %v11649 = vrot.slane %v10694, 5
        %v11650 = vsel %vm1443, %v11648, %v11649
        %v11651 = vrot.slane %v11649, 4
        %v11652 = vrot.slane %v10695, 5
        %v11653 = vsel %vm1443, %v11651, %v11652
        %v11654 = vrot.slane %v11548, 5
        %v11655 = vrot.slane %v11654, 4
        %v11656 = vrot.slane %v10697, 5
        %v11657 = vsel %vm1443, %v11655, %v11656
        %v11658 = vrot.slane %v11656, 4
        %v11659 = vrot.slane %v10698, 5
        %v11660 = vsel %vm1443, %v11658, %v11659
        %v11661 = vrot.slane %v11549, 5
        %v11662 = vrot.slane %v11661, 4
        %v11663 = vrot.slane %v10700, 5
        %v11664 = vsel %vm1443, %v11662, %v11663
        %v11665 = vrot.slane %v11663, 4
        %v11666 = vrot.slane %v10701, 5
        %v11667 = vsel %vm1443, %v11665, %v11666
        %v11668 = vrot.slane %v11550, 5
        %v11669 = vrot.slane %v11668, 4
        %v11670 = vrot.slane %v10703, 5
        %v11671 = vsel %vm1443, %v11669, %v11670
        %v11672 = vrot.slane %v11670, 4
        %v11673 = vrot.slane %v10704, 5
        %v11674 = vsel %vm1443, %v11672, %v11673
        %v11675 = vrot.slane %v11551, 5
        %v11676 = vrot.slane %v11675, 4
        %v11677 = vrot.slane %v10706, 5
        %v11678 = vsel %vm1443, %v11676, %v11677
        %v11679 = vrot.slane %v11677, 4
        %v11680 = vrot.slane %v10707, 5
        %v11681 = vsel %vm1443, %v11679, %v11680
        %v11682 = vrot.slane %v11552, 5
        %v11683 = vrot.slane %v11682, 4
        %v11684 = vrot.slane %v10709, 5
        %v11685 = vsel %vm1443, %v11683, %v11684
        %v11686 = vrot.slane %v11684, 4
        %v11687 = vrot.slane %v10710, 5
        %v11688 = vsel %vm1443, %v11686, %v11687
        %v11689 = vrot.slane %v11553, 5
        %v11690 = vrot.slane %v11689, 4
        %v11691 = vrot.slane %v10712, 5
        %v11692 = vsel %vm1443, %v11690, %v11691
        %v11693 = vrot.slane %v11691, 4
        %v11694 = vrot.slane %v10713, 5
        %v11695 = vsel %vm1443, %v11693, %v11694
        %v11696 = vrot.slane %v11554, 5
        %v11697 = vrot.slane %v11696, 4
        %v11698 = vrot.slane %v10715, 5
        %v11699 = vsel %vm1443, %v11697, %v11698
        %v11700 = vrot.slane %v11698, 4
        %v11701 = vrot.slane %v10716, 5
        %v11702 = vsel %vm1443, %v11700, %v11701
        %v11703 = vrot.slane %v11555, 5
        %v11704 = vrot.slane %v11703, 4
        %v11705 = vrot.slane %v10718, 5
        %v11706 = vsel %vm1443, %v11704, %v11705
        %v11707 = vrot.slane %v11705, 4
        %v11708 = vrot.slane %v10719, 5
        %v11709 = vsel %vm1443, %v11707, %v11708
        %v11710 = vrot.slane %v11556, 5
        %v11711 = vrot.slane %v11710, 4
        %v11712 = vrot.slane %v10721, 5
        %v11713 = vsel %vm1443, %v11711, %v11712
        %v11714 = vrot.slane %v11712, 4
        %v11715 = vrot.slane %v10722, 5
        %v11716 = vsel %vm1443, %v11714, %v11715
        %s11717 = scalar_lea.vmem %s3, 128
        %v11718 = vld [vmem:[%s11717] sm:$0xf]
        %v11719 = vld [vmem:[%s11717 + $0x4] sm:$0xf]
        %v11720 = vld [vmem:[%s11717 + $0x8] sm:$0xf]
        %v11721 = vld [vmem:[%s11717 + $0xc] sm:$0xf]
        %v11722 = vunpack.c.l.b16 %v11608
        %v11723 = vunpack.c.l.b16 %v11611
        %v11724 = vunpack.c.l.b16 %v11615
        %v11725 = vunpack.c.l.b16 %v11618
        %v11726 = vunpack.c.l.b16 %v11622
        %v11727 = vunpack.c.l.b16 %v11625
        %v11728 = vunpack.c.l.b16 %v11629
        %v11729 = vunpack.c.l.b16 %v11632
        %v11730 = vunpack.c.l.b16 %v11636
        %v11731 = vunpack.c.l.b16 %v11639
        %v11732 = vunpack.c.l.b16 %v11643
        %v11733 = vunpack.c.l.b16 %v11646
        %v11734 = vunpack.c.l.b16 %v11650
        %v11735 = vunpack.c.l.b16 %v11653
        %v11736 = vunpack.c.l.b16 %v11657
        %v11737 = vunpack.c.l.b16 %v11660
        %v11738 = vunpack.c.l.b16 %v11664
        %v11739 = vunpack.c.l.b16 %v11667
        %v11740 = vunpack.c.l.b16 %v11671
        %v11741 = vunpack.c.l.b16 %v11674
        %v11742 = vunpack.c.l.b16 %v11678
        %v11743 = vunpack.c.l.b16 %v11681
        %v11744 = vunpack.c.l.b16 %v11685
        %v11745 = vunpack.c.l.b16 %v11688
        %v11746 = vunpack.c.l.b16 %v11692
        %v11747 = vunpack.c.l.b16 %v11695
        %v11748 = vunpack.c.l.b16 %v11699
        %v11749 = vunpack.c.l.b16 %v11702
        %v11750 = vunpack.c.l.b16 %v11706
        %v11751 = vunpack.c.l.b16 %v11709
        %v11752 = vunpack.c.l.b16 %v11713
        %v11753 = vunpack.c.l.b16 %v11716
        %v11754 = vpack.c.b16 %v11723, %v11722
        %v11755 = vpack.c.b16 %v11725, %v11724
        %v11756 = vpack.c.b16 %v11727, %v11726
        %v11757 = vpack.c.b16 %v11729, %v11728
        %v11758 = vpack.c.b16 %v11731, %v11730
        %v11759 = vpack.c.b16 %v11733, %v11732
        %v11760 = vpack.c.b16 %v11735, %v11734
        %v11761 = vpack.c.b16 %v11737, %v11736
        %v11762 = vpack.c.b16 %v11739, %v11738
        %v11763 = vpack.c.b16 %v11741, %v11740
        %v11764 = vpack.c.b16 %v11743, %v11742
        %v11765 = vpack.c.b16 %v11745, %v11744
        %v11766 = vpack.c.b16 %v11747, %v11746
        %v11767 = vpack.c.b16 %v11749, %v11748
        %v11768 = vpack.c.b16 %v11751, %v11750
        %v11769 = vpack.c.b16 %v11753, %v11752
        %v11774 = vunpack.c.l.b16 %v11718
        %v11775 = vunpack.c.l.b16 %v11719
        %v11776 = vunpack.c.l.b16 %v11720
        %v11777 = vunpack.c.l.b16 %v11721
        %v11778 = vpack.c.b16 %v11775, %v11774
        %v11779 = vpack.c.b16 %v11777, %v11776
        %v11783 = vsel %vm6356, %v11754, 0
        %v11786 = vsel %vm6356, %v11755, 0
        %v11789 = vsel %vm6356, %v11756, 0
        %v11792 = vsel %vm6356, %v11757, 0
        %v11795 = vsel %vm6356, %v11758, 0
        %v11798 = vsel %vm6356, %v11759, 0
        %v11801 = vsel %vm6356, %v11760, 0
        %v11804 = vsel %vm6356, %v11761, 0
        %v11807 = vsel %vm6356, %v11762, 0
        %v11810 = vsel %vm6356, %v11763, 0
        %v11813 = vsel %vm6356, %v11764, 0
        %v11816 = vsel %vm6356, %v11765, 0
        %v11819 = vsel %vm6356, %v11766, 0
        %v11822 = vsel %vm6356, %v11767, 0
        %v11825 = vsel %vm6356, %v11768, 0
        %v11828 = vsel %vm6356, %v11769, 0
        %11830 = vmatprep.subr.bf16.mxu0 0
        %11831 = vmatpush1.bf16.msra.mxu0 %v11778
        %11832 = vmatprep.subr.bf16.mxu0 0
        %11833 = vmatpush1.bf16.msra.mxu0 %v11779
        %11834 = vmatprep.subr.bf16.mxu0 0
        %11835 = vmatpush1.bf16.msra.mxu0 0
        %11836 = vmatprep.subr.bf16.mxu0 0
        %11837 = vmatpush1.bf16.msra.mxu0 0
        %11838 = vmatprep.subr.bf16.mxu0 0
        %11839 = vmatpush1.bf16.msra.mxu0 0
        %11840 = vmatprep.subr.bf16.mxu0 0
        %11841 = vmatpush1.bf16.msra.mxu0 0
        %11842 = vmatprep.subr.bf16.mxu0 0
        %11843 = vmatpush1.bf16.msra.mxu0 0
        %11844 = vmatprep.subr.bf16.mxu0 0
        %11845 = vmatpush1.bf16.msra.mxu0 0
        %11846 = vmatprep.subr.bf16.mxu0 0
        %11847 = vmatpush1.bf16.msra.mxu0 0
        %11848 = vmatprep.subr.bf16.mxu0 0
        %11849 = vmatpush1.bf16.msra.mxu0 0
        %11850 = vmatprep.subr.bf16.mxu0 0
        %11851 = vmatpush1.bf16.msra.mxu0 0
        %11852 = vmatprep.subr.bf16.mxu0 0
        %11853 = vmatpush1.bf16.msra.mxu0 0
        %11854 = vmatprep.subr.bf16.mxu0 0
        %11855 = vmatpush1.bf16.msra.mxu0 0
        %11856 = vmatprep.subr.bf16.mxu0 0
        %11857 = vmatpush1.bf16.msra.mxu0 0
        %11858 = vmatprep.subr.bf16.mxu0 0
        %11859 = vmatpush1.bf16.msra.mxu0 0
        %11860 = vmatprep.subr.bf16.mxu0 0
        %11861 = vmatpush1.bf16.msra.mxu0 0
        %11862 = vmatprep.mubr.bf16.mxu0 0
        %11863 = vmatmul.mubr.bf16.gmra.mrb[0].mxu0 %v11783
        %v11864 = vpop.f32.mrb[0].mxu0
        %v11865 = vadd.f32 0.0, %v11864
        %v11866 = vpop.f32.mrb[0].mxu0
        %v11867 = vpop.f32.mrb[0].mxu0
        %v11868 = vadd.f32 0.0, %v11867
        %v11869 = vpop.f32.mrb[0].mxu0
        %11870 = vmatprep.mubr.bf16.mxu0 0
        %11871 = vmatmul.mubr.bf16.gmra.mrb[0].mxu0 %v11786
        %v11872 = vpop.f32.mrb[0].mxu0
        %v11873 = vadd.f32 0.0, %v11872
        %v11874 = vpop.f32.mrb[0].mxu0
        %v11875 = vpop.f32.mrb[0].mxu0
        %v11876 = vadd.f32 0.0, %v11875
        %v11877 = vpop.f32.mrb[0].mxu0
        %11878 = vmatprep.mubr.bf16.mxu0 0
        %11879 = vmatmul.mubr.bf16.gmra.mrb[0].mxu0 %v11789
        %v11880 = vpop.f32.mrb[0].mxu0
        %v11881 = vadd.f32 0.0, %v11880
        %v11882 = vpop.f32.mrb[0].mxu0
        %v11883 = vpop.f32.mrb[0].mxu0
        %v11884 = vadd.f32 0.0, %v11883
        %v11885 = vpop.f32.mrb[0].mxu0
        %11886 = vmatprep.mubr.bf16.mxu0 0
        %11887 = vmatmul.mubr.bf16.gmra.mrb[0].mxu0 %v11792
        %v11888 = vpop.f32.mrb[0].mxu0
        %v11889 = vadd.f32 0.0, %v11888
        %v11890 = vpop.f32.mrb[0].mxu0
        %v11891 = vpop.f32.mrb[0].mxu0
        %v11892 = vadd.f32 0.0, %v11891
        %v11893 = vpop.f32.mrb[0].mxu0
        %11894 = vmatprep.mubr.bf16.mxu0 0
        %11895 = vmatmul.mubr.bf16.gmra.mrb[0].mxu0 %v11795
        %v11896 = vpop.f32.mrb[0].mxu0
        %v11897 = vadd.f32 0.0, %v11896
        %v11898 = vpop.f32.mrb[0].mxu0
        %v11899 = vpop.f32.mrb[0].mxu0
        %v11900 = vadd.f32 0.0, %v11899
        %v11901 = vpop.f32.mrb[0].mxu0
        %11902 = vmatprep.mubr.bf16.mxu0 0
        %11903 = vmatmul.mubr.bf16.gmra.mrb[0].mxu0 %v11798
        %v11904 = vpop.f32.mrb[0].mxu0
        %v11905 = vadd.f32 0.0, %v11904
        %v11906 = vpop.f32.mrb[0].mxu0
        %v11907 = vpop.f32.mrb[0].mxu0
        %v11908 = vadd.f32 0.0, %v11907
        %v11909 = vpop.f32.mrb[0].mxu0
        %11910 = vmatprep.mubr.bf16.mxu0 0
        %11911 = vmatmul.mubr.bf16.gmra.mrb[0].mxu0 %v11801
        %v11912 = vpop.f32.mrb[0].mxu0
        %v11913 = vadd.f32 0.0, %v11912
        %v11914 = vpop.f32.mrb[0].mxu0
        %v11915 = vpop.f32.mrb[0].mxu0
        %v11916 = vadd.f32 0.0, %v11915
        %v11917 = vpop.f32.mrb[0].mxu0
        %11918 = vmatprep.mubr.bf16.mxu0 0
        %11919 = vmatmul.mubr.bf16.gmra.mrb[0].mxu0 %v11804
        %v11920 = vpop.f32.mrb[0].mxu0
        %v11921 = vadd.f32 0.0, %v11920
        %v11922 = vpop.f32.mrb[0].mxu0
        %v11923 = vpop.f32.mrb[0].mxu0
        %v11924 = vadd.f32 0.0, %v11923
        %v11925 = vpop.f32.mrb[0].mxu0
        %11926 = vmatprep.mubr.bf16.mxu0 0
        %11927 = vmatmul.mubr.bf16.gmra.mrb[0].mxu0 %v11807
        %v11928 = vpop.f32.mrb[0].mxu0
        %v11929 = vadd.f32 0.0, %v11928
        %v11930 = vpop.f32.mrb[0].mxu0
        %v11931 = vpop.f32.mrb[0].mxu0
        %v11932 = vadd.f32 0.0, %v11931
        %v11933 = vpop.f32.mrb[0].mxu0
        %11934 = vmatprep.mubr.bf16.mxu0 0
        %11935 = vmatmul.mubr.bf16.gmra.mrb[0].mxu0 %v11810
        %v11936 = vpop.f32.mrb[0].mxu0
        %v11937 = vadd.f32 0.0, %v11936
        %v11938 = vpop.f32.mrb[0].mxu0
        %v11939 = vpop.f32.mrb[0].mxu0
        %v11940 = vadd.f32 0.0, %v11939
        %v11941 = vpop.f32.mrb[0].mxu0
        %11942 = vmatprep.mubr.bf16.mxu0 0
        %11943 = vmatmul.mubr.bf16.gmra.mrb[0].mxu0 %v11813
        %v11944 = vpop.f32.mrb[0].mxu0
        %v11945 = vadd.f32 0.0, %v11944
        %v11946 = vpop.f32.mrb[0].mxu0
        %v11947 = vpop.f32.mrb[0].mxu0
        %v11948 = vadd.f32 0.0, %v11947
        %v11949 = vpop.f32.mrb[0].mxu0
        %11950 = vmatprep.mubr.bf16.mxu0 0
        %11951 = vmatmul.mubr.bf16.gmra.mrb[0].mxu0 %v11816
        %v11952 = vpop.f32.mrb[0].mxu0
        %v11953 = vadd.f32 0.0, %v11952
        %v11954 = vpop.f32.mrb[0].mxu0
        %v11955 = vpop.f32.mrb[0].mxu0
        %v11956 = vadd.f32 0.0, %v11955
        %v11957 = vpop.f32.mrb[0].mxu0
        %11958 = vmatprep.mubr.bf16.mxu0 0
        %11959 = vmatmul.mubr.bf16.gmra.mrb[0].mxu0 %v11819
        %v11960 = vpop.f32.mrb[0].mxu0
        %v11961 = vadd.f32 0.0, %v11960
        %v11962 = vpop.f32.mrb[0].mxu0
        %v11963 = vpop.f32.mrb[0].mxu0
        %v11964 = vadd.f32 0.0, %v11963
        %v11965 = vpop.f32.mrb[0].mxu0
        %11966 = vmatprep.mubr.bf16.mxu0 0
        %11967 = vmatmul.mubr.bf16.gmra.mrb[0].mxu0 %v11822
        %v11968 = vpop.f32.mrb[0].mxu0
        %v11969 = vadd.f32 0.0, %v11968
        %v11970 = vpop.f32.mrb[0].mxu0
        %v11971 = vpop.f32.mrb[0].mxu0
        %v11972 = vadd.f32 0.0, %v11971
        %v11973 = vpop.f32.mrb[0].mxu0
        %11974 = vmatprep.mubr.bf16.mxu0 0
        %11975 = vmatmul.mubr.bf16.gmra.mrb[0].mxu0 %v11825
        %v11976 = vpop.f32.mrb[0].mxu0
        %v11977 = vadd.f32 0.0, %v11976
        %v11978 = vpop.f32.mrb[0].mxu0
        %v11979 = vpop.f32.mrb[0].mxu0
        %v11980 = vadd.f32 0.0, %v11979
        %v11981 = vpop.f32.mrb[0].mxu0
        %11982 = vmatprep.mubr.bf16.mxu0 0
        %11983 = vmatmul.mubr.bf16.gmra.mrb[0].mxu0 %v11828
        %v11984 = vpop.f32.mrb[0].mxu0
        %v11985 = vadd.f32 0.0, %v11984
        %v11986 = vpop.f32.mrb[0].mxu0
        %v11987 = vpop.f32.mrb[0].mxu0
        %v11988 = vadd.f32 0.0, %v11987
        %v11989 = vpop.f32.mrb[0].mxu0
        %11990 = vdwg.mxu0
        %12023 = vrot.lane.b32.xlu0 %v11865, 64
        %v12024 = vpop.permute.xlu0 %12023
        %12025 = vrot.lane.b32.xlu0 %v11868, 64
        %v12026 = vpop.permute.xlu0 %12025
        %12027 = vrot.lane.b32.xlu0 %v11873, 64
        %v12028 = vpop.permute.xlu0 %12027
        %12029 = vrot.lane.b32.xlu0 %v11876, 64
        %v12030 = vpop.permute.xlu0 %12029
        %12031 = vrot.lane.b32.xlu0 %v11881, 64
        %v12032 = vpop.permute.xlu0 %12031
        %12033 = vrot.lane.b32.xlu0 %v11884, 64
        %v12034 = vpop.permute.xlu0 %12033
        %12035 = vrot.lane.b32.xlu0 %v11889, 64
        %v12036 = vpop.permute.xlu0 %12035
        %12037 = vrot.lane.b32.xlu0 %v11892, 64
        %v12038 = vpop.permute.xlu0 %12037
        %12039 = vrot.lane.b32.xlu0 %v11897, 64
        %v12040 = vpop.permute.xlu0 %12039
        %12041 = vrot.lane.b32.xlu0 %v11900, 64
        %v12042 = vpop.permute.xlu0 %12041
        %12043 = vrot.lane.b32.xlu0 %v11905, 64
        %v12044 = vpop.permute.xlu0 %12043
        %12045 = vrot.lane.b32.xlu0 %v11908, 64
        %v12046 = vpop.permute.xlu0 %12045
        %12047 = vrot.lane.b32.xlu0 %v11913, 64
        %v12048 = vpop.permute.xlu0 %12047
        %12049 = vrot.lane.b32.xlu0 %v11916, 64
        %v12050 = vpop.permute.xlu0 %12049
        %12051 = vrot.lane.b32.xlu0 %v11921, 64
        %v12052 = vpop.permute.xlu0 %12051
        %12053 = vrot.lane.b32.xlu0 %v11924, 64
        %v12054 = vpop.permute.xlu0 %12053
        %12055 = vrot.lane.b32.xlu0 %v11929, 64
        %v12056 = vpop.permute.xlu0 %12055
        %12057 = vrot.lane.b32.xlu0 %v11932, 64
        %v12058 = vpop.permute.xlu0 %12057
        %12059 = vrot.lane.b32.xlu0 %v11937, 64
        %v12060 = vpop.permute.xlu0 %12059
        %12061 = vrot.lane.b32.xlu0 %v11940, 64
        %v12062 = vpop.permute.xlu0 %12061
        %12063 = vrot.lane.b32.xlu0 %v11945, 64
        %v12064 = vpop.permute.xlu0 %12063
        %12065 = vrot.lane.b32.xlu0 %v11948, 64
        %v12066 = vpop.permute.xlu0 %12065
        %12067 = vrot.lane.b32.xlu0 %v11953, 64
        %v12068 = vpop.permute.xlu0 %12067
        %12069 = vrot.lane.b32.xlu0 %v11956, 64
        %v12070 = vpop.permute.xlu0 %12069
        %12071 = vrot.lane.b32.xlu0 %v11961, 64
        %v12072 = vpop.permute.xlu0 %12071
        %12073 = vrot.lane.b32.xlu0 %v11964, 64
        %v12074 = vpop.permute.xlu0 %12073
        %12075 = vrot.lane.b32.xlu0 %v11969, 64
        %v12076 = vpop.permute.xlu0 %12075
        %12077 = vrot.lane.b32.xlu0 %v11972, 64
        %v12078 = vpop.permute.xlu0 %12077
        %12079 = vrot.lane.b32.xlu0 %v11977, 64
        %v12080 = vpop.permute.xlu0 %12079
        %12081 = vrot.lane.b32.xlu0 %v11980, 64
        %v12082 = vpop.permute.xlu0 %12081
        %12083 = vrot.lane.b32.xlu0 %v11985, 64
        %v12084 = vpop.permute.xlu0 %12083
        %12085 = vrot.lane.b32.xlu0 %v11988, 64
        %v12086 = vpop.permute.xlu0 %12085
        %v12119 = vadd.f32 %v11509, %v12024
        %v12120 = vadd.f32 %v11510, %v12026
        %v12121 = vadd.f32 %v11511, %v12028
        %v12122 = vadd.f32 %v11512, %v12030
        %v12123 = vadd.f32 %v11513, %v12032
        %v12124 = vadd.f32 %v11514, %v12034
        %v12125 = vadd.f32 %v11515, %v12036
        %v12126 = vadd.f32 %v11516, %v12038
        %v12127 = vadd.f32 %v11517, %v12040
        %v12128 = vadd.f32 %v11518, %v12042
        %v12129 = vadd.f32 %v11519, %v12044
        %v12130 = vadd.f32 %v11520, %v12046
        %v12131 = vadd.f32 %v11521, %v12048
        %v12132 = vadd.f32 %v11522, %v12050
        %v12133 = vadd.f32 %v11523, %v12052
        %v12134 = vadd.f32 %v11524, %v12054
        %v12135 = vadd.f32 %v11525, %v12056
        %v12136 = vadd.f32 %v11526, %v12058
        %v12137 = vadd.f32 %v11527, %v12060
        %v12138 = vadd.f32 %v11528, %v12062
        %v12139 = vadd.f32 %v11529, %v12064
        %v12140 = vadd.f32 %v11530, %v12066
        %v12141 = vadd.f32 %v11531, %v12068
        %v12142 = vadd.f32 %v11532, %v12070
        %v12143 = vadd.f32 %v11533, %v12072
        %v12144 = vadd.f32 %v11534, %v12074
        %v12145 = vadd.f32 %v11535, %v12076
        %v12146 = vadd.f32 %v11536, %v12078
        %v12147 = vadd.f32 %v11537, %v12080
        %v12148 = vadd.f32 %v11538, %v12082
        %v12149 = vadd.f32 %v11539, %v12084
        %v12150 = vadd.f32 %v11540, %v12086
        %v12151 = vtanh.pop %v12119
        %v12152 = vtanh.pop %v12120
        %v12153 = vtanh.pop %v12121
        %v12154 = vtanh.pop %v12122
        %v12155 = vtanh.pop %v12123
        %v12156 = vtanh.pop %v12124
        %v12157 = vtanh.pop %v12125
        %v12158 = vtanh.pop %v12126
        %v12159 = vtanh.pop %v12127
        %v12160 = vtanh.pop %v12128
        %v12161 = vtanh.pop %v12129
        %v12162 = vtanh.pop %v12130
        %v12163 = vtanh.pop %v12131
        %v12164 = vtanh.pop %v12132
        %v12165 = vtanh.pop %v12133
        %v12166 = vtanh.pop %v12134
        %v12167 = vtanh.pop %v12135
        %v12168 = vtanh.pop %v12136
        %v12169 = vtanh.pop %v12137
        %v12170 = vtanh.pop %v12138
        %v12171 = vtanh.pop %v12139
        %v12172 = vtanh.pop %v12140
        %v12173 = vtanh.pop %v12141
        %v12174 = vtanh.pop %v12142
        %v12175 = vtanh.pop %v12143
        %v12176 = vtanh.pop %v12144
        %v12177 = vtanh.pop %v12145
        %v12178 = vtanh.pop %v12146
        %v12179 = vtanh.pop %v12147
        %v12180 = vtanh.pop %v12148
        %v12181 = vtanh.pop %v12149
        %v12182 = vtanh.pop %v12150
        %v12183 = vsub.f32 1.0, %v5222
        %v12184 = vsub.f32 1.0, %v5224
        %v12185 = vsub.f32 1.0, %v5226
        %v12186 = vsub.f32 1.0, %v5228
        %v12187 = vsub.f32 1.0, %v5230
        %v12188 = vsub.f32 1.0, %v5232
        %v12189 = vsub.f32 1.0, %v5234
        %v12190 = vsub.f32 1.0, %v5236
        %v12191 = vsub.f32 1.0, %v5238
        %v12192 = vsub.f32 1.0, %v5240
        %v12193 = vsub.f32 1.0, %v5242
        %v12194 = vsub.f32 1.0, %v5244
        %v12195 = vsub.f32 1.0, %v5246
        %v12196 = vsub.f32 1.0, %v5248
        %v12197 = vsub.f32 1.0, %v5250
        %v12198 = vsub.f32 1.0, %v5252
        %v12199 = vsub.f32 1.0, %v5254
        %v12200 = vsub.f32 1.0, %v5256
        %v12201 = vsub.f32 1.0, %v5258
        %v12202 = vsub.f32 1.0, %v5260
        %v12203 = vsub.f32 1.0, %v5262
        %v12204 = vsub.f32 1.0, %v5264
        %v12205 = vsub.f32 1.0, %v5266
        %v12206 = vsub.f32 1.0, %v5268
        %v12207 = vsub.f32 1.0, %v5270
        %v12208 = vsub.f32 1.0, %v5272
        %v12209 = vsub.f32 1.0, %v5274
        %v12210 = vsub.f32 1.0, %v5276
        %v12211 = vsub.f32 1.0, %v5278
        %v12212 = vsub.f32 1.0, %v5280
        %v12213 = vsub.f32 1.0, %v5282
        %v12214 = vsub.f32 1.0, %v5284
        %v12215 = vmul.f32 %v12183, %v5285
        %v12216 = vmul.f32 %v12184, %v5286
        %v12217 = vmul.f32 %v12185, %v5287
        %v12218 = vmul.f32 %v12186, %v5288
        %v12219 = vmul.f32 %v12187, %v5289
        %v12220 = vmul.f32 %v12188, %v5290
        %v12221 = vmul.f32 %v12189, %v5291
        %v12222 = vmul.f32 %v12190, %v5292
        %v12223 = vmul.f32 %v12191, %v5293
        %v12224 = vmul.f32 %v12192, %v5294
        %v12225 = vmul.f32 %v12193, %v5295
        %v12226 = vmul.f32 %v12194, %v5296
        %v12227 = vmul.f32 %v12195, %v5297
        %v12228 = vmul.f32 %v12196, %v5298
        %v12229 = vmul.f32 %v12197, %v5299
        %v12230 = vmul.f32 %v12198, %v5300
        %v12231 = vmul.f32 %v12199, %v5301
        %v12232 = vmul.f32 %v12200, %v5302
        %v12233 = vmul.f32 %v12201, %v5303
        %v12234 = vmul.f32 %v12202, %v5304
        %v12235 = vmul.f32 %v12203, %v5305
        %v12236 = vmul.f32 %v12204, %v5306
        %v12237 = vmul.f32 %v12205, %v5307
        %v12238 = vmul.f32 %v12206, %v5308
        %v12239 = vmul.f32 %v12207, %v5309
        %v12240 = vmul.f32 %v12208, %v5310
        %v12241 = vmul.f32 %v12209, %v5311
        %v12242 = vmul.f32 %v12210, %v5312
        %v12243 = vmul.f32 %v12211, %v5313
        %v12244 = vmul.f32 %v12212, %v5314
        %v12245 = vmul.f32 %v12213, %v5315
        %v12246 = vmul.f32 %v12214, %v5316
        %12279 = vrot.lane.b32.xlu0 %v12151, 64
        %v12280 = vpop.permute.xlu0 %12279
        %12281 = vrot.lane.b32.xlu0 %v12152, 64
        %v12282 = vpop.permute.xlu0 %12281
        %12283 = vrot.lane.b32.xlu0 %v12153, 64
        %v12284 = vpop.permute.xlu0 %12283
        %12285 = vrot.lane.b32.xlu0 %v12154, 64
        %v12286 = vpop.permute.xlu0 %12285
        %12287 = vrot.lane.b32.xlu0 %v12155, 64
        %v12288 = vpop.permute.xlu0 %12287
        %12289 = vrot.lane.b32.xlu0 %v12156, 64
        %v12290 = vpop.permute.xlu0 %12289
        %12291 = vrot.lane.b32.xlu0 %v12157, 64
        %v12292 = vpop.permute.xlu0 %12291
        %12293 = vrot.lane.b32.xlu0 %v12158, 64
        %v12294 = vpop.permute.xlu0 %12293
        %12295 = vrot.lane.b32.xlu0 %v12159, 64
        %v12296 = vpop.permute.xlu0 %12295
        %12297 = vrot.lane.b32.xlu0 %v12160, 64
        %v12298 = vpop.permute.xlu0 %12297
        %12299 = vrot.lane.b32.xlu0 %v12161, 64
        %v12300 = vpop.permute.xlu0 %12299
        %12301 = vrot.lane.b32.xlu0 %v12162, 64
        %v12302 = vpop.permute.xlu0 %12301
        %12303 = vrot.lane.b32.xlu0 %v12163, 64
        %v12304 = vpop.permute.xlu0 %12303
        %12305 = vrot.lane.b32.xlu0 %v12164, 64
        %v12306 = vpop.permute.xlu0 %12305
        %12307 = vrot.lane.b32.xlu0 %v12165, 64
        %v12308 = vpop.permute.xlu0 %12307
        %12309 = vrot.lane.b32.xlu0 %v12166, 64
        %v12310 = vpop.permute.xlu0 %12309
        %12311 = vrot.lane.b32.xlu0 %v12167, 64
        %v12312 = vpop.permute.xlu0 %12311
        %12313 = vrot.lane.b32.xlu0 %v12168, 64
        %v12314 = vpop.permute.xlu0 %12313
        %12315 = vrot.lane.b32.xlu0 %v12169, 64
        %v12316 = vpop.permute.xlu0 %12315
        %12317 = vrot.lane.b32.xlu0 %v12170, 64
        %v12318 = vpop.permute.xlu0 %12317
        %12319 = vrot.lane.b32.xlu0 %v12171, 64
        %v12320 = vpop.permute.xlu0 %12319
        %12321 = vrot.lane.b32.xlu0 %v12172, 64
        %v12322 = vpop.permute.xlu0 %12321
        %12323 = vrot.lane.b32.xlu0 %v12173, 64
        %v12324 = vpop.permute.xlu0 %12323
        %12325 = vrot.lane.b32.xlu0 %v12174, 64
        %v12326 = vpop.permute.xlu0 %12325
        %12327 = vrot.lane.b32.xlu0 %v12175, 64
        %v12328 = vpop.permute.xlu0 %12327
        %12329 = vrot.lane.b32.xlu0 %v12176, 64
        %v12330 = vpop.permute.xlu0 %12329
        %12331 = vrot.lane.b32.xlu0 %v12177, 64
        %v12332 = vpop.permute.xlu0 %12331
        %12333 = vrot.lane.b32.xlu0 %v12178, 64
        %v12334 = vpop.permute.xlu0 %12333
        %12335 = vrot.lane.b32.xlu0 %v12179, 64
        %v12336 = vpop.permute.xlu0 %12335
        %12337 = vrot.lane.b32.xlu0 %v12180, 64
        %v12338 = vpop.permute.xlu0 %12337
        %12339 = vrot.lane.b32.xlu0 %v12181, 64
        %v12340 = vpop.permute.xlu0 %12339
        %12341 = vrot.lane.b32.xlu0 %v12182, 64
        %v12342 = vpop.permute.xlu0 %12341
        %v12375 = vmul.f32 %v5222, %v12280
        %v12376 = vmul.f32 %v5224, %v12282
        %v12377 = vmul.f32 %v5226, %v12284
        %v12378 = vmul.f32 %v5228, %v12286
        %v12379 = vmul.f32 %v5230, %v12288
        %v12380 = vmul.f32 %v5232, %v12290
        %v12381 = vmul.f32 %v5234, %v12292
        %v12382 = vmul.f32 %v5236, %v12294
        %v12383 = vmul.f32 %v5238, %v12296
        %v12384 = vmul.f32 %v5240, %v12298
        %v12385 = vmul.f32 %v5242, %v12300
        %v12386 = vmul.f32 %v5244, %v12302
        %v12387 = vmul.f32 %v5246, %v12304
        %v12388 = vmul.f32 %v5248, %v12306
        %v12389 = vmul.f32 %v5250, %v12308
        %v12390 = vmul.f32 %v5252, %v12310
        %v12391 = vmul.f32 %v5254, %v12312
        %v12392 = vmul.f32 %v5256, %v12314
        %v12393 = vmul.f32 %v5258, %v12316
        %v12394 = vmul.f32 %v5260, %v12318
        %v12395 = vmul.f32 %v5262, %v12320
        %v12396 = vmul.f32 %v5264, %v12322
        %v12397 = vmul.f32 %v5266, %v12324
        %v12398 = vmul.f32 %v5268, %v12326
        %v12399 = vmul.f32 %v5270, %v12328
        %v12400 = vmul.f32 %v5272, %v12330
        %v12401 = vmul.f32 %v5274, %v12332
        %v12402 = vmul.f32 %v5276, %v12334
        %v12403 = vmul.f32 %v5278, %v12336
        %v12404 = vmul.f32 %v5280, %v12338
        %v12405 = vmul.f32 %v5282, %v12340
        %v12406 = vmul.f32 %v5284, %v12342
        %v12407 = vadd.f32 %v12215, %v12375
        %v12408 = vadd.f32 %v12216, %v12376
        %v12409 = vadd.f32 %v12217, %v12377
        %v12410 = vadd.f32 %v12218, %v12378
        %v12411 = vadd.f32 %v12219, %v12379
        %v12412 = vadd.f32 %v12220, %v12380
        %v12413 = vadd.f32 %v12221, %v12381
        %v12414 = vadd.f32 %v12222, %v12382
        %v12415 = vadd.f32 %v12223, %v12383
        %v12416 = vadd.f32 %v12224, %v12384
        %v12417 = vadd.f32 %v12225, %v12385
        %v12418 = vadd.f32 %v12226, %v12386
        %v12419 = vadd.f32 %v12227, %v12387
        %v12420 = vadd.f32 %v12228, %v12388
        %v12421 = vadd.f32 %v12229, %v12389
        %v12422 = vadd.f32 %v12230, %v12390
        %v12423 = vadd.f32 %v12231, %v12391
        %v12424 = vadd.f32 %v12232, %v12392
        %v12425 = vadd.f32 %v12233, %v12393
        %v12426 = vadd.f32 %v12234, %v12394
        %v12427 = vadd.f32 %v12235, %v12395
        %v12428 = vadd.f32 %v12236, %v12396
        %v12429 = vadd.f32 %v12237, %v12397
        %v12430 = vadd.f32 %v12238, %v12398
        %v12431 = vadd.f32 %v12239, %v12399
        %v12432 = vadd.f32 %v12240, %v12400
        %v12433 = vadd.f32 %v12241, %v12401
        %v12434 = vadd.f32 %v12242, %v12402
        %v12435 = vadd.f32 %v12243, %v12403
        %v12436 = vadd.f32 %v12244, %v12404
        %v12437 = vadd.f32 %v12245, %v12405
        %v12438 = vadd.f32 %v12246, %v12406
        %12439 = vst.msk [vmem:[%s232] sm:$0xff] %vm6356, %v12407
        %12440 = vst.msk [vmem:[%s232 + $0x8] sm:$0xff] %vm6356, %v12408
        %12441 = vst.msk [vmem:[%s232 + $0x10] sm:$0xff] %vm6356, %v12409
        %12442 = vst.msk [vmem:[%s232 + $0x18] sm:$0xff] %vm6356, %v12410
        %12443 = vst.msk [vmem:[%s232 + $0x20] sm:$0xff] %vm6356, %v12411
        %12444 = vst.msk [vmem:[%s232 + $0x28] sm:$0xff] %vm6356, %v12412
        %12445 = vst.msk [vmem:[%s232 + $0x30] sm:$0xff] %vm6356, %v12413
        %12446 = vst.msk [vmem:[%s232 + $0x38] sm:$0xff] %vm6356, %v12414
        %12447 = vst.msk [vmem:[%s232 + $0x40] sm:$0xff] %vm6356, %v12415
        %12448 = vst.msk [vmem:[%s232 + $0x48] sm:$0xff] %vm6356, %v12416
        %12449 = vst.msk [vmem:[%s232 + $0x50] sm:$0xff] %vm6356, %v12417
        %12450 = vst.msk [vmem:[%s232 + $0x58] sm:$0xff] %vm6356, %v12418
        %12451 = vst.msk [vmem:[%s232 + $0x60] sm:$0xff] %vm6356, %v12419
        %12452 = vst.msk [vmem:[%s232 + $0x68] sm:$0xff] %vm6356, %v12420
        %12453 = vst.msk [vmem:[%s232 + $0x70] sm:$0xff] %vm6356, %v12421
        %12454 = vst.msk [vmem:[%s232 + $0x78] sm:$0xff] %vm6356, %v12422
        %12455 = vst.msk [vmem:[%s232 + $0x80] sm:$0xff] %vm6356, %v12423
        %12456 = vst.msk [vmem:[%s232 + $0x88] sm:$0xff] %vm6356, %v12424
        %12457 = vst.msk [vmem:[%s232 + $0x90] sm:$0xff] %vm6356, %v12425
        %12458 = vst.msk [vmem:[%s232 + $0x98] sm:$0xff] %vm6356, %v12426
        %12459 = vst.msk [vmem:[%s232 + $0xa0] sm:$0xff] %vm6356, %v12427
        %12460 = vst.msk [vmem:[%s232 + $0xa8] sm:$0xff] %vm6356, %v12428
        %12461 = vst.msk [vmem:[%s232 + $0xb0] sm:$0xff] %vm6356, %v12429
        %12462 = vst.msk [vmem:[%s232 + $0xb8] sm:$0xff] %vm6356, %v12430
        %12463 = vst.msk [vmem:[%s232 + $0xc0] sm:$0xff] %vm6356, %v12431
        %12464 = vst.msk [vmem:[%s232 + $0xc8] sm:$0xff] %vm6356, %v12432
        %12465 = vst.msk [vmem:[%s232 + $0xd0] sm:$0xff] %vm6356, %v12433
        %12466 = vst.msk [vmem:[%s232 + $0xd8] sm:$0xff] %vm6356, %v12434
        %12467 = vst.msk [vmem:[%s232 + $0xe0] sm:$0xff] %vm6356, %v12435
        %12468 = vst.msk [vmem:[%s232 + $0xe8] sm:$0xff] %vm6356, %v12436
        %12469 = vst.msk [vmem:[%s232 + $0xf0] sm:$0xff] %vm6356, %v12437
        %12470 = vst.msk [vmem:[%s232 + $0xf8] sm:$0xff] %vm6356, %v12438
        %s12471 = sand.u32 %s142, 1
        %s12472 = scalar_lea.sflag [#allocation4], %s12471
        %s12473 = sand.u32 %s142, 1
        %s12474 = smul.addr %s12473, 256
        %s12475 = scalar_lea.vmem [#allocation3], %s12474
        // Predicated region
        $region41: #{conv_gru_pallas.1} parent=39 // pred_check
          %p12476 = pneg %p152
        $region42: #{conv_gru_pallas.1} parent=39 // pred_check_branch
          %12478 = sbr.rel (%p12476) target = $region44
        $region43: #{conv_gru_pallas.1} parent=39 // pred_region
          %s12480 = ssub.s32 4096, 4096
          %12481 = vsyncadd %s12472, %s12480
          %s12482 = smul.addr %s19, 32
          %s12483 = smul.addr %s12482, 128
          %s12484 = scalar_lea.hbm %s5, %s12483
          %s12485 = sshll.u32 %s12475, 4
          %s12486 = int_to_ptr.vmem [resolvable:$true] %s12485
          %12491 = dma.vmem_to_hbm [thread:$0]  %s12486, 4096, %s12484, %s12472, 128, 128, 8
        $region44: #{conv_gru_pallas.1} parent=39 // pred_fallthru
          _
      $region40: #{conv_gru_pallas.1} parent=5 // pred_fallthru
        _
      %p12492 = scmp.le.s32.totalorder 2, %s14
      // Predicated region
      $region45: #{conv_gru_pallas.1} parent=5 // pred_check
        %p12493 = pneg %p12492
      $region46: #{conv_gru_pallas.1} parent=5 // pred_check_branch
        %12495 = sbr.rel (%p12493) target = $region48
      $region47: #{conv_gru_pallas.1} parent=5 // pred_region
        %s12496 = ssub.s32 %s14, 2
        // Predicated region
        $region49: #{conv_gru_pallas.1} parent=47 // pred_check
          %p12497 = pneg %p158
        $region50: #{conv_gru_pallas.1} parent=47 // pred_check_branch
          %12499 = sbr.rel (%p12497) target = $region52
        $region51: #{conv_gru_pallas.1} parent=47 // pred_region
          %s12500 = sand.u32 %s143, 1
          %s12501 = scalar_lea.sflag [#allocation4], %s12500
          %s12502 = sand.u32 %s143, 1
          %s12503 = smul.addr %s12502, 256
          %s12504 = scalar_lea.vmem [#allocation3], %s12503
          %12505 = dma.done %s12501, 4096
        $region52: #{conv_gru_pallas.1} parent=47 // pred_fallthru
          _
      $region48: #{conv_gru_pallas.1} parent=5 // pred_fallthru
        _
    $region6: #{conv_gru_pallas.1} parent=1 // loop_footer
      %s18 = sadd.s32 1, %s14
    $region7: #{conv_gru_pallas.1} parent=1 // loop_footer_branch
      %13 = sbr.rel target = $region3
    $region8: #{conv_gru_pallas.1} parent=1 // loop_exit
      _
    %12506 = vsyncpa [#allocation4], 1
    %s12507 = scalar_lea.sflag [#allocation4], 1
    %12508 = vsyncpa %s12507, 1

</llo_original>
